<compile_context>
chip_gen: v7x
topology: tpu7x:2x2x1
jax: 0.10.0
libtpu: 0.0.40
codegen_flags: <defaults>
</compile_context>

<pallas_src>
import jax
import jax.numpy as jnp
from jax.experimental import pallas as pl
from jax.experimental.pallas import tpu as pltpu


LANE = 128                          # lane-dense channel padding
_VMEM_LIMIT = 48 * 1024 * 1024      # <= v7x physical VMEM (64 MiB) w/ headroom


def _rup(c, m=LANE):
    return ((c + m - 1) // m) * m


def _rup8(n):
    return ((n + 7) // 8) * 8


def _pad_channels(x, cp):
    c = x.shape[-1]
    if c == cp:
        return x
    return jnp.pad(x, ((0, 0),) * (x.ndim - 1) + ((0, cp - c),))


# ----------------------------------------------------------------------------
# Pallas kernel 1: fused 3x3 conv
#   grid = (N, Cout_tiles, Cin_tiles); Cin axis is the "arbitrary" reduction.
#   Per step: (optional GroupNorm+SiLU) fused into the VMEM fill of a flat
#   zero-padded buffer, then k*k full-spatial matmuls (stride folded into the
#   tap loads).  Epilogue: bias (+ optional residual), per-channel sum/sumsq
#   stats of the f32 result, bf16 lane-dense output store.
# ----------------------------------------------------------------------------
def _make_conv3_kernel(*, H, W, Wp, F, stride, k, pad, gn, has_res, Ho, Wo, M_acc):
    def kernel(*refs):
        pos = 3
        x_ref, w_ref, b_ref = refs[0], refs[1], refs[2]
        if gn:
            a_ref, s_ref = refs[pos], refs[pos + 1]
            pos += 2
        if has_res:
            r_ref = refs[pos]
            pos += 1
        o_ref, s1_ref, s2_ref = refs[pos], refs[pos + 1], refs[pos + 2]
        acc_ref, xbuf_ref = refs[pos + 3], refs[pos + 4]

        ci = pl.program_id(2)

        @pl.when(ci == 0)
        def _():
            acc_ref[...] = jnp.zeros_like(acc_ref)
            # Re-establish the zero halo once per (n, cout-tile) reduction
            # pass.  (Zeroing only at the very first grid step would be unsafe
            # if a megacore shards the parallel axes; this is still far less
            # store traffic than the old per-step zero + full copy.)
            xbuf_ref[...] = jnp.zeros_like(xbuf_ref)

        # ---- fill the flat padded input buffer (fused GroupNorm + SiLU) ----
        if gn:
            a = a_ref[0]                                   # (1, cin_t) f32
            s = s_ref[0]
        for r in range(H):
            row = x_ref[0, r]                              # (W, cin_t) bf16
            if gn:
                rf = row.astype(jnp.float32) * a + s
                row = (rf * jax.nn.sigmoid(rf)).astype(xbuf_ref.dtype)
            xbuf_ref[pl.ds(F + (r + pad) * Wp, W), :] = row

        # ---- one MXU matmul per tap over the whole (strided) spatial extent
        for i in range(k):
            for j in range(k):
                start = F + i * Wp + (j - pad)             # static offset
                if stride == 1:
                    lhs = xbuf_ref[pl.ds(start, M_acc), :]
                else:
                    # stride folded into the tap load: only even rows/cols of
                    # the output are ever computed.
                    lhs = xbuf_ref[pl.ds(start, M_acc, stride), :]
                acc_ref[...] += jnp.dot(lhs, w_ref[i * k + j],
                                        preferred_element_type=jnp.float32)

        # ---- epilogue: bias + residual + GN stats + bf16 store --------------
        @pl.when(ci == pl.num_programs(2) - 1)
        def _():
            bias = b_ref[...]                              # (1, cout_t) f32
            cout_t = bias.shape[-1]
            s1 = jnp.zeros((1, cout_t), jnp.float32)
            s2 = jnp.zeros((1, cout_t), jnp.float32)
            for ho in range(Ho):
                y = acc_ref[pl.ds(ho * Wp, Wo), :] + bias  # (Wo, cout_t) f32
                if has_res:
                    y = y + r_ref[0, ho].astype(jnp.float32)
                s1 = s1 + jnp.sum(y, axis=0, keepdims=True)
                s2 = s2 + jnp.sum(y * y, axis=0, keepdims=True)
                o_ref[0, ho] = y.astype(o_ref.dtype)
            s1_ref[0] = s1
            s2_ref[0] = s2

    return kernel


def conv3x3(x, w, b, *, stride=1, gn=None, residual=None):
    """Fused 3x3 conv.

    x: (N, H, W, Cin_p) bf16; w: (9, Cin_p, Cout_p) bf16; b: (1, Cout_p) f32.
    gn: optional (scale, shift), each (N, 1, Cin_p) f32 -> GroupNorm + SiLU is
        applied to the input inside the kernel.
    residual: optional (N, Ho, Wo, Cout_p) added in the epilogue.
    Returns (y, s1, s2): y (N, Ho, Wo, Cout_p) bf16 and per-channel sum /
    sum-of-squares of the f32 output (for the next GroupNorm).
    """
    N, H, W, cin_p = x.shape
    taps, _, cout_p = w.shape
    assert taps == 9 and cin_p % LANE == 0 and cout_p % LANE == 0
    k, pad = 3, 1
    assert H % stride == 0 and W % stride == 0
    Ho, Wo = H // stride, W // stride

    Wp = _rup8(W + 2 * pad)                 # lane-friendly flat row stride
    F = 8                                   # front halo (sublane aligned)
    L = _rup8(F + (H + 2 * pad) * Wp + pad)  # flat padded buffer length
    M_acc = Ho * Wp                          # matmul M (>= 256 at 16x16)

    cin_t = min(cin_p, LANE)
    cout_t = min(cout_p, LANE)
    n_ci = cin_p // cin_t
    n_co = cout_p // cout_t

    in_specs = [
        pl.BlockSpec((1, H, W, cin_t), lambda n, co, ci: (n, 0, 0, ci)),
        pl.BlockSpec((taps, cin_t, cout_t), lambda n, co, ci: (0, ci, co)),
        pl.BlockSpec((1, cout_t), lambda n, co, ci: (0, co)),
    ]
    args = [x, w, b]
    if gn is not None:
        in_specs += [pl.BlockSpec((1, 1, cin_t), lambda n, co, ci: (n, 0, ci))] * 2
        args += [gn[0], gn[1]]
    if residual is not None:
        in_specs.append(
            pl.BlockSpec((1, Ho, Wo, cout_t), lambda n, co, ci: (n, 0, 0, co)))
        args.append(residual)

    kernel = _make_conv3_kernel(H=H, W=W, Wp=Wp, F=F, stride=stride, k=k,
                                pad=pad, gn=gn is not None,
                                has_res=residual is not None,
                                Ho=Ho, Wo=Wo, M_acc=M_acc)

    y, s1, s2 = pl.pallas_call(
        kernel,
        out_shape=(jax.ShapeDtypeStruct((N, Ho, Wo, cout_p), x.dtype),
                   jax.ShapeDtypeStruct((N, 1, cout_p), jnp.float32),
                   jax.ShapeDtypeStruct((N, 1, cout_p), jnp.float32)),
        grid=(N, n_co, n_ci),
        in_specs=in_specs,
        out_specs=(pl.BlockSpec((1, Ho, Wo, cout_t),
                                lambda n, co, ci: (n, 0, 0, co)),
                   pl.BlockSpec((1, 1, cout_t), lambda n, co, ci: (n, 0, co)),
                   pl.BlockSpec((1, 1, cout_t), lambda n, co, ci: (n, 0, co))),
        scratch_shapes=[
            pltpu.VMEM((M_acc, cout_t), jnp.float32),   # f32 accumulator
            pltpu.VMEM((L, cin_t), x.dtype),            # flat padded input
        ],
        compiler_params=pltpu.CompilerParams(
            dimension_semantics=("parallel", "parallel", "arbitrary"),
            vmem_limit_bytes=_VMEM_LIMIT),
    )(*args)
    return y, s1, s2


# ----------------------------------------------------------------------------
# Pallas kernel 2: 1x1 conv (ResBlock skip) — single matmul on the flattened
# spatial extent, no padded buffer, no stats.
# ----------------------------------------------------------------------------
def _conv1x1_kernel(x_ref, w_ref, b_ref, o_ref, acc_ref):
    ci = pl.program_id(2)

    @pl.when(ci == 0)
    def _():
        acc_ref[...] = jnp.zeros_like(acc_ref)

    acc_ref[...] += jnp.dot(x_ref[0], w_ref[0],
                            preferred_element_type=jnp.float32)

    @pl.when(ci == pl.num_programs(2) - 1)
    def _():
        o_ref[0] = (acc_ref[...] + b_ref[...]).astype(o_ref.dtype)


def conv1x1(x, w, b):
    N, H, W, cin_p = x.shape
    _, _, cout_p = w.shape
    cin_t = min(cin_p, LANE)
    cout_t = min(cout_p, LANE)
    n_ci = cin_p // cin_t
    n_co = cout_p // cout_t
    HW = H * W
    xf = x.reshape(N, HW, cin_p)

    y = pl.pallas_call(
        _conv1x1_kernel,
        out_shape=jax.ShapeDtypeStruct((N, HW, cout_p), x.dtype),
        grid=(N, n_co, n_ci),
        in_specs=[pl.BlockSpec((1, HW, cin_t), lambda n, co, ci: (n, 0, ci)),
                  pl.BlockSpec((1, cin_t, cout_t), lambda n, co, ci: (0, ci, co)),
                  pl.BlockSpec((1, cout_t), lambda n, co, ci: (0, co))],
        out_specs=pl.BlockSpec((1, HW, cout_t), lambda n, co, ci: (n, 0, co)),
        scratch_shapes=[pltpu.VMEM((HW, cout_t), jnp.float32)],
        compiler_params=pltpu.CompilerParams(
            dimension_semantics=("parallel", "parallel", "arbitrary"),
            vmem_limit_bytes=_VMEM_LIMIT),
    )(xf, w, b)
    return y.reshape(N, H, W, cout_p)


# ----------------------------------------------------------------------------
# Tiny XLA glue: per-(sample, group) GroupNorm statistics -> per-channel
# scale/shift that the consuming conv applies in its fill phase.
# ----------------------------------------------------------------------------
def _gn_scale_shift(s1, s2, count_hw, gamma, beta, num_groups, eps=1e-5):
    N, _, Cp = s1.shape
    C = gamma.shape[0]
    G = num_groups
    cg = C // G
    cnt = float(count_hw * cg)
    g1 = s1[:, 0, :C].reshape(N, G, cg).sum(axis=-1)
    g2 = s2[:, 0, :C].reshape(N, G, cg).sum(axis=-1)
    mean = g1 / cnt
    var = jnp.maximum(g2 / cnt - mean * mean, 0.0)
    rstd = jax.lax.rsqrt(var + eps)
    mean_c = jnp.repeat(mean, cg, axis=1)                  # (N, C)
    rstd_c = jnp.repeat(rstd, cg, axis=1)
    scale_c = rstd_c * gamma[None, :]
    shift_c = beta[None, :] - mean_c * scale_c
    # Padded channels get scale = shift = 0 -> stay exactly zero.
    scale = jnp.zeros((N, 1, Cp), jnp.float32).at[:, 0, :C].set(scale_c)
    shift = jnp.zeros((N, 1, Cp), jnp.float32).at[:, 0, :C].set(shift_c)
    return scale, shift


# ----------------------------------------------------------------------------
# Pallas kernel 3: fused KL loss + reparameterization sample (tiny latent)
# ----------------------------------------------------------------------------
def _kl_sample_kernel(mean_ref, logvar_ref, noise_ref, z_ref, kl_ref):
    mean = mean_ref[...].astype(jnp.float32)
    logvar = jnp.clip(logvar_ref[...].astype(jnp.float32), -30.0, 20.0)
    std = jnp.exp(0.5 * logvar)
    z_ref[...] = (mean + noise_ref[...] * std).astype(z_ref.dtype)
    kl_ref[...] = -0.5 * jnp.sum(1.0 + logvar - mean * mean - jnp.exp(logvar),
                                 axis=1, keepdims=True)


def kl_sample(mean, log_var, noise):
    N = mean.shape[0]
    D = mean.size // N
    m = mean.reshape(N, D)
    lv = log_var.reshape(N, D)
    nz = noise.reshape(N, D)
    z, kl = pl.pallas_call(
        _kl_sample_kernel,
        out_shape=(jax.ShapeDtypeStruct((N, D), jnp.bfloat16),
                   jax.ShapeDtypeStruct((N, 1), jnp.float32)),
        grid=(1,),
        in_specs=[pl.BlockSpec((N, D), lambda i: (0, 0))] * 3,
        out_specs=(pl.BlockSpec((N, D), lambda i: (0, 0)),
                   pl.BlockSpec((N, 1), lambda i: (0, 0))),
        compiler_params=pltpu.CompilerParams(
            dimension_semantics=("arbitrary",),
            vmem_limit_bytes=_VMEM_LIMIT),
    )(m, lv, nz)
    return z.reshape(mean.shape), jnp.mean(kl)


# ----------------------------------------------------------------------------
# Parameter init (deterministic, synthetic, channel-padded to lane multiples)
# ----------------------------------------------------------------------------
def _init_conv(key, cin, cout, k):
    cin_p, cout_p = _rup(cin), _rup(cout)
    scale = (cin * k * k) ** -0.5
    w = jax.random.normal(key, (k * k, cin, cout), jnp.float32) * scale
    wp = jnp.zeros((k * k, cin_p, cout_p), jnp.bfloat16)
    wp = wp.at[:, :cin, :cout].set(w.astype(jnp.bfloat16))
    return {"w": wp, "b": jnp.zeros((1, cout_p), jnp.float32)}


def _init_gn(c):
    return {"g": jnp.ones((c,), jnp.float32), "b": jnp.zeros((c,), jnp.float32)}


def _init_resblock(key, cin, cout):
    k1, k2, k3 = jax.random.split(key, 3)
    p = {"gn1": _init_gn(cin), "conv1": _init_conv(k1, cin, cout, 3),
         "gn2": _init_gn(cout), "conv2": _init_conv(k2, cout, cout, 3)}
    if cin != cout:
        p["skip"] = _init_conv(k3, cin, cout, 1)
    return p


def _init_coder(key, c_in, channels, c_out, n_res, upsample):
    keys = list(jax.random.split(key, 4 + len(channels) * (n_res + 1)))
    ki = iter(keys)
    p = {"conv_in": _init_conv(next(ki), c_in, channels[0], 3), "stages": []}
    prev = channels[0]
    for ch in channels:
        blocks = []
        for _ in range(n_res):
            blocks.append(_init_resblock(next(ki), prev, ch))
            prev = ch
        p["stages"].append({"blocks": blocks,
                            "resize": _init_conv(next(ki), ch, ch, 3)})
    p["norm_out"] = _init_gn(prev)
    p["conv_out"] = _init_conv(next(ki), prev, c_out, 3)
    p["upsample"] = upsample
    return p


def init_vae_params(key, cfg):
    ke, kd = jax.random.split(key)
    z_out = cfg["z_dim"] if cfg["bottleneck"] == "vq" else 2 * cfg["z_dim"]
    enc = _init_coder(ke, cfg["in_channels"], cfg["channels"], z_out,
                      cfg["enc_num_res_blocks"], upsample=False)
    dec = _init_coder(kd, cfg["z_dim"], cfg["channels"][::-1],
                      cfg["in_channels"], cfg["dec_num_res_blocks"],
                      upsample=True)
    return {"enc": enc, "dec": dec}


# ----------------------------------------------------------------------------
# Forward
# ----------------------------------------------------------------------------
def _resblock_fwd(p, x, stats, num_groups):
    """x: (N,H,W,Cp) bf16; stats: (s1, s2) per-channel sums of x."""
    N, H, W, _ = x.shape
    a1, b1 = _gn_scale_shift(stats[0], stats[1], H * W,
                             p["gn1"]["g"], p["gn1"]["b"], num_groups)
    h, hs1, hs2 = conv3x3(x, p["conv1"]["w"], p["conv1"]["b"], gn=(a1, b1))
    a2, b2 = _gn_scale_shift(hs1, hs2, H * W,
                             p["gn2"]["g"], p["gn2"]["b"], num_groups)
    res = conv1x1(x, p["skip"]["w"], p["skip"]["b"]) if "skip" in p else x
    # GroupNorm+SiLU applied on the way in, residual added in the epilogue.
    y, ys1, ys2 = conv3x3(h, p["conv2"]["w"], p["conv2"]["b"],
                          gn=(a2, b2), residual=res)
    return y, (ys1, ys2)


def _coder_fwd(p, h, num_groups):
    h, s1, s2 = conv3x3(h, p["conv_in"]["w"], p["conv_in"]["b"])
    for stage in p["stages"]:
        for blk in stage["blocks"]:
            h, (s1, s2) = _resblock_fwd(blk, h, (s1, s2), num_groups)
        if p["upsample"]:
            # TODO(synk): fold nearest-2x into the resize conv's VMEM fill.
            h = jnp.repeat(jnp.repeat(h, 2, axis=1), 2, axis=2)
            h, s1, s2 = conv3x3(h, stage["resize"]["w"], stage["resize"]["b"])
        else:
            h, s1, s2 = conv3x3(h, stage["resize"]["w"], stage["resize"]["b"],
                                stride=2)
    N, H, W, _ = h.shape
    a, b = _gn_scale_shift(s1, s2, H * W,
                           p["norm_out"]["g"], p["norm_out"]["b"], num_groups)
    h, _, _ = conv3x3(h, p["conv_out"]["w"], p["conv_out"]["b"], gn=(a, b))
    return h


def vae_forward(params, x_nchw, noise_key, cfg):
    """Matches VAE.forward with bottleneck='kl' (sample=True, returns x_hat, kl)."""
    num_groups = cfg["num_groups"]
    z_dim = cfg["z_dim"]

    x = jnp.transpose(x_nchw, (0, 2, 3, 1)).astype(jnp.bfloat16)  # NCHW->NHWC
    x = _pad_channels(x, _rup(cfg["in_channels"]))

    z_enc = _coder_fwd(params["enc"], x, num_groups)        # (N, h, w, Cp)
    mean = z_enc[..., :z_dim]
    log_var = z_enc[..., z_dim:2 * z_dim]
    noise = jax.random.normal(noise_key, mean.shape, jnp.float32)
    z, kl_loss = kl_sample(mean, log_var, noise)             # fused Pallas kernel

    z = _pad_channels(z, _rup(z_dim))
    x_hat = _coder_fwd(params["dec"], z, num_groups)         # (N, H, W, Cp)
    x_hat = x_hat[..., :cfg["in_channels"]].astype(jnp.float32)
    return jnp.transpose(x_hat, (0, 3, 1, 2)), kl_loss       # back to NCHW


# ----------------------------------------------------------------------------
if __name__ == "__main__":
    cfg = dict(
        in_channels=3, channels=[8, 16], z_dim=4, bottleneck="kl",
        codebook_size=64, codebook_beta=0.25, codebook_gamma=0.99,
        enc_num_res_blocks=1, dec_num_res_blocks=1,
        attn_resolutions=[], num_heads=1, init_resolution=16, num_groups=4,
    )
    key = jax.random.PRNGKey(0)
    pkey, xkey, nkey = jax.random.split(key, 3)

    params = init_vae_params(pkey, cfg)
    x = jax.random.normal(xkey, (2, cfg["in_channels"], 16, 16), jnp.float32)

    x_hat, kl = vae_forward(params, x, nkey, cfg)
    x_hat = jax.block_until_ready(x_hat)
    kl = jax.block_until_ready(kl)

    assert x_hat.shape == x.shape, (x_hat.shape, x.shape)
    assert bool(jnp.all(jnp.isfinite(x_hat))) and bool(jnp.isfinite(kl))
    print("KERNEL_OK")
</pallas_src>

<mosaic_0001>
module attributes {stable_mosaic.version = 11 : i64} {
  func.func @kernel(%arg0: i32, %arg1: i32, %arg2: i32, %arg3: memref<1x16x16x128xbf16, #tpu.memory_space<vmem>>, %arg4: memref<9x128x128xbf16, #tpu.memory_space<vmem>>, %arg5: memref<1x128xf32, #tpu.memory_space<vmem>>, %arg6: memref<1x16x16x128xbf16, #tpu.memory_space<vmem>>, %arg7: memref<1x1x128xf32, #tpu.memory_space<vmem>>, %arg8: memref<1x1x128xf32, #tpu.memory_space<vmem>>, %arg9: memref<384x128xf32, #tpu.memory_space<vmem>>, %arg10: memref<448x128xbf16, #tpu.memory_space<vmem>>) attributes {dimension_semantics = [#tpu.dimension_semantics<parallel>, #tpu.dimension_semantics<parallel>, #tpu.dimension_semantics<arbitrary>], iteration_bounds = array<i64: 2, 1, 1>, scalar_prefetch = 0 : i64, scratch_operands = 2 : i64, tpu.core_type = #tpu.core_type<tc>, window_params = [{transform_indices = @transform_0, window_bounds = array<i64: 1, 16, 16, 128>}, {transform_indices = @transform_1, window_bounds = array<i64: 9, 128, 128>}, {transform_indices = @transform_2, window_bounds = array<i64: 1, 128>}, {transform_indices = @transform_3, window_bounds = array<i64: 1, 16, 16, 128>}, {transform_indices = @transform_4, window_bounds = array<i64: 1, 1, 128>}, {transform_indices = @transform_5, window_bounds = array<i64: 1, 1, 128>}]} {
    %c0_i32 = arith.constant 0 : i32
    %0 = arith.cmpi eq, %arg2, %c0_i32 : i32
    %1 = arith.extui %0 : i1 to i32
    %c0_i32_0 = arith.constant 0 : i32
    %2 = arith.cmpi ne, %1, %c0_i32_0 : i32
    scf.if %2 {
      %cst_152 = arith.constant 0.000000e+00 : f32
      %117 = vector.broadcast %cst_152 : f32 to vector<384x128xf32>
      %c0_153 = arith.constant 0 : index
      %c0_154 = arith.constant 0 : index
      %118 = vector.load %arg9[%c0_153, %c0_154] : memref<384x128xf32, #tpu.memory_space<vmem>>, vector<384x128xf32>
      tpu.vector_store %arg9[%c0_153, %c0_154], %117 {strides = array<i32>} : memref<384x128xf32, #tpu.memory_space<vmem>>, vector<384x128xf32>,
      %cst_155 = arith.constant 0.000000e+00 : bf16
      %119 = vector.broadcast %cst_155 : bf16 to vector<448x128xbf16>
      %c0_156 = arith.constant 0 : index
      %c0_157 = arith.constant 0 : index
      %120 = vector.load %arg10[%c0_156, %c0_157] : memref<448x128xbf16, #tpu.memory_space<vmem>>, vector<448x128xbf16>
      tpu.vector_store %arg10[%c0_156, %c0_157], %119 {strides = array<i32>} : memref<448x128xbf16, #tpu.memory_space<vmem>>, vector<448x128xbf16>,
    } else {
    }
    %c0 = arith.constant 0 : index
    %c0_1 = arith.constant 0 : index
    %c0_2 = arith.constant 0 : index
    %c0_3 = arith.constant 0 : index
    %3 = vector.load %arg3[%c0, %c0_1, %c0_2, %c0_3] : memref<1x16x16x128xbf16, #tpu.memory_space<vmem>>, vector<1x1x16x128xbf16>
    %4 = vector.shape_cast %3 : vector<1x1x16x128xbf16> to vector<16x128xbf16>
    %c32 = arith.constant 32 : index
    %c0_4 = arith.constant 0 : index
    %5 = vector.load %arg10[%c32, %c0_4] : memref<448x128xbf16, #tpu.memory_space<vmem>>, vector<16x128xbf16>
    tpu.vector_store %arg10[%c32, %c0_4], %4 {strides = array<i32>} : memref<448x128xbf16, #tpu.memory_space<vmem>>, vector<16x128xbf16>,
    %c0_5 = arith.constant 0 : index
    %c1 = arith.constant 1 : index
    %c0_6 = arith.constant 0 : index
    %c0_7 = arith.constant 0 : index
    %6 = vector.load %arg3[%c0_5, %c1, %c0_6, %c0_7] : memref<1x16x16x128xbf16, #tpu.memory_space<vmem>>, vector<1x1x16x128xbf16>
    %7 = vector.shape_cast %6 : vector<1x1x16x128xbf16> to vector<16x128xbf16>
    %c56 = arith.constant 56 : index
    %c0_8 = arith.constant 0 : index
    %8 = vector.load %arg10[%c56, %c0_8] : memref<448x128xbf16, #tpu.memory_space<vmem>>, vector<16x128xbf16>
    tpu.vector_store %arg10[%c56, %c0_8], %7 {strides = array<i32>} : memref<448x128xbf16, #tpu.memory_space<vmem>>, vector<16x128xbf16>,
    %c0_9 = arith.constant 0 : index
    %c2 = arith.constant 2 : index
    %c0_10 = arith.constant 0 : index
    %c0_11 = arith.constant 0 : index
    %9 = vector.load %arg3[%c0_9, %c2, %c0_10, %c0_11] : memref<1x16x16x128xbf16, #tpu.memory_space<vmem>>, vector<1x1x16x128xbf16>
    %10 = vector.shape_cast %9 : vector<1x1x16x128xbf16> to vector<16x128xbf16>
    %c80 = arith.constant 80 : index
    %c0_12 = arith.constant 0 : index
    %11 = vector.load %arg10[%c80, %c0_12] : memref<448x128xbf16, #tpu.memory_space<vmem>>, vector<16x128xbf16>
    tpu.vector_store %arg10[%c80, %c0_12], %10 {strides = array<i32>} : memref<448x128xbf16, #tpu.memory_space<vmem>>, vector<16x128xbf16>,
    %c0_13 = arith.constant 0 : index
    %c3 = arith.constant 3 : index
    %c0_14 = arith.constant 0 : index
    %c0_15 = arith.constant 0 : index
    %12 = vector.load %arg3[%c0_13, %c3, %c0_14, %c0_15] : memref<1x16x16x128xbf16, #tpu.memory_space<vmem>>, vector<1x1x16x128xbf16>
    %13 = vector.shape_cast %12 : vector<1x1x16x128xbf16> to vector<16x128xbf16>
    %c104 = arith.constant 104 : index
    %c0_16 = arith.constant 0 : index
    %14 = vector.load %arg10[%c104, %c0_16] : memref<448x128xbf16, #tpu.memory_space<vmem>>, vector<16x128xbf16>
    tpu.vector_store %arg10[%c104, %c0_16], %13 {strides = array<i32>} : memref<448x128xbf16, #tpu.memory_space<vmem>>, vector<16x128xbf16>,
    %c0_17 = arith.constant 0 : index
    %c4 = arith.constant 4 : index
    %c0_18 = arith.constant 0 : index
    %c0_19 = arith.constant 0 : index
    %15 = vector.load %arg3[%c0_17, %c4, %c0_18, %c0_19] : memref<1x16x16x128xbf16, #tpu.memory_space<vmem>>, vector<1x1x16x128xbf16>
    %16 = vector.shape_cast %15 : vector<1x1x16x128xbf16> to vector<16x128xbf16>
    %c128 = arith.constant 128 : index
    %c0_20 = arith.constant 0 : index
    %17 = vector.load %arg10[%c128, %c0_20] : memref<448x128xbf16, #tpu.memory_space<vmem>>, vector<16x128xbf16>
    tpu.vector_store %arg10[%c128, %c0_20], %16 {strides = array<i32>} : memref<448x128xbf16, #tpu.memory_space<vmem>>, vector<16x128xbf16>,
    %c0_21 = arith.constant 0 : index
    %c5 = arith.constant 5 : index
    %c0_22 = arith.constant 0 : index
    %c0_23 = arith.constant 0 : index
    %18 = vector.load %arg3[%c0_21, %c5, %c0_22, %c0_23] : memref<1x16x16x128xbf16, #tpu.memory_space<vmem>>, vector<1x1x16x128xbf16>
    %19 = vector.shape_cast %18 : vector<1x1x16x128xbf16> to vector<16x128xbf16>
    %c152 = arith.constant 152 : index
    %c0_24 = arith.constant 0 : index
    %20 = vector.load %arg10[%c152, %c0_24] : memref<448x128xbf16, #tpu.memory_space<vmem>>, vector<16x128xbf16>
    tpu.vector_store %arg10[%c152, %c0_24], %19 {strides = array<i32>} : memref<448x128xbf16, #tpu.memory_space<vmem>>, vector<16x128xbf16>,
    %c0_25 = arith.constant 0 : index
    %c6 = arith.constant 6 : index
    %c0_26 = arith.constant 0 : index
    %c0_27 = arith.constant 0 : index
    %21 = vector.load %arg3[%c0_25, %c6, %c0_26, %c0_27] : memref<1x16x16x128xbf16, #tpu.memory_space<vmem>>, vector<1x1x16x128xbf16>
    %22 = vector.shape_cast %21 : vector<1x1x16x128xbf16> to vector<16x128xbf16>
    %c176 = arith.constant 176 : index
    %c0_28 = arith.constant 0 : index
    %23 = vector.load %arg10[%c176, %c0_28] : memref<448x128xbf16, #tpu.memory_space<vmem>>, vector<16x128xbf16>
    tpu.vector_store %arg10[%c176, %c0_28], %22 {strides = array<i32>} : memref<448x128xbf16, #tpu.memory_space<vmem>>, vector<16x128xbf16>,
    %c0_29 = arith.constant 0 : index
    %c7 = arith.constant 7 : index
    %c0_30 = arith.constant 0 : index
    %c0_31 = arith.constant 0 : index
    %24 = vector.load %arg3[%c0_29, %c7, %c0_30, %c0_31] : memref<1x16x16x128xbf16, #tpu.memory_space<vmem>>, vector<1x1x16x128xbf16>
    %25 = vector.shape_cast %24 : vector<1x1x16x128xbf16> to vector<16x128xbf16>
    %c200 = arith.constant 200 : index
    %c0_32 = arith.constant 0 : index
    %26 = vector.load %arg10[%c200, %c0_32] : memref<448x128xbf16, #tpu.memory_space<vmem>>, vector<16x128xbf16>
    tpu.vector_store %arg10[%c200, %c0_32], %25 {strides = array<i32>} : memref<448x128xbf16, #tpu.memory_space<vmem>>, vector<16x128xbf16>,
    %c0_33 = arith.constant 0 : index
    %c8 = arith.constant 8 : index
    %c0_34 = arith.constant 0 : index
    %c0_35 = arith.constant 0 : index
    %27 = vector.load %arg3[%c0_33, %c8, %c0_34, %c0_35] : memref<1x16x16x128xbf16, #tpu.memory_space<vmem>>, vector<1x1x16x128xbf16>
    %28 = vector.shape_cast %27 : vector<1x1x16x128xbf16> to vector<16x128xbf16>
    %c224 = arith.constant 224 : index
    %c0_36 = arith.constant 0 : index
    %29 = vector.load %arg10[%c224, %c0_36] : memref<448x128xbf16, #tpu.memory_space<vmem>>, vector<16x128xbf16>
    tpu.vector_store %arg10[%c224, %c0_36], %28 {strides = array<i32>} : memref<448x128xbf16, #tpu.memory_space<vmem>>, vector<16x128xbf16>,
    %c0_37 = arith.constant 0 : index
    %c9 = arith.constant 9 : index
    %c0_38 = arith.constant 0 : index
    %c0_39 = arith.constant 0 : index
    %30 = vector.load %arg3[%c0_37, %c9, %c0_38, %c0_39] : memref<1x16x16x128xbf16, #tpu.memory_space<vmem>>, vector<1x1x16x128xbf16>
    %31 = vector.shape_cast %30 : vector<1x1x16x128xbf16> to vector<16x128xbf16>
    %c248 = arith.constant 248 : index
    %c0_40 = arith.constant 0 : index
    %32 = vector.load %arg10[%c248, %c0_40] : memref<448x128xbf16, #tpu.memory_space<vmem>>, vector<16x128xbf16>
    tpu.vector_store %arg10[%c248, %c0_40], %31 {strides = array<i32>} : memref<448x128xbf16, #tpu.memory_space<vmem>>, vector<16x128xbf16>,
    %c0_41 = arith.constant 0 : index
    %c10 = arith.constant 10 : index
    %c0_42 = arith.constant 0 : index
    %c0_43 = arith.constant 0 : index
    %33 = vector.load %arg3[%c0_41, %c10, %c0_42, %c0_43] : memref<1x16x16x128xbf16, #tpu.memory_space<vmem>>, vector<1x1x16x128xbf16>
    %34 = vector.shape_cast %33 : vector<1x1x16x128xbf16> to vector<16x128xbf16>
    %c272 = arith.constant 272 : index
    %c0_44 = arith.constant 0 : index
    %35 = vector.load %arg10[%c272, %c0_44] : memref<448x128xbf16, #tpu.memory_space<vmem>>, vector<16x128xbf16>
    tpu.vector_store %arg10[%c272, %c0_44], %34 {strides = array<i32>} : memref<448x128xbf16, #tpu.memory_space<vmem>>, vector<16x128xbf16>,
    %c0_45 = arith.constant 0 : index
    %c11 = arith.constant 11 : index
    %c0_46 = arith.constant 0 : index
    %c0_47 = arith.constant 0 : index
    %36 = vector.load %arg3[%c0_45, %c11, %c0_46, %c0_47] : memref<1x16x16x128xbf16, #tpu.memory_space<vmem>>, vector<1x1x16x128xbf16>
    %37 = vector.shape_cast %36 : vector<1x1x16x128xbf16> to vector<16x128xbf16>
    %c296 = arith.constant 296 : index
    %c0_48 = arith.constant 0 : index
    %38 = vector.load %arg10[%c296, %c0_48] : memref<448x128xbf16, #tpu.memory_space<vmem>>, vector<16x128xbf16>
    tpu.vector_store %arg10[%c296, %c0_48], %37 {strides = array<i32>} : memref<448x128xbf16, #tpu.memory_space<vmem>>, vector<16x128xbf16>,
    %c0_49 = arith.constant 0 : index
    %c12 = arith.constant 12 : index
    %c0_50 = arith.constant 0 : index
    %c0_51 = arith.constant 0 : index
    %39 = vector.load %arg3[%c0_49, %c12, %c0_50, %c0_51] : memref<1x16x16x128xbf16, #tpu.memory_space<vmem>>, vector<1x1x16x128xbf16>
    %40 = vector.shape_cast %39 : vector<1x1x16x128xbf16> to vector<16x128xbf16>
    %c320 = arith.constant 320 : index
    %c0_52 = arith.constant 0 : index
    %41 = vector.load %arg10[%c320, %c0_52] : memref<448x128xbf16, #tpu.memory_space<vmem>>, vector<16x128xbf16>
    tpu.vector_store %arg10[%c320, %c0_52], %40 {strides = array<i32>} : memref<448x128xbf16, #tpu.memory_space<vmem>>, vector<16x128xbf16>,
    %c0_53 = arith.constant 0 : index
    %c13 = arith.constant 13 : index
    %c0_54 = arith.constant 0 : index
    %c0_55 = arith.constant 0 : index
    %42 = vector.load %arg3[%c0_53, %c13, %c0_54, %c0_55] : memref<1x16x16x128xbf16, #tpu.memory_space<vmem>>, vector<1x1x16x128xbf16>
    %43 = vector.shape_cast %42 : vector<1x1x16x128xbf16> to vector<16x128xbf16>
    %c344 = arith.constant 344 : index
    %c0_56 = arith.constant 0 : index
    %44 = vector.load %arg10[%c344, %c0_56] : memref<448x128xbf16, #tpu.memory_space<vmem>>, vector<16x128xbf16>
    tpu.vector_store %arg10[%c344, %c0_56], %43 {strides = array<i32>} : memref<448x128xbf16, #tpu.memory_space<vmem>>, vector<16x128xbf16>,
    %c0_57 = arith.constant 0 : index
    %c14 = arith.constant 14 : index
    %c0_58 = arith.constant 0 : index
    %c0_59 = arith.constant 0 : index
    %45 = vector.load %arg3[%c0_57, %c14, %c0_58, %c0_59] : memref<1x16x16x128xbf16, #tpu.memory_space<vmem>>, vector<1x1x16x128xbf16>
    %46 = vector.shape_cast %45 : vector<1x1x16x128xbf16> to vector<16x128xbf16>
    %c368 = arith.constant 368 : index
    %c0_60 = arith.constant 0 : index
    %47 = vector.load %arg10[%c368, %c0_60] : memref<448x128xbf16, #tpu.memory_space<vmem>>, vector<16x128xbf16>
    tpu.vector_store %arg10[%c368, %c0_60], %46 {strides = array<i32>} : memref<448x128xbf16, #tpu.memory_space<vmem>>, vector<16x128xbf16>,
    %c0_61 = arith.constant 0 : index
    %c15 = arith.constant 15 : index
    %c0_62 = arith.constant 0 : index
    %c0_63 = arith.constant 0 : index
    %48 = vector.load %arg3[%c0_61, %c15, %c0_62, %c0_63] : memref<1x16x16x128xbf16, #tpu.memory_space<vmem>>, vector<1x1x16x128xbf16>
    %49 = vector.shape_cast %48 : vector<1x1x16x128xbf16> to vector<16x128xbf16>
    %c392 = arith.constant 392 : index
    %c0_64 = arith.constant 0 : index
    %50 = vector.load %arg10[%c392, %c0_64] : memref<448x128xbf16, #tpu.memory_space<vmem>>, vector<16x128xbf16>
    tpu.vector_store %arg10[%c392, %c0_64], %49 {strides = array<i32>} : memref<448x128xbf16, #tpu.memory_space<vmem>>, vector<16x128xbf16>,
    %c7_65 = arith.constant 7 : index
    %c0_66 = arith.constant 0 : index
    %51 = vector.load %arg10[%c7_65, %c0_66] : memref<448x128xbf16, #tpu.memory_space<vmem>>, vector<384x128xbf16>
    %c0_67 = arith.constant 0 : index
    %c0_68 = arith.constant 0 : index
    %52 = vector.load %arg9[%c0_67, %c0_68] : memref<384x128xf32, #tpu.memory_space<vmem>>, vector<384x128xf32>
    %c0_69 = arith.constant 0 : index
    %c0_70 = arith.constant 0 : index
    %c0_71 = arith.constant 0 : index
    %53 = vector.load %arg4[%c0_69, %c0_70, %c0_71] : memref<9x128x128xbf16, #tpu.memory_space<vmem>>, vector<1x128x128xbf16>
    %54 = vector.shape_cast %53 : vector<1x128x128xbf16> to vector<128x128xbf16>
    %cst = arith.constant dense<0.000000e+00> : vector<384x128xf32>
    %55 = tpu.matmul %51, %54, %cst {dimension_numbers = #tpu.dot_dimension_numbers<[1], [0], [0], [1], [0, 0, 1, 1], [], []>} : vector<384x128xbf16>, vector<128x128xbf16>, vector<384x128xf32> -> vector<384x128xf32>
    %56 = arith.addf %52, %55 : vector<384x128xf32>
    %c0_72 = arith.constant 0 : index
    %c0_73 = arith.constant 0 : index
    %57 = vector.load %arg9[%c0_72, %c0_73] : memref<384x128xf32, #tpu.memory_space<vmem>>, vector<384x128xf32>
    tpu.vector_store %arg9[%c0_72, %c0_73], %56 {strides = array<i32>} : memref<384x128xf32, #tpu.memory_space<vmem>>, vector<384x128xf32>,
    %c8_74 = arith.constant 8 : index
    %c0_75 = arith.constant 0 : index
    %58 = vector.load %arg10[%c8_74, %c0_75] : memref<448x128xbf16, #tpu.memory_space<vmem>>, vector<384x128xbf16>
    %c0_76 = arith.constant 0 : index
    %c0_77 = arith.constant 0 : index
    %59 = vector.load %arg9[%c0_76, %c0_77] : memref<384x128xf32, #tpu.memory_space<vmem>>, vector<384x128xf32>
    %c1_78 = arith.constant 1 : index
    %c0_79 = arith.constant 0 : index
    %c0_80 = arith.constant 0 : index
    %60 = vector.load %arg4[%c1_78, %c0_79, %c0_80] : memref<9x128x128xbf16, #tpu.memory_space<vmem>>, vector<1x128x128xbf16>
    %61 = vector.shape_cast %60 : vector<1x128x128xbf16> to vector<128x128xbf16>
    %cst_81 = arith.constant dense<0.000000e+00> : vector<384x128xf32>
    %62 = tpu.matmul %58, %61, %cst_81 {dimension_numbers = #tpu.dot_dimension_numbers<[1], [0], [0], [1], [0, 0, 1, 1], [], []>} : vector<384x128xbf16>, vector<128x128xbf16>, vector<384x128xf32> -> vector<384x128xf32>
    %63 = arith.addf %59, %62 : vector<384x128xf32>
    %c0_82 = arith.constant 0 : index
    %c0_83 = arith.constant 0 : index
    %64 = vector.load %arg9[%c0_82, %c0_83] : memref<384x128xf32, #tpu.memory_space<vmem>>, vector<384x128xf32>
    tpu.vector_store %arg9[%c0_82, %c0_83], %63 {strides = array<i32>} : memref<384x128xf32, #tpu.memory_space<vmem>>, vector<384x128xf32>,
    %c9_84 = arith.constant 9 : index
    %c0_85 = arith.constant 0 : index
    %65 = vector.load %arg10[%c9_84, %c0_85] : memref<448x128xbf16, #tpu.memory_space<vmem>>, vector<384x128xbf16>
    %c0_86 = arith.constant 0 : index
    %c0_87 = arith.constant 0 : index
    %66 = vector.load %arg9[%c0_86, %c0_87] : memref<384x128xf32, #tpu.memory_space<vmem>>, vector<384x128xf32>
    %c2_88 = arith.constant 2 : index
    %c0_89 = arith.constant 0 : index
    %c0_90 = arith.constant 0 : index
    %67 = vector.load %arg4[%c2_88, %c0_89, %c0_90] : memref<9x128x128xbf16, #tpu.memory_space<vmem>>, vector<1x128x128xbf16>
    %68 = vector.shape_cast %67 : vector<1x128x128xbf16> to vector<128x128xbf16>
    %cst_91 = arith.constant dense<0.000000e+00> : vector<384x128xf32>
    %69 = tpu.matmul %65, %68, %cst_91 {dimension_numbers = #tpu.dot_dimension_numbers<[1], [0], [0], [1], [0, 0, 1, 1], [], []>} : vector<384x128xbf16>, vector<128x128xbf16>, vector<384x128xf32> -> vector<384x128xf32>
    %70 = arith.addf %66, %69 : vector<384x128xf32>
    %c0_92 = arith.constant 0 : index
    %c0_93 = arith.constant 0 : index
    %71 = vector.load %arg9[%c0_92, %c0_93] : memref<384x128xf32, #tpu.memory_space<vmem>>, vector<384x128xf32>
    tpu.vector_store %arg9[%c0_92, %c0_93], %70 {strides = array<i32>} : memref<384x128xf32, #tpu.memory_space<vmem>>, vector<384x128xf32>,
    %c31 = arith.constant 31 : index
    %c0_94 = arith.constant 0 : index
    %72 = vector.load %arg10[%c31, %c0_94] : memref<448x128xbf16, #tpu.memory_space<vmem>>, vector<384x128xbf16>
    %c0_95 = arith.constant 0 : index
    %c0_96 = arith.constant 0 : index
    %73 = vector.load %arg9[%c0_95, %c0_96] : memref<384x128xf32, #tpu.memory_space<vmem>>, vector<384x128xf32>
    %c3_97 = arith.constant 3 : index
    %c0_98 = arith.constant 0 : index
    %c0_99 = arith.constant 0 : index
    %74 = vector.load %arg4[%c3_97, %c0_98, %c0_99] : memref<9x128x128xbf16, #tpu.memory_space<vmem>>, vector<1x128x128xbf16>
    %75 = vector.shape_cast %74 : vector<1x128x128xbf16> to vector<128x128xbf16>
    %cst_100 = arith.constant dense<0.000000e+00> : vector<384x128xf32>
    %76 = tpu.matmul %72, %75, %cst_100 {dimension_numbers = #tpu.dot_dimension_numbers<[1], [0], [0], [1], [0, 0, 1, 1], [], []>} : vector<384x128xbf16>, vector<128x128xbf16>, vector<384x128xf32> -> vector<384x128xf32>
    %77 = arith.addf %73, %76 : vector<384x128xf32>
    %c0_101 = arith.constant 0 : index
    %c0_102 = arith.constant 0 : index
    %78 = vector.load %arg9[%c0_101, %c0_102] : memref<384x128xf32, #tpu.memory_space<vmem>>, vector<384x128xf32>
    tpu.vector_store %arg9[%c0_101, %c0_102], %77 {strides = array<i32>} : memref<384x128xf32, #tpu.memory_space<vmem>>, vector<384x128xf32>,
    %c32_103 = arith.constant 32 : index
    %c0_104 = arith.constant 0 : index
    %79 = vector.load %arg10[%c32_103, %c0_104] : memref<448x128xbf16, #tpu.memory_space<vmem>>, vector<384x128xbf16>
    %c0_105 = arith.constant 0 : index
    %c0_106 = arith.constant 0 : index
    %80 = vector.load %arg9[%c0_105, %c0_106] : memref<384x128xf32, #tpu.memory_space<vmem>>, vector<384x128xf32>
    %c4_107 = arith.constant 4 : index
    %c0_108 = arith.constant 0 : index
    %c0_109 = arith.constant 0 : index
    %81 = vector.load %arg4[%c4_107, %c0_108, %c0_109] : memref<9x128x128xbf16, #tpu.memory_space<vmem>>, vector<1x128x128xbf16>
    %82 = vector.shape_cast %81 : vector<1x128x128xbf16> to vector<128x128xbf16>
    %cst_110 = arith.constant dense<0.000000e+00> : vector<384x128xf32>
    %83 = tpu.matmul %79, %82, %cst_110 {dimension_numbers = #tpu.dot_dimension_numbers<[1], [0], [0], [1], [0, 0, 1, 1], [], []>} : vector<384x128xbf16>, vector<128x128xbf16>, vector<384x128xf32> -> vector<384x128xf32>
    %84 = arith.addf %80, %83 : vector<384x128xf32>
    %c0_111 = arith.constant 0 : index
    %c0_112 = arith.constant 0 : index
    %85 = vector.load %arg9[%c0_111, %c0_112] : memref<384x128xf32, #tpu.memory_space<vmem>>, vector<384x128xf32>
    tpu.vector_store %arg9[%c0_111, %c0_112], %84 {strides = array<i32>} : memref<384x128xf32, #tpu.memory_space<vmem>>, vector<384x128xf32>,
    %c33 = arith.constant 33 : index
    %c0_113 = arith.constant 0 : index
    %86 = vector.load %arg10[%c33, %c0_113] : memref<448x128xbf16, #tpu.memory_space<vmem>>, vector<384x128xbf16>
    %c0_114 = arith.constant 0 : index
    %c0_115 = arith.constant 0 : index
    %87 = vector.load %arg9[%c0_114, %c0_115] : memref<384x128xf32, #tpu.memory_space<vmem>>, vector<384x128xf32>
    %c5_116 = arith.constant 5 : index
    %c0_117 = arith.constant 0 : index
    %c0_118 = arith.constant 0 : index
    %88 = vector.load %arg4[%c5_116, %c0_117, %c0_118] : memref<9x128x128xbf16, #tpu.memory_space<vmem>>, vector<1x128x128xbf16>
    %89 = vector.shape_cast %88 : vector<1x128x128xbf16> to vector<128x128xbf16>
    %cst_119 = arith.constant dense<0.000000e+00> : vector<384x128xf32>
    %90 = tpu.matmul %86, %89, %cst_119 {dimension_numbers = #tpu.dot_dimension_numbers<[1], [0], [0], [1], [0, 0, 1, 1], [], []>} : vector<384x128xbf16>, vector<128x128xbf16>, vector<384x128xf32> -> vector<384x128xf32>
    %91 = arith.addf %87, %90 : vector<384x128xf32>
    %c0_120 = arith.constant 0 : index
    %c0_121 = arith.constant 0 : index
    %92 = vector.load %arg9[%c0_120, %c0_121] : memref<384x128xf32, #tpu.memory_space<vmem>>, vector<384x128xf32>
    tpu.vector_store %arg9[%c0_120, %c0_121], %91 {strides = array<i32>} : memref<384x128xf32, #tpu.memory_space<vmem>>, vector<384x128xf32>,
    %c55 = arith.constant 55 : index
    %c0_122 = arith.constant 0 : index
    %93 = vector.load %arg10[%c55, %c0_122] : memref<448x128xbf16, #tpu.memory_space<vmem>>, vector<384x128xbf16>
    %c0_123 = arith.constant 0 : index
    %c0_124 = arith.constant 0 : index
    %94 = vector.load %arg9[%c0_123, %c0_124] : memref<384x128xf32, #tpu.memory_space<vmem>>, vector<384x128xf32>
    %c6_125 = arith.constant 6 : index
    %c0_126 = arith.constant 0 : index
    %c0_127 = arith.constant 0 : index
    %95 = vector.load %arg4[%c6_125, %c0_126, %c0_127] : memref<9x128x128xbf16, #tpu.memory_space<vmem>>, vector<1x128x128xbf16>
    %96 = vector.shape_cast %95 : vector<1x128x128xbf16> to vector<128x128xbf16>
    %cst_128 = arith.constant dense<0.000000e+00> : vector<384x128xf32>
    %97 = tpu.matmul %93, %96, %cst_128 {dimension_numbers = #tpu.dot_dimension_numbers<[1], [0], [0], [1], [0, 0, 1, 1], [], []>} : vector<384x128xbf16>, vector<128x128xbf16>, vector<384x128xf32> -> vector<384x128xf32>
    %98 = arith.addf %94, %97 : vector<384x128xf32>
    %c0_129 = arith.constant 0 : index
    %c0_130 = arith.constant 0 : index
    %99 = vector.load %arg9[%c0_129, %c0_130] : memref<384x128xf32, #tpu.memory_space<vmem>>, vector<384x128xf32>
    tpu.vector_store %arg9[%c0_129, %c0_130], %98 {strides = array<i32>} : memref<384x128xf32, #tpu.memory_space<vmem>>, vector<384x128xf32>,
    %c56_131 = arith.constant 56 : index
    %c0_132 = arith.constant 0 : index
    %100 = vector.load %arg10[%c56_131, %c0_132] : memref<448x128xbf16, #tpu.memory_space<vmem>>, vector<384x128xbf16>
    %c0_133 = arith.constant 0 : index
    %c0_134 = arith.constant 0 : index
    %101 = vector.load %arg9[%c0_133, %c0_134] : memref<384x128xf32, #tpu.memory_space<vmem>>, vector<384x128xf32>
    %c7_135 = arith.constant 7 : index
    %c0_136 = arith.constant 0 : index
    %c0_137 = arith.constant 0 : index
    %102 = vector.load %arg4[%c7_135, %c0_136, %c0_137] : memref<9x128x128xbf16, #tpu.memory_space<vmem>>, vector<1x128x128xbf16>
    %103 = vector.shape_cast %102 : vector<1x128x128xbf16> to vector<128x128xbf16>
    %cst_138 = arith.constant dense<0.000000e+00> : vector<384x128xf32>
    %104 = tpu.matmul %100, %103, %cst_138 {dimension_numbers = #tpu.dot_dimension_numbers<[1], [0], [0], [1], [0, 0, 1, 1], [], []>} : vector<384x128xbf16>, vector<128x128xbf16>, vector<384x128xf32> -> vector<384x128xf32>
    %105 = arith.addf %101, %104 : vector<384x128xf32>
    %c0_139 = arith.constant 0 : index
    %c0_140 = arith.constant 0 : index
    %106 = vector.load %arg9[%c0_139, %c0_140] : memref<384x128xf32, #tpu.memory_space<vmem>>, vector<384x128xf32>
    tpu.vector_store %arg9[%c0_139, %c0_140], %105 {strides = array<i32>} : memref<384x128xf32, #tpu.memory_space<vmem>>, vector<384x128xf32>,
    %c57 = arith.constant 57 : index
    %c0_141 = arith.constant 0 : index
    %107 = vector.load %arg10[%c57, %c0_141] : memref<448x128xbf16, #tpu.memory_space<vmem>>, vector<384x128xbf16>
    %c0_142 = arith.constant 0 : index
    %c0_143 = arith.constant 0 : index
    %108 = vector.load %arg9[%c0_142, %c0_143] : memref<384x128xf32, #tpu.memory_space<vmem>>, vector<384x128xf32>
    %c8_144 = arith.constant 8 : index
    %c0_145 = arith.constant 0 : index
    %c0_146 = arith.constant 0 : index
    %109 = vector.load %arg4[%c8_144, %c0_145, %c0_146] : memref<9x128x128xbf16, #tpu.memory_space<vmem>>, vector<1x128x128xbf16>
    %110 = vector.shape_cast %109 : vector<1x128x128xbf16> to vector<128x128xbf16>
    %cst_147 = arith.constant dense<0.000000e+00> : vector<384x128xf32>
    %111 = tpu.matmul %107, %110, %cst_147 {dimension_numbers = #tpu.dot_dimension_numbers<[1], [0], [0], [1], [0, 0, 1, 1], [], []>} : vector<384x128xbf16>, vector<128x128xbf16>, vector<384x128xf32> -> vector<384x128xf32>
    %112 = arith.addf %108, %111 : vector<384x128xf32>
    %c0_148 = arith.constant 0 : index
    %c0_149 = arith.constant 0 : index
    %113 = vector.load %arg9[%c0_148, %c0_149] : memref<384x128xf32, #tpu.memory_space<vmem>>, vector<384x128xf32>
    tpu.vector_store %arg9[%c0_148, %c0_149], %112 {strides = array<i32>} : memref<384x128xf32, #tpu.memory_space<vmem>>, vector<384x128xf32>,
    %c0_i32_150 = arith.constant 0 : i32
    %114 = arith.cmpi eq, %arg2, %c0_i32_150 : i32
    %115 = arith.extui %114 : i1 to i32
    %c0_i32_151 = arith.constant 0 : i32
    %116 = arith.cmpi ne, %115, %c0_i32_151 : i32
    scf.if %116 {
      %c0_152 = arith.constant 0 : index
      %c0_153 = arith.constant 0 : index
      %117 = vector.load %arg5[%c0_152, %c0_153] : memref<1x128xf32, #tpu.memory_space<vmem>>, vector<1x128xf32>
      %cst_154 = arith.constant 0.000000e+00 : f32
      %118 = vector.broadcast %cst_154 : f32 to vector<1x128xf32>
      %cst_155 = arith.constant 0.000000e+00 : f32
      %119 = vector.broadcast %cst_155 : f32 to vector<1x128xf32>
      %c0_156 = arith.constant 0 : index
      %c0_157 = arith.constant 0 : index
      %120 = vector.load %arg9[%c0_156, %c0_157] : memref<384x128xf32, #tpu.memory_space<vmem>>, vector<16x128xf32>
      %121 = vector.broadcast %117 : vector<1x128xf32> to vector<16x128xf32>
      %122 = arith.addf %120, %121 : vector<16x128xf32>
      %cst_158 = arith.constant dense<0.000000e+00> : vector<128xf32>
      %123 = vector.multi_reduction <add>, %122, %cst_158 [0] : vector<16x128xf32> to vector<128xf32>
      %124 = vector.shape_cast %123 : vector<128xf32> to vector<1x128xf32>
      %125 = arith.addf %118, %124 : vector<1x128xf32>
      %126 = arith.mulf %122, %122 : vector<16x128xf32>
      %cst_159 = arith.constant dense<0.000000e+00> : vector<128xf32>
      %127 = vector.multi_reduction <add>, %126, %cst_159 [0] : vector<16x128xf32> to vector<128xf32>
      %128 = vector.shape_cast %127 : vector<128xf32> to vector<1x128xf32>
      %129 = arith.addf %119, %128 : vector<1x128xf32>
      %130 = arith.truncf %122 : vector<16x128xf32> to vector<16x128xbf16>
      %c0_160 = arith.constant 0 : index
      %c0_161 = arith.constant 0 : index
      %c0_162 = arith.constant 0 : index
      %c0_163 = arith.constant 0 : index
      %131 = vector.load %arg6[%c0_160, %c0_161, %c0_162, %c0_163] : memref<1x16x16x128xbf16, #tpu.memory_space<vmem>>, vector<1x1x16x128xbf16>
      %132 = vector.shape_cast %131 : vector<1x1x16x128xbf16> to vector<16x128xbf16>
      %133 = vector.shape_cast %130 : vector<16x128xbf16> to vector<1x1x16x128xbf16>
      tpu.vector_store %arg6[%c0_160, %c0_161, %c0_162, %c0_163], %133 {strides = array<i32>} : memref<1x16x16x128xbf16, #tpu.memory_space<vmem>>, vector<1x1x16x128xbf16>,
      %c24 = arith.constant 24 : index
      %c0_164 = arith.constant 0 : index
      %134 = vector.load %arg9[%c24, %c0_164] : memref<384x128xf32, #tpu.memory_space<vmem>>, vector<16x128xf32>
      %135 = vector.broadcast %117 : vector<1x128xf32> to vector<16x128xf32>
      %136 = arith.addf %134, %135 : vector<16x128xf32>
      %cst_165 = arith.constant dense<0.000000e+00> : vector<128xf32>
      %137 = vector.multi_reduction <add>, %136, %cst_165 [0] : vector<16x128xf32> to vector<128xf32>
      %138 = vector.shape_cast %137 : vector<128xf32> to vector<1x128xf32>
      %139 = arith.addf %125, %138 : vector<1x128xf32>
      %140 = arith.mulf %136, %136 : vector<16x128xf32>
      %cst_166 = arith.constant dense<0.000000e+00> : vector<128xf32>
      %141 = vector.multi_reduction <add>, %140, %cst_166 [0] : vector<16x128xf32> to vector<128xf32>
      %142 = vector.shape_cast %141 : vector<128xf32> to vector<1x128xf32>
      %143 = arith.addf %129, %142 : vector<1x128xf32>
      %144 = arith.truncf %136 : vector<16x128xf32> to vector<16x128xbf16>
      %c0_167 = arith.constant 0 : index
      %c1_168 = arith.constant 1 : index
      %c0_169 = arith.constant 0 : index
      %c0_170 = arith.constant 0 : index
      %145 = vector.load %arg6[%c0_167, %c1_168, %c0_169, %c0_170] : memref<1x16x16x128xbf16, #tpu.memory_space<vmem>>, vector<1x1x16x128xbf16>
      %146 = vector.shape_cast %145 : vector<1x1x16x128xbf16> to vector<16x128xbf16>
      %147 = vector.shape_cast %144 : vector<16x128xbf16> to vector<1x1x16x128xbf16>
      tpu.vector_store %arg6[%c0_167, %c1_168, %c0_169, %c0_170], %147 {strides = array<i32>} : memref<1x16x16x128xbf16, #tpu.memory_space<vmem>>, vector<1x1x16x128xbf16>,
      %c48 = arith.constant 48 : index
      %c0_171 = arith.constant 0 : index
      %148 = vector.load %arg9[%c48, %c0_171] : memref<384x128xf32, #tpu.memory_space<vmem>>, vector<16x128xf32>
      %149 = vector.broadcast %117 : vector<1x128xf32> to vector<16x128xf32>
      %150 = arith.addf %148, %149 : vector<16x128xf32>
      %cst_172 = arith.constant dense<0.000000e+00> : vector<128xf32>
      %151 = vector.multi_reduction <add>, %150, %cst_172 [0] : vector<16x128xf32> to vector<128xf32>
      %152 = vector.shape_cast %151 : vector<128xf32> to vector<1x128xf32>
      %153 = arith.addf %139, %152 : vector<1x128xf32>
      %154 = arith.mulf %150, %150 : vector<16x128xf32>
      %cst_173 = arith.constant dense<0.000000e+00> : vector<128xf32>
      %155 = vector.multi_reduction <add>, %154, %cst_173 [0] : vector<16x128xf32> to vector<128xf32>
      %156 = vector.shape_cast %155 : vector<128xf32> to vector<1x128xf32>
      %157 = arith.addf %143, %156 : vector<1x128xf32>
      %158 = arith.truncf %150 : vector<16x128xf32> to vector<16x128xbf16>
      %c0_174 = arith.constant 0 : index
      %c2_175 = arith.constant 2 : index
      %c0_176 = arith.constant 0 : index
      %c0_177 = arith.constant 0 : index
      %159 = vector.load %arg6[%c0_174, %c2_175, %c0_176, %c0_177] : memref<1x16x16x128xbf16, #tpu.memory_space<vmem>>, vector<1x1x16x128xbf16>
      %160 = vector.shape_cast %159 : vector<1x1x16x128xbf16> to vector<16x128xbf16>
      %161 = vector.shape_cast %158 : vector<16x128xbf16> to vector<1x1x16x128xbf16>
      tpu.vector_store %arg6[%c0_174, %c2_175, %c0_176, %c0_177], %161 {strides = array<i32>} : memref<1x16x16x128xbf16, #tpu.memory_space<vmem>>, vector<1x1x16x128xbf16>,
      %c72 = arith.constant 72 : index
      %c0_178 = arith.constant 0 : index
      %162 = vector.load %arg9[%c72, %c0_178] : memref<384x128xf32, #tpu.memory_space<vmem>>, vector<16x128xf32>
      %163 = vector.broadcast %117 : vector<1x128xf32> to vector<16x128xf32>
      %164 = arith.addf %162, %163 : vector<16x128xf32>
      %cst_179 = arith.constant dense<0.000000e+00> : vector<128xf32>
      %165 = vector.multi_reduction <add>, %164, %cst_179 [0] : vector<16x128xf32> to vector<128xf32>
      %166 = vector.shape_cast %165 : vector<128xf32> to vector<1x128xf32>
      %167 = arith.addf %153, %166 : vector<1x128xf32>
      %168 = arith.mulf %164, %164 : vector<16x128xf32>
      %cst_180 = arith.constant dense<0.000000e+00> : vector<128xf32>
      %169 = vector.multi_reduction <add>, %168, %cst_180 [0] : vector<16x128xf32> to vector<128xf32>
      %170 = vector.shape_cast %169 : vector<128xf32> to vector<1x128xf32>
      %171 = arith.addf %157, %170 : vector<1x128xf32>
      %172 = arith.truncf %164 : vector<16x128xf32> to vector<16x128xbf16>
      %c0_181 = arith.constant 0 : index
      %c3_182 = arith.constant 3 : index
      %c0_183 = arith.constant 0 : index
      %c0_184 = arith.constant 0 : index
      %173 = vector.load %arg6[%c0_181, %c3_182, %c0_183, %c0_184] : memref<1x16x16x128xbf16, #tpu.memory_space<vmem>>, vector<1x1x16x128xbf16>
      %174 = vector.shape_cast %173 : vector<1x1x16x128xbf16> to vector<16x128xbf16>
      %175 = vector.shape_cast %172 : vector<16x128xbf16> to vector<1x1x16x128xbf16>
      tpu.vector_store %arg6[%c0_181, %c3_182, %c0_183, %c0_184], %175 {strides = array<i32>} : memref<1x16x16x128xbf16, #tpu.memory_space<vmem>>, vector<1x1x16x128xbf16>,
      %c96 = arith.constant 96 : index
      %c0_185 = arith.constant 0 : index
      %176 = vector.load %arg9[%c96, %c0_185] : memref<384x128xf32, #tpu.memory_space<vmem>>, vector<16x128xf32>
      %177 = vector.broadcast %117 : vector<1x128xf32> to vector<16x128xf32>
      %178 = arith.addf %176, %177 : vector<16x128xf32>
      %cst_186 = arith.constant dense<0.000000e+00> : vector<128xf32>
      %179 = vector.multi_reduction <add>, %178, %cst_186 [0] : vector<16x128xf32> to vector<128xf32>
      %180 = vector.shape_cast %179 : vector<128xf32> to vector<1x128xf32>
      %181 = arith.addf %167, %180 : vector<1x128xf32>
      %182 = arith.mulf %178, %178 : vector<16x128xf32>
      %cst_187 = arith.constant dense<0.000000e+00> : vector<128xf32>
      %183 = vector.multi_reduction <add>, %182, %cst_187 [0] : vector<16x128xf32> to vector<128xf32>
      %184 = vector.shape_cast %183 : vector<128xf32> to vector<1x128xf32>
      %185 = arith.addf %171, %184 : vector<1x128xf32>
      %186 = arith.truncf %178 : vector<16x128xf32> to vector<16x128xbf16>
      %c0_188 = arith.constant 0 : index
      %c4_189 = arith.constant 4 : index
      %c0_190 = arith.constant 0 : index
      %c0_191 = arith.constant 0 : index
      %187 = vector.load %arg6[%c0_188, %c4_189, %c0_190, %c0_191] : memref<1x16x16x128xbf16, #tpu.memory_space<vmem>>, vector<1x1x16x128xbf16>
      %188 = vector.shape_cast %187 : vector<1x1x16x128xbf16> to vector<16x128xbf16>
      %189 = vector.shape_cast %186 : vector<16x128xbf16> to vector<1x1x16x128xbf16>
      tpu.vector_store %arg6[%c0_188, %c4_189, %c0_190, %c0_191], %189 {strides = array<i32>} : memref<1x16x16x128xbf16, #tpu.memory_space<vmem>>, vector<1x1x16x128xbf16>,
      %c120 = arith.constant 120 : index
      %c0_192 = arith.constant 0 : index
      %190 = vector.load %arg9[%c120, %c0_192] : memref<384x128xf32, #tpu.memory_space<vmem>>, vector<16x128xf32>
      %191 = vector.broadcast %117 : vector<1x128xf32> to vector<16x128xf32>
      %192 = arith.addf %190, %191 : vector<16x128xf32>
      %cst_193 = arith.constant dense<0.000000e+00> : vector<128xf32>
      %193 = vector.multi_reduction <add>, %192, %cst_193 [0] : vector<16x128xf32> to vector<128xf32>
      %194 = vector.shape_cast %193 : vector<128xf32> to vector<1x128xf32>
      %195 = arith.addf %181, %194 : vector<1x128xf32>
      %196 = arith.mulf %192, %192 : vector<16x128xf32>
      %cst_194 = arith.constant dense<0.000000e+00> : vector<128xf32>
      %197 = vector.multi_reduction <add>, %196, %cst_194 [0] : vector<16x128xf32> to vector<128xf32>
      %198 = vector.shape_cast %197 : vector<128xf32> to vector<1x128xf32>
      %199 = arith.addf %185, %198 : vector<1x128xf32>
      %200 = arith.truncf %192 : vector<16x128xf32> to vector<16x128xbf16>
      %c0_195 = arith.constant 0 : index
      %c5_196 = arith.constant 5 : index
      %c0_197 = arith.constant 0 : index
      %c0_198 = arith.constant 0 : index
      %201 = vector.load %arg6[%c0_195, %c5_196, %c0_197, %c0_198] : memref<1x16x16x128xbf16, #tpu.memory_space<vmem>>, vector<1x1x16x128xbf16>
      %202 = vector.shape_cast %201 : vector<1x1x16x128xbf16> to vector<16x128xbf16>
      %203 = vector.shape_cast %200 : vector<16x128xbf16> to vector<1x1x16x128xbf16>
      tpu.vector_store %arg6[%c0_195, %c5_196, %c0_197, %c0_198], %203 {strides = array<i32>} : memref<1x16x16x128xbf16, #tpu.memory_space<vmem>>, vector<1x1x16x128xbf16>,
      %c144 = arith.constant 144 : index
      %c0_199 = arith.constant 0 : index
      %204 = vector.load %arg9[%c144, %c0_199] : memref<384x128xf32, #tpu.memory_space<vmem>>, vector<16x128xf32>
      %205 = vector.broadcast %117 : vector<1x128xf32> to vector<16x128xf32>
      %206 = arith.addf %204, %205 : vector<16x128xf32>
      %cst_200 = arith.constant dense<0.000000e+00> : vector<128xf32>
      %207 = vector.multi_reduction <add>, %206, %cst_200 [0] : vector<16x128xf32> to vector<128xf32>
      %208 = vector.shape_cast %207 : vector<128xf32> to vector<1x128xf32>
      %209 = arith.addf %195, %208 : vector<1x128xf32>
      %210 = arith.mulf %206, %206 : vector<16x128xf32>
      %cst_201 = arith.constant dense<0.000000e+00> : vector<128xf32>
      %211 = vector.multi_reduction <add>, %210, %cst_201 [0] : vector<16x128xf32> to vector<128xf32>
      %212 = vector.shape_cast %211 : vector<128xf32> to vector<1x128xf32>
      %213 = arith.addf %199, %212 : vector<1x128xf32>
      %214 = arith.truncf %206 : vector<16x128xf32> to vector<16x128xbf16>
      %c0_202 = arith.constant 0 : index
      %c6_203 = arith.constant 6 : index
      %c0_204 = arith.constant 0 : index
      %c0_205 = arith.constant 0 : index
      %215 = vector.load %arg6[%c0_202, %c6_203, %c0_204, %c0_205] : memref<1x16x16x128xbf16, #tpu.memory_space<vmem>>, vector<1x1x16x128xbf16>
      %216 = vector.shape_cast %215 : vector<1x1x16x128xbf16> to vector<16x128xbf16>
      %217 = vector.shape_cast %214 : vector<16x128xbf16> to vector<1x1x16x128xbf16>
      tpu.vector_store %arg6[%c0_202, %c6_203, %c0_204, %c0_205], %217 {strides = array<i32>} : memref<1x16x16x128xbf16, #tpu.memory_space<vmem>>, vector<1x1x16x128xbf16>,
      %c168 = arith.constant 168 : index
      %c0_206 = arith.constant 0 : index
      %218 = vector.load %arg9[%c168, %c0_206] : memref<384x128xf32, #tpu.memory_space<vmem>>, vector<16x128xf32>
      %219 = vector.broadcast %117 : vector<1x128xf32> to vector<16x128xf32>
      %220 = arith.addf %218, %219 : vector<16x128xf32>
      %cst_207 = arith.constant dense<0.000000e+00> : vector<128xf32>
      %221 = vector.multi_reduction <add>, %220, %cst_207 [0] : vector<16x128xf32> to vector<128xf32>
      %222 = vector.shape_cast %221 : vector<128xf32> to vector<1x128xf32>
      %223 = arith.addf %209, %222 : vector<1x128xf32>
      %224 = arith.mulf %220, %220 : vector<16x128xf32>
      %cst_208 = arith.constant dense<0.000000e+00> : vector<128xf32>
      %225 = vector.multi_reduction <add>, %224, %cst_208 [0] : vector<16x128xf32> to vector<128xf32>
      %226 = vector.shape_cast %225 : vector<128xf32> to vector<1x128xf32>
      %227 = arith.addf %213, %226 : vector<1x128xf32>
      %228 = arith.truncf %220 : vector<16x128xf32> to vector<16x128xbf16>
      %c0_209 = arith.constant 0 : index
      %c7_210 = arith.constant 7 : index
      %c0_211 = arith.constant 0 : index
      %c0_212 = arith.constant 0 : index
      %229 = vector.load %arg6[%c0_209, %c7_210, %c0_211, %c0_212] : memref<1x16x16x128xbf16, #tpu.memory_space<vmem>>, vector<1x1x16x128xbf16>
      %230 = vector.shape_cast %229 : vector<1x1x16x128xbf16> to vector<16x128xbf16>
      %231 = vector.shape_cast %228 : vector<16x128xbf16> to vector<1x1x16x128xbf16>
      tpu.vector_store %arg6[%c0_209, %c7_210, %c0_211, %c0_212], %231 {strides = array<i32>} : memref<1x16x16x128xbf16, #tpu.memory_space<vmem>>, vector<1x1x16x128xbf16>,
      %c192 = arith.constant 192 : index
      %c0_213 = arith.constant 0 : index
      %232 = vector.load %arg9[%c192, %c0_213] : memref<384x128xf32, #tpu.memory_space<vmem>>, vector<16x128xf32>
      %233 = vector.broadcast %117 : vector<1x128xf32> to vector<16x128xf32>
      %234 = arith.addf %232, %233 : vector<16x128xf32>
      %cst_214 = arith.constant dense<0.000000e+00> : vector<128xf32>
      %235 = vector.multi_reduction <add>, %234, %cst_214 [0] : vector<16x128xf32> to vector<128xf32>
      %236 = vector.shape_cast %235 : vector<128xf32> to vector<1x128xf32>
      %237 = arith.addf %223, %236 : vector<1x128xf32>
      %238 = arith.mulf %234, %234 : vector<16x128xf32>
      %cst_215 = arith.constant dense<0.000000e+00> : vector<128xf32>
      %239 = vector.multi_reduction <add>, %238, %cst_215 [0] : vector<16x128xf32> to vector<128xf32>
      %240 = vector.shape_cast %239 : vector<128xf32> to vector<1x128xf32>
      %241 = arith.addf %227, %240 : vector<1x128xf32>
      %242 = arith.truncf %234 : vector<16x128xf32> to vector<16x128xbf16>
      %c0_216 = arith.constant 0 : index
      %c8_217 = arith.constant 8 : index
      %c0_218 = arith.constant 0 : index
      %c0_219 = arith.constant 0 : index
      %243 = vector.load %arg6[%c0_216, %c8_217, %c0_218, %c0_219] : memref<1x16x16x128xbf16, #tpu.memory_space<vmem>>, vector<1x1x16x128xbf16>
      %244 = vector.shape_cast %243 : vector<1x1x16x128xbf16> to vector<16x128xbf16>
      %245 = vector.shape_cast %242 : vector<16x128xbf16> to vector<1x1x16x128xbf16>
      tpu.vector_store %arg6[%c0_216, %c8_217, %c0_218, %c0_219], %245 {strides = array<i32>} : memref<1x16x16x128xbf16, #tpu.memory_space<vmem>>, vector<1x1x16x128xbf16>,
      %c216 = arith.constant 216 : index
      %c0_220 = arith.constant 0 : index
      %246 = vector.load %arg9[%c216, %c0_220] : memref<384x128xf32, #tpu.memory_space<vmem>>, vector<16x128xf32>
      %247 = vector.broadcast %117 : vector<1x128xf32> to vector<16x128xf32>
      %248 = arith.addf %246, %247 : vector<16x128xf32>
      %cst_221 = arith.constant dense<0.000000e+00> : vector<128xf32>
      %249 = vector.multi_reduction <add>, %248, %cst_221 [0] : vector<16x128xf32> to vector<128xf32>
      %250 = vector.shape_cast %249 : vector<128xf32> to vector<1x128xf32>
      %251 = arith.addf %237, %250 : vector<1x128xf32>
      %252 = arith.mulf %248, %248 : vector<16x128xf32>
      %cst_222 = arith.constant dense<0.000000e+00> : vector<128xf32>
      %253 = vector.multi_reduction <add>, %252, %cst_222 [0] : vector<16x128xf32> to vector<128xf32>
      %254 = vector.shape_cast %253 : vector<128xf32> to vector<1x128xf32>
      %255 = arith.addf %241, %254 : vector<1x128xf32>
      %256 = arith.truncf %248 : vector<16x128xf32> to vector<16x128xbf16>
      %c0_223 = arith.constant 0 : index
      %c9_224 = arith.constant 9 : index
      %c0_225 = arith.constant 0 : index
      %c0_226 = arith.constant 0 : index
      %257 = vector.load %arg6[%c0_223, %c9_224, %c0_225, %c0_226] : memref<1x16x16x128xbf16, #tpu.memory_space<vmem>>, vector<1x1x16x128xbf16>
      %258 = vector.shape_cast %257 : vector<1x1x16x128xbf16> to vector<16x128xbf16>
      %259 = vector.shape_cast %256 : vector<16x128xbf16> to vector<1x1x16x128xbf16>
      tpu.vector_store %arg6[%c0_223, %c9_224, %c0_225, %c0_226], %259 {strides = array<i32>} : memref<1x16x16x128xbf16, #tpu.memory_space<vmem>>, vector<1x1x16x128xbf16>,
      %c240 = arith.constant 240 : index
      %c0_227 = arith.constant 0 : index
      %260 = vector.load %arg9[%c240, %c0_227] : memref<384x128xf32, #tpu.memory_space<vmem>>, vector<16x128xf32>
      %261 = vector.broadcast %117 : vector<1x128xf32> to vector<16x128xf32>
      %262 = arith.addf %260, %261 : vector<16x128xf32>
      %cst_228 = arith.constant dense<0.000000e+00> : vector<128xf32>
      %263 = vector.multi_reduction <add>, %262, %cst_228 [0] : vector<16x128xf32> to vector<128xf32>
      %264 = vector.shape_cast %263 : vector<128xf32> to vector<1x128xf32>
      %265 = arith.addf %251, %264 : vector<1x128xf32>
      %266 = arith.mulf %262, %262 : vector<16x128xf32>
      %cst_229 = arith.constant dense<0.000000e+00> : vector<128xf32>
      %267 = vector.multi_reduction <add>, %266, %cst_229 [0] : vector<16x128xf32> to vector<128xf32>
      %268 = vector.shape_cast %267 : vector<128xf32> to vector<1x128xf32>
      %269 = arith.addf %255, %268 : vector<1x128xf32>
      %270 = arith.truncf %262 : vector<16x128xf32> to vector<16x128xbf16>
      %c0_230 = arith.constant 0 : index
      %c10_231 = arith.constant 10 : index
      %c0_232 = arith.constant 0 : index
      %c0_233 = arith.constant 0 : index
      %271 = vector.load %arg6[%c0_230, %c10_231, %c0_232, %c0_233] : memref<1x16x16x128xbf16, #tpu.memory_space<vmem>>, vector<1x1x16x128xbf16>
      %272 = vector.shape_cast %271 : vector<1x1x16x128xbf16> to vector<16x128xbf16>
      %273 = vector.shape_cast %270 : vector<16x128xbf16> to vector<1x1x16x128xbf16>
      tpu.vector_store %arg6[%c0_230, %c10_231, %c0_232, %c0_233], %273 {strides = array<i32>} : memref<1x16x16x128xbf16, #tpu.memory_space<vmem>>, vector<1x1x16x128xbf16>,
      %c264 = arith.constant 264 : index
      %c0_234 = arith.constant 0 : index
      %274 = vector.load %arg9[%c264, %c0_234] : memref<384x128xf32, #tpu.memory_space<vmem>>, vector<16x128xf32>
      %275 = vector.broadcast %117 : vector<1x128xf32> to vector<16x128xf32>
      %276 = arith.addf %274, %275 : vector<16x128xf32>
      %cst_235 = arith.constant dense<0.000000e+00> : vector<128xf32>
      %277 = vector.multi_reduction <add>, %276, %cst_235 [0] : vector<16x128xf32> to vector<128xf32>
      %278 = vector.shape_cast %277 : vector<128xf32> to vector<1x128xf32>
      %279 = arith.addf %265, %278 : vector<1x128xf32>
      %280 = arith.mulf %276, %276 : vector<16x128xf32>
      %cst_236 = arith.constant dense<0.000000e+00> : vector<128xf32>
      %281 = vector.multi_reduction <add>, %280, %cst_236 [0] : vector<16x128xf32> to vector<128xf32>
      %282 = vector.shape_cast %281 : vector<128xf32> to vector<1x128xf32>
      %283 = arith.addf %269, %282 : vector<1x128xf32>
      %284 = arith.truncf %276 : vector<16x128xf32> to vector<16x128xbf16>
      %c0_237 = arith.constant 0 : index
      %c11_238 = arith.constant 11 : index
      %c0_239 = arith.constant 0 : index
      %c0_240 = arith.constant 0 : index
      %285 = vector.load %arg6[%c0_237, %c11_238, %c0_239, %c0_240] : memref<1x16x16x128xbf16, #tpu.memory_space<vmem>>, vector<1x1x16x128xbf16>
      %286 = vector.shape_cast %285 : vector<1x1x16x128xbf16> to vector<16x128xbf16>
      %287 = vector.shape_cast %284 : vector<16x128xbf16> to vector<1x1x16x128xbf16>
      tpu.vector_store %arg6[%c0_237, %c11_238, %c0_239, %c0_240], %287 {strides = array<i32>} : memref<1x16x16x128xbf16, #tpu.memory_space<vmem>>, vector<1x1x16x128xbf16>,
      %c288 = arith.constant 288 : index
      %c0_241 = arith.constant 0 : index
      %288 = vector.load %arg9[%c288, %c0_241] : memref<384x128xf32, #tpu.memory_space<vmem>>, vector<16x128xf32>
      %289 = vector.broadcast %117 : vector<1x128xf32> to vector<16x128xf32>
      %290 = arith.addf %288, %289 : vector<16x128xf32>
      %cst_242 = arith.constant dense<0.000000e+00> : vector<128xf32>
      %291 = vector.multi_reduction <add>, %290, %cst_242 [0] : vector<16x128xf32> to vector<128xf32>
      %292 = vector.shape_cast %291 : vector<128xf32> to vector<1x128xf32>
      %293 = arith.addf %279, %292 : vector<1x128xf32>
      %294 = arith.mulf %290, %290 : vector<16x128xf32>
      %cst_243 = arith.constant dense<0.000000e+00> : vector<128xf32>
      %295 = vector.multi_reduction <add>, %294, %cst_243 [0] : vector<16x128xf32> to vector<128xf32>
      %296 = vector.shape_cast %295 : vector<128xf32> to vector<1x128xf32>
      %297 = arith.addf %283, %296 : vector<1x128xf32>
      %298 = arith.truncf %290 : vector<16x128xf32> to vector<16x128xbf16>
      %c0_244 = arith.constant 0 : index
      %c12_245 = arith.constant 12 : index
      %c0_246 = arith.constant 0 : index
      %c0_247 = arith.constant 0 : index
      %299 = vector.load %arg6[%c0_244, %c12_245, %c0_246, %c0_247] : memref<1x16x16x128xbf16, #tpu.memory_space<vmem>>, vector<1x1x16x128xbf16>
      %300 = vector.shape_cast %299 : vector<1x1x16x128xbf16> to vector<16x128xbf16>
      %301 = vector.shape_cast %298 : vector<16x128xbf16> to vector<1x1x16x128xbf16>
      tpu.vector_store %arg6[%c0_244, %c12_245, %c0_246, %c0_247], %301 {strides = array<i32>} : memref<1x16x16x128xbf16, #tpu.memory_space<vmem>>, vector<1x1x16x128xbf16>,
      %c312 = arith.constant 312 : index
      %c0_248 = arith.constant 0 : index
      %302 = vector.load %arg9[%c312, %c0_248] : memref<384x128xf32, #tpu.memory_space<vmem>>, vector<16x128xf32>
      %303 = vector.broadcast %117 : vector<1x128xf32> to vector<16x128xf32>
      %304 = arith.addf %302, %303 : vector<16x128xf32>
      %cst_249 = arith.constant dense<0.000000e+00> : vector<128xf32>
      %305 = vector.multi_reduction <add>, %304, %cst_249 [0] : vector<16x128xf32> to vector<128xf32>
      %306 = vector.shape_cast %305 : vector<128xf32> to vector<1x128xf32>
      %307 = arith.addf %293, %306 : vector<1x128xf32>
      %308 = arith.mulf %304, %304 : vector<16x128xf32>
      %cst_250 = arith.constant dense<0.000000e+00> : vector<128xf32>
      %309 = vector.multi_reduction <add>, %308, %cst_250 [0] : vector<16x128xf32> to vector<128xf32>
      %310 = vector.shape_cast %309 : vector<128xf32> to vector<1x128xf32>
      %311 = arith.addf %297, %310 : vector<1x128xf32>
      %312 = arith.truncf %304 : vector<16x128xf32> to vector<16x128xbf16>
      %c0_251 = arith.constant 0 : index
      %c13_252 = arith.constant 13 : index
      %c0_253 = arith.constant 0 : index
      %c0_254 = arith.constant 0 : index
      %313 = vector.load %arg6[%c0_251, %c13_252, %c0_253, %c0_254] : memref<1x16x16x128xbf16, #tpu.memory_space<vmem>>, vector<1x1x16x128xbf16>
      %314 = vector.shape_cast %313 : vector<1x1x16x128xbf16> to vector<16x128xbf16>
      %315 = vector.shape_cast %312 : vector<16x128xbf16> to vector<1x1x16x128xbf16>
      tpu.vector_store %arg6[%c0_251, %c13_252, %c0_253, %c0_254], %315 {strides = array<i32>} : memref<1x16x16x128xbf16, #tpu.memory_space<vmem>>, vector<1x1x16x128xbf16>,
      %c336 = arith.constant 336 : index
      %c0_255 = arith.constant 0 : index
      %316 = vector.load %arg9[%c336, %c0_255] : memref<384x128xf32, #tpu.memory_space<vmem>>, vector<16x128xf32>
      %317 = vector.broadcast %117 : vector<1x128xf32> to vector<16x128xf32>
      %318 = arith.addf %316, %317 : vector<16x128xf32>
      %cst_256 = arith.constant dense<0.000000e+00> : vector<128xf32>
      %319 = vector.multi_reduction <add>, %318, %cst_256 [0] : vector<16x128xf32> to vector<128xf32>
      %320 = vector.shape_cast %319 : vector<128xf32> to vector<1x128xf32>
      %321 = arith.addf %307, %320 : vector<1x128xf32>
      %322 = arith.mulf %318, %318 : vector<16x128xf32>
      %cst_257 = arith.constant dense<0.000000e+00> : vector<128xf32>
      %323 = vector.multi_reduction <add>, %322, %cst_257 [0] : vector<16x128xf32> to vector<128xf32>
      %324 = vector.shape_cast %323 : vector<128xf32> to vector<1x128xf32>
      %325 = arith.addf %311, %324 : vector<1x128xf32>
      %326 = arith.truncf %318 : vector<16x128xf32> to vector<16x128xbf16>
      %c0_258 = arith.constant 0 : index
      %c14_259 = arith.constant 14 : index
      %c0_260 = arith.constant 0 : index
      %c0_261 = arith.constant 0 : index
      %327 = vector.load %arg6[%c0_258, %c14_259, %c0_260, %c0_261] : memref<1x16x16x128xbf16, #tpu.memory_space<vmem>>, vector<1x1x16x128xbf16>
      %328 = vector.shape_cast %327 : vector<1x1x16x128xbf16> to vector<16x128xbf16>
      %329 = vector.shape_cast %326 : vector<16x128xbf16> to vector<1x1x16x128xbf16>
      tpu.vector_store %arg6[%c0_258, %c14_259, %c0_260, %c0_261], %329 {strides = array<i32>} : memref<1x16x16x128xbf16, #tpu.memory_space<vmem>>, vector<1x1x16x128xbf16>,
      %c360 = arith.constant 360 : index
      %c0_262 = arith.constant 0 : index
      %330 = vector.load %arg9[%c360, %c0_262] : memref<384x128xf32, #tpu.memory_space<vmem>>, vector<16x128xf32>
      %331 = vector.broadcast %117 : vector<1x128xf32> to vector<16x128xf32>
      %332 = arith.addf %330, %331 : vector<16x128xf32>
      %cst_263 = arith.constant dense<0.000000e+00> : vector<128xf32>
      %333 = vector.multi_reduction <add>, %332, %cst_263 [0] : vector<16x128xf32> to vector<128xf32>
      %334 = vector.shape_cast %333 : vector<128xf32> to vector<1x128xf32>
      %335 = arith.addf %321, %334 : vector<1x128xf32>
      %336 = arith.mulf %332, %332 : vector<16x128xf32>
      %cst_264 = arith.constant dense<0.000000e+00> : vector<128xf32>
      %337 = vector.multi_reduction <add>, %336, %cst_264 [0] : vector<16x128xf32> to vector<128xf32>
      %338 = vector.shape_cast %337 : vector<128xf32> to vector<1x128xf32>
      %339 = arith.addf %325, %338 : vector<1x128xf32>
      %340 = arith.truncf %332 : vector<16x128xf32> to vector<16x128xbf16>
      %c0_265 = arith.constant 0 : index
      %c15_266 = arith.constant 15 : index
      %c0_267 = arith.constant 0 : index
      %c0_268 = arith.constant 0 : index
      %341 = vector.load %arg6[%c0_265, %c15_266, %c0_267, %c0_268] : memref<1x16x16x128xbf16, #tpu.memory_space<vmem>>, vector<1x1x16x128xbf16>
      %342 = vector.shape_cast %341 : vector<1x1x16x128xbf16> to vector<16x128xbf16>
      %343 = vector.shape_cast %340 : vector<16x128xbf16> to vector<1x1x16x128xbf16>
      tpu.vector_store %arg6[%c0_265, %c15_266, %c0_267, %c0_268], %343 {strides = array<i32>} : memref<1x16x16x128xbf16, #tpu.memory_space<vmem>>, vector<1x1x16x128xbf16>,
      %c0_269 = arith.constant 0 : index
      %c0_270 = arith.constant 0 : index
      %c0_271 = arith.constant 0 : index
      %344 = vector.load %arg7[%c0_269, %c0_270, %c0_271] : memref<1x1x128xf32, #tpu.memory_space<vmem>>, vector<1x1x128xf32>
      %345 = vector.shape_cast %344 : vector<1x1x128xf32> to vector<1x128xf32>
      %346 = vector.shape_cast %335 : vector<1x128xf32> to vector<1x1x128xf32>
      tpu.vector_store %arg7[%c0_269, %c0_270, %c0_271], %346 {strides = array<i32>} : memref<1x1x128xf32, #tpu.memory_space<vmem>>, vector<1x1x128xf32>,
      %c0_272 = arith.constant 0 : index
      %c0_273 = arith.constant 0 : index
      %c0_274 = arith.constant 0 : index
      %347 = vector.load %arg8[%c0_272, %c0_273, %c0_274] : memref<1x1x128xf32, #tpu.memory_space<vmem>>, vector<1x1x128xf32>
      %348 = vector.shape_cast %347 : vector<1x1x128xf32> to vector<1x128xf32>
      %349 = vector.shape_cast %339 : vector<1x128xf32> to vector<1x1x128xf32>
      tpu.vector_store %arg8[%c0_272, %c0_273, %c0_274], %349 {strides = array<i32>} : memref<1x1x128xf32, #tpu.memory_space<vmem>>, vector<1x1x128xf32>,
    } else {
    }
    return
  }
  func.func @transform_0(%arg0: i32, %arg1: i32, %arg2: i32) -> (i32, i32, i32, i32) {
    %c0_i32 = arith.constant 0 : i32
    %c0_i32_0 = arith.constant 0 : i32
    %c0_i32_1 = arith.constant 0 : i32
    return %arg0, %c0_i32, %c0_i32_0, %arg2 : i32, i32, i32, i32
  }
  func.func @transform_1(%arg0: i32, %arg1: i32, %arg2: i32) -> (i32, i32, i32) {
    %c0_i32 = arith.constant 0 : i32
    %c0_i32_0 = arith.constant 0 : i32
    return %c0_i32, %arg2, %arg1 : i32, i32, i32
  }
  func.func @transform_2(%arg0: i32, %arg1: i32, %arg2: i32) -> (i32, i32) {
    %c0_i32 = arith.constant 0 : i32
    %c0_i32_0 = arith.constant 0 : i32
    return %c0_i32, %arg1 : i32, i32
  }
  func.func @transform_3(%arg0: i32, %arg1: i32, %arg2: i32) -> (i32, i32, i32, i32) {
    %c0_i32 = arith.constant 0 : i32
    %c0_i32_0 = arith.constant 0 : i32
    %c0_i32_1 = arith.constant 0 : i32
    return %arg0, %c0_i32, %c0_i32_0, %arg1 : i32, i32, i32, i32
  }
  func.func @transform_4(%arg0: i32, %arg1: i32, %arg2: i32) -> (i32, i32, i32) {
    %c0_i32 = arith.constant 0 : i32
    %c0_i32_0 = arith.constant 0 : i32
    return %arg0, %c0_i32, %arg1 : i32, i32, i32
  }
  func.func @transform_5(%arg0: i32, %arg1: i32, %arg2: i32) -> (i32, i32, i32) {
    %c0_i32 = arith.constant 0 : i32
    %c0_i32_0 = arith.constant 0 : i32
    return %arg0, %c0_i32, %arg1 : i32, i32, i32
  }
}

</mosaic_0001>

<llo_original>
// kernel: tpu_custom_call.1
$region0: #{tpu_custom_call.1}
  #allocation0 [shape = 'u32[]', space=smem, size = 0x4, offset = 0x4, fixed_abs, tag = 'smem constant byte address 0x4 - core index']
  #allocation1 [shape = 'u32[144,128]{1,0:T(1,128)}', space=vmem, size = 0x12000, scoped, tag = 'internal scratch']
  #allocation2 [shape = 'f32[384,128]{1,0:T(8,128)}', space=vmem, size = 0x30000, scoped, tag = 'scratch operand']
  #allocation3 [shape = 'bf16[448,128]{1,0:T(16,128)(2,1)}', space=vmem, size = 0x1c000, scoped, tag = 'scratch operand']
  %s0 = inlined_call_operand.hbm [shape: bf16[2,16,16,128], index: 0, kind: input, shape index: {}]
  %s1 = inlined_call_operand.hbm [shape: bf16[9,128,128], index: 1, kind: input, shape index: {}]
  %s2 = inlined_call_operand.vmem [shape: f32[1,128], index: 2, kind: input, shape index: {}]
  %s3 = inlined_call_operand.hbm [shape: bf16[2,16,16,128], index: 3, kind: output, shape index: {0}]
  %s4 = inlined_call_operand.hbm [shape: f32[2,1,128], index: 4, kind: output, shape index: {1}]
  %s5 = inlined_call_operand.hbm [shape: f32[2,1,128], index: 5, kind: output, shape index: {2}]
  %6 = xla_tuple %s3, %s4, %s5
  %s7 = sld [smem:[#allocation0]]
  $region77: #{tpu_custom_call.1} parent=0
    _
  %s9 = ssub.s32 1, %s7
  %s10 = scalar_select 0, %s9, %s7
  $region1: #{tpu_custom_call.1} parent=0
    #allocation4 [shape = 'u8[131072]{0}', space=vmem, size = 0x20000, scoped, tag = 'input window, operand 0']
    #allocation5 [shape = 's32[2]{0}', space=sflag, size = 0x8, scoped, tag = 'scoped memory for tpu_custom_call.1']
    #allocation6 [shape = 's32[2]{0}', space=sflag, size = 0x8, scoped, tag = 'scoped memory for tpu_custom_call.1']
    #allocation7 [shape = 'u8[294912]{0}', space=vmem, size = 0x48000, scoped, tag = 'input window, operand 1, single buffered']
    #allocation8 [shape = 's32[1]{0}', space=sflag, size = 0x4, scoped, tag = 'scoped memory for tpu_custom_call.1']
    #allocation9 [shape = 'u8[131072]{0}', space=vmem, size = 0x20000, scoped, tag = 'output window, operand 0']
    #allocation10 [shape = 'u8[1024]{0}', space=vmem, size = 0x400, scoped, tag = 'output window, operand 1']
    #allocation11 [shape = 's32[2]{0}', space=sflag, size = 0x8, scoped, tag = 'scoped memory for tpu_custom_call.1']
    #allocation12 [shape = 'u8[1024]{0}', space=vmem, size = 0x400, scoped, tag = 'output window, operand 2']
    %11 = vsyncpa [#allocation5], 0
    %s12 = scalar_lea.sflag [#allocation5], 1
    %13 = vsyncpa %s12, 0
    %14 = vsyncpa [#allocation8], 0
    %15 = vsyncpa [#allocation6], 0
    %s16 = scalar_lea.sflag [#allocation6], 1
    %17 = vsyncpa %s16, 0
    %18 = vsyncpa [#allocation11], 0
    %s19 = scalar_lea.sflag [#allocation11], 1
    %20 = vsyncpa %s19, 0
    loop: start=0, step=1, limit=4
    $region2: #{tpu_custom_call.1} parent=1 // loop_pre_header
      _
    $region3: #{tpu_custom_call.1} parent=1 // loop_header
      %s22 = sphi 0, %s26
      %p23 = scmp.ge.s32.totalorder %s22, 4
      %s29 = sphi 0, %s48
      %s30 = sphi 0, %s44
      %s31 = sphi 0, %s40
      %s32 = sphi 0, %s29
      %s33 = sphi 0, %s30
      %s34 = sphi 0, %s31
      %s35 = sphi 0, %s32
      %s36 = sphi 0, %s33
      %s37 = sphi 0, %s34
      %s53 = sphi 0, %s55
      %s56 = sphi 0, %s53
      %s57 = sphi 0, %s56
      %s73 = sphi 0, %s57
      %s81 = sphi 0, %s83
      %s84 = sphi 0, %s81
      %s85 = sphi 0, %s84
      %s101 = sphi 0, %s85
      %s107 = sphi 0, %s109
      %s110 = sphi 0, %s107
      %s111 = sphi 0, %s110
      %s127 = sphi 0, %s111
      %s135 = sphi 0, %s137
      %s138 = sphi 0, %s135
      %s139 = sphi 0, %s138
      %s155 = sphi 0, %s139
      %s163 = sphi 0, %s165
      %s166 = sphi 0, %s163
      %s167 = sphi 0, %s166
      %s183 = sphi 0, %s167
      %s191 = sphi 0, %s193
      %s194 = sphi 0, %s191
      %s195 = sphi 0, %s194
      %s211 = sphi 0, %s195
    $region4: #{tpu_custom_call.1} parent=1 // loop_header_branch
      %25 = sbr.rel (%p23) target = $region8
    $region5: #{tpu_custom_call.1} parent=1 // loop_body
      %s27 = ssub.s32 %s22, 1
      %s28 = ssub.s32 %s22, 2
      %s38 = sadd.s32 1, %s31
      %p39 = scmp.ge.s32.totalorder %s38, 1
      %s40 = scalar_select %p39, 0, %s38
      %s41 = sadd.s32 1, %s30
      %s42 = scalar_select %p39, %s41, %s30
      %p43 = scmp.ge.s32.totalorder %s42, 1
      %s44 = scalar_select %p43, 0, %s42
      %s45 = sadd.s32 1, %s29
      %s46 = scalar_select %p43, %s45, %s29
      %p47 = scmp.ge.s32.totalorder %s46, 2
      %s48 = scalar_select %p47, 0, %s46
      %s49 = ssub.s32 %s29, %s48
      %s50 = ssub.s32 %s31, %s40
      %s51 = sor.u32 %s49, %s50
      %p52 = scmp.eq.s32.totalorder %s51, 0
      %s54 = sadd.s32 %s53, 1
      %s55 = scalar_select %p52, %s53, %s54
      %p58 = pneg %p52
      %p59 = scmp.eq.s32.totalorder %s22, 1
      %p60 = por %p58, %p59
      %p61 = scmp.ne.s32.totalorder %s53, %s56
      %p62 = scmp.eq.s32.totalorder %s22, 0
      %p63 = por %p61, %p62
      %p64 = scmp.ne.s32.totalorder %s53, %s56
      %p65 = scmp.eq.s32.totalorder %s27, 1
      %p66 = por %p64, %p65
      %p67 = scmp.ne.s32.totalorder %s56, %s57
      %p68 = scmp.eq.s32.totalorder %s27, 0
      %p69 = por %p67, %p68
      %p70 = scmp.ne.s32.totalorder %s56, %s57
      %p71 = scmp.eq.s32.totalorder %s28, 1
      %p72 = por %p70, %p71
      %p74 = scmp.ne.s32.totalorder %s57, %s73
      %p75 = scmp.eq.s32.totalorder %s28, 0
      %p76 = por %p74, %p75
      %s77 = ssub.s32 %s31, %s40
      %s78 = ssub.s32 %s30, %s44
      %s79 = sor.u32 %s77, %s78
      %p80 = scmp.eq.s32.totalorder %s79, 0
      %s82 = sadd.s32 %s81, 1
      %s83 = scalar_select %p80, %s81, %s82
      %p86 = pneg %p80
      %p87 = scmp.eq.s32.totalorder %s22, 1
      %p88 = por %p86, %p87
      %p89 = scmp.ne.s32.totalorder %s81, %s84
      %p90 = scmp.eq.s32.totalorder %s22, 0
      %p91 = por %p89, %p90
      %p92 = scmp.ne.s32.totalorder %s81, %s84
      %p93 = scmp.eq.s32.totalorder %s27, 1
      %p94 = por %p92, %p93
      %p95 = scmp.ne.s32.totalorder %s84, %s85
      %p96 = scmp.eq.s32.totalorder %s27, 0
      %p97 = por %p95, %p96
      %p98 = scmp.ne.s32.totalorder %s84, %s85
      %p99 = scmp.eq.s32.totalorder %s28, 1
      %p100 = por %p98, %p99
      %p102 = scmp.ne.s32.totalorder %s85, %s101
      %p103 = scmp.eq.s32.totalorder %s28, 0
      %p104 = por %p102, %p103
      %s105 = ssub.s32 %s30, %s44
      %p106 = scmp.eq.s32.totalorder %s105, 0
      %s108 = sadd.s32 %s107, 1
      %s109 = scalar_select %p106, %s107, %s108
      %p112 = pneg %p106
      %p113 = scmp.eq.s32.totalorder %s22, 1
      %p114 = por %p112, %p113
      %p115 = scmp.ne.s32.totalorder %s107, %s110
      %p116 = scmp.eq.s32.totalorder %s22, 0
      %p117 = por %p115, %p116
      %p118 = scmp.ne.s32.totalorder %s107, %s110
      %p119 = scmp.eq.s32.totalorder %s27, 1
      %p120 = por %p118, %p119
      %p121 = scmp.ne.s32.totalorder %s110, %s111
      %p122 = scmp.eq.s32.totalorder %s27, 0
      %p123 = por %p121, %p122
      %p124 = scmp.ne.s32.totalorder %s110, %s111
      %p125 = scmp.eq.s32.totalorder %s28, 1
      %p126 = por %p124, %p125
      %p128 = scmp.ne.s32.totalorder %s111, %s127
      %p129 = scmp.eq.s32.totalorder %s28, 0
      %p130 = por %p128, %p129
      %s131 = ssub.s32 %s29, %s48
      %s132 = ssub.s32 %s30, %s44
      %s133 = sor.u32 %s131, %s132
      %p134 = scmp.eq.s32.totalorder %s133, 0
      %s136 = sadd.s32 %s135, 1
      %s137 = scalar_select %p134, %s135, %s136
      %p140 = pneg %p134
      %p141 = scmp.eq.s32.totalorder %s22, 1
      %p142 = por %p140, %p141
      %p143 = scmp.ne.s32.totalorder %s135, %s138
      %p144 = scmp.eq.s32.totalorder %s22, 0
      %p145 = por %p143, %p144
      %p146 = scmp.ne.s32.totalorder %s135, %s138
      %p147 = scmp.eq.s32.totalorder %s27, 1
      %p148 = por %p146, %p147
      %p149 = scmp.ne.s32.totalorder %s138, %s139
      %p150 = scmp.eq.s32.totalorder %s27, 0
      %p151 = por %p149, %p150
      %p152 = scmp.ne.s32.totalorder %s138, %s139
      %p153 = scmp.eq.s32.totalorder %s28, 1
      %p154 = por %p152, %p153
      %p156 = scmp.ne.s32.totalorder %s139, %s155
      %p157 = scmp.eq.s32.totalorder %s28, 0
      %p158 = por %p156, %p157
      %s159 = ssub.s32 %s29, %s48
      %s160 = ssub.s32 %s30, %s44
      %s161 = sor.u32 %s159, %s160
      %p162 = scmp.eq.s32.totalorder %s161, 0
      %s164 = sadd.s32 %s163, 1
      %s165 = scalar_select %p162, %s163, %s164
      %p168 = pneg %p162
      %p169 = scmp.eq.s32.totalorder %s22, 1
      %p170 = por %p168, %p169
      %p171 = scmp.ne.s32.totalorder %s163, %s166
      %p172 = scmp.eq.s32.totalorder %s22, 0
      %p173 = por %p171, %p172
      %p174 = scmp.ne.s32.totalorder %s163, %s166
      %p175 = scmp.eq.s32.totalorder %s27, 1
      %p176 = por %p174, %p175
      %p177 = scmp.ne.s32.totalorder %s166, %s167
      %p178 = scmp.eq.s32.totalorder %s27, 0
      %p179 = por %p177, %p178
      %p180 = scmp.ne.s32.totalorder %s166, %s167
      %p181 = scmp.eq.s32.totalorder %s28, 1
      %p182 = por %p180, %p181
      %p184 = scmp.ne.s32.totalorder %s167, %s183
      %p185 = scmp.eq.s32.totalorder %s28, 0
      %p186 = por %p184, %p185
      %s187 = ssub.s32 %s29, %s48
      %s188 = ssub.s32 %s30, %s44
      %s189 = sor.u32 %s187, %s188
      %p190 = scmp.eq.s32.totalorder %s189, 0
      %s192 = sadd.s32 %s191, 1
      %s193 = scalar_select %p190, %s191, %s192
      %p196 = pneg %p190
      %p197 = scmp.eq.s32.totalorder %s22, 1
      %p198 = por %p196, %p197
      %p199 = scmp.ne.s32.totalorder %s191, %s194
      %p200 = scmp.eq.s32.totalorder %s22, 0
      %p201 = por %p199, %p200
      %p202 = scmp.ne.s32.totalorder %s191, %s194
      %p203 = scmp.eq.s32.totalorder %s27, 1
      %p204 = por %p202, %p203
      %p205 = scmp.ne.s32.totalorder %s194, %s195
      %p206 = scmp.eq.s32.totalorder %s27, 0
      %p207 = por %p205, %p206
      %p208 = scmp.ne.s32.totalorder %s194, %s195
      %p209 = scmp.eq.s32.totalorder %s28, 1
      %p210 = por %p208, %p209
      %p212 = scmp.ne.s32.totalorder %s195, %s211
      %p213 = scmp.eq.s32.totalorder %s28, 0
      %p214 = por %p212, %p213
      %p215 = scmp.le.s32.totalorder 1, %s22
      %p216 = scmp.lt.s32.totalorder %s22, 3
      %p217 = pnand %p215, %p216
      %p218 = pneg %p217
      // Predicated region
      $region9: #{tpu_custom_call.1} parent=5 // pred_check
        _
      $region10: #{tpu_custom_call.1} parent=5 // pred_check_branch
        %220 = sbr.rel (%p217) target = $region12
      $region11: #{tpu_custom_call.1} parent=5 // pred_region
        %s221 = ssub.s32 %s22, 1
        // Predicated region
        $region13: #{tpu_custom_call.1} parent=11 // pred_check
          %p222 = pneg %p97
        $region14: #{tpu_custom_call.1} parent=11 // pred_check_branch
          %224 = sbr.rel (%p222) target = $region16
        $region15: #{tpu_custom_call.1} parent=11 // pred_region
          %s225 = smul.u32 16, %s34
          %s227 = ssub.s32 9216, 9216
          %228 = vsyncadd [#allocation8], %s227
          %s229 = sadd.s32 %s33, %s225
          %s230 = smul.addr %s229, 64
          %s231 = scalar_lea.hbm %s1, %s230
          %s232 = sshll.u32 [#allocation7], 4
          %s233 = int_to_ptr.vmem [resolvable:$true] %s232
          %238 = dma.hbm_to_vmem [thread:$0]  %s231, 9216, %s233, [#allocation8], 64, 64, 4
        $region16: #{tpu_custom_call.1} parent=11 // pred_fallthru
          _
        // Predicated region
        $region17: #{tpu_custom_call.1} parent=11 // pred_check
          %p239 = pneg %p123
        $region18: #{tpu_custom_call.1} parent=11 // pred_check_branch
          %241 = sbr.rel (%p239) target = $region20
        $region19: #{tpu_custom_call.1} parent=11 // pred_region
          %p242 = scmp.lt.s32.totalorder %s33, 0
          %s243 = scalar_select %p242, %s33, 0
          %s244 = scalar_lea.vmem %s2, %s243
        $region20: #{tpu_custom_call.1} parent=11 // pred_fallthru
          _
      $region12: #{tpu_custom_call.1} parent=5 // pred_fallthru
        _
      %p245 = scmp.lt.s32.totalorder %s22, 2
      // Predicated region
      $region21: #{tpu_custom_call.1} parent=5 // pred_check
        %p246 = pneg %p245
      $region22: #{tpu_custom_call.1} parent=5 // pred_check_branch
        %248 = sbr.rel (%p246) target = $region24
      $region23: #{tpu_custom_call.1} parent=5 // pred_region
        // Predicated region
        $region25: #{tpu_custom_call.1} parent=23 // pred_check
          %p249 = pneg %p63
        $region26: #{tpu_custom_call.1} parent=23 // pred_check_branch
          %251 = sbr.rel (%p249) target = $region28
        $region27: #{tpu_custom_call.1} parent=23 // pred_region
          %s252 = sand.u32 %s53, 1
          %s253 = scalar_lea.sflag [#allocation5], %s252
          %s254 = sand.u32 %s53, 1
          %s255 = smul.addr %s254, 128
          %s256 = scalar_lea.vmem [#allocation4], %s255
          %s258 = ssub.s32 2048, 2048
          %259 = vsyncadd %s253, %s258
          %s260 = smul.addr %s29, 32
          %s261 = sadd.s32 %s31, %s260
          %s262 = smul.addr %s261, 64
          %s263 = scalar_lea.hbm %s0, %s262
          %s264 = sshll.u32 %s256, 4
          %s265 = int_to_ptr.vmem [resolvable:$true] %s264
          %270 = dma.hbm_to_vmem [thread:$0]  %s263, 2048, %s265, %s253, 64, 64, 4
        $region28: #{tpu_custom_call.1} parent=23 // pred_fallthru
          _
      $region24: #{tpu_custom_call.1} parent=5 // pred_fallthru
        _
      %p271 = scmp.le.s32.totalorder 1, %s22
      %p272 = scmp.lt.s32.totalorder %s22, 3
      %p273 = pnand %p271, %p272
      %p274 = pneg %p273
      // Predicated region
      $region29: #{tpu_custom_call.1} parent=5 // pred_check
        _
      $region30: #{tpu_custom_call.1} parent=5 // pred_check_branch
        %276 = sbr.rel (%p273) target = $region32
      $region31: #{tpu_custom_call.1} parent=5 // pred_region
        %s277 = ssub.s32 %s22, 1
        %s278 = sand.u32 %s56, 1
        %s279 = scalar_lea.sflag [#allocation5], %s278
        %s280 = sand.u32 %s56, 1
        %s281 = smul.addr %s280, 128
        %s282 = scalar_lea.vmem [#allocation4], %s281
        // Predicated region
        $region33: #{tpu_custom_call.1} parent=31 // pred_check
          %p283 = pneg %p69
        $region34: #{tpu_custom_call.1} parent=31 // pred_check_branch
          %285 = sbr.rel (%p283) target = $region36
        $region35: #{tpu_custom_call.1} parent=31 // pred_region
          %286 = dma.done %s279, 2048
        $region36: #{tpu_custom_call.1} parent=31 // pred_fallthru
          _
        // Predicated region
        $region37: #{tpu_custom_call.1} parent=31 // pred_check
          %p287 = pneg %p97
        $region38: #{tpu_custom_call.1} parent=31 // pred_check_branch
          %289 = sbr.rel (%p287) target = $region40
        $region39: #{tpu_custom_call.1} parent=31 // pred_region
          %290 = dma.done [#allocation8], 9216
        $region40: #{tpu_custom_call.1} parent=31 // pred_fallthru
          _
        %s291 = sand.u32 %s56, 1
        %s292 = scalar_lea.sflag [#allocation5], %s291
        %s293 = sand.u32 %s56, 1
        %s294 = smul.addr %s293, 128
        %s295 = scalar_lea.vmem [#allocation4], %s294
        %p296 = pneg %p69
        %p297 = pneg %p66
        %p298 = pneg %p97
        %p299 = pneg %p94
        %p300 = scmp.lt.s32.totalorder %s33, 0
        %s301 = scalar_select %p300, %s33, 0
        %s302 = scalar_lea.vmem %s2, %s301
        %p303 = pneg %p123
        %p304 = pneg %p120
        %p305 = pneg %p151
        %p306 = pneg %p148
        %s307 = sand.u32 %s138, 1
        %s308 = scalar_lea.sflag [#allocation6], %s307
        %s309 = sand.u32 %s138, 1
        %s310 = smul.addr %s309, 128
        %s311 = scalar_lea.vmem [#allocation9], %s310
        %p312 = pneg %p179
        %p313 = pneg %p176
        %s314 = sand.u32 %s27, 1
        %s315 = scalar_lea.sflag [#allocation11], %s314
        %s316 = sand.u32 %s166, 1
        %s317 = scalar_lea.vmem [#allocation10], %s316
        %p318 = pneg %p207
        %p319 = pneg %p204
        %s320 = sand.u32 %s27, 1
        %s321 = scalar_lea.sflag [#allocation11], %s320
        %s322 = sand.u32 %s194, 1
        %s323 = scalar_lea.vmem [#allocation12], %s322
        %s324 = smul.u32 16, %s34
        %p325 = scmp.lt.s32.totalorder %s33, 0
        %s326 = scalar_select %p325, %s33, 0
        %s327 = scalar_lea.vmem %s2, %s326
        %p329 = scmp.eq.s32.totalorder %s34, 0
        // Predicated region
        $region41: #{tpu_custom_call.1} parent=31 // pred_check
          %p330 = pneg %p329
        $region42: #{tpu_custom_call.1} parent=31 // pred_check_branch
          %332 = sbr.rel (%p330) target = $region44
        $region43: #{tpu_custom_call.1} parent=31 // pred_region
          %333 = vst [vmem:[#allocation2] sm:$0xff] 0.0
          %334 = vst [vmem:[#allocation2 + $0x8] sm:$0xff] 0.0
          %335 = vst [vmem:[#allocation2 + $0x10] sm:$0xff] 0.0
          %336 = vst [vmem:[#allocation2 + $0x18] sm:$0xff] 0.0
          %337 = vst [vmem:[#allocation2 + $0x20] sm:$0xff] 0.0
          %338 = vst [vmem:[#allocation2 + $0x28] sm:$0xff] 0.0
          %339 = vst [vmem:[#allocation2 + $0x30] sm:$0xff] 0.0
          %340 = vst [vmem:[#allocation2 + $0x38] sm:$0xff] 0.0
          %341 = vst [vmem:[#allocation2 + $0x40] sm:$0xff] 0.0
          %342 = vst [vmem:[#allocation2 + $0x48] sm:$0xff] 0.0
          %343 = vst [vmem:[#allocation2 + $0x50] sm:$0xff] 0.0
          %344 = vst [vmem:[#allocation2 + $0x58] sm:$0xff] 0.0
          %345 = vst [vmem:[#allocation2 + $0x60] sm:$0xff] 0.0
          %346 = vst [vmem:[#allocation2 + $0x68] sm:$0xff] 0.0
          %347 = vst [vmem:[#allocation2 + $0x70] sm:$0xff] 0.0
          %348 = vst [vmem:[#allocation2 + $0x78] sm:$0xff] 0.0
          %349 = vst [vmem:[#allocation2 + $0x80] sm:$0xff] 0.0
          %350 = vst [vmem:[#allocation2 + $0x88] sm:$0xff] 0.0
          %351 = vst [vmem:[#allocation2 + $0x90] sm:$0xff] 0.0
          %352 = vst [vmem:[#allocation2 + $0x98] sm:$0xff] 0.0
          %353 = vst [vmem:[#allocation2 + $0xa0] sm:$0xff] 0.0
          %354 = vst [vmem:[#allocation2 + $0xa8] sm:$0xff] 0.0
          %355 = vst [vmem:[#allocation2 + $0xb0] sm:$0xff] 0.0
          %356 = vst [vmem:[#allocation2 + $0xb8] sm:$0xff] 0.0
          %357 = vst [vmem:[#allocation2 + $0xc0] sm:$0xff] 0.0
          %358 = vst [vmem:[#allocation2 + $0xc8] sm:$0xff] 0.0
          %359 = vst [vmem:[#allocation2 + $0xd0] sm:$0xff] 0.0
          %360 = vst [vmem:[#allocation2 + $0xd8] sm:$0xff] 0.0
          %361 = vst [vmem:[#allocation2 + $0xe0] sm:$0xff] 0.0
          %362 = vst [vmem:[#allocation2 + $0xe8] sm:$0xff] 0.0
          %363 = vst [vmem:[#allocation2 + $0xf0] sm:$0xff] 0.0
          %364 = vst [vmem:[#allocation2 + $0xf8] sm:$0xff] 0.0
          %365 = vst [vmem:[#allocation2 + $0x100] sm:$0xff] 0.0
          %366 = vst [vmem:[#allocation2 + $0x108] sm:$0xff] 0.0
          %367 = vst [vmem:[#allocation2 + $0x110] sm:$0xff] 0.0
          %368 = vst [vmem:[#allocation2 + $0x118] sm:$0xff] 0.0
          %369 = vst [vmem:[#allocation2 + $0x120] sm:$0xff] 0.0
          %370 = vst [vmem:[#allocation2 + $0x128] sm:$0xff] 0.0
          %371 = vst [vmem:[#allocation2 + $0x130] sm:$0xff] 0.0
          %372 = vst [vmem:[#allocation2 + $0x138] sm:$0xff] 0.0
          %373 = vst [vmem:[#allocation2 + $0x140] sm:$0xff] 0.0
          %374 = vst [vmem:[#allocation2 + $0x148] sm:$0xff] 0.0
          %375 = vst [vmem:[#allocation2 + $0x150] sm:$0xff] 0.0
          %376 = vst [vmem:[#allocation2 + $0x158] sm:$0xff] 0.0
          %377 = vst [vmem:[#allocation2 + $0x160] sm:$0xff] 0.0
          %378 = vst [vmem:[#allocation2 + $0x168] sm:$0xff] 0.0
          %379 = vst [vmem:[#allocation2 + $0x170] sm:$0xff] 0.0
          %380 = vst [vmem:[#allocation2 + $0x178] sm:$0xff] 0.0
          %381 = vst [vmem:[#allocation3] sm:$0xff] 0
          %382 = vst [vmem:[#allocation3 + $0x8] sm:$0xff] 0
          %383 = vst [vmem:[#allocation3 + $0x10] sm:$0xff] 0
          %384 = vst [vmem:[#allocation3 + $0x18] sm:$0xff] 0
          %385 = vst [vmem:[#allocation3 + $0x20] sm:$0xff] 0
          %386 = vst [vmem:[#allocation3 + $0x28] sm:$0xff] 0
          %387 = vst [vmem:[#allocation3 + $0x30] sm:$0xff] 0
          %388 = vst [vmem:[#allocation3 + $0x38] sm:$0xff] 0
          %389 = vst [vmem:[#allocation3 + $0x40] sm:$0xff] 0
          %390 = vst [vmem:[#allocation3 + $0x48] sm:$0xff] 0
          %391 = vst [vmem:[#allocation3 + $0x50] sm:$0xff] 0
          %392 = vst [vmem:[#allocation3 + $0x58] sm:$0xff] 0
          %393 = vst [vmem:[#allocation3 + $0x60] sm:$0xff] 0
          %394 = vst [vmem:[#allocation3 + $0x68] sm:$0xff] 0
          %395 = vst [vmem:[#allocation3 + $0x70] sm:$0xff] 0
          %396 = vst [vmem:[#allocation3 + $0x78] sm:$0xff] 0
          %397 = vst [vmem:[#allocation3 + $0x80] sm:$0xff] 0
          %398 = vst [vmem:[#allocation3 + $0x88] sm:$0xff] 0
          %399 = vst [vmem:[#allocation3 + $0x90] sm:$0xff] 0
          %400 = vst [vmem:[#allocation3 + $0x98] sm:$0xff] 0
          %401 = vst [vmem:[#allocation3 + $0xa0] sm:$0xff] 0
          %402 = vst [vmem:[#allocation3 + $0xa8] sm:$0xff] 0
          %403 = vst [vmem:[#allocation3 + $0xb0] sm:$0xff] 0
          %404 = vst [vmem:[#allocation3 + $0xb8] sm:$0xff] 0
          %405 = vst [vmem:[#allocation3 + $0xc0] sm:$0xff] 0
          %406 = vst [vmem:[#allocation3 + $0xc8] sm:$0xff] 0
          %407 = vst [vmem:[#allocation3 + $0xd0] sm:$0xff] 0
          %408 = vst [vmem:[#allocation3 + $0xd8] sm:$0xff] 0
        $region44: #{tpu_custom_call.1} parent=31 // pred_fallthru
          _
        %v409 = vld [vmem:[%s282] sm:$0xf]
        %v410 = vld [vmem:[%s282 + $0x4] sm:$0xf]
        %v413 = vunpack.c.l.b16 %v409
        %v414 = vunpack.c.l.b16 %v410
        %v415 = vpack.c.b16 %v414, %v413
        %417 = vst [vmem:[#allocation3 + $0x10] sm:$0xff] %v415
        %s418 = scalar_lea.vmem %s282, 8 [#allocation4]
        %v419 = vld [vmem:[%s418] sm:$0xf]
        %v420 = vld [vmem:[%s418 + $0x4] sm:$0xf]
        %v423 = vunpack.c.l.b16 %v419
        %v424 = vunpack.c.l.b16 %v420
        %v425 = vpack.c.b16 %v423, %v423
        %v426 = vpack.c.b16 %v424, %v424
        %429 = vst [vmem:[#allocation3 + $0x18] sm:$0xf0] %v425
        %430 = vst [vmem:[#allocation3 + $0x20] sm:$0xf] %v426
        %s431 = scalar_lea.vmem %s282, 16 [#allocation4]
        %v432 = vld [vmem:[%s431] sm:$0xf]
        %v433 = vld [vmem:[%s431 + $0x4] sm:$0xf]
        %v436 = vunpack.c.l.b16 %v432
        %v437 = vunpack.c.l.b16 %v433
        %v438 = vpack.c.b16 %v437, %v436
        %440 = vst [vmem:[#allocation3 + $0x28] sm:$0xff] %v438
        %s441 = scalar_lea.vmem %s282, 24 [#allocation4]
        %v442 = vld [vmem:[%s441] sm:$0xf]
        %v443 = vld [vmem:[%s441 + $0x4] sm:$0xf]
        %v446 = vunpack.c.l.b16 %v442
        %v447 = vunpack.c.l.b16 %v443
        %v448 = vpack.c.b16 %v446, %v446
        %v449 = vpack.c.b16 %v447, %v447
        %452 = vst [vmem:[#allocation3 + $0x30] sm:$0xf0] %v448
        %453 = vst [vmem:[#allocation3 + $0x38] sm:$0xf] %v449
        %s454 = scalar_lea.vmem %s282, 32 [#allocation4]
        %v455 = vld [vmem:[%s454] sm:$0xf]
        %v456 = vld [vmem:[%s454 + $0x4] sm:$0xf]
        %v459 = vunpack.c.l.b16 %v455
        %v460 = vunpack.c.l.b16 %v456
        %v461 = vpack.c.b16 %v460, %v459
        %463 = vst [vmem:[#allocation3 + $0x40] sm:$0xff] %v461
        %s464 = scalar_lea.vmem %s282, 40 [#allocation4]
        %v465 = vld [vmem:[%s464] sm:$0xf]
        %v466 = vld [vmem:[%s464 + $0x4] sm:$0xf]
        %v469 = vunpack.c.l.b16 %v465
        %v470 = vunpack.c.l.b16 %v466
        %v471 = vpack.c.b16 %v469, %v469
        %v472 = vpack.c.b16 %v470, %v470
        %475 = vst [vmem:[#allocation3 + $0x48] sm:$0xf0] %v471
        %476 = vst [vmem:[#allocation3 + $0x50] sm:$0xf] %v472
        %s477 = scalar_lea.vmem %s282, 48 [#allocation4]
        %v478 = vld [vmem:[%s477] sm:$0xf]
        %v479 = vld [vmem:[%s477 + $0x4] sm:$0xf]
        %v482 = vunpack.c.l.b16 %v478
        %v483 = vunpack.c.l.b16 %v479
        %v484 = vpack.c.b16 %v483, %v482
        %486 = vst [vmem:[#allocation3 + $0x58] sm:$0xff] %v484
        %s487 = scalar_lea.vmem %s282, 56 [#allocation4]
        %v488 = vld [vmem:[%s487] sm:$0xf]
        %v489 = vld [vmem:[%s487 + $0x4] sm:$0xf]
        %v492 = vunpack.c.l.b16 %v488
        %v493 = vunpack.c.l.b16 %v489
        %v494 = vpack.c.b16 %v492, %v492
        %v495 = vpack.c.b16 %v493, %v493
        %498 = vst [vmem:[#allocation3 + $0x60] sm:$0xf0] %v494
        %499 = vst [vmem:[#allocation3 + $0x68] sm:$0xf] %v495
        %s500 = scalar_lea.vmem %s282, 64 [#allocation4]
        %v501 = vld [vmem:[%s500] sm:$0xf]
        %v502 = vld [vmem:[%s500 + $0x4] sm:$0xf]
        %v505 = vunpack.c.l.b16 %v501
        %v506 = vunpack.c.l.b16 %v502
        %v507 = vpack.c.b16 %v506, %v505
        %509 = vst [vmem:[#allocation3 + $0x70] sm:$0xff] %v507
        %s510 = scalar_lea.vmem %s282, 72 [#allocation4]
        %v511 = vld [vmem:[%s510] sm:$0xf]
        %v512 = vld [vmem:[%s510 + $0x4] sm:$0xf]
        %v515 = vunpack.c.l.b16 %v511
        %v516 = vunpack.c.l.b16 %v512
        %v517 = vpack.c.b16 %v515, %v515
        %v518 = vpack.c.b16 %v516, %v516
        %521 = vst [vmem:[#allocation3 + $0x78] sm:$0xf0] %v517
        %522 = vst [vmem:[#allocation3 + $0x80] sm:$0xf] %v518
        %s523 = scalar_lea.vmem %s282, 80 [#allocation4]
        %v524 = vld [vmem:[%s523] sm:$0xf]
        %v525 = vld [vmem:[%s523 + $0x4] sm:$0xf]
        %v528 = vunpack.c.l.b16 %v524
        %v529 = vunpack.c.l.b16 %v525
        %v530 = vpack.c.b16 %v529, %v528
        %532 = vst [vmem:[#allocation3 + $0x88] sm:$0xff] %v530
        %s533 = scalar_lea.vmem %s282, 88 [#allocation4]
        %v534 = vld [vmem:[%s533] sm:$0xf]
        %v535 = vld [vmem:[%s533 + $0x4] sm:$0xf]
        %v538 = vunpack.c.l.b16 %v534
        %v539 = vunpack.c.l.b16 %v535
        %v540 = vpack.c.b16 %v538, %v538
        %v541 = vpack.c.b16 %v539, %v539
        %544 = vst [vmem:[#allocation3 + $0x90] sm:$0xf0] %v540
        %545 = vst [vmem:[#allocation3 + $0x98] sm:$0xf] %v541
        %s546 = scalar_lea.vmem %s282, 96 [#allocation4]
        %v547 = vld [vmem:[%s546] sm:$0xf]
        %v548 = vld [vmem:[%s546 + $0x4] sm:$0xf]
        %v551 = vunpack.c.l.b16 %v547
        %v552 = vunpack.c.l.b16 %v548
        %v553 = vpack.c.b16 %v552, %v551
        %555 = vst [vmem:[#allocation3 + $0xa0] sm:$0xff] %v553
        %s556 = scalar_lea.vmem %s282, 104 [#allocation4]
        %v557 = vld [vmem:[%s556] sm:$0xf]
        %v558 = vld [vmem:[%s556 + $0x4] sm:$0xf]
        %v561 = vunpack.c.l.b16 %v557
        %v562 = vunpack.c.l.b16 %v558
        %v563 = vpack.c.b16 %v561, %v561
        %v564 = vpack.c.b16 %v562, %v562
        %567 = vst [vmem:[#allocation3 + $0xa8] sm:$0xf0] %v563
        %568 = vst [vmem:[#allocation3 + $0xb0] sm:$0xf] %v564
        %s569 = scalar_lea.vmem %s282, 112 [#allocation4]
        %v570 = vld [vmem:[%s569] sm:$0xf]
        %v571 = vld [vmem:[%s569 + $0x4] sm:$0xf]
        %v574 = vunpack.c.l.b16 %v570
        %v575 = vunpack.c.l.b16 %v571
        %v576 = vpack.c.b16 %v575, %v574
        %578 = vst [vmem:[#allocation3 + $0xb8] sm:$0xff] %v576
        %s579 = scalar_lea.vmem %s282, 120 [#allocation4]
        %v580 = vld [vmem:[%s579] sm:$0xf]
        %v581 = vld [vmem:[%s579 + $0x4] sm:$0xf]
        %v584 = vunpack.c.l.b16 %v580
        %v585 = vunpack.c.l.b16 %v581
        %v586 = vpack.c.b16 %v584, %v584
        %v587 = vpack.c.b16 %v585, %v585
        %590 = vst [vmem:[#allocation3 + $0xc0] sm:$0xf0] %v586
        %591 = vst [vmem:[#allocation3 + $0xc8] sm:$0xf] %v587
        %v592 = vld [vmem:[#allocation3] sm:$0xf8]
        %v593 = vld [vmem:[#allocation3 + $0x8] sm:$0xff]
        %v594 = vld [vmem:[#allocation3 + $0x10] sm:$0xff]
        %v595 = vld [vmem:[#allocation3 + $0x18] sm:$0xff]
        %v596 = vld [vmem:[#allocation3 + $0x20] sm:$0xff]
        %v597 = vld [vmem:[#allocation3 + $0x28] sm:$0xff]
        %v598 = vld [vmem:[#allocation3 + $0x30] sm:$0xff]
        %v599 = vld [vmem:[#allocation3 + $0x38] sm:$0xff]
        %v600 = vld [vmem:[#allocation3 + $0x40] sm:$0xff]
        %v601 = vld [vmem:[#allocation3 + $0x48] sm:$0xff]
        %v602 = vld [vmem:[#allocation3 + $0x50] sm:$0xff]
        %v603 = vld [vmem:[#allocation3 + $0x58] sm:$0xff]
        %v604 = vld [vmem:[#allocation3 + $0x60] sm:$0xff]
        %v605 = vld [vmem:[#allocation3 + $0x68] sm:$0xff]
        %v606 = vld [vmem:[#allocation3 + $0x70] sm:$0xff]
        %v607 = vld [vmem:[#allocation3 + $0x78] sm:$0xff]
        %v608 = vld [vmem:[#allocation3 + $0x80] sm:$0xff]
        %v609 = vld [vmem:[#allocation3 + $0x88] sm:$0xff]
        %v610 = vld [vmem:[#allocation3 + $0x90] sm:$0xff]
        %v611 = vld [vmem:[#allocation3 + $0x98] sm:$0xff]
        %v612 = vld [vmem:[#allocation3 + $0xa0] sm:$0xff]
        %v613 = vld [vmem:[#allocation3 + $0xa8] sm:$0xff]
        %v614 = vld [vmem:[#allocation3 + $0xb0] sm:$0xff]
        %v615 = vld [vmem:[#allocation3 + $0xb8] sm:$0xff]
        %v616 = vld [vmem:[#allocation3 + $0xc0] sm:$0xf]
        %v617 = vld [vmem:[#allocation2] sm:$0xff]
        %v618 = vld [vmem:[#allocation2 + $0x8] sm:$0xff]
        %v619 = vld [vmem:[#allocation2 + $0x10] sm:$0xff]
        %v620 = vld [vmem:[#allocation2 + $0x18] sm:$0xff]
        %v621 = vld [vmem:[#allocation2 + $0x20] sm:$0xff]
        %v622 = vld [vmem:[#allocation2 + $0x28] sm:$0xff]
        %v623 = vld [vmem:[#allocation2 + $0x30] sm:$0xff]
        %v624 = vld [vmem:[#allocation2 + $0x38] sm:$0xff]
        %v625 = vld [vmem:[#allocation2 + $0x40] sm:$0xff]
        %v626 = vld [vmem:[#allocation2 + $0x48] sm:$0xff]
        %v627 = vld [vmem:[#allocation2 + $0x50] sm:$0xff]
        %v628 = vld [vmem:[#allocation2 + $0x58] sm:$0xff]
        %v629 = vld [vmem:[#allocation2 + $0x60] sm:$0xff]
        %v630 = vld [vmem:[#allocation2 + $0x68] sm:$0xff]
        %v631 = vld [vmem:[#allocation2 + $0x70] sm:$0xff]
        %v632 = vld [vmem:[#allocation2 + $0x78] sm:$0xff]
        %v633 = vld [vmem:[#allocation2 + $0x80] sm:$0xff]
        %v634 = vld [vmem:[#allocation2 + $0x88] sm:$0xff]
        %v635 = vld [vmem:[#allocation2 + $0x90] sm:$0xff]
        %v636 = vld [vmem:[#allocation2 + $0x98] sm:$0xff]
        %v637 = vld [vmem:[#allocation2 + $0xa0] sm:$0xff]
        %v638 = vld [vmem:[#allocation2 + $0xa8] sm:$0xff]
        %v639 = vld [vmem:[#allocation2 + $0xb0] sm:$0xff]
        %v640 = vld [vmem:[#allocation2 + $0xb8] sm:$0xff]
        %v641 = vld [vmem:[#allocation2 + $0xc0] sm:$0xff]
        %v642 = vld [vmem:[#allocation2 + $0xc8] sm:$0xff]
        %v643 = vld [vmem:[#allocation2 + $0xd0] sm:$0xff]
        %v644 = vld [vmem:[#allocation2 + $0xd8] sm:$0xff]
        %v645 = vld [vmem:[#allocation2 + $0xe0] sm:$0xff]
        %v646 = vld [vmem:[#allocation2 + $0xe8] sm:$0xff]
        %v647 = vld [vmem:[#allocation2 + $0xf0] sm:$0xff]
        %v648 = vld [vmem:[#allocation2 + $0xf8] sm:$0xff]
        %v649 = vld [vmem:[#allocation2 + $0x100] sm:$0xff]
        %v650 = vld [vmem:[#allocation2 + $0x108] sm:$0xff]
        %v651 = vld [vmem:[#allocation2 + $0x110] sm:$0xff]
        %v652 = vld [vmem:[#allocation2 + $0x118] sm:$0xff]
        %v653 = vld [vmem:[#allocation2 + $0x120] sm:$0xff]
        %v654 = vld [vmem:[#allocation2 + $0x128] sm:$0xff]
        %v655 = vld [vmem:[#allocation2 + $0x130] sm:$0xff]
        %v656 = vld [vmem:[#allocation2 + $0x138] sm:$0xff]
        %v657 = vld [vmem:[#allocation2 + $0x140] sm:$0xff]
        %v658 = vld [vmem:[#allocation2 + $0x148] sm:$0xff]
        %v659 = vld [vmem:[#allocation2 + $0x150] sm:$0xff]
        %v660 = vld [vmem:[#allocation2 + $0x158] sm:$0xff]
        %v661 = vld [vmem:[#allocation2 + $0x160] sm:$0xff]
        %v662 = vld [vmem:[#allocation2 + $0x168] sm:$0xff]
        %v663 = vld [vmem:[#allocation2 + $0x170] sm:$0xff]
        %v664 = vld [vmem:[#allocation2 + $0x178] sm:$0xff]
        %v665 = vld [vmem:[#allocation7] sm:$0xf]
        %v666 = vld [vmem:[#allocation7 + $0x4] sm:$0xf]
        %v667 = vld [vmem:[#allocation7 + $0x8] sm:$0xf]
        %v668 = vld [vmem:[#allocation7 + $0xc] sm:$0xf]
        %v669 = vld [vmem:[#allocation7 + $0x10] sm:$0xf]
        %v670 = vld [vmem:[#allocation7 + $0x14] sm:$0xf]
        %v671 = vld [vmem:[#allocation7 + $0x18] sm:$0xf]
        %v672 = vld [vmem:[#allocation7 + $0x1c] sm:$0xf]
        %v673 = vld [vmem:[#allocation7 + $0x20] sm:$0xf]
        %v674 = vld [vmem:[#allocation7 + $0x24] sm:$0xf]
        %v675 = vld [vmem:[#allocation7 + $0x28] sm:$0xf]
        %v676 = vld [vmem:[#allocation7 + $0x2c] sm:$0xf]
        %v677 = vld [vmem:[#allocation7 + $0x30] sm:$0xf]
        %v678 = vld [vmem:[#allocation7 + $0x34] sm:$0xf]
        %v679 = vld [vmem:[#allocation7 + $0x38] sm:$0xf]
        %v680 = vld [vmem:[#allocation7 + $0x3c] sm:$0xf]
        %vm681 = vsmask.f32 4352
        %v683 = vshrl.u32 %v592, 16
        %v685 = vrot.slane %v683, 3
        %v686 = vshll.u32 %v592, 16
        %v688 = vrot.slane %v686, 4
        %v689 = vor.u32 %v685, %v688
        %v691 = vshrl.u32 %v593, 16
        %v693 = vrot.slane %v691, 3
        %v694 = vshll.u32 %v593, 16
        %v696 = vrot.slane %v694, 4
        %v697 = vor.u32 %v693, %v696
        %v698 = vsel %vm681, %v689, %v697
        %v700 = vshrl.u32 %v594, 16
        %v702 = vrot.slane %v700, 3
        %v703 = vshll.u32 %v594, 16
        %v705 = vrot.slane %v703, 4
        %v706 = vor.u32 %v702, %v705
        %v707 = vsel %vm681, %v697, %v706
        %v709 = vshrl.u32 %v595, 16
        %v711 = vrot.slane %v709, 3
        %v712 = vshll.u32 %v595, 16
        %v714 = vrot.slane %v712, 4
        %v715 = vor.u32 %v711, %v714
        %v716 = vsel %vm681, %v706, %v715
        %v718 = vshrl.u32 %v596, 16
        %v720 = vrot.slane %v718, 3
        %v721 = vshll.u32 %v596, 16
        %v723 = vrot.slane %v721, 4
        %v724 = vor.u32 %v720, %v723
        %v725 = vsel %vm681, %v715, %v724
        %v727 = vshrl.u32 %v597, 16
        %v729 = vrot.slane %v727, 3
        %v730 = vshll.u32 %v597, 16
        %v732 = vrot.slane %v730, 4
        %v733 = vor.u32 %v729, %v732
        %v734 = vsel %vm681, %v724, %v733
        %v736 = vshrl.u32 %v598, 16
        %v738 = vrot.slane %v736, 3
        %v739 = vshll.u32 %v598, 16
        %v741 = vrot.slane %v739, 4
        %v742 = vor.u32 %v738, %v741
        %v743 = vsel %vm681, %v733, %v742
        %v745 = vshrl.u32 %v599, 16
        %v747 = vrot.slane %v745, 3
        %v748 = vshll.u32 %v599, 16
        %v750 = vrot.slane %v748, 4
        %v751 = vor.u32 %v747, %v750
        %v752 = vsel %vm681, %v742, %v751
        %v754 = vshrl.u32 %v600, 16
        %v756 = vrot.slane %v754, 3
        %v757 = vshll.u32 %v600, 16
        %v759 = vrot.slane %v757, 4
        %v760 = vor.u32 %v756, %v759
        %v761 = vsel %vm681, %v751, %v760
        %v763 = vshrl.u32 %v601, 16
        %v765 = vrot.slane %v763, 3
        %v766 = vshll.u32 %v601, 16
        %v768 = vrot.slane %v766, 4
        %v769 = vor.u32 %v765, %v768
        %v770 = vsel %vm681, %v760, %v769
        %v772 = vshrl.u32 %v602, 16
        %v774 = vrot.slane %v772, 3
        %v775 = vshll.u32 %v602, 16
        %v777 = vrot.slane %v775, 4
        %v778 = vor.u32 %v774, %v777
        %v779 = vsel %vm681, %v769, %v778
        %v781 = vshrl.u32 %v603, 16
        %v783 = vrot.slane %v781, 3
        %v784 = vshll.u32 %v603, 16
        %v786 = vrot.slane %v784, 4
        %v787 = vor.u32 %v783, %v786
        %v788 = vsel %vm681, %v778, %v787
        %v790 = vshrl.u32 %v604, 16
        %v792 = vrot.slane %v790, 3
        %v793 = vshll.u32 %v604, 16
        %v795 = vrot.slane %v793, 4
        %v796 = vor.u32 %v792, %v795
        %v797 = vsel %vm681, %v787, %v796
        %v799 = vshrl.u32 %v605, 16
        %v801 = vrot.slane %v799, 3
        %v802 = vshll.u32 %v605, 16
        %v804 = vrot.slane %v802, 4
        %v805 = vor.u32 %v801, %v804
        %v806 = vsel %vm681, %v796, %v805
        %v808 = vshrl.u32 %v606, 16
        %v810 = vrot.slane %v808, 3
        %v811 = vshll.u32 %v606, 16
        %v813 = vrot.slane %v811, 4
        %v814 = vor.u32 %v810, %v813
        %v815 = vsel %vm681, %v805, %v814
        %v817 = vshrl.u32 %v607, 16
        %v819 = vrot.slane %v817, 3
        %v820 = vshll.u32 %v607, 16
        %v822 = vrot.slane %v820, 4
        %v823 = vor.u32 %v819, %v822
        %v824 = vsel %vm681, %v814, %v823
        %v826 = vshrl.u32 %v608, 16
        %v828 = vrot.slane %v826, 3
        %v829 = vshll.u32 %v608, 16
        %v831 = vrot.slane %v829, 4
        %v832 = vor.u32 %v828, %v831
        %v833 = vsel %vm681, %v823, %v832
        %v835 = vshrl.u32 %v609, 16
        %v837 = vrot.slane %v835, 3
        %v838 = vshll.u32 %v609, 16
        %v840 = vrot.slane %v838, 4
        %v841 = vor.u32 %v837, %v840
        %v842 = vsel %vm681, %v832, %v841
        %v844 = vshrl.u32 %v610, 16
        %v846 = vrot.slane %v844, 3
        %v847 = vshll.u32 %v610, 16
        %v849 = vrot.slane %v847, 4
        %v850 = vor.u32 %v846, %v849
        %v851 = vsel %vm681, %v841, %v850
        %v853 = vshrl.u32 %v611, 16
        %v855 = vrot.slane %v853, 3
        %v856 = vshll.u32 %v611, 16
        %v858 = vrot.slane %v856, 4
        %v859 = vor.u32 %v855, %v858
        %v860 = vsel %vm681, %v850, %v859
        %v862 = vshrl.u32 %v612, 16
        %v864 = vrot.slane %v862, 3
        %v865 = vshll.u32 %v612, 16
        %v867 = vrot.slane %v865, 4
        %v868 = vor.u32 %v864, %v867
        %v869 = vsel %vm681, %v859, %v868
        %v871 = vshrl.u32 %v613, 16
        %v873 = vrot.slane %v871, 3
        %v874 = vshll.u32 %v613, 16
        %v876 = vrot.slane %v874, 4
        %v877 = vor.u32 %v873, %v876
        %v878 = vsel %vm681, %v868, %v877
        %v880 = vshrl.u32 %v614, 16
        %v882 = vrot.slane %v880, 3
        %v883 = vshll.u32 %v614, 16
        %v885 = vrot.slane %v883, 4
        %v886 = vor.u32 %v882, %v885
        %v887 = vsel %vm681, %v877, %v886
        %v889 = vshrl.u32 %v615, 16
        %v891 = vrot.slane %v889, 3
        %v892 = vshll.u32 %v615, 16
        %v894 = vrot.slane %v892, 4
        %v895 = vor.u32 %v891, %v894
        %v896 = vsel %vm681, %v886, %v895
        %v898 = vshrl.u32 %v616, 16
        %v900 = vrot.slane %v898, 3
        %v901 = vshll.u32 %v616, 16
        %v903 = vrot.slane %v901, 4
        %v904 = vor.u32 %v900, %v903
        %v905 = vsel %vm681, %v895, %v904
        %v946 = vunpack.c.l.b16 %v665
        %v947 = vunpack.c.l.b16 %v666
        %v948 = vunpack.c.l.b16 %v667
        %v949 = vunpack.c.l.b16 %v668
        %v950 = vunpack.c.l.b16 %v669
        %v951 = vunpack.c.l.b16 %v670
        %v952 = vunpack.c.l.b16 %v671
        %v953 = vunpack.c.l.b16 %v672
        %v954 = vunpack.c.l.b16 %v673
        %v955 = vunpack.c.l.b16 %v674
        %v956 = vunpack.c.l.b16 %v675
        %v957 = vunpack.c.l.b16 %v676
        %v958 = vunpack.c.l.b16 %v677
        %v959 = vunpack.c.l.b16 %v678
        %v960 = vunpack.c.l.b16 %v679
        %v961 = vunpack.c.l.b16 %v680
        %v962 = vpack.c.b16 %v947, %v946
        %v963 = vpack.c.b16 %v949, %v948
        %v964 = vpack.c.b16 %v951, %v950
        %v965 = vpack.c.b16 %v953, %v952
        %v966 = vpack.c.b16 %v955, %v954
        %v967 = vpack.c.b16 %v957, %v956
        %v968 = vpack.c.b16 %v959, %v958
        %v969 = vpack.c.b16 %v961, %v960
        %978 = vmatprep.subr.bf16.mxu0 0
        %979 = vmatpush1.bf16.msra.mxu0 %v962
        %980 = vmatprep.subr.bf16.mxu0 0
        %981 = vmatpush1.bf16.msra.mxu0 %v963
        %982 = vmatprep.subr.bf16.mxu0 0
        %983 = vmatpush1.bf16.msra.mxu0 %v964
        %984 = vmatprep.subr.bf16.mxu0 0
        %985 = vmatpush1.bf16.msra.mxu0 %v965
        %986 = vmatprep.subr.bf16.mxu0 0
        %987 = vmatpush1.bf16.msra.mxu0 %v966
        %988 = vmatprep.subr.bf16.mxu0 0
        %989 = vmatpush1.bf16.msra.mxu0 %v967
        %990 = vmatprep.subr.bf16.mxu0 0
        %991 = vmatpush1.bf16.msra.mxu0 %v968
        %992 = vmatprep.subr.bf16.mxu0 0
        %993 = vmatpush1.bf16.msra.mxu0 %v969
        %994 = vmatprep.subr.bf16.mxu0 0
        %995 = vmatpush1.bf16.msra.mxu0 0
        %996 = vmatprep.subr.bf16.mxu0 0
        %997 = vmatpush1.bf16.msra.mxu0 0
        %998 = vmatprep.subr.bf16.mxu0 0
        %999 = vmatpush1.bf16.msra.mxu0 0
        %1000 = vmatprep.subr.bf16.mxu0 0
        %1001 = vmatpush1.bf16.msra.mxu0 0
        %1002 = vmatprep.subr.bf16.mxu0 0
        %1003 = vmatpush1.bf16.msra.mxu0 0
        %1004 = vmatprep.subr.bf16.mxu0 0
        %1005 = vmatpush1.bf16.msra.mxu0 0
        %1006 = vmatprep.subr.bf16.mxu0 0
        %1007 = vmatpush1.bf16.msra.mxu0 0
        %1008 = vmatprep.subr.bf16.mxu0 0
        %1009 = vmatpush1.bf16.msra.mxu0 0
        %1010 = vmatprep.mubr.bf16.mxu0 0
        %1011 = vmatmul.mubr.bf16.gmra.mrb[0].mxu0 %v698
        %v1012 = vpop.f32.mrb[0].mxu0
        %v1013 = vadd.f32 0.0, %v1012
        %v1014 = vpop.f32.mrb[0].mxu0
        %v1015 = vpop.f32.mrb[0].mxu0
        %v1016 = vadd.f32 0.0, %v1015
        %v1017 = vpop.f32.mrb[0].mxu0
        %1018 = vmatprep.mubr.bf16.mxu0 0
        %1019 = vmatmul.mubr.bf16.gmra.mrb[0].mxu0 %v707
        %v1020 = vpop.f32.mrb[0].mxu0
        %v1021 = vadd.f32 0.0, %v1020
        %v1022 = vpop.f32.mrb[0].mxu0
        %v1023 = vpop.f32.mrb[0].mxu0
        %v1024 = vadd.f32 0.0, %v1023
        %v1025 = vpop.f32.mrb[0].mxu0
        %1026 = vmatprep.mubr.bf16.mxu0 0
        %1027 = vmatmul.mubr.bf16.gmra.mrb[0].mxu0 %v716
        %v1028 = vpop.f32.mrb[0].mxu0
        %v1029 = vadd.f32 0.0, %v1028
        %v1030 = vpop.f32.mrb[0].mxu0
        %v1031 = vpop.f32.mrb[0].mxu0
        %v1032 = vadd.f32 0.0, %v1031
        %v1033 = vpop.f32.mrb[0].mxu0
        %1034 = vmatprep.mubr.bf16.mxu0 0
        %1035 = vmatmul.mubr.bf16.gmra.mrb[0].mxu0 %v725
        %v1036 = vpop.f32.mrb[0].mxu0
        %v1037 = vadd.f32 0.0, %v1036
        %v1038 = vpop.f32.mrb[0].mxu0
        %v1039 = vpop.f32.mrb[0].mxu0
        %v1040 = vadd.f32 0.0, %v1039
        %v1041 = vpop.f32.mrb[0].mxu0
        %1042 = vmatprep.mubr.bf16.mxu0 0
        %1043 = vmatmul.mubr.bf16.gmra.mrb[0].mxu0 %v734
        %v1044 = vpop.f32.mrb[0].mxu0
        %v1045 = vadd.f32 0.0, %v1044
        %v1046 = vpop.f32.mrb[0].mxu0
        %v1047 = vpop.f32.mrb[0].mxu0
        %v1048 = vadd.f32 0.0, %v1047
        %v1049 = vpop.f32.mrb[0].mxu0
        %1050 = vmatprep.mubr.bf16.mxu0 0
        %1051 = vmatmul.mubr.bf16.gmra.mrb[0].mxu0 %v743
        %v1052 = vpop.f32.mrb[0].mxu0
        %v1053 = vadd.f32 0.0, %v1052
        %v1054 = vpop.f32.mrb[0].mxu0
        %v1055 = vpop.f32.mrb[0].mxu0
        %v1056 = vadd.f32 0.0, %v1055
        %v1057 = vpop.f32.mrb[0].mxu0
        %1058 = vmatprep.mubr.bf16.mxu0 0
        %1059 = vmatmul.mubr.bf16.gmra.mrb[0].mxu0 %v752
        %v1060 = vpop.f32.mrb[0].mxu0
        %v1061 = vadd.f32 0.0, %v1060
        %v1062 = vpop.f32.mrb[0].mxu0
        %v1063 = vpop.f32.mrb[0].mxu0
        %v1064 = vadd.f32 0.0, %v1063
        %v1065 = vpop.f32.mrb[0].mxu0
        %1066 = vmatprep.mubr.bf16.mxu0 0
        %1067 = vmatmul.mubr.bf16.gmra.mrb[0].mxu0 %v761
        %v1068 = vpop.f32.mrb[0].mxu0
        %v1069 = vadd.f32 0.0, %v1068
        %v1070 = vpop.f32.mrb[0].mxu0
        %v1071 = vpop.f32.mrb[0].mxu0
        %v1072 = vadd.f32 0.0, %v1071
        %v1073 = vpop.f32.mrb[0].mxu0
        %1074 = vmatprep.mubr.bf16.mxu0 0
        %1075 = vmatmul.mubr.bf16.gmra.mrb[0].mxu0 %v770
        %v1076 = vpop.f32.mrb[0].mxu0
        %v1077 = vadd.f32 0.0, %v1076
        %v1078 = vpop.f32.mrb[0].mxu0
        %v1079 = vpop.f32.mrb[0].mxu0
        %v1080 = vadd.f32 0.0, %v1079
        %v1081 = vpop.f32.mrb[0].mxu0
        %1082 = vmatprep.mubr.bf16.mxu0 0
        %1083 = vmatmul.mubr.bf16.gmra.mrb[0].mxu0 %v779
        %v1084 = vpop.f32.mrb[0].mxu0
        %v1085 = vadd.f32 0.0, %v1084
        %v1086 = vpop.f32.mrb[0].mxu0
        %v1087 = vpop.f32.mrb[0].mxu0
        %v1088 = vadd.f32 0.0, %v1087
        %v1089 = vpop.f32.mrb[0].mxu0
        %1090 = vmatprep.mubr.bf16.mxu0 0
        %1091 = vmatmul.mubr.bf16.gmra.mrb[0].mxu0 %v788
        %v1092 = vpop.f32.mrb[0].mxu0
        %v1093 = vadd.f32 0.0, %v1092
        %v1094 = vpop.f32.mrb[0].mxu0
        %v1095 = vpop.f32.mrb[0].mxu0
        %v1096 = vadd.f32 0.0, %v1095
        %v1097 = vpop.f32.mrb[0].mxu0
        %1098 = vmatprep.mubr.bf16.mxu0 0
        %1099 = vmatmul.mubr.bf16.gmra.mrb[0].mxu0 %v797
        %v1100 = vpop.f32.mrb[0].mxu0
        %v1101 = vadd.f32 0.0, %v1100
        %v1102 = vpop.f32.mrb[0].mxu0
        %v1103 = vpop.f32.mrb[0].mxu0
        %v1104 = vadd.f32 0.0, %v1103
        %v1105 = vpop.f32.mrb[0].mxu0
        %1106 = vmatprep.mubr.bf16.mxu0 0
        %1107 = vmatmul.mubr.bf16.gmra.mrb[0].mxu0 %v806
        %v1108 = vpop.f32.mrb[0].mxu0
        %v1109 = vadd.f32 0.0, %v1108
        %v1110 = vpop.f32.mrb[0].mxu0
        %v1111 = vpop.f32.mrb[0].mxu0
        %v1112 = vadd.f32 0.0, %v1111
        %v1113 = vpop.f32.mrb[0].mxu0
        %1114 = vmatprep.mubr.bf16.mxu0 0
        %1115 = vmatmul.mubr.bf16.gmra.mrb[0].mxu0 %v815
        %v1116 = vpop.f32.mrb[0].mxu0
        %v1117 = vadd.f32 0.0, %v1116
        %v1118 = vpop.f32.mrb[0].mxu0
        %v1119 = vpop.f32.mrb[0].mxu0
        %v1120 = vadd.f32 0.0, %v1119
        %v1121 = vpop.f32.mrb[0].mxu0
        %1122 = vmatprep.mubr.bf16.mxu0 0
        %1123 = vmatmul.mubr.bf16.gmra.mrb[0].mxu0 %v824
        %v1124 = vpop.f32.mrb[0].mxu0
        %v1125 = vadd.f32 0.0, %v1124
        %v1126 = vpop.f32.mrb[0].mxu0
        %v1127 = vpop.f32.mrb[0].mxu0
        %v1128 = vadd.f32 0.0, %v1127
        %v1129 = vpop.f32.mrb[0].mxu0
        %1130 = vmatprep.mubr.bf16.mxu0 0
        %1131 = vmatmul.mubr.bf16.gmra.mrb[0].mxu0 %v833
        %v1132 = vpop.f32.mrb[0].mxu0
        %v1133 = vadd.f32 0.0, %v1132
        %v1134 = vpop.f32.mrb[0].mxu0
        %v1135 = vpop.f32.mrb[0].mxu0
        %v1136 = vadd.f32 0.0, %v1135
        %v1137 = vpop.f32.mrb[0].mxu0
        %1138 = vmatprep.mubr.bf16.mxu0 0
        %1139 = vmatmul.mubr.bf16.gmra.mrb[0].mxu0 %v842
        %v1140 = vpop.f32.mrb[0].mxu0
        %v1141 = vadd.f32 0.0, %v1140
        %v1142 = vpop.f32.mrb[0].mxu0
        %v1143 = vpop.f32.mrb[0].mxu0
        %v1144 = vadd.f32 0.0, %v1143
        %v1145 = vpop.f32.mrb[0].mxu0
        %1146 = vmatprep.mubr.bf16.mxu0 0
        %1147 = vmatmul.mubr.bf16.gmra.mrb[0].mxu0 %v851
        %v1148 = vpop.f32.mrb[0].mxu0
        %v1149 = vadd.f32 0.0, %v1148
        %v1150 = vpop.f32.mrb[0].mxu0
        %v1151 = vpop.f32.mrb[0].mxu0
        %v1152 = vadd.f32 0.0, %v1151
        %v1153 = vpop.f32.mrb[0].mxu0
        %1154 = vmatprep.mubr.bf16.mxu0 0
        %1155 = vmatmul.mubr.bf16.gmra.mrb[0].mxu0 %v860
        %v1156 = vpop.f32.mrb[0].mxu0
        %v1157 = vadd.f32 0.0, %v1156
        %v1158 = vpop.f32.mrb[0].mxu0
        %v1159 = vpop.f32.mrb[0].mxu0
        %v1160 = vadd.f32 0.0, %v1159
        %v1161 = vpop.f32.mrb[0].mxu0
        %1162 = vmatprep.mubr.bf16.mxu0 0
        %1163 = vmatmul.mubr.bf16.gmra.mrb[0].mxu0 %v869
        %v1164 = vpop.f32.mrb[0].mxu0
        %v1165 = vadd.f32 0.0, %v1164
        %v1166 = vpop.f32.mrb[0].mxu0
        %v1167 = vpop.f32.mrb[0].mxu0
        %v1168 = vadd.f32 0.0, %v1167
        %v1169 = vpop.f32.mrb[0].mxu0
        %1170 = vmatprep.mubr.bf16.mxu0 0
        %1171 = vmatmul.mubr.bf16.gmra.mrb[0].mxu0 %v878
        %v1172 = vpop.f32.mrb[0].mxu0
        %v1173 = vadd.f32 0.0, %v1172
        %v1174 = vpop.f32.mrb[0].mxu0
        %v1175 = vpop.f32.mrb[0].mxu0
        %v1176 = vadd.f32 0.0, %v1175
        %v1177 = vpop.f32.mrb[0].mxu0
        %1178 = vmatprep.mubr.bf16.mxu0 0
        %1179 = vmatmul.mubr.bf16.gmra.mrb[0].mxu0 %v887
        %v1180 = vpop.f32.mrb[0].mxu0
        %v1181 = vadd.f32 0.0, %v1180
        %v1182 = vpop.f32.mrb[0].mxu0
        %v1183 = vpop.f32.mrb[0].mxu0
        %v1184 = vadd.f32 0.0, %v1183
        %v1185 = vpop.f32.mrb[0].mxu0
        %1186 = vmatprep.mubr.bf16.mxu0 0
        %1187 = vmatmul.mubr.bf16.gmra.mrb[0].mxu0 %v896
        %v1188 = vpop.f32.mrb[0].mxu0
        %v1189 = vadd.f32 0.0, %v1188
        %v1190 = vpop.f32.mrb[0].mxu0
        %v1191 = vpop.f32.mrb[0].mxu0
        %v1192 = vadd.f32 0.0, %v1191
        %v1193 = vpop.f32.mrb[0].mxu0
        %1194 = vmatprep.mubr.bf16.mxu0 0
        %1195 = vmatmul.mubr.bf16.gmra.mrb[0].mxu0 %v905
        %v1196 = vpop.f32.mrb[0].mxu0
        %v1197 = vadd.f32 0.0, %v1196
        %v1198 = vpop.f32.mrb[0].mxu0
        %v1199 = vpop.f32.mrb[0].mxu0
        %v1200 = vadd.f32 0.0, %v1199
        %v1201 = vpop.f32.mrb[0].mxu0
        %1202 = vdwg.mxu0
        %v1203 = vadd.f32 %v617, %v1013
        %v1204 = vadd.f32 %v618, %v1016
        %v1205 = vadd.f32 %v619, %v1021
        %v1206 = vadd.f32 %v620, %v1024
        %v1207 = vadd.f32 %v621, %v1029
        %v1208 = vadd.f32 %v622, %v1032
        %v1209 = vadd.f32 %v623, %v1037
        %v1210 = vadd.f32 %v624, %v1040
        %v1211 = vadd.f32 %v625, %v1045
        %v1212 = vadd.f32 %v626, %v1048
        %v1213 = vadd.f32 %v627, %v1053
        %v1214 = vadd.f32 %v628, %v1056
        %v1215 = vadd.f32 %v629, %v1061
        %v1216 = vadd.f32 %v630, %v1064
        %v1217 = vadd.f32 %v631, %v1069
        %v1218 = vadd.f32 %v632, %v1072
        %v1219 = vadd.f32 %v633, %v1077
        %v1220 = vadd.f32 %v634, %v1080
        %v1221 = vadd.f32 %v635, %v1085
        %v1222 = vadd.f32 %v636, %v1088
        %v1223 = vadd.f32 %v637, %v1093
        %v1224 = vadd.f32 %v638, %v1096
        %v1225 = vadd.f32 %v639, %v1101
        %v1226 = vadd.f32 %v640, %v1104
        %v1227 = vadd.f32 %v641, %v1109
        %v1228 = vadd.f32 %v642, %v1112
        %v1229 = vadd.f32 %v643, %v1117
        %v1230 = vadd.f32 %v644, %v1120
        %v1231 = vadd.f32 %v645, %v1125
        %v1232 = vadd.f32 %v646, %v1128
        %v1233 = vadd.f32 %v647, %v1133
        %v1234 = vadd.f32 %v648, %v1136
        %v1235 = vadd.f32 %v649, %v1141
        %v1236 = vadd.f32 %v650, %v1144
        %v1237 = vadd.f32 %v651, %v1149
        %v1238 = vadd.f32 %v652, %v1152
        %v1239 = vadd.f32 %v653, %v1157
        %v1240 = vadd.f32 %v654, %v1160
        %v1241 = vadd.f32 %v655, %v1165
        %v1242 = vadd.f32 %v656, %v1168
        %v1243 = vadd.f32 %v657, %v1173
        %v1244 = vadd.f32 %v658, %v1176
        %v1245 = vadd.f32 %v659, %v1181
        %v1246 = vadd.f32 %v660, %v1184
        %v1247 = vadd.f32 %v661, %v1189
        %v1248 = vadd.f32 %v662, %v1192
        %v1249 = vadd.f32 %v663, %v1197
        %v1250 = vadd.f32 %v664, %v1200
        %1251 = vst [vmem:[#allocation2] sm:$0xff] %v1203
        %1252 = vst [vmem:[#allocation2 + $0x8] sm:$0xff] %v1204
        %1253 = vst [vmem:[#allocation2 + $0x10] sm:$0xff] %v1205
        %1254 = vst [vmem:[#allocation2 + $0x18] sm:$0xff] %v1206
        %1255 = vst [vmem:[#allocation2 + $0x20] sm:$0xff] %v1207
        %1256 = vst [vmem:[#allocation2 + $0x28] sm:$0xff] %v1208
        %1257 = vst [vmem:[#allocation2 + $0x30] sm:$0xff] %v1209
        %1258 = vst [vmem:[#allocation2 + $0x38] sm:$0xff] %v1210
        %1259 = vst [vmem:[#allocation2 + $0x40] sm:$0xff] %v1211
        %1260 = vst [vmem:[#allocation2 + $0x48] sm:$0xff] %v1212
        %1261 = vst [vmem:[#allocation2 + $0x50] sm:$0xff] %v1213
        %1262 = vst [vmem:[#allocation2 + $0x58] sm:$0xff] %v1214
        %1263 = vst [vmem:[#allocation2 + $0x60] sm:$0xff] %v1215
        %1264 = vst [vmem:[#allocation2 + $0x68] sm:$0xff] %v1216
        %1265 = vst [vmem:[#allocation2 + $0x70] sm:$0xff] %v1217
        %1266 = vst [vmem:[#allocation2 + $0x78] sm:$0xff] %v1218
        %1267 = vst [vmem:[#allocation2 + $0x80] sm:$0xff] %v1219
        %1268 = vst [vmem:[#allocation2 + $0x88] sm:$0xff] %v1220
        %1269 = vst [vmem:[#allocation2 + $0x90] sm:$0xff] %v1221
        %1270 = vst [vmem:[#allocation2 + $0x98] sm:$0xff] %v1222
        %1271 = vst [vmem:[#allocation2 + $0xa0] sm:$0xff] %v1223
        %1272 = vst [vmem:[#allocation2 + $0xa8] sm:$0xff] %v1224
        %1273 = vst [vmem:[#allocation2 + $0xb0] sm:$0xff] %v1225
        %1274 = vst [vmem:[#allocation2 + $0xb8] sm:$0xff] %v1226
        %1275 = vst [vmem:[#allocation2 + $0xc0] sm:$0xff] %v1227
        %1276 = vst [vmem:[#allocation2 + $0xc8] sm:$0xff] %v1228
        %1277 = vst [vmem:[#allocation2 + $0xd0] sm:$0xff] %v1229
        %1278 = vst [vmem:[#allocation2 + $0xd8] sm:$0xff] %v1230
        %1279 = vst [vmem:[#allocation2 + $0xe0] sm:$0xff] %v1231
        %1280 = vst [vmem:[#allocation2 + $0xe8] sm:$0xff] %v1232
        %1281 = vst [vmem:[#allocation2 + $0xf0] sm:$0xff] %v1233
        %1282 = vst [vmem:[#allocation2 + $0xf8] sm:$0xff] %v1234
        %1283 = vst [vmem:[#allocation2 + $0x100] sm:$0xff] %v1235
        %1284 = vst [vmem:[#allocation2 + $0x108] sm:$0xff] %v1236
        %1285 = vst [vmem:[#allocation2 + $0x110] sm:$0xff] %v1237
        %1286 = vst [vmem:[#allocation2 + $0x118] sm:$0xff] %v1238
        %1287 = vst [vmem:[#allocation2 + $0x120] sm:$0xff] %v1239
        %1288 = vst [vmem:[#allocation2 + $0x128] sm:$0xff] %v1240
        %1289 = vst [vmem:[#allocation2 + $0x130] sm:$0xff] %v1241
        %1290 = vst [vmem:[#allocation2 + $0x138] sm:$0xff] %v1242
        %1291 = vst [vmem:[#allocation2 + $0x140] sm:$0xff] %v1243
        %1292 = vst [vmem:[#allocation2 + $0x148] sm:$0xff] %v1244
        %1293 = vst [vmem:[#allocation2 + $0x150] sm:$0xff] %v1245
        %1294 = vst [vmem:[#allocation2 + $0x158] sm:$0xff] %v1246
        %1295 = vst [vmem:[#allocation2 + $0x160] sm:$0xff] %v1247
        %1296 = vst [vmem:[#allocation2 + $0x168] sm:$0xff] %v1248
        %1297 = vst [vmem:[#allocation2 + $0x170] sm:$0xff] %v1249
        %1298 = vst [vmem:[#allocation2 + $0x178] sm:$0xff] %v1250
        %v1299 = vld [vmem:[#allocation3] sm:$0xf0]
        %v1300 = vld [vmem:[#allocation3 + $0x8] sm:$0xff]
        %v1301 = vld [vmem:[#allocation3 + $0x10] sm:$0xff]
        %v1302 = vld [vmem:[#allocation3 + $0x18] sm:$0xff]
        %v1303 = vld [vmem:[#allocation3 + $0x20] sm:$0xff]
        %v1304 = vld [vmem:[#allocation3 + $0x28] sm:$0xff]
        %v1305 = vld [vmem:[#allocation3 + $0x30] sm:$0xff]
        %v1306 = vld [vmem:[#allocation3 + $0x38] sm:$0xff]
        %v1307 = vld [vmem:[#allocation3 + $0x40] sm:$0xff]
        %v1308 = vld [vmem:[#allocation3 + $0x48] sm:$0xff]
        %v1309 = vld [vmem:[#allocation3 + $0x50] sm:$0xff]
        %v1310 = vld [vmem:[#allocation3 + $0x58] sm:$0xff]
        %v1311 = vld [vmem:[#allocation3 + $0x60] sm:$0xff]
        %v1312 = vld [vmem:[#allocation3 + $0x68] sm:$0xff]
        %v1313 = vld [vmem:[#allocation3 + $0x70] sm:$0xff]
        %v1314 = vld [vmem:[#allocation3 + $0x78] sm:$0xff]
        %v1315 = vld [vmem:[#allocation3 + $0x80] sm:$0xff]
        %v1316 = vld [vmem:[#allocation3 + $0x88] sm:$0xff]
        %v1317 = vld [vmem:[#allocation3 + $0x90] sm:$0xff]
        %v1318 = vld [vmem:[#allocation3 + $0x98] sm:$0xff]
        %v1319 = vld [vmem:[#allocation3 + $0xa0] sm:$0xff]
        %v1320 = vld [vmem:[#allocation3 + $0xa8] sm:$0xff]
        %v1321 = vld [vmem:[#allocation3 + $0xb0] sm:$0xff]
        %v1322 = vld [vmem:[#allocation3 + $0xb8] sm:$0xff]
        %v1323 = vld [vmem:[#allocation3 + $0xc0] sm:$0xf]
        %v1324 = vld [vmem:[#allocation2] sm:$0xff]
        %v1325 = vld [vmem:[#allocation2 + $0x8] sm:$0xff]
        %v1326 = vld [vmem:[#allocation2 + $0x10] sm:$0xff]
        %v1327 = vld [vmem:[#allocation2 + $0x18] sm:$0xff]
        %v1328 = vld [vmem:[#allocation2 + $0x20] sm:$0xff]
        %v1329 = vld [vmem:[#allocation2 + $0x28] sm:$0xff]
        %v1330 = vld [vmem:[#allocation2 + $0x30] sm:$0xff]
        %v1331 = vld [vmem:[#allocation2 + $0x38] sm:$0xff]
        %v1332 = vld [vmem:[#allocation2 + $0x40] sm:$0xff]
        %v1333 = vld [vmem:[#allocation2 + $0x48] sm:$0xff]
        %v1334 = vld [vmem:[#allocation2 + $0x50] sm:$0xff]
        %v1335 = vld [vmem:[#allocation2 + $0x58] sm:$0xff]
        %v1336 = vld [vmem:[#allocation2 + $0x60] sm:$0xff]
        %v1337 = vld [vmem:[#allocation2 + $0x68] sm:$0xff]
        %v1338 = vld [vmem:[#allocation2 + $0x70] sm:$0xff]
        %v1339 = vld [vmem:[#allocation2 + $0x78] sm:$0xff]
        %v1340 = vld [vmem:[#allocation2 + $0x80] sm:$0xff]
        %v1341 = vld [vmem:[#allocation2 + $0x88] sm:$0xff]
        %v1342 = vld [vmem:[#allocation2 + $0x90] sm:$0xff]
        %v1343 = vld [vmem:[#allocation2 + $0x98] sm:$0xff]
        %v1344 = vld [vmem:[#allocation2 + $0xa0] sm:$0xff]
        %v1345 = vld [vmem:[#allocation2 + $0xa8] sm:$0xff]
        %v1346 = vld [vmem:[#allocation2 + $0xb0] sm:$0xff]
        %v1347 = vld [vmem:[#allocation2 + $0xb8] sm:$0xff]
        %v1348 = vld [vmem:[#allocation2 + $0xc0] sm:$0xff]
        %v1349 = vld [vmem:[#allocation2 + $0xc8] sm:$0xff]
        %v1350 = vld [vmem:[#allocation2 + $0xd0] sm:$0xff]
        %v1351 = vld [vmem:[#allocation2 + $0xd8] sm:$0xff]
        %v1352 = vld [vmem:[#allocation2 + $0xe0] sm:$0xff]
        %v1353 = vld [vmem:[#allocation2 + $0xe8] sm:$0xff]
        %v1354 = vld [vmem:[#allocation2 + $0xf0] sm:$0xff]
        %v1355 = vld [vmem:[#allocation2 + $0xf8] sm:$0xff]
        %v1356 = vld [vmem:[#allocation2 + $0x100] sm:$0xff]
        %v1357 = vld [vmem:[#allocation2 + $0x108] sm:$0xff]
        %v1358 = vld [vmem:[#allocation2 + $0x110] sm:$0xff]
        %v1359 = vld [vmem:[#allocation2 + $0x118] sm:$0xff]
        %v1360 = vld [vmem:[#allocation2 + $0x120] sm:$0xff]
        %v1361 = vld [vmem:[#allocation2 + $0x128] sm:$0xff]
        %v1362 = vld [vmem:[#allocation2 + $0x130] sm:$0xff]
        %v1363 = vld [vmem:[#allocation2 + $0x138] sm:$0xff]
        %v1364 = vld [vmem:[#allocation2 + $0x140] sm:$0xff]
        %v1365 = vld [vmem:[#allocation2 + $0x148] sm:$0xff]
        %v1366 = vld [vmem:[#allocation2 + $0x150] sm:$0xff]
        %v1367 = vld [vmem:[#allocation2 + $0x158] sm:$0xff]
        %v1368 = vld [vmem:[#allocation2 + $0x160] sm:$0xff]
        %v1369 = vld [vmem:[#allocation2 + $0x168] sm:$0xff]
        %v1370 = vld [vmem:[#allocation2 + $0x170] sm:$0xff]
        %v1371 = vld [vmem:[#allocation2 + $0x178] sm:$0xff]
        %s1372 = scalar_lea.vmem [#allocation7], 64
        %v1373 = vld [vmem:[%s1372] sm:$0xf]
        %v1374 = vld [vmem:[%s1372 + $0x4] sm:$0xf]
        %v1375 = vld [vmem:[%s1372 + $0x8] sm:$0xf]
        %v1376 = vld [vmem:[%s1372 + $0xc] sm:$0xf]
        %v1377 = vld [vmem:[%s1372 + $0x10] sm:$0xf]
        %v1378 = vld [vmem:[%s1372 + $0x14] sm:$0xf]
        %v1379 = vld [vmem:[%s1372 + $0x18] sm:$0xf]
        %v1380 = vld [vmem:[%s1372 + $0x1c] sm:$0xf]
        %v1381 = vld [vmem:[%s1372 + $0x20] sm:$0xf]
        %v1382 = vld [vmem:[%s1372 + $0x24] sm:$0xf]
        %v1383 = vld [vmem:[%s1372 + $0x28] sm:$0xf]
        %v1384 = vld [vmem:[%s1372 + $0x2c] sm:$0xf]
        %v1385 = vld [vmem:[%s1372 + $0x30] sm:$0xf]
        %v1386 = vld [vmem:[%s1372 + $0x34] sm:$0xf]
        %v1387 = vld [vmem:[%s1372 + $0x38] sm:$0xf]
        %v1388 = vld [vmem:[%s1372 + $0x3c] sm:$0xf]
        %vm1414 = vcmask 1043456
        %v1415 = vrot.slane %v1299, 4
        %v1416 = vrot.slane %v1300, 4
        %v1417 = vsel %vm1414, %v1415, %v1416
        %v1418 = vrot.slane %v1301, 4
        %v1419 = vsel %vm1414, %v1416, %v1418
        %v1420 = vrot.slane %v1302, 4
        %v1421 = vsel %vm1414, %v1418, %v1420
        %v1422 = vrot.slane %v1303, 4
        %v1423 = vsel %vm1414, %v1420, %v1422
        %v1424 = vrot.slane %v1304, 4
        %v1425 = vsel %vm1414, %v1422, %v1424
        %v1426 = vrot.slane %v1305, 4
        %v1427 = vsel %vm1414, %v1424, %v1426
        %v1428 = vrot.slane %v1306, 4
        %v1429 = vsel %vm1414, %v1426, %v1428
        %v1430 = vrot.slane %v1307, 4
        %v1431 = vsel %vm1414, %v1428, %v1430
        %v1432 = vrot.slane %v1308, 4
        %v1433 = vsel %vm1414, %v1430, %v1432
        %v1434 = vrot.slane %v1309, 4
        %v1435 = vsel %vm1414, %v1432, %v1434
        %v1436 = vrot.slane %v1310, 4
        %v1437 = vsel %vm1414, %v1434, %v1436
        %v1438 = vrot.slane %v1311, 4
        %v1439 = vsel %vm1414, %v1436, %v1438
        %v1440 = vrot.slane %v1312, 4
        %v1441 = vsel %vm1414, %v1438, %v1440
        %v1442 = vrot.slane %v1313, 4
        %v1443 = vsel %vm1414, %v1440, %v1442
        %v1444 = vrot.slane %v1314, 4
        %v1445 = vsel %vm1414, %v1442, %v1444
        %v1446 = vrot.slane %v1315, 4
        %v1447 = vsel %vm1414, %v1444, %v1446
        %v1448 = vrot.slane %v1316, 4
        %v1449 = vsel %vm1414, %v1446, %v1448
        %v1450 = vrot.slane %v1317, 4
        %v1451 = vsel %vm1414, %v1448, %v1450
        %v1452 = vrot.slane %v1318, 4
        %v1453 = vsel %vm1414, %v1450, %v1452
        %v1454 = vrot.slane %v1319, 4
        %v1455 = vsel %vm1414, %v1452, %v1454
        %v1456 = vrot.slane %v1320, 4
        %v1457 = vsel %vm1414, %v1454, %v1456
        %v1458 = vrot.slane %v1321, 4
        %v1459 = vsel %vm1414, %v1456, %v1458
        %v1460 = vrot.slane %v1322, 4
        %v1461 = vsel %vm1414, %v1458, %v1460
        %v1462 = vrot.slane %v1323, 4
        %v1463 = vsel %vm1414, %v1460, %v1462
        %v1504 = vunpack.c.l.b16 %v1373
        %v1505 = vunpack.c.l.b16 %v1374
        %v1506 = vunpack.c.l.b16 %v1375
        %v1507 = vunpack.c.l.b16 %v1376
        %v1508 = vunpack.c.l.b16 %v1377
        %v1509 = vunpack.c.l.b16 %v1378
        %v1510 = vunpack.c.l.b16 %v1379
        %v1511 = vunpack.c.l.b16 %v1380
        %v1512 = vunpack.c.l.b16 %v1381
        %v1513 = vunpack.c.l.b16 %v1382
        %v1514 = vunpack.c.l.b16 %v1383
        %v1515 = vunpack.c.l.b16 %v1384
        %v1516 = vunpack.c.l.b16 %v1385
        %v1517 = vunpack.c.l.b16 %v1386
        %v1518 = vunpack.c.l.b16 %v1387
        %v1519 = vunpack.c.l.b16 %v1388
        %v1520 = vpack.c.b16 %v1505, %v1504
        %v1521 = vpack.c.b16 %v1507, %v1506
        %v1522 = vpack.c.b16 %v1509, %v1508
        %v1523 = vpack.c.b16 %v1511, %v1510
        %v1524 = vpack.c.b16 %v1513, %v1512
        %v1525 = vpack.c.b16 %v1515, %v1514
        %v1526 = vpack.c.b16 %v1517, %v1516
        %v1527 = vpack.c.b16 %v1519, %v1518
        %1536 = vmatprep.subr.bf16.mxu0 0
        %1537 = vmatpush1.bf16.msra.mxu0 %v1520
        %1538 = vmatprep.subr.bf16.mxu0 0
        %1539 = vmatpush1.bf16.msra.mxu0 %v1521
        %1540 = vmatprep.subr.bf16.mxu0 0
        %1541 = vmatpush1.bf16.msra.mxu0 %v1522
        %1542 = vmatprep.subr.bf16.mxu0 0
        %1543 = vmatpush1.bf16.msra.mxu0 %v1523
        %1544 = vmatprep.subr.bf16.mxu0 0
        %1545 = vmatpush1.bf16.msra.mxu0 %v1524
        %1546 = vmatprep.subr.bf16.mxu0 0
        %1547 = vmatpush1.bf16.msra.mxu0 %v1525
        %1548 = vmatprep.subr.bf16.mxu0 0
        %1549 = vmatpush1.bf16.msra.mxu0 %v1526
        %1550 = vmatprep.subr.bf16.mxu0 0
        %1551 = vmatpush1.bf16.msra.mxu0 %v1527
        %1552 = vmatprep.subr.bf16.mxu0 0
        %1553 = vmatpush1.bf16.msra.mxu0 0
        %1554 = vmatprep.subr.bf16.mxu0 0
        %1555 = vmatpush1.bf16.msra.mxu0 0
        %1556 = vmatprep.subr.bf16.mxu0 0
        %1557 = vmatpush1.bf16.msra.mxu0 0
        %1558 = vmatprep.subr.bf16.mxu0 0
        %1559 = vmatpush1.bf16.msra.mxu0 0
        %1560 = vmatprep.subr.bf16.mxu0 0
        %1561 = vmatpush1.bf16.msra.mxu0 0
        %1562 = vmatprep.subr.bf16.mxu0 0
        %1563 = vmatpush1.bf16.msra.mxu0 0
        %1564 = vmatprep.subr.bf16.mxu0 0
        %1565 = vmatpush1.bf16.msra.mxu0 0
        %1566 = vmatprep.subr.bf16.mxu0 0
        %1567 = vmatpush1.bf16.msra.mxu0 0
        %1568 = vmatprep.mubr.bf16.mxu0 0
        %1569 = vmatmul.mubr.bf16.gmra.mrb[0].mxu0 %v1417
        %v1570 = vpop.f32.mrb[0].mxu0
        %v1571 = vadd.f32 0.0, %v1570
        %v1572 = vpop.f32.mrb[0].mxu0
        %v1573 = vpop.f32.mrb[0].mxu0
        %v1574 = vadd.f32 0.0, %v1573
        %v1575 = vpop.f32.mrb[0].mxu0
        %1576 = vmatprep.mubr.bf16.mxu0 0
        %1577 = vmatmul.mubr.bf16.gmra.mrb[0].mxu0 %v1419
        %v1578 = vpop.f32.mrb[0].mxu0
        %v1579 = vadd.f32 0.0, %v1578
        %v1580 = vpop.f32.mrb[0].mxu0
        %v1581 = vpop.f32.mrb[0].mxu0
        %v1582 = vadd.f32 0.0, %v1581
        %v1583 = vpop.f32.mrb[0].mxu0
        %1584 = vmatprep.mubr.bf16.mxu0 0
        %1585 = vmatmul.mubr.bf16.gmra.mrb[0].mxu0 %v1421
        %v1586 = vpop.f32.mrb[0].mxu0
        %v1587 = vadd.f32 0.0, %v1586
        %v1588 = vpop.f32.mrb[0].mxu0
        %v1589 = vpop.f32.mrb[0].mxu0
        %v1590 = vadd.f32 0.0, %v1589
        %v1591 = vpop.f32.mrb[0].mxu0
        %1592 = vmatprep.mubr.bf16.mxu0 0
        %1593 = vmatmul.mubr.bf16.gmra.mrb[0].mxu0 %v1423
        %v1594 = vpop.f32.mrb[0].mxu0
        %v1595 = vadd.f32 0.0, %v1594
        %v1596 = vpop.f32.mrb[0].mxu0
        %v1597 = vpop.f32.mrb[0].mxu0
        %v1598 = vadd.f32 0.0, %v1597
        %v1599 = vpop.f32.mrb[0].mxu0
        %1600 = vmatprep.mubr.bf16.mxu0 0
        %1601 = vmatmul.mubr.bf16.gmra.mrb[0].mxu0 %v1425
        %v1602 = vpop.f32.mrb[0].mxu0
        %v1603 = vadd.f32 0.0, %v1602
        %v1604 = vpop.f32.mrb[0].mxu0
        %v1605 = vpop.f32.mrb[0].mxu0
        %v1606 = vadd.f32 0.0, %v1605
        %v1607 = vpop.f32.mrb[0].mxu0
        %1608 = vmatprep.mubr.bf16.mxu0 0
        %1609 = vmatmul.mubr.bf16.gmra.mrb[0].mxu0 %v1427
        %v1610 = vpop.f32.mrb[0].mxu0
        %v1611 = vadd.f32 0.0, %v1610
        %v1612 = vpop.f32.mrb[0].mxu0
        %v1613 = vpop.f32.mrb[0].mxu0
        %v1614 = vadd.f32 0.0, %v1613
        %v1615 = vpop.f32.mrb[0].mxu0
        %1616 = vmatprep.mubr.bf16.mxu0 0
        %1617 = vmatmul.mubr.bf16.gmra.mrb[0].mxu0 %v1429
        %v1618 = vpop.f32.mrb[0].mxu0
        %v1619 = vadd.f32 0.0, %v1618
        %v1620 = vpop.f32.mrb[0].mxu0
        %v1621 = vpop.f32.mrb[0].mxu0
        %v1622 = vadd.f32 0.0, %v1621
        %v1623 = vpop.f32.mrb[0].mxu0
        %1624 = vmatprep.mubr.bf16.mxu0 0
        %1625 = vmatmul.mubr.bf16.gmra.mrb[0].mxu0 %v1431
        %v1626 = vpop.f32.mrb[0].mxu0
        %v1627 = vadd.f32 0.0, %v1626
        %v1628 = vpop.f32.mrb[0].mxu0
        %v1629 = vpop.f32.mrb[0].mxu0
        %v1630 = vadd.f32 0.0, %v1629
        %v1631 = vpop.f32.mrb[0].mxu0
        %1632 = vmatprep.mubr.bf16.mxu0 0
        %1633 = vmatmul.mubr.bf16.gmra.mrb[0].mxu0 %v1433
        %v1634 = vpop.f32.mrb[0].mxu0
        %v1635 = vadd.f32 0.0, %v1634
        %v1636 = vpop.f32.mrb[0].mxu0
        %v1637 = vpop.f32.mrb[0].mxu0
        %v1638 = vadd.f32 0.0, %v1637
        %v1639 = vpop.f32.mrb[0].mxu0
        %1640 = vmatprep.mubr.bf16.mxu0 0
        %1641 = vmatmul.mubr.bf16.gmra.mrb[0].mxu0 %v1435
        %v1642 = vpop.f32.mrb[0].mxu0
        %v1643 = vadd.f32 0.0, %v1642
        %v1644 = vpop.f32.mrb[0].mxu0
        %v1645 = vpop.f32.mrb[0].mxu0
        %v1646 = vadd.f32 0.0, %v1645
        %v1647 = vpop.f32.mrb[0].mxu0
        %1648 = vmatprep.mubr.bf16.mxu0 0
        %1649 = vmatmul.mubr.bf16.gmra.mrb[0].mxu0 %v1437
        %v1650 = vpop.f32.mrb[0].mxu0
        %v1651 = vadd.f32 0.0, %v1650
        %v1652 = vpop.f32.mrb[0].mxu0
        %v1653 = vpop.f32.mrb[0].mxu0
        %v1654 = vadd.f32 0.0, %v1653
        %v1655 = vpop.f32.mrb[0].mxu0
        %1656 = vmatprep.mubr.bf16.mxu0 0
        %1657 = vmatmul.mubr.bf16.gmra.mrb[0].mxu0 %v1439
        %v1658 = vpop.f32.mrb[0].mxu0
        %v1659 = vadd.f32 0.0, %v1658
        %v1660 = vpop.f32.mrb[0].mxu0
        %v1661 = vpop.f32.mrb[0].mxu0
        %v1662 = vadd.f32 0.0, %v1661
        %v1663 = vpop.f32.mrb[0].mxu0
        %1664 = vmatprep.mubr.bf16.mxu0 0
        %1665 = vmatmul.mubr.bf16.gmra.mrb[0].mxu0 %v1441
        %v1666 = vpop.f32.mrb[0].mxu0
        %v1667 = vadd.f32 0.0, %v1666
        %v1668 = vpop.f32.mrb[0].mxu0
        %v1669 = vpop.f32.mrb[0].mxu0
        %v1670 = vadd.f32 0.0, %v1669
        %v1671 = vpop.f32.mrb[0].mxu0
        %1672 = vmatprep.mubr.bf16.mxu0 0
        %1673 = vmatmul.mubr.bf16.gmra.mrb[0].mxu0 %v1443
        %v1674 = vpop.f32.mrb[0].mxu0
        %v1675 = vadd.f32 0.0, %v1674
        %v1676 = vpop.f32.mrb[0].mxu0
        %v1677 = vpop.f32.mrb[0].mxu0
        %v1678 = vadd.f32 0.0, %v1677
        %v1679 = vpop.f32.mrb[0].mxu0
        %1680 = vmatprep.mubr.bf16.mxu0 0
        %1681 = vmatmul.mubr.bf16.gmra.mrb[0].mxu0 %v1445
        %v1682 = vpop.f32.mrb[0].mxu0
        %v1683 = vadd.f32 0.0, %v1682
        %v1684 = vpop.f32.mrb[0].mxu0
        %v1685 = vpop.f32.mrb[0].mxu0
        %v1686 = vadd.f32 0.0, %v1685
        %v1687 = vpop.f32.mrb[0].mxu0
        %1688 = vmatprep.mubr.bf16.mxu0 0
        %1689 = vmatmul.mubr.bf16.gmra.mrb[0].mxu0 %v1447
        %v1690 = vpop.f32.mrb[0].mxu0
        %v1691 = vadd.f32 0.0, %v1690
        %v1692 = vpop.f32.mrb[0].mxu0
        %v1693 = vpop.f32.mrb[0].mxu0
        %v1694 = vadd.f32 0.0, %v1693
        %v1695 = vpop.f32.mrb[0].mxu0
        %1696 = vmatprep.mubr.bf16.mxu0 0
        %1697 = vmatmul.mubr.bf16.gmra.mrb[0].mxu0 %v1449
        %v1698 = vpop.f32.mrb[0].mxu0
        %v1699 = vadd.f32 0.0, %v1698
        %v1700 = vpop.f32.mrb[0].mxu0
        %v1701 = vpop.f32.mrb[0].mxu0
        %v1702 = vadd.f32 0.0, %v1701
        %v1703 = vpop.f32.mrb[0].mxu0
        %1704 = vmatprep.mubr.bf16.mxu0 0
        %1705 = vmatmul.mubr.bf16.gmra.mrb[0].mxu0 %v1451
        %v1706 = vpop.f32.mrb[0].mxu0
        %v1707 = vadd.f32 0.0, %v1706
        %v1708 = vpop.f32.mrb[0].mxu0
        %v1709 = vpop.f32.mrb[0].mxu0
        %v1710 = vadd.f32 0.0, %v1709
        %v1711 = vpop.f32.mrb[0].mxu0
        %1712 = vmatprep.mubr.bf16.mxu0 0
        %1713 = vmatmul.mubr.bf16.gmra.mrb[0].mxu0 %v1453
        %v1714 = vpop.f32.mrb[0].mxu0
        %v1715 = vadd.f32 0.0, %v1714
        %v1716 = vpop.f32.mrb[0].mxu0
        %v1717 = vpop.f32.mrb[0].mxu0
        %v1718 = vadd.f32 0.0, %v1717
        %v1719 = vpop.f32.mrb[0].mxu0
        %1720 = vmatprep.mubr.bf16.mxu0 0
        %1721 = vmatmul.mubr.bf16.gmra.mrb[0].mxu0 %v1455
        %v1722 = vpop.f32.mrb[0].mxu0
        %v1723 = vadd.f32 0.0, %v1722
        %v1724 = vpop.f32.mrb[0].mxu0
        %v1725 = vpop.f32.mrb[0].mxu0
        %v1726 = vadd.f32 0.0, %v1725
        %v1727 = vpop.f32.mrb[0].mxu0
        %1728 = vmatprep.mubr.bf16.mxu0 0
        %1729 = vmatmul.mubr.bf16.gmra.mrb[0].mxu0 %v1457
        %v1730 = vpop.f32.mrb[0].mxu0
        %v1731 = vadd.f32 0.0, %v1730
        %v1732 = vpop.f32.mrb[0].mxu0
        %v1733 = vpop.f32.mrb[0].mxu0
        %v1734 = vadd.f32 0.0, %v1733
        %v1735 = vpop.f32.mrb[0].mxu0
        %1736 = vmatprep.mubr.bf16.mxu0 0
        %1737 = vmatmul.mubr.bf16.gmra.mrb[0].mxu0 %v1459
        %v1738 = vpop.f32.mrb[0].mxu0
        %v1739 = vadd.f32 0.0, %v1738
        %v1740 = vpop.f32.mrb[0].mxu0
        %v1741 = vpop.f32.mrb[0].mxu0
        %v1742 = vadd.f32 0.0, %v1741
        %v1743 = vpop.f32.mrb[0].mxu0
        %1744 = vmatprep.mubr.bf16.mxu0 0
        %1745 = vmatmul.mubr.bf16.gmra.mrb[0].mxu0 %v1461
        %v1746 = vpop.f32.mrb[0].mxu0
        %v1747 = vadd.f32 0.0, %v1746
        %v1748 = vpop.f32.mrb[0].mxu0
        %v1749 = vpop.f32.mrb[0].mxu0
        %v1750 = vadd.f32 0.0, %v1749
        %v1751 = vpop.f32.mrb[0].mxu0
        %1752 = vmatprep.mubr.bf16.mxu0 0
        %1753 = vmatmul.mubr.bf16.gmra.mrb[0].mxu0 %v1463
        %v1754 = vpop.f32.mrb[0].mxu0
        %v1755 = vadd.f32 0.0, %v1754
        %v1756 = vpop.f32.mrb[0].mxu0
        %v1757 = vpop.f32.mrb[0].mxu0
        %v1758 = vadd.f32 0.0, %v1757
        %v1759 = vpop.f32.mrb[0].mxu0
        %1760 = vdwg.mxu0
        %v1761 = vadd.f32 %v1324, %v1571
        %v1762 = vadd.f32 %v1325, %v1574
        %v1763 = vadd.f32 %v1326, %v1579
        %v1764 = vadd.f32 %v1327, %v1582
        %v1765 = vadd.f32 %v1328, %v1587
        %v1766 = vadd.f32 %v1329, %v1590
        %v1767 = vadd.f32 %v1330, %v1595
        %v1768 = vadd.f32 %v1331, %v1598
        %v1769 = vadd.f32 %v1332, %v1603
        %v1770 = vadd.f32 %v1333, %v1606
        %v1771 = vadd.f32 %v1334, %v1611
        %v1772 = vadd.f32 %v1335, %v1614
        %v1773 = vadd.f32 %v1336, %v1619
        %v1774 = vadd.f32 %v1337, %v1622
        %v1775 = vadd.f32 %v1338, %v1627
        %v1776 = vadd.f32 %v1339, %v1630
        %v1777 = vadd.f32 %v1340, %v1635
        %v1778 = vadd.f32 %v1341, %v1638
        %v1779 = vadd.f32 %v1342, %v1643
        %v1780 = vadd.f32 %v1343, %v1646
        %v1781 = vadd.f32 %v1344, %v1651
        %v1782 = vadd.f32 %v1345, %v1654
        %v1783 = vadd.f32 %v1346, %v1659
        %v1784 = vadd.f32 %v1347, %v1662
        %v1785 = vadd.f32 %v1348, %v1667
        %v1786 = vadd.f32 %v1349, %v1670
        %v1787 = vadd.f32 %v1350, %v1675
        %v1788 = vadd.f32 %v1351, %v1678
        %v1789 = vadd.f32 %v1352, %v1683
        %v1790 = vadd.f32 %v1353, %v1686
        %v1791 = vadd.f32 %v1354, %v1691
        %v1792 = vadd.f32 %v1355, %v1694
        %v1793 = vadd.f32 %v1356, %v1699
        %v1794 = vadd.f32 %v1357, %v1702
        %v1795 = vadd.f32 %v1358, %v1707
        %v1796 = vadd.f32 %v1359, %v1710
        %v1797 = vadd.f32 %v1360, %v1715
        %v1798 = vadd.f32 %v1361, %v1718
        %v1799 = vadd.f32 %v1362, %v1723
        %v1800 = vadd.f32 %v1363, %v1726
        %v1801 = vadd.f32 %v1364, %v1731
        %v1802 = vadd.f32 %v1365, %v1734
        %v1803 = vadd.f32 %v1366, %v1739
        %v1804 = vadd.f32 %v1367, %v1742
        %v1805 = vadd.f32 %v1368, %v1747
        %v1806 = vadd.f32 %v1369, %v1750
        %v1807 = vadd.f32 %v1370, %v1755
        %v1808 = vadd.f32 %v1371, %v1758
        %1809 = vst [vmem:[#allocation2] sm:$0xff] %v1761
        %1810 = vst [vmem:[#allocation2 + $0x8] sm:$0xff] %v1762
        %1811 = vst [vmem:[#allocation2 + $0x10] sm:$0xff] %v1763
        %1812 = vst [vmem:[#allocation2 + $0x18] sm:$0xff] %v1764
        %1813 = vst [vmem:[#allocation2 + $0x20] sm:$0xff] %v1765
        %1814 = vst [vmem:[#allocation2 + $0x28] sm:$0xff] %v1766
        %1815 = vst [vmem:[#allocation2 + $0x30] sm:$0xff] %v1767
        %1816 = vst [vmem:[#allocation2 + $0x38] sm:$0xff] %v1768
        %1817 = vst [vmem:[#allocation2 + $0x40] sm:$0xff] %v1769
        %1818 = vst [vmem:[#allocation2 + $0x48] sm:$0xff] %v1770
        %1819 = vst [vmem:[#allocation2 + $0x50] sm:$0xff] %v1771
        %1820 = vst [vmem:[#allocation2 + $0x58] sm:$0xff] %v1772
        %1821 = vst [vmem:[#allocation2 + $0x60] sm:$0xff] %v1773
        %1822 = vst [vmem:[#allocation2 + $0x68] sm:$0xff] %v1774
        %1823 = vst [vmem:[#allocation2 + $0x70] sm:$0xff] %v1775
        %1824 = vst [vmem:[#allocation2 + $0x78] sm:$0xff] %v1776
        %1825 = vst [vmem:[#allocation2 + $0x80] sm:$0xff] %v1777
        %1826 = vst [vmem:[#allocation2 + $0x88] sm:$0xff] %v1778
        %1827 = vst [vmem:[#allocation2 + $0x90] sm:$0xff] %v1779
        %1828 = vst [vmem:[#allocation2 + $0x98] sm:$0xff] %v1780
        %1829 = vst [vmem:[#allocation2 + $0xa0] sm:$0xff] %v1781
        %1830 = vst [vmem:[#allocation2 + $0xa8] sm:$0xff] %v1782
        %1831 = vst [vmem:[#allocation2 + $0xb0] sm:$0xff] %v1783
        %1832 = vst [vmem:[#allocation2 + $0xb8] sm:$0xff] %v1784
        %1833 = vst [vmem:[#allocation2 + $0xc0] sm:$0xff] %v1785
        %1834 = vst [vmem:[#allocation2 + $0xc8] sm:$0xff] %v1786
        %1835 = vst [vmem:[#allocation2 + $0xd0] sm:$0xff] %v1787
        %1836 = vst [vmem:[#allocation2 + $0xd8] sm:$0xff] %v1788
        %1837 = vst [vmem:[#allocation2 + $0xe0] sm:$0xff] %v1789
        %1838 = vst [vmem:[#allocation2 + $0xe8] sm:$0xff] %v1790
        %1839 = vst [vmem:[#allocation2 + $0xf0] sm:$0xff] %v1791
        %1840 = vst [vmem:[#allocation2 + $0xf8] sm:$0xff] %v1792
        %1841 = vst [vmem:[#allocation2 + $0x100] sm:$0xff] %v1793
        %1842 = vst [vmem:[#allocation2 + $0x108] sm:$0xff] %v1794
        %1843 = vst [vmem:[#allocation2 + $0x110] sm:$0xff] %v1795
        %1844 = vst [vmem:[#allocation2 + $0x118] sm:$0xff] %v1796
        %1845 = vst [vmem:[#allocation2 + $0x120] sm:$0xff] %v1797
        %1846 = vst [vmem:[#allocation2 + $0x128] sm:$0xff] %v1798
        %1847 = vst [vmem:[#allocation2 + $0x130] sm:$0xff] %v1799
        %1848 = vst [vmem:[#allocation2 + $0x138] sm:$0xff] %v1800
        %1849 = vst [vmem:[#allocation2 + $0x140] sm:$0xff] %v1801
        %1850 = vst [vmem:[#allocation2 + $0x148] sm:$0xff] %v1802
        %1851 = vst [vmem:[#allocation2 + $0x150] sm:$0xff] %v1803
        %1852 = vst [vmem:[#allocation2 + $0x158] sm:$0xff] %v1804
        %1853 = vst [vmem:[#allocation2 + $0x160] sm:$0xff] %v1805
        %1854 = vst [vmem:[#allocation2 + $0x168] sm:$0xff] %v1806
        %1855 = vst [vmem:[#allocation2 + $0x170] sm:$0xff] %v1807
        %1856 = vst [vmem:[#allocation2 + $0x178] sm:$0xff] %v1808
        %v1857 = vld [vmem:[#allocation3] sm:$0xf0]
        %v1858 = vld [vmem:[#allocation3 + $0x8] sm:$0xff]
        %v1859 = vld [vmem:[#allocation3 + $0x10] sm:$0xff]
        %v1860 = vld [vmem:[#allocation3 + $0x18] sm:$0xff]
        %v1861 = vld [vmem:[#allocation3 + $0x20] sm:$0xff]
        %v1862 = vld [vmem:[#allocation3 + $0x28] sm:$0xff]
        %v1863 = vld [vmem:[#allocation3 + $0x30] sm:$0xff]
        %v1864 = vld [vmem:[#allocation3 + $0x38] sm:$0xff]
        %v1865 = vld [vmem:[#allocation3 + $0x40] sm:$0xff]
        %v1866 = vld [vmem:[#allocation3 + $0x48] sm:$0xff]
        %v1867 = vld [vmem:[#allocation3 + $0x50] sm:$0xff]
        %v1868 = vld [vmem:[#allocation3 + $0x58] sm:$0xff]
        %v1869 = vld [vmem:[#allocation3 + $0x60] sm:$0xff]
        %v1870 = vld [vmem:[#allocation3 + $0x68] sm:$0xff]
        %v1871 = vld [vmem:[#allocation3 + $0x70] sm:$0xff]
        %v1872 = vld [vmem:[#allocation3 + $0x78] sm:$0xff]
        %v1873 = vld [vmem:[#allocation3 + $0x80] sm:$0xff]
        %v1874 = vld [vmem:[#allocation3 + $0x88] sm:$0xff]
        %v1875 = vld [vmem:[#allocation3 + $0x90] sm:$0xff]
        %v1876 = vld [vmem:[#allocation3 + $0x98] sm:$0xff]
        %v1877 = vld [vmem:[#allocation3 + $0xa0] sm:$0xff]
        %v1878 = vld [vmem:[#allocation3 + $0xa8] sm:$0xff]
        %v1879 = vld [vmem:[#allocation3 + $0xb0] sm:$0xff]
        %v1880 = vld [vmem:[#allocation3 + $0xb8] sm:$0xff]
        %v1881 = vld [vmem:[#allocation3 + $0xc0] sm:$0x1f]
        %v1882 = vld [vmem:[#allocation2] sm:$0xff]
        %v1883 = vld [vmem:[#allocation2 + $0x8] sm:$0xff]
        %v1884 = vld [vmem:[#allocation2 + $0x10] sm:$0xff]
        %v1885 = vld [vmem:[#allocation2 + $0x18] sm:$0xff]
        %v1886 = vld [vmem:[#allocation2 + $0x20] sm:$0xff]
        %v1887 = vld [vmem:[#allocation2 + $0x28] sm:$0xff]
        %v1888 = vld [vmem:[#allocation2 + $0x30] sm:$0xff]
        %v1889 = vld [vmem:[#allocation2 + $0x38] sm:$0xff]
        %v1890 = vld [vmem:[#allocation2 + $0x40] sm:$0xff]
        %v1891 = vld [vmem:[#allocation2 + $0x48] sm:$0xff]
        %v1892 = vld [vmem:[#allocation2 + $0x50] sm:$0xff]
        %v1893 = vld [vmem:[#allocation2 + $0x58] sm:$0xff]
        %v1894 = vld [vmem:[#allocation2 + $0x60] sm:$0xff]
        %v1895 = vld [vmem:[#allocation2 + $0x68] sm:$0xff]
        %v1896 = vld [vmem:[#allocation2 + $0x70] sm:$0xff]
        %v1897 = vld [vmem:[#allocation2 + $0x78] sm:$0xff]
        %v1898 = vld [vmem:[#allocation2 + $0x80] sm:$0xff]
        %v1899 = vld [vmem:[#allocation2 + $0x88] sm:$0xff]
        %v1900 = vld [vmem:[#allocation2 + $0x90] sm:$0xff]
        %v1901 = vld [vmem:[#allocation2 + $0x98] sm:$0xff]
        %v1902 = vld [vmem:[#allocation2 + $0xa0] sm:$0xff]
        %v1903 = vld [vmem:[#allocation2 + $0xa8] sm:$0xff]
        %v1904 = vld [vmem:[#allocation2 + $0xb0] sm:$0xff]
        %v1905 = vld [vmem:[#allocation2 + $0xb8] sm:$0xff]
        %v1906 = vld [vmem:[#allocation2 + $0xc0] sm:$0xff]
        %v1907 = vld [vmem:[#allocation2 + $0xc8] sm:$0xff]
        %v1908 = vld [vmem:[#allocation2 + $0xd0] sm:$0xff]
        %v1909 = vld [vmem:[#allocation2 + $0xd8] sm:$0xff]
        %v1910 = vld [vmem:[#allocation2 + $0xe0] sm:$0xff]
        %v1911 = vld [vmem:[#allocation2 + $0xe8] sm:$0xff]
        %v1912 = vld [vmem:[#allocation2 + $0xf0] sm:$0xff]
        %v1913 = vld [vmem:[#allocation2 + $0xf8] sm:$0xff]
        %v1914 = vld [vmem:[#allocation2 + $0x100] sm:$0xff]
        %v1915 = vld [vmem:[#allocation2 + $0x108] sm:$0xff]
        %v1916 = vld [vmem:[#allocation2 + $0x110] sm:$0xff]
        %v1917 = vld [vmem:[#allocation2 + $0x118] sm:$0xff]
        %v1918 = vld [vmem:[#allocation2 + $0x120] sm:$0xff]
        %v1919 = vld [vmem:[#allocation2 + $0x128] sm:$0xff]
        %v1920 = vld [vmem:[#allocation2 + $0x130] sm:$0xff]
        %v1921 = vld [vmem:[#allocation2 + $0x138] sm:$0xff]
        %v1922 = vld [vmem:[#allocation2 + $0x140] sm:$0xff]
        %v1923 = vld [vmem:[#allocation2 + $0x148] sm:$0xff]
        %v1924 = vld [vmem:[#allocation2 + $0x150] sm:$0xff]
        %v1925 = vld [vmem:[#allocation2 + $0x158] sm:$0xff]
        %v1926 = vld [vmem:[#allocation2 + $0x160] sm:$0xff]
        %v1927 = vld [vmem:[#allocation2 + $0x168] sm:$0xff]
        %v1928 = vld [vmem:[#allocation2 + $0x170] sm:$0xff]
        %v1929 = vld [vmem:[#allocation2 + $0x178] sm:$0xff]
        %s1930 = scalar_lea.vmem [#allocation7], 128
        %v1931 = vld [vmem:[%s1930] sm:$0xf]
        %v1932 = vld [vmem:[%s1930 + $0x4] sm:$0xf]
        %v1933 = vld [vmem:[%s1930 + $0x8] sm:$0xf]
        %v1934 = vld [vmem:[%s1930 + $0xc] sm:$0xf]
        %v1935 = vld [vmem:[%s1930 + $0x10] sm:$0xf]
        %v1936 = vld [vmem:[%s1930 + $0x14] sm:$0xf]
        %v1937 = vld [vmem:[%s1930 + $0x18] sm:$0xf]
        %v1938 = vld [vmem:[%s1930 + $0x1c] sm:$0xf]
        %v1939 = vld [vmem:[%s1930 + $0x20] sm:$0xf]
        %v1940 = vld [vmem:[%s1930 + $0x24] sm:$0xf]
        %v1941 = vld [vmem:[%s1930 + $0x28] sm:$0xf]
        %v1942 = vld [vmem:[%s1930 + $0x2c] sm:$0xf]
        %v1943 = vld [vmem:[%s1930 + $0x30] sm:$0xf]
        %v1944 = vld [vmem:[%s1930 + $0x34] sm:$0xf]
        %v1945 = vld [vmem:[%s1930 + $0x38] sm:$0xf]
        %v1946 = vld [vmem:[%s1930 + $0x3c] sm:$0xf]
        %vm1947 = vsmask.f32 3328
        %v1949 = vshrl.u32 %v1857, 16
        %v1951 = vrot.slane %v1949, 4
        %v1952 = vshll.u32 %v1857, 16
        %v1954 = vrot.slane %v1952, 5
        %v1955 = vor.u32 %v1951, %v1954
        %v1957 = vshrl.u32 %v1858, 16
        %v1959 = vrot.slane %v1957, 4
        %v1960 = vshll.u32 %v1858, 16
        %v1962 = vrot.slane %v1960, 5
        %v1963 = vor.u32 %v1959, %v1962
        %v1964 = vsel %vm1947, %v1955, %v1963
        %v1966 = vshrl.u32 %v1859, 16
        %v1968 = vrot.slane %v1966, 4
        %v1969 = vshll.u32 %v1859, 16
        %v1971 = vrot.slane %v1969, 5
        %v1972 = vor.u32 %v1968, %v1971
        %v1973 = vsel %vm1947, %v1963, %v1972
        %v1975 = vshrl.u32 %v1860, 16
        %v1977 = vrot.slane %v1975, 4
        %v1978 = vshll.u32 %v1860, 16
        %v1980 = vrot.slane %v1978, 5
        %v1981 = vor.u32 %v1977, %v1980
        %v1982 = vsel %vm1947, %v1972, %v1981
        %v1984 = vshrl.u32 %v1861, 16
        %v1986 = vrot.slane %v1984, 4
        %v1987 = vshll.u32 %v1861, 16
        %v1989 = vrot.slane %v1987, 5
        %v1990 = vor.u32 %v1986, %v1989
        %v1991 = vsel %vm1947, %v1981, %v1990
        %v1993 = vshrl.u32 %v1862, 16
        %v1995 = vrot.slane %v1993, 4
        %v1996 = vshll.u32 %v1862, 16
        %v1998 = vrot.slane %v1996, 5
        %v1999 = vor.u32 %v1995, %v1998
        %v2000 = vsel %vm1947, %v1990, %v1999
        %v2002 = vshrl.u32 %v1863, 16
        %v2004 = vrot.slane %v2002, 4
        %v2005 = vshll.u32 %v1863, 16
        %v2007 = vrot.slane %v2005, 5
        %v2008 = vor.u32 %v2004, %v2007
        %v2009 = vsel %vm1947, %v1999, %v2008
        %v2011 = vshrl.u32 %v1864, 16
        %v2013 = vrot.slane %v2011, 4
        %v2014 = vshll.u32 %v1864, 16
        %v2016 = vrot.slane %v2014, 5
        %v2017 = vor.u32 %v2013, %v2016
        %v2018 = vsel %vm1947, %v2008, %v2017
        %v2020 = vshrl.u32 %v1865, 16
        %v2022 = vrot.slane %v2020, 4
        %v2023 = vshll.u32 %v1865, 16
        %v2025 = vrot.slane %v2023, 5
        %v2026 = vor.u32 %v2022, %v2025
        %v2027 = vsel %vm1947, %v2017, %v2026
        %v2029 = vshrl.u32 %v1866, 16
        %v2031 = vrot.slane %v2029, 4
        %v2032 = vshll.u32 %v1866, 16
        %v2034 = vrot.slane %v2032, 5
        %v2035 = vor.u32 %v2031, %v2034
        %v2036 = vsel %vm1947, %v2026, %v2035
        %v2038 = vshrl.u32 %v1867, 16
        %v2040 = vrot.slane %v2038, 4
        %v2041 = vshll.u32 %v1867, 16
        %v2043 = vrot.slane %v2041, 5
        %v2044 = vor.u32 %v2040, %v2043
        %v2045 = vsel %vm1947, %v2035, %v2044
        %v2047 = vshrl.u32 %v1868, 16
        %v2049 = vrot.slane %v2047, 4
        %v2050 = vshll.u32 %v1868, 16
        %v2052 = vrot.slane %v2050, 5
        %v2053 = vor.u32 %v2049, %v2052
        %v2054 = vsel %vm1947, %v2044, %v2053
        %v2056 = vshrl.u32 %v1869, 16
        %v2058 = vrot.slane %v2056, 4
        %v2059 = vshll.u32 %v1869, 16
        %v2061 = vrot.slane %v2059, 5
        %v2062 = vor.u32 %v2058, %v2061
        %v2063 = vsel %vm1947, %v2053, %v2062
        %v2065 = vshrl.u32 %v1870, 16
        %v2067 = vrot.slane %v2065, 4
        %v2068 = vshll.u32 %v1870, 16
        %v2070 = vrot.slane %v2068, 5
        %v2071 = vor.u32 %v2067, %v2070
        %v2072 = vsel %vm1947, %v2062, %v2071
        %v2074 = vshrl.u32 %v1871, 16
        %v2076 = vrot.slane %v2074, 4
        %v2077 = vshll.u32 %v1871, 16
        %v2079 = vrot.slane %v2077, 5
        %v2080 = vor.u32 %v2076, %v2079
        %v2081 = vsel %vm1947, %v2071, %v2080
        %v2083 = vshrl.u32 %v1872, 16
        %v2085 = vrot.slane %v2083, 4
        %v2086 = vshll.u32 %v1872, 16
        %v2088 = vrot.slane %v2086, 5
        %v2089 = vor.u32 %v2085, %v2088
        %v2090 = vsel %vm1947, %v2080, %v2089
        %v2092 = vshrl.u32 %v1873, 16
        %v2094 = vrot.slane %v2092, 4
        %v2095 = vshll.u32 %v1873, 16
        %v2097 = vrot.slane %v2095, 5
        %v2098 = vor.u32 %v2094, %v2097
        %v2099 = vsel %vm1947, %v2089, %v2098
        %v2101 = vshrl.u32 %v1874, 16
        %v2103 = vrot.slane %v2101, 4
        %v2104 = vshll.u32 %v1874, 16
        %v2106 = vrot.slane %v2104, 5
        %v2107 = vor.u32 %v2103, %v2106
        %v2108 = vsel %vm1947, %v2098, %v2107
        %v2110 = vshrl.u32 %v1875, 16
        %v2112 = vrot.slane %v2110, 4
        %v2113 = vshll.u32 %v1875, 16
        %v2115 = vrot.slane %v2113, 5
        %v2116 = vor.u32 %v2112, %v2115
        %v2117 = vsel %vm1947, %v2107, %v2116
        %v2119 = vshrl.u32 %v1876, 16
        %v2121 = vrot.slane %v2119, 4
        %v2122 = vshll.u32 %v1876, 16
        %v2124 = vrot.slane %v2122, 5
        %v2125 = vor.u32 %v2121, %v2124
        %v2126 = vsel %vm1947, %v2116, %v2125
        %v2128 = vshrl.u32 %v1877, 16
        %v2130 = vrot.slane %v2128, 4
        %v2131 = vshll.u32 %v1877, 16
        %v2133 = vrot.slane %v2131, 5
        %v2134 = vor.u32 %v2130, %v2133
        %v2135 = vsel %vm1947, %v2125, %v2134
        %v2137 = vshrl.u32 %v1878, 16
        %v2139 = vrot.slane %v2137, 4
        %v2140 = vshll.u32 %v1878, 16
        %v2142 = vrot.slane %v2140, 5
        %v2143 = vor.u32 %v2139, %v2142
        %v2144 = vsel %vm1947, %v2134, %v2143
        %v2146 = vshrl.u32 %v1879, 16
        %v2148 = vrot.slane %v2146, 4
        %v2149 = vshll.u32 %v1879, 16
        %v2151 = vrot.slane %v2149, 5
        %v2152 = vor.u32 %v2148, %v2151
        %v2153 = vsel %vm1947, %v2143, %v2152
        %v2155 = vshrl.u32 %v1880, 16
        %v2157 = vrot.slane %v2155, 4
        %v2158 = vshll.u32 %v1880, 16
        %v2160 = vrot.slane %v2158, 5
        %v2161 = vor.u32 %v2157, %v2160
        %v2162 = vsel %vm1947, %v2152, %v2161
        %v2164 = vshrl.u32 %v1881, 16
        %v2166 = vrot.slane %v2164, 4
        %v2167 = vshll.u32 %v1881, 16
        %v2169 = vrot.slane %v2167, 5
        %v2170 = vor.u32 %v2166, %v2169
        %v2171 = vsel %vm1947, %v2161, %v2170
        %v2212 = vunpack.c.l.b16 %v1931
        %v2213 = vunpack.c.l.b16 %v1932
        %v2214 = vunpack.c.l.b16 %v1933
        %v2215 = vunpack.c.l.b16 %v1934
        %v2216 = vunpack.c.l.b16 %v1935
        %v2217 = vunpack.c.l.b16 %v1936
        %v2218 = vunpack.c.l.b16 %v1937
        %v2219 = vunpack.c.l.b16 %v1938
        %v2220 = vunpack.c.l.b16 %v1939
        %v2221 = vunpack.c.l.b16 %v1940
        %v2222 = vunpack.c.l.b16 %v1941
        %v2223 = vunpack.c.l.b16 %v1942
        %v2224 = vunpack.c.l.b16 %v1943
        %v2225 = vunpack.c.l.b16 %v1944
        %v2226 = vunpack.c.l.b16 %v1945
        %v2227 = vunpack.c.l.b16 %v1946
        %v2228 = vpack.c.b16 %v2213, %v2212
        %v2229 = vpack.c.b16 %v2215, %v2214
        %v2230 = vpack.c.b16 %v2217, %v2216
        %v2231 = vpack.c.b16 %v2219, %v2218
        %v2232 = vpack.c.b16 %v2221, %v2220
        %v2233 = vpack.c.b16 %v2223, %v2222
        %v2234 = vpack.c.b16 %v2225, %v2224
        %v2235 = vpack.c.b16 %v2227, %v2226
        %2244 = vmatprep.subr.bf16.mxu0 0
        %2245 = vmatpush1.bf16.msra.mxu0 %v2228
        %2246 = vmatprep.subr.bf16.mxu0 0
        %2247 = vmatpush1.bf16.msra.mxu0 %v2229
        %2248 = vmatprep.subr.bf16.mxu0 0
        %2249 = vmatpush1.bf16.msra.mxu0 %v2230
        %2250 = vmatprep.subr.bf16.mxu0 0
        %2251 = vmatpush1.bf16.msra.mxu0 %v2231
        %2252 = vmatprep.subr.bf16.mxu0 0
        %2253 = vmatpush1.bf16.msra.mxu0 %v2232
        %2254 = vmatprep.subr.bf16.mxu0 0
        %2255 = vmatpush1.bf16.msra.mxu0 %v2233
        %2256 = vmatprep.subr.bf16.mxu0 0
        %2257 = vmatpush1.bf16.msra.mxu0 %v2234
        %2258 = vmatprep.subr.bf16.mxu0 0
        %2259 = vmatpush1.bf16.msra.mxu0 %v2235
        %2260 = vmatprep.subr.bf16.mxu0 0
        %2261 = vmatpush1.bf16.msra.mxu0 0
        %2262 = vmatprep.subr.bf16.mxu0 0
        %2263 = vmatpush1.bf16.msra.mxu0 0
        %2264 = vmatprep.subr.bf16.mxu0 0
        %2265 = vmatpush1.bf16.msra.mxu0 0
        %2266 = vmatprep.subr.bf16.mxu0 0
        %2267 = vmatpush1.bf16.msra.mxu0 0
        %2268 = vmatprep.subr.bf16.mxu0 0
        %2269 = vmatpush1.bf16.msra.mxu0 0
        %2270 = vmatprep.subr.bf16.mxu0 0
        %2271 = vmatpush1.bf16.msra.mxu0 0
        %2272 = vmatprep.subr.bf16.mxu0 0
        %2273 = vmatpush1.bf16.msra.mxu0 0
        %2274 = vmatprep.subr.bf16.mxu0 0
        %2275 = vmatpush1.bf16.msra.mxu0 0
        %2276 = vmatprep.mubr.bf16.mxu0 0
        %2277 = vmatmul.mubr.bf16.gmra.mrb[0].mxu0 %v1964
        %v2278 = vpop.f32.mrb[0].mxu0
        %v2279 = vadd.f32 0.0, %v2278
        %v2280 = vpop.f32.mrb[0].mxu0
        %v2281 = vpop.f32.mrb[0].mxu0
        %v2282 = vadd.f32 0.0, %v2281
        %v2283 = vpop.f32.mrb[0].mxu0
        %2284 = vmatprep.mubr.bf16.mxu0 0
        %2285 = vmatmul.mubr.bf16.gmra.mrb[0].mxu0 %v1973
        %v2286 = vpop.f32.mrb[0].mxu0
        %v2287 = vadd.f32 0.0, %v2286
        %v2288 = vpop.f32.mrb[0].mxu0
        %v2289 = vpop.f32.mrb[0].mxu0
        %v2290 = vadd.f32 0.0, %v2289
        %v2291 = vpop.f32.mrb[0].mxu0
        %2292 = vmatprep.mubr.bf16.mxu0 0
        %2293 = vmatmul.mubr.bf16.gmra.mrb[0].mxu0 %v1982
        %v2294 = vpop.f32.mrb[0].mxu0
        %v2295 = vadd.f32 0.0, %v2294
        %v2296 = vpop.f32.mrb[0].mxu0
        %v2297 = vpop.f32.mrb[0].mxu0
        %v2298 = vadd.f32 0.0, %v2297
        %v2299 = vpop.f32.mrb[0].mxu0
        %2300 = vmatprep.mubr.bf16.mxu0 0
        %2301 = vmatmul.mubr.bf16.gmra.mrb[0].mxu0 %v1991
        %v2302 = vpop.f32.mrb[0].mxu0
        %v2303 = vadd.f32 0.0, %v2302
        %v2304 = vpop.f32.mrb[0].mxu0
        %v2305 = vpop.f32.mrb[0].mxu0
        %v2306 = vadd.f32 0.0, %v2305
        %v2307 = vpop.f32.mrb[0].mxu0
        %2308 = vmatprep.mubr.bf16.mxu0 0
        %2309 = vmatmul.mubr.bf16.gmra.mrb[0].mxu0 %v2000
        %v2310 = vpop.f32.mrb[0].mxu0
        %v2311 = vadd.f32 0.0, %v2310
        %v2312 = vpop.f32.mrb[0].mxu0
        %v2313 = vpop.f32.mrb[0].mxu0
        %v2314 = vadd.f32 0.0, %v2313
        %v2315 = vpop.f32.mrb[0].mxu0
        %2316 = vmatprep.mubr.bf16.mxu0 0
        %2317 = vmatmul.mubr.bf16.gmra.mrb[0].mxu0 %v2009
        %v2318 = vpop.f32.mrb[0].mxu0
        %v2319 = vadd.f32 0.0, %v2318
        %v2320 = vpop.f32.mrb[0].mxu0
        %v2321 = vpop.f32.mrb[0].mxu0
        %v2322 = vadd.f32 0.0, %v2321
        %v2323 = vpop.f32.mrb[0].mxu0
        %2324 = vmatprep.mubr.bf16.mxu0 0
        %2325 = vmatmul.mubr.bf16.gmra.mrb[0].mxu0 %v2018
        %v2326 = vpop.f32.mrb[0].mxu0
        %v2327 = vadd.f32 0.0, %v2326
        %v2328 = vpop.f32.mrb[0].mxu0
        %v2329 = vpop.f32.mrb[0].mxu0
        %v2330 = vadd.f32 0.0, %v2329
        %v2331 = vpop.f32.mrb[0].mxu0
        %2332 = vmatprep.mubr.bf16.mxu0 0
        %2333 = vmatmul.mubr.bf16.gmra.mrb[0].mxu0 %v2027
        %v2334 = vpop.f32.mrb[0].mxu0
        %v2335 = vadd.f32 0.0, %v2334
        %v2336 = vpop.f32.mrb[0].mxu0
        %v2337 = vpop.f32.mrb[0].mxu0
        %v2338 = vadd.f32 0.0, %v2337
        %v2339 = vpop.f32.mrb[0].mxu0
        %2340 = vmatprep.mubr.bf16.mxu0 0
        %2341 = vmatmul.mubr.bf16.gmra.mrb[0].mxu0 %v2036
        %v2342 = vpop.f32.mrb[0].mxu0
        %v2343 = vadd.f32 0.0, %v2342
        %v2344 = vpop.f32.mrb[0].mxu0
        %v2345 = vpop.f32.mrb[0].mxu0
        %v2346 = vadd.f32 0.0, %v2345
        %v2347 = vpop.f32.mrb[0].mxu0
        %2348 = vmatprep.mubr.bf16.mxu0 0
        %2349 = vmatmul.mubr.bf16.gmra.mrb[0].mxu0 %v2045
        %v2350 = vpop.f32.mrb[0].mxu0
        %v2351 = vadd.f32 0.0, %v2350
        %v2352 = vpop.f32.mrb[0].mxu0
        %v2353 = vpop.f32.mrb[0].mxu0
        %v2354 = vadd.f32 0.0, %v2353
        %v2355 = vpop.f32.mrb[0].mxu0
        %2356 = vmatprep.mubr.bf16.mxu0 0
        %2357 = vmatmul.mubr.bf16.gmra.mrb[0].mxu0 %v2054
        %v2358 = vpop.f32.mrb[0].mxu0
        %v2359 = vadd.f32 0.0, %v2358
        %v2360 = vpop.f32.mrb[0].mxu0
        %v2361 = vpop.f32.mrb[0].mxu0
        %v2362 = vadd.f32 0.0, %v2361
        %v2363 = vpop.f32.mrb[0].mxu0
        %2364 = vmatprep.mubr.bf16.mxu0 0
        %2365 = vmatmul.mubr.bf16.gmra.mrb[0].mxu0 %v2063
        %v2366 = vpop.f32.mrb[0].mxu0
        %v2367 = vadd.f32 0.0, %v2366
        %v2368 = vpop.f32.mrb[0].mxu0
        %v2369 = vpop.f32.mrb[0].mxu0
        %v2370 = vadd.f32 0.0, %v2369
        %v2371 = vpop.f32.mrb[0].mxu0
        %2372 = vmatprep.mubr.bf16.mxu0 0
        %2373 = vmatmul.mubr.bf16.gmra.mrb[0].mxu0 %v2072
        %v2374 = vpop.f32.mrb[0].mxu0
        %v2375 = vadd.f32 0.0, %v2374
        %v2376 = vpop.f32.mrb[0].mxu0
        %v2377 = vpop.f32.mrb[0].mxu0
        %v2378 = vadd.f32 0.0, %v2377
        %v2379 = vpop.f32.mrb[0].mxu0
        %2380 = vmatprep.mubr.bf16.mxu0 0
        %2381 = vmatmul.mubr.bf16.gmra.mrb[0].mxu0 %v2081
        %v2382 = vpop.f32.mrb[0].mxu0
        %v2383 = vadd.f32 0.0, %v2382
        %v2384 = vpop.f32.mrb[0].mxu0
        %v2385 = vpop.f32.mrb[0].mxu0
        %v2386 = vadd.f32 0.0, %v2385
        %v2387 = vpop.f32.mrb[0].mxu0
        %2388 = vmatprep.mubr.bf16.mxu0 0
        %2389 = vmatmul.mubr.bf16.gmra.mrb[0].mxu0 %v2090
        %v2390 = vpop.f32.mrb[0].mxu0
        %v2391 = vadd.f32 0.0, %v2390
        %v2392 = vpop.f32.mrb[0].mxu0
        %v2393 = vpop.f32.mrb[0].mxu0
        %v2394 = vadd.f32 0.0, %v2393
        %v2395 = vpop.f32.mrb[0].mxu0
        %2396 = vmatprep.mubr.bf16.mxu0 0
        %2397 = vmatmul.mubr.bf16.gmra.mrb[0].mxu0 %v2099
        %v2398 = vpop.f32.mrb[0].mxu0
        %v2399 = vadd.f32 0.0, %v2398
        %v2400 = vpop.f32.mrb[0].mxu0
        %v2401 = vpop.f32.mrb[0].mxu0
        %v2402 = vadd.f32 0.0, %v2401
        %v2403 = vpop.f32.mrb[0].mxu0
        %2404 = vmatprep.mubr.bf16.mxu0 0
        %2405 = vmatmul.mubr.bf16.gmra.mrb[0].mxu0 %v2108
        %v2406 = vpop.f32.mrb[0].mxu0
        %v2407 = vadd.f32 0.0, %v2406
        %v2408 = vpop.f32.mrb[0].mxu0
        %v2409 = vpop.f32.mrb[0].mxu0
        %v2410 = vadd.f32 0.0, %v2409
        %v2411 = vpop.f32.mrb[0].mxu0
        %2412 = vmatprep.mubr.bf16.mxu0 0
        %2413 = vmatmul.mubr.bf16.gmra.mrb[0].mxu0 %v2117
        %v2414 = vpop.f32.mrb[0].mxu0
        %v2415 = vadd.f32 0.0, %v2414
        %v2416 = vpop.f32.mrb[0].mxu0
        %v2417 = vpop.f32.mrb[0].mxu0
        %v2418 = vadd.f32 0.0, %v2417
        %v2419 = vpop.f32.mrb[0].mxu0
        %2420 = vmatprep.mubr.bf16.mxu0 0
        %2421 = vmatmul.mubr.bf16.gmra.mrb[0].mxu0 %v2126
        %v2422 = vpop.f32.mrb[0].mxu0
        %v2423 = vadd.f32 0.0, %v2422
        %v2424 = vpop.f32.mrb[0].mxu0
        %v2425 = vpop.f32.mrb[0].mxu0
        %v2426 = vadd.f32 0.0, %v2425
        %v2427 = vpop.f32.mrb[0].mxu0
        %2428 = vmatprep.mubr.bf16.mxu0 0
        %2429 = vmatmul.mubr.bf16.gmra.mrb[0].mxu0 %v2135
        %v2430 = vpop.f32.mrb[0].mxu0
        %v2431 = vadd.f32 0.0, %v2430
        %v2432 = vpop.f32.mrb[0].mxu0
        %v2433 = vpop.f32.mrb[0].mxu0
        %v2434 = vadd.f32 0.0, %v2433
        %v2435 = vpop.f32.mrb[0].mxu0
        %2436 = vmatprep.mubr.bf16.mxu0 0
        %2437 = vmatmul.mubr.bf16.gmra.mrb[0].mxu0 %v2144
        %v2438 = vpop.f32.mrb[0].mxu0
        %v2439 = vadd.f32 0.0, %v2438
        %v2440 = vpop.f32.mrb[0].mxu0
        %v2441 = vpop.f32.mrb[0].mxu0
        %v2442 = vadd.f32 0.0, %v2441
        %v2443 = vpop.f32.mrb[0].mxu0
        %2444 = vmatprep.mubr.bf16.mxu0 0
        %2445 = vmatmul.mubr.bf16.gmra.mrb[0].mxu0 %v2153
        %v2446 = vpop.f32.mrb[0].mxu0
        %v2447 = vadd.f32 0.0, %v2446
        %v2448 = vpop.f32.mrb[0].mxu0
        %v2449 = vpop.f32.mrb[0].mxu0
        %v2450 = vadd.f32 0.0, %v2449
        %v2451 = vpop.f32.mrb[0].mxu0
        %2452 = vmatprep.mubr.bf16.mxu0 0
        %2453 = vmatmul.mubr.bf16.gmra.mrb[0].mxu0 %v2162
        %v2454 = vpop.f32.mrb[0].mxu0
        %v2455 = vadd.f32 0.0, %v2454
        %v2456 = vpop.f32.mrb[0].mxu0
        %v2457 = vpop.f32.mrb[0].mxu0
        %v2458 = vadd.f32 0.0, %v2457
        %v2459 = vpop.f32.mrb[0].mxu0
        %2460 = vmatprep.mubr.bf16.mxu0 0
        %2461 = vmatmul.mubr.bf16.gmra.mrb[0].mxu0 %v2171
        %v2462 = vpop.f32.mrb[0].mxu0
        %v2463 = vadd.f32 0.0, %v2462
        %v2464 = vpop.f32.mrb[0].mxu0
        %v2465 = vpop.f32.mrb[0].mxu0
        %v2466 = vadd.f32 0.0, %v2465
        %v2467 = vpop.f32.mrb[0].mxu0
        %2468 = vdwg.mxu0
        %v2469 = vadd.f32 %v1882, %v2279
        %v2470 = vadd.f32 %v1883, %v2282
        %v2471 = vadd.f32 %v1884, %v2287
        %v2472 = vadd.f32 %v1885, %v2290
        %v2473 = vadd.f32 %v1886, %v2295
        %v2474 = vadd.f32 %v1887, %v2298
        %v2475 = vadd.f32 %v1888, %v2303
        %v2476 = vadd.f32 %v1889, %v2306
        %v2477 = vadd.f32 %v1890, %v2311
        %v2478 = vadd.f32 %v1891, %v2314
        %v2479 = vadd.f32 %v1892, %v2319
        %v2480 = vadd.f32 %v1893, %v2322
        %v2481 = vadd.f32 %v1894, %v2327
        %v2482 = vadd.f32 %v1895, %v2330
        %v2483 = vadd.f32 %v1896, %v2335
        %v2484 = vadd.f32 %v1897, %v2338
        %v2485 = vadd.f32 %v1898, %v2343
        %v2486 = vadd.f32 %v1899, %v2346
        %v2487 = vadd.f32 %v1900, %v2351
        %v2488 = vadd.f32 %v1901, %v2354
        %v2489 = vadd.f32 %v1902, %v2359
        %v2490 = vadd.f32 %v1903, %v2362
        %v2491 = vadd.f32 %v1904, %v2367
        %v2492 = vadd.f32 %v1905, %v2370
        %v2493 = vadd.f32 %v1906, %v2375
        %v2494 = vadd.f32 %v1907, %v2378
        %v2495 = vadd.f32 %v1908, %v2383
        %v2496 = vadd.f32 %v1909, %v2386
        %v2497 = vadd.f32 %v1910, %v2391
        %v2498 = vadd.f32 %v1911, %v2394
        %v2499 = vadd.f32 %v1912, %v2399
        %v2500 = vadd.f32 %v1913, %v2402
        %v2501 = vadd.f32 %v1914, %v2407
        %v2502 = vadd.f32 %v1915, %v2410
        %v2503 = vadd.f32 %v1916, %v2415
        %v2504 = vadd.f32 %v1917, %v2418
        %v2505 = vadd.f32 %v1918, %v2423
        %v2506 = vadd.f32 %v1919, %v2426
        %v2507 = vadd.f32 %v1920, %v2431
        %v2508 = vadd.f32 %v1921, %v2434
        %v2509 = vadd.f32 %v1922, %v2439
        %v2510 = vadd.f32 %v1923, %v2442
        %v2511 = vadd.f32 %v1924, %v2447
        %v2512 = vadd.f32 %v1925, %v2450
        %v2513 = vadd.f32 %v1926, %v2455
        %v2514 = vadd.f32 %v1927, %v2458
        %v2515 = vadd.f32 %v1928, %v2463
        %v2516 = vadd.f32 %v1929, %v2466
        %2517 = vst [vmem:[#allocation2] sm:$0xff] %v2469
        %2518 = vst [vmem:[#allocation2 + $0x8] sm:$0xff] %v2470
        %2519 = vst [vmem:[#allocation2 + $0x10] sm:$0xff] %v2471
        %2520 = vst [vmem:[#allocation2 + $0x18] sm:$0xff] %v2472
        %2521 = vst [vmem:[#allocation2 + $0x20] sm:$0xff] %v2473
        %2522 = vst [vmem:[#allocation2 + $0x28] sm:$0xff] %v2474
        %2523 = vst [vmem:[#allocation2 + $0x30] sm:$0xff] %v2475
        %2524 = vst [vmem:[#allocation2 + $0x38] sm:$0xff] %v2476
        %2525 = vst [vmem:[#allocation2 + $0x40] sm:$0xff] %v2477
        %2526 = vst [vmem:[#allocation2 + $0x48] sm:$0xff] %v2478
        %2527 = vst [vmem:[#allocation2 + $0x50] sm:$0xff] %v2479
        %2528 = vst [vmem:[#allocation2 + $0x58] sm:$0xff] %v2480
        %2529 = vst [vmem:[#allocation2 + $0x60] sm:$0xff] %v2481
        %2530 = vst [vmem:[#allocation2 + $0x68] sm:$0xff] %v2482
        %2531 = vst [vmem:[#allocation2 + $0x70] sm:$0xff] %v2483
        %2532 = vst [vmem:[#allocation2 + $0x78] sm:$0xff] %v2484
        %2533 = vst [vmem:[#allocation2 + $0x80] sm:$0xff] %v2485
        %2534 = vst [vmem:[#allocation2 + $0x88] sm:$0xff] %v2486
        %2535 = vst [vmem:[#allocation2 + $0x90] sm:$0xff] %v2487
        %2536 = vst [vmem:[#allocation2 + $0x98] sm:$0xff] %v2488
        %2537 = vst [vmem:[#allocation2 + $0xa0] sm:$0xff] %v2489
        %2538 = vst [vmem:[#allocation2 + $0xa8] sm:$0xff] %v2490
        %2539 = vst [vmem:[#allocation2 + $0xb0] sm:$0xff] %v2491
        %2540 = vst [vmem:[#allocation2 + $0xb8] sm:$0xff] %v2492
        %2541 = vst [vmem:[#allocation2 + $0xc0] sm:$0xff] %v2493
        %2542 = vst [vmem:[#allocation2 + $0xc8] sm:$0xff] %v2494
        %2543 = vst [vmem:[#allocation2 + $0xd0] sm:$0xff] %v2495
        %2544 = vst [vmem:[#allocation2 + $0xd8] sm:$0xff] %v2496
        %2545 = vst [vmem:[#allocation2 + $0xe0] sm:$0xff] %v2497
        %2546 = vst [vmem:[#allocation2 + $0xe8] sm:$0xff] %v2498
        %2547 = vst [vmem:[#allocation2 + $0xf0] sm:$0xff] %v2499
        %2548 = vst [vmem:[#allocation2 + $0xf8] sm:$0xff] %v2500
        %2549 = vst [vmem:[#allocation2 + $0x100] sm:$0xff] %v2501
        %2550 = vst [vmem:[#allocation2 + $0x108] sm:$0xff] %v2502
        %2551 = vst [vmem:[#allocation2 + $0x110] sm:$0xff] %v2503
        %2552 = vst [vmem:[#allocation2 + $0x118] sm:$0xff] %v2504
        %2553 = vst [vmem:[#allocation2 + $0x120] sm:$0xff] %v2505
        %2554 = vst [vmem:[#allocation2 + $0x128] sm:$0xff] %v2506
        %2555 = vst [vmem:[#allocation2 + $0x130] sm:$0xff] %v2507
        %2556 = vst [vmem:[#allocation2 + $0x138] sm:$0xff] %v2508
        %2557 = vst [vmem:[#allocation2 + $0x140] sm:$0xff] %v2509
        %2558 = vst [vmem:[#allocation2 + $0x148] sm:$0xff] %v2510
        %2559 = vst [vmem:[#allocation2 + $0x150] sm:$0xff] %v2511
        %2560 = vst [vmem:[#allocation2 + $0x158] sm:$0xff] %v2512
        %2561 = vst [vmem:[#allocation2 + $0x160] sm:$0xff] %v2513
        %2562 = vst [vmem:[#allocation2 + $0x168] sm:$0xff] %v2514
        %2563 = vst [vmem:[#allocation2 + $0x170] sm:$0xff] %v2515
        %2564 = vst [vmem:[#allocation2 + $0x178] sm:$0xff] %v2516
        %v2565 = vld [vmem:[#allocation3 + $0x8] sm:$0x80]
        %v2566 = vld [vmem:[#allocation3 + $0x10] sm:$0xff]
        %v2567 = vld [vmem:[#allocation3 + $0x18] sm:$0xff]
        %v2568 = vld [vmem:[#allocation3 + $0x20] sm:$0xff]
        %v2569 = vld [vmem:[#allocation3 + $0x28] sm:$0xff]
        %v2570 = vld [vmem:[#allocation3 + $0x30] sm:$0xff]
        %v2571 = vld [vmem:[#allocation3 + $0x38] sm:$0xff]
        %v2572 = vld [vmem:[#allocation3 + $0x40] sm:$0xff]
        %v2573 = vld [vmem:[#allocation3 + $0x48] sm:$0xff]
        %v2574 = vld [vmem:[#allocation3 + $0x50] sm:$0xff]
        %v2575 = vld [vmem:[#allocation3 + $0x58] sm:$0xff]
        %v2576 = vld [vmem:[#allocation3 + $0x60] sm:$0xff]
        %v2577 = vld [vmem:[#allocation3 + $0x68] sm:$0xff]
        %v2578 = vld [vmem:[#allocation3 + $0x70] sm:$0xff]
        %v2579 = vld [vmem:[#allocation3 + $0x78] sm:$0xff]
        %v2580 = vld [vmem:[#allocation3 + $0x80] sm:$0xff]
        %v2581 = vld [vmem:[#allocation3 + $0x88] sm:$0xff]
        %v2582 = vld [vmem:[#allocation3 + $0x90] sm:$0xff]
        %v2583 = vld [vmem:[#allocation3 + $0x98] sm:$0xff]
        %v2584 = vld [vmem:[#allocation3 + $0xa0] sm:$0xff]
        %v2585 = vld [vmem:[#allocation3 + $0xa8] sm:$0xff]
        %v2586 = vld [vmem:[#allocation3 + $0xb0] sm:$0xff]
        %v2587 = vld [vmem:[#allocation3 + $0xb8] sm:$0xff]
        %v2588 = vld [vmem:[#allocation3 + $0xc0] sm:$0xff]
        %v2589 = vld [vmem:[#allocation3 + $0xc8] sm:$0xff]
        %v2590 = vld [vmem:[#allocation2] sm:$0xff]
        %v2591 = vld [vmem:[#allocation2 + $0x8] sm:$0xff]
        %v2592 = vld [vmem:[#allocation2 + $0x10] sm:$0xff]
        %v2593 = vld [vmem:[#allocation2 + $0x18] sm:$0xff]
        %v2594 = vld [vmem:[#allocation2 + $0x20] sm:$0xff]
        %v2595 = vld [vmem:[#allocation2 + $0x28] sm:$0xff]
        %v2596 = vld [vmem:[#allocation2 + $0x30] sm:$0xff]
        %v2597 = vld [vmem:[#allocation2 + $0x38] sm:$0xff]
        %v2598 = vld [vmem:[#allocation2 + $0x40] sm:$0xff]
        %v2599 = vld [vmem:[#allocation2 + $0x48] sm:$0xff]
        %v2600 = vld [vmem:[#allocation2 + $0x50] sm:$0xff]
        %v2601 = vld [vmem:[#allocation2 + $0x58] sm:$0xff]
        %v2602 = vld [vmem:[#allocation2 + $0x60] sm:$0xff]
        %v2603 = vld [vmem:[#allocation2 + $0x68] sm:$0xff]
        %v2604 = vld [vmem:[#allocation2 + $0x70] sm:$0xff]
        %v2605 = vld [vmem:[#allocation2 + $0x78] sm:$0xff]
        %v2606 = vld [vmem:[#allocation2 + $0x80] sm:$0xff]
        %v2607 = vld [vmem:[#allocation2 + $0x88] sm:$0xff]
        %v2608 = vld [vmem:[#allocation2 + $0x90] sm:$0xff]
        %v2609 = vld [vmem:[#allocation2 + $0x98] sm:$0xff]
        %v2610 = vld [vmem:[#allocation2 + $0xa0] sm:$0xff]
        %v2611 = vld [vmem:[#allocation2 + $0xa8] sm:$0xff]
        %v2612 = vld [vmem:[#allocation2 + $0xb0] sm:$0xff]
        %v2613 = vld [vmem:[#allocation2 + $0xb8] sm:$0xff]
        %v2614 = vld [vmem:[#allocation2 + $0xc0] sm:$0xff]
        %v2615 = vld [vmem:[#allocation2 + $0xc8] sm:$0xff]
        %v2616 = vld [vmem:[#allocation2 + $0xd0] sm:$0xff]
        %v2617 = vld [vmem:[#allocation2 + $0xd8] sm:$0xff]
        %v2618 = vld [vmem:[#allocation2 + $0xe0] sm:$0xff]
        %v2619 = vld [vmem:[#allocation2 + $0xe8] sm:$0xff]
        %v2620 = vld [vmem:[#allocation2 + $0xf0] sm:$0xff]
        %v2621 = vld [vmem:[#allocation2 + $0xf8] sm:$0xff]
        %v2622 = vld [vmem:[#allocation2 + $0x100] sm:$0xff]
        %v2623 = vld [vmem:[#allocation2 + $0x108] sm:$0xff]
        %v2624 = vld [vmem:[#allocation2 + $0x110] sm:$0xff]
        %v2625 = vld [vmem:[#allocation2 + $0x118] sm:$0xff]
        %v2626 = vld [vmem:[#allocation2 + $0x120] sm:$0xff]
        %v2627 = vld [vmem:[#allocation2 + $0x128] sm:$0xff]
        %v2628 = vld [vmem:[#allocation2 + $0x130] sm:$0xff]
        %v2629 = vld [vmem:[#allocation2 + $0x138] sm:$0xff]
        %v2630 = vld [vmem:[#allocation2 + $0x140] sm:$0xff]
        %v2631 = vld [vmem:[#allocation2 + $0x148] sm:$0xff]
        %v2632 = vld [vmem:[#allocation2 + $0x150] sm:$0xff]
        %v2633 = vld [vmem:[#allocation2 + $0x158] sm:$0xff]
        %v2634 = vld [vmem:[#allocation2 + $0x160] sm:$0xff]
        %v2635 = vld [vmem:[#allocation2 + $0x168] sm:$0xff]
        %v2636 = vld [vmem:[#allocation2 + $0x170] sm:$0xff]
        %v2637 = vld [vmem:[#allocation2 + $0x178] sm:$0xff]
        %s2638 = scalar_lea.vmem [#allocation7], 192
        %v2639 = vld [vmem:[%s2638] sm:$0xf]
        %v2640 = vld [vmem:[%s2638 + $0x4] sm:$0xf]
        %v2641 = vld [vmem:[%s2638 + $0x8] sm:$0xf]
        %v2642 = vld [vmem:[%s2638 + $0xc] sm:$0xf]
        %v2643 = vld [vmem:[%s2638 + $0x10] sm:$0xf]
        %v2644 = vld [vmem:[%s2638 + $0x14] sm:$0xf]
        %v2645 = vld [vmem:[%s2638 + $0x18] sm:$0xf]
        %v2646 = vld [vmem:[%s2638 + $0x1c] sm:$0xf]
        %v2647 = vld [vmem:[%s2638 + $0x20] sm:$0xf]
        %v2648 = vld [vmem:[%s2638 + $0x24] sm:$0xf]
        %v2649 = vld [vmem:[%s2638 + $0x28] sm:$0xf]
        %v2650 = vld [vmem:[%s2638 + $0x2c] sm:$0xf]
        %v2651 = vld [vmem:[%s2638 + $0x30] sm:$0xf]
        %v2652 = vld [vmem:[%s2638 + $0x34] sm:$0xf]
        %v2653 = vld [vmem:[%s2638 + $0x38] sm:$0xf]
        %v2654 = vld [vmem:[%s2638 + $0x3c] sm:$0xf]
        %vm2655 = vsmask.f32 256
        %v2657 = vshrl.u32 %v2565, 16
        %v2659 = vrot.slane %v2657, 7
        %v2661 = vshrl.u32 %v2566, 16
        %v2663 = vrot.slane %v2661, 7
        %v2664 = vshll.u32 %v2566, 16
        %v2666 = vor.u32 %v2663, %v2664
        %v2667 = vsel %vm2655, %v2659, %v2666
        %v2669 = vshrl.u32 %v2567, 16
        %v2671 = vrot.slane %v2669, 7
        %v2672 = vshll.u32 %v2567, 16
        %v2674 = vor.u32 %v2671, %v2672
        %v2675 = vsel %vm2655, %v2663, %v2674
        %v2677 = vshrl.u32 %v2568, 16
        %v2679 = vrot.slane %v2677, 7
        %v2680 = vshll.u32 %v2568, 16
        %v2682 = vor.u32 %v2679, %v2680
        %v2683 = vsel %vm2655, %v2671, %v2682
        %v2685 = vshrl.u32 %v2569, 16
        %v2687 = vrot.slane %v2685, 7
        %v2688 = vshll.u32 %v2569, 16
        %v2690 = vor.u32 %v2687, %v2688
        %v2691 = vsel %vm2655, %v2679, %v2690
        %v2693 = vshrl.u32 %v2570, 16
        %v2695 = vrot.slane %v2693, 7
        %v2696 = vshll.u32 %v2570, 16
        %v2698 = vor.u32 %v2695, %v2696
        %v2699 = vsel %vm2655, %v2687, %v2698
        %v2701 = vshrl.u32 %v2571, 16
        %v2703 = vrot.slane %v2701, 7
        %v2704 = vshll.u32 %v2571, 16
        %v2706 = vor.u32 %v2703, %v2704
        %v2707 = vsel %vm2655, %v2695, %v2706
        %v2709 = vshrl.u32 %v2572, 16
        %v2711 = vrot.slane %v2709, 7
        %v2712 = vshll.u32 %v2572, 16
        %v2714 = vor.u32 %v2711, %v2712
        %v2715 = vsel %vm2655, %v2703, %v2714
        %v2717 = vshrl.u32 %v2573, 16
        %v2719 = vrot.slane %v2717, 7
        %v2720 = vshll.u32 %v2573, 16
        %v2722 = vor.u32 %v2719, %v2720
        %v2723 = vsel %vm2655, %v2711, %v2722
        %v2725 = vshrl.u32 %v2574, 16
        %v2727 = vrot.slane %v2725, 7
        %v2728 = vshll.u32 %v2574, 16
        %v2730 = vor.u32 %v2727, %v2728
        %v2731 = vsel %vm2655, %v2719, %v2730
        %v2733 = vshrl.u32 %v2575, 16
        %v2735 = vrot.slane %v2733, 7
        %v2736 = vshll.u32 %v2575, 16
        %v2738 = vor.u32 %v2735, %v2736
        %v2739 = vsel %vm2655, %v2727, %v2738
        %v2741 = vshrl.u32 %v2576, 16
        %v2743 = vrot.slane %v2741, 7
        %v2744 = vshll.u32 %v2576, 16
        %v2746 = vor.u32 %v2743, %v2744
        %v2747 = vsel %vm2655, %v2735, %v2746
        %v2749 = vshrl.u32 %v2577, 16
        %v2751 = vrot.slane %v2749, 7
        %v2752 = vshll.u32 %v2577, 16
        %v2754 = vor.u32 %v2751, %v2752
        %v2755 = vsel %vm2655, %v2743, %v2754
        %v2757 = vshrl.u32 %v2578, 16
        %v2759 = vrot.slane %v2757, 7
        %v2760 = vshll.u32 %v2578, 16
        %v2762 = vor.u32 %v2759, %v2760
        %v2763 = vsel %vm2655, %v2751, %v2762
        %v2765 = vshrl.u32 %v2579, 16
        %v2767 = vrot.slane %v2765, 7
        %v2768 = vshll.u32 %v2579, 16
        %v2770 = vor.u32 %v2767, %v2768
        %v2771 = vsel %vm2655, %v2759, %v2770
        %v2773 = vshrl.u32 %v2580, 16
        %v2775 = vrot.slane %v2773, 7
        %v2776 = vshll.u32 %v2580, 16
        %v2778 = vor.u32 %v2775, %v2776
        %v2779 = vsel %vm2655, %v2767, %v2778
        %v2781 = vshrl.u32 %v2581, 16
        %v2783 = vrot.slane %v2781, 7
        %v2784 = vshll.u32 %v2581, 16
        %v2786 = vor.u32 %v2783, %v2784
        %v2787 = vsel %vm2655, %v2775, %v2786
        %v2789 = vshrl.u32 %v2582, 16
        %v2791 = vrot.slane %v2789, 7
        %v2792 = vshll.u32 %v2582, 16
        %v2794 = vor.u32 %v2791, %v2792
        %v2795 = vsel %vm2655, %v2783, %v2794
        %v2797 = vshrl.u32 %v2583, 16
        %v2799 = vrot.slane %v2797, 7
        %v2800 = vshll.u32 %v2583, 16
        %v2802 = vor.u32 %v2799, %v2800
        %v2803 = vsel %vm2655, %v2791, %v2802
        %v2805 = vshrl.u32 %v2584, 16
        %v2807 = vrot.slane %v2805, 7
        %v2808 = vshll.u32 %v2584, 16
        %v2810 = vor.u32 %v2807, %v2808
        %v2811 = vsel %vm2655, %v2799, %v2810
        %v2813 = vshrl.u32 %v2585, 16
        %v2815 = vrot.slane %v2813, 7
        %v2816 = vshll.u32 %v2585, 16
        %v2818 = vor.u32 %v2815, %v2816
        %v2819 = vsel %vm2655, %v2807, %v2818
        %v2821 = vshrl.u32 %v2586, 16
        %v2823 = vrot.slane %v2821, 7
        %v2824 = vshll.u32 %v2586, 16
        %v2826 = vor.u32 %v2823, %v2824
        %v2827 = vsel %vm2655, %v2815, %v2826
        %v2829 = vshrl.u32 %v2587, 16
        %v2831 = vrot.slane %v2829, 7
        %v2832 = vshll.u32 %v2587, 16
        %v2834 = vor.u32 %v2831, %v2832
        %v2835 = vsel %vm2655, %v2823, %v2834
        %v2837 = vshrl.u32 %v2588, 16
        %v2839 = vrot.slane %v2837, 7
        %v2840 = vshll.u32 %v2588, 16
        %v2842 = vor.u32 %v2839, %v2840
        %v2843 = vsel %vm2655, %v2831, %v2842
        %v2845 = vshrl.u32 %v2589, 16
        %v2847 = vrot.slane %v2845, 7
        %v2848 = vshll.u32 %v2589, 16
        %v2850 = vor.u32 %v2847, %v2848
        %v2851 = vsel %vm2655, %v2839, %v2850
        %v2892 = vunpack.c.l.b16 %v2639
        %v2893 = vunpack.c.l.b16 %v2640
        %v2894 = vunpack.c.l.b16 %v2641
        %v2895 = vunpack.c.l.b16 %v2642
        %v2896 = vunpack.c.l.b16 %v2643
        %v2897 = vunpack.c.l.b16 %v2644
        %v2898 = vunpack.c.l.b16 %v2645
        %v2899 = vunpack.c.l.b16 %v2646
        %v2900 = vunpack.c.l.b16 %v2647
        %v2901 = vunpack.c.l.b16 %v2648
        %v2902 = vunpack.c.l.b16 %v2649
        %v2903 = vunpack.c.l.b16 %v2650
        %v2904 = vunpack.c.l.b16 %v2651
        %v2905 = vunpack.c.l.b16 %v2652
        %v2906 = vunpack.c.l.b16 %v2653
        %v2907 = vunpack.c.l.b16 %v2654
        %v2908 = vpack.c.b16 %v2893, %v2892
        %v2909 = vpack.c.b16 %v2895, %v2894
        %v2910 = vpack.c.b16 %v2897, %v2896
        %v2911 = vpack.c.b16 %v2899, %v2898
        %v2912 = vpack.c.b16 %v2901, %v2900
        %v2913 = vpack.c.b16 %v2903, %v2902
        %v2914 = vpack.c.b16 %v2905, %v2904
        %v2915 = vpack.c.b16 %v2907, %v2906
        %2924 = vmatprep.subr.bf16.mxu0 0
        %2925 = vmatpush1.bf16.msra.mxu0 %v2908
        %2926 = vmatprep.subr.bf16.mxu0 0
        %2927 = vmatpush1.bf16.msra.mxu0 %v2909
        %2928 = vmatprep.subr.bf16.mxu0 0
        %2929 = vmatpush1.bf16.msra.mxu0 %v2910
        %2930 = vmatprep.subr.bf16.mxu0 0
        %2931 = vmatpush1.bf16.msra.mxu0 %v2911
        %2932 = vmatprep.subr.bf16.mxu0 0
        %2933 = vmatpush1.bf16.msra.mxu0 %v2912
        %2934 = vmatprep.subr.bf16.mxu0 0
        %2935 = vmatpush1.bf16.msra.mxu0 %v2913
        %2936 = vmatprep.subr.bf16.mxu0 0
        %2937 = vmatpush1.bf16.msra.mxu0 %v2914
        %2938 = vmatprep.subr.bf16.mxu0 0
        %2939 = vmatpush1.bf16.msra.mxu0 %v2915
        %2940 = vmatprep.subr.bf16.mxu0 0
        %2941 = vmatpush1.bf16.msra.mxu0 0
        %2942 = vmatprep.subr.bf16.mxu0 0
        %2943 = vmatpush1.bf16.msra.mxu0 0
        %2944 = vmatprep.subr.bf16.mxu0 0
        %2945 = vmatpush1.bf16.msra.mxu0 0
        %2946 = vmatprep.subr.bf16.mxu0 0
        %2947 = vmatpush1.bf16.msra.mxu0 0
        %2948 = vmatprep.subr.bf16.mxu0 0
        %2949 = vmatpush1.bf16.msra.mxu0 0
        %2950 = vmatprep.subr.bf16.mxu0 0
        %2951 = vmatpush1.bf16.msra.mxu0 0
        %2952 = vmatprep.subr.bf16.mxu0 0
        %2953 = vmatpush1.bf16.msra.mxu0 0
        %2954 = vmatprep.subr.bf16.mxu0 0
        %2955 = vmatpush1.bf16.msra.mxu0 0
        %2956 = vmatprep.mubr.bf16.mxu0 0
        %2957 = vmatmul.mubr.bf16.gmra.mrb[0].mxu0 %v2667
        %v2958 = vpop.f32.mrb[0].mxu0
        %v2959 = vadd.f32 0.0, %v2958
        %v2960 = vpop.f32.mrb[0].mxu0
        %v2961 = vpop.f32.mrb[0].mxu0
        %v2962 = vadd.f32 0.0, %v2961
        %v2963 = vpop.f32.mrb[0].mxu0
        %2964 = vmatprep.mubr.bf16.mxu0 0
        %2965 = vmatmul.mubr.bf16.gmra.mrb[0].mxu0 %v2675
        %v2966 = vpop.f32.mrb[0].mxu0
        %v2967 = vadd.f32 0.0, %v2966
        %v2968 = vpop.f32.mrb[0].mxu0
        %v2969 = vpop.f32.mrb[0].mxu0
        %v2970 = vadd.f32 0.0, %v2969
        %v2971 = vpop.f32.mrb[0].mxu0
        %2972 = vmatprep.mubr.bf16.mxu0 0
        %2973 = vmatmul.mubr.bf16.gmra.mrb[0].mxu0 %v2683
        %v2974 = vpop.f32.mrb[0].mxu0
        %v2975 = vadd.f32 0.0, %v2974
        %v2976 = vpop.f32.mrb[0].mxu0
        %v2977 = vpop.f32.mrb[0].mxu0
        %v2978 = vadd.f32 0.0, %v2977
        %v2979 = vpop.f32.mrb[0].mxu0
        %2980 = vmatprep.mubr.bf16.mxu0 0
        %2981 = vmatmul.mubr.bf16.gmra.mrb[0].mxu0 %v2691
        %v2982 = vpop.f32.mrb[0].mxu0
        %v2983 = vadd.f32 0.0, %v2982
        %v2984 = vpop.f32.mrb[0].mxu0
        %v2985 = vpop.f32.mrb[0].mxu0
        %v2986 = vadd.f32 0.0, %v2985
        %v2987 = vpop.f32.mrb[0].mxu0
        %2988 = vmatprep.mubr.bf16.mxu0 0
        %2989 = vmatmul.mubr.bf16.gmra.mrb[0].mxu0 %v2699
        %v2990 = vpop.f32.mrb[0].mxu0
        %v2991 = vadd.f32 0.0, %v2990
        %v2992 = vpop.f32.mrb[0].mxu0
        %v2993 = vpop.f32.mrb[0].mxu0
        %v2994 = vadd.f32 0.0, %v2993
        %v2995 = vpop.f32.mrb[0].mxu0
        %2996 = vmatprep.mubr.bf16.mxu0 0
        %2997 = vmatmul.mubr.bf16.gmra.mrb[0].mxu0 %v2707
        %v2998 = vpop.f32.mrb[0].mxu0
        %v2999 = vadd.f32 0.0, %v2998
        %v3000 = vpop.f32.mrb[0].mxu0
        %v3001 = vpop.f32.mrb[0].mxu0
        %v3002 = vadd.f32 0.0, %v3001
        %v3003 = vpop.f32.mrb[0].mxu0
        %3004 = vmatprep.mubr.bf16.mxu0 0
        %3005 = vmatmul.mubr.bf16.gmra.mrb[0].mxu0 %v2715
        %v3006 = vpop.f32.mrb[0].mxu0
        %v3007 = vadd.f32 0.0, %v3006
        %v3008 = vpop.f32.mrb[0].mxu0
        %v3009 = vpop.f32.mrb[0].mxu0
        %v3010 = vadd.f32 0.0, %v3009
        %v3011 = vpop.f32.mrb[0].mxu0
        %3012 = vmatprep.mubr.bf16.mxu0 0
        %3013 = vmatmul.mubr.bf16.gmra.mrb[0].mxu0 %v2723
        %v3014 = vpop.f32.mrb[0].mxu0
        %v3015 = vadd.f32 0.0, %v3014
        %v3016 = vpop.f32.mrb[0].mxu0
        %v3017 = vpop.f32.mrb[0].mxu0
        %v3018 = vadd.f32 0.0, %v3017
        %v3019 = vpop.f32.mrb[0].mxu0
        %3020 = vmatprep.mubr.bf16.mxu0 0
        %3021 = vmatmul.mubr.bf16.gmra.mrb[0].mxu0 %v2731
        %v3022 = vpop.f32.mrb[0].mxu0
        %v3023 = vadd.f32 0.0, %v3022
        %v3024 = vpop.f32.mrb[0].mxu0
        %v3025 = vpop.f32.mrb[0].mxu0
        %v3026 = vadd.f32 0.0, %v3025
        %v3027 = vpop.f32.mrb[0].mxu0
        %3028 = vmatprep.mubr.bf16.mxu0 0
        %3029 = vmatmul.mubr.bf16.gmra.mrb[0].mxu0 %v2739
        %v3030 = vpop.f32.mrb[0].mxu0
        %v3031 = vadd.f32 0.0, %v3030
        %v3032 = vpop.f32.mrb[0].mxu0
        %v3033 = vpop.f32.mrb[0].mxu0
        %v3034 = vadd.f32 0.0, %v3033
        %v3035 = vpop.f32.mrb[0].mxu0
        %3036 = vmatprep.mubr.bf16.mxu0 0
        %3037 = vmatmul.mubr.bf16.gmra.mrb[0].mxu0 %v2747
        %v3038 = vpop.f32.mrb[0].mxu0
        %v3039 = vadd.f32 0.0, %v3038
        %v3040 = vpop.f32.mrb[0].mxu0
        %v3041 = vpop.f32.mrb[0].mxu0
        %v3042 = vadd.f32 0.0, %v3041
        %v3043 = vpop.f32.mrb[0].mxu0
        %3044 = vmatprep.mubr.bf16.mxu0 0
        %3045 = vmatmul.mubr.bf16.gmra.mrb[0].mxu0 %v2755
        %v3046 = vpop.f32.mrb[0].mxu0
        %v3047 = vadd.f32 0.0, %v3046
        %v3048 = vpop.f32.mrb[0].mxu0
        %v3049 = vpop.f32.mrb[0].mxu0
        %v3050 = vadd.f32 0.0, %v3049
        %v3051 = vpop.f32.mrb[0].mxu0
        %3052 = vmatprep.mubr.bf16.mxu0 0
        %3053 = vmatmul.mubr.bf16.gmra.mrb[0].mxu0 %v2763
        %v3054 = vpop.f32.mrb[0].mxu0
        %v3055 = vadd.f32 0.0, %v3054
        %v3056 = vpop.f32.mrb[0].mxu0
        %v3057 = vpop.f32.mrb[0].mxu0
        %v3058 = vadd.f32 0.0, %v3057
        %v3059 = vpop.f32.mrb[0].mxu0
        %3060 = vmatprep.mubr.bf16.mxu0 0
        %3061 = vmatmul.mubr.bf16.gmra.mrb[0].mxu0 %v2771
        %v3062 = vpop.f32.mrb[0].mxu0
        %v3063 = vadd.f32 0.0, %v3062
        %v3064 = vpop.f32.mrb[0].mxu0
        %v3065 = vpop.f32.mrb[0].mxu0
        %v3066 = vadd.f32 0.0, %v3065
        %v3067 = vpop.f32.mrb[0].mxu0
        %3068 = vmatprep.mubr.bf16.mxu0 0
        %3069 = vmatmul.mubr.bf16.gmra.mrb[0].mxu0 %v2779
        %v3070 = vpop.f32.mrb[0].mxu0
        %v3071 = vadd.f32 0.0, %v3070
        %v3072 = vpop.f32.mrb[0].mxu0
        %v3073 = vpop.f32.mrb[0].mxu0
        %v3074 = vadd.f32 0.0, %v3073
        %v3075 = vpop.f32.mrb[0].mxu0
        %3076 = vmatprep.mubr.bf16.mxu0 0
        %3077 = vmatmul.mubr.bf16.gmra.mrb[0].mxu0 %v2787
        %v3078 = vpop.f32.mrb[0].mxu0
        %v3079 = vadd.f32 0.0, %v3078
        %v3080 = vpop.f32.mrb[0].mxu0
        %v3081 = vpop.f32.mrb[0].mxu0
        %v3082 = vadd.f32 0.0, %v3081
        %v3083 = vpop.f32.mrb[0].mxu0
        %3084 = vmatprep.mubr.bf16.mxu0 0
        %3085 = vmatmul.mubr.bf16.gmra.mrb[0].mxu0 %v2795
        %v3086 = vpop.f32.mrb[0].mxu0
        %v3087 = vadd.f32 0.0, %v3086
        %v3088 = vpop.f32.mrb[0].mxu0
        %v3089 = vpop.f32.mrb[0].mxu0
        %v3090 = vadd.f32 0.0, %v3089
        %v3091 = vpop.f32.mrb[0].mxu0
        %3092 = vmatprep.mubr.bf16.mxu0 0
        %3093 = vmatmul.mubr.bf16.gmra.mrb[0].mxu0 %v2803
        %v3094 = vpop.f32.mrb[0].mxu0
        %v3095 = vadd.f32 0.0, %v3094
        %v3096 = vpop.f32.mrb[0].mxu0
        %v3097 = vpop.f32.mrb[0].mxu0
        %v3098 = vadd.f32 0.0, %v3097
        %v3099 = vpop.f32.mrb[0].mxu0
        %3100 = vmatprep.mubr.bf16.mxu0 0
        %3101 = vmatmul.mubr.bf16.gmra.mrb[0].mxu0 %v2811
        %v3102 = vpop.f32.mrb[0].mxu0
        %v3103 = vadd.f32 0.0, %v3102
        %v3104 = vpop.f32.mrb[0].mxu0
        %v3105 = vpop.f32.mrb[0].mxu0
        %v3106 = vadd.f32 0.0, %v3105
        %v3107 = vpop.f32.mrb[0].mxu0
        %3108 = vmatprep.mubr.bf16.mxu0 0
        %3109 = vmatmul.mubr.bf16.gmra.mrb[0].mxu0 %v2819
        %v3110 = vpop.f32.mrb[0].mxu0
        %v3111 = vadd.f32 0.0, %v3110
        %v3112 = vpop.f32.mrb[0].mxu0
        %v3113 = vpop.f32.mrb[0].mxu0
        %v3114 = vadd.f32 0.0, %v3113
        %v3115 = vpop.f32.mrb[0].mxu0
        %3116 = vmatprep.mubr.bf16.mxu0 0
        %3117 = vmatmul.mubr.bf16.gmra.mrb[0].mxu0 %v2827
        %v3118 = vpop.f32.mrb[0].mxu0
        %v3119 = vadd.f32 0.0, %v3118
        %v3120 = vpop.f32.mrb[0].mxu0
        %v3121 = vpop.f32.mrb[0].mxu0
        %v3122 = vadd.f32 0.0, %v3121
        %v3123 = vpop.f32.mrb[0].mxu0
        %3124 = vmatprep.mubr.bf16.mxu0 0
        %3125 = vmatmul.mubr.bf16.gmra.mrb[0].mxu0 %v2835
        %v3126 = vpop.f32.mrb[0].mxu0
        %v3127 = vadd.f32 0.0, %v3126
        %v3128 = vpop.f32.mrb[0].mxu0
        %v3129 = vpop.f32.mrb[0].mxu0
        %v3130 = vadd.f32 0.0, %v3129
        %v3131 = vpop.f32.mrb[0].mxu0
        %3132 = vmatprep.mubr.bf16.mxu0 0
        %3133 = vmatmul.mubr.bf16.gmra.mrb[0].mxu0 %v2843
        %v3134 = vpop.f32.mrb[0].mxu0
        %v3135 = vadd.f32 0.0, %v3134
        %v3136 = vpop.f32.mrb[0].mxu0
        %v3137 = vpop.f32.mrb[0].mxu0
        %v3138 = vadd.f32 0.0, %v3137
        %v3139 = vpop.f32.mrb[0].mxu0
        %3140 = vmatprep.mubr.bf16.mxu0 0
        %3141 = vmatmul.mubr.bf16.gmra.mrb[0].mxu0 %v2851
        %v3142 = vpop.f32.mrb[0].mxu0
        %v3143 = vadd.f32 0.0, %v3142
        %v3144 = vpop.f32.mrb[0].mxu0
        %v3145 = vpop.f32.mrb[0].mxu0
        %v3146 = vadd.f32 0.0, %v3145
        %v3147 = vpop.f32.mrb[0].mxu0
        %3148 = vdwg.mxu0
        %v3149 = vadd.f32 %v2590, %v2959
        %v3150 = vadd.f32 %v2591, %v2962
        %v3151 = vadd.f32 %v2592, %v2967
        %v3152 = vadd.f32 %v2593, %v2970
        %v3153 = vadd.f32 %v2594, %v2975
        %v3154 = vadd.f32 %v2595, %v2978
        %v3155 = vadd.f32 %v2596, %v2983
        %v3156 = vadd.f32 %v2597, %v2986
        %v3157 = vadd.f32 %v2598, %v2991
        %v3158 = vadd.f32 %v2599, %v2994
        %v3159 = vadd.f32 %v2600, %v2999
        %v3160 = vadd.f32 %v2601, %v3002
        %v3161 = vadd.f32 %v2602, %v3007
        %v3162 = vadd.f32 %v2603, %v3010
        %v3163 = vadd.f32 %v2604, %v3015
        %v3164 = vadd.f32 %v2605, %v3018
        %v3165 = vadd.f32 %v2606, %v3023
        %v3166 = vadd.f32 %v2607, %v3026
        %v3167 = vadd.f32 %v2608, %v3031
        %v3168 = vadd.f32 %v2609, %v3034
        %v3169 = vadd.f32 %v2610, %v3039
        %v3170 = vadd.f32 %v2611, %v3042
        %v3171 = vadd.f32 %v2612, %v3047
        %v3172 = vadd.f32 %v2613, %v3050
        %v3173 = vadd.f32 %v2614, %v3055
        %v3174 = vadd.f32 %v2615, %v3058
        %v3175 = vadd.f32 %v2616, %v3063
        %v3176 = vadd.f32 %v2617, %v3066
        %v3177 = vadd.f32 %v2618, %v3071
        %v3178 = vadd.f32 %v2619, %v3074
        %v3179 = vadd.f32 %v2620, %v3079
        %v3180 = vadd.f32 %v2621, %v3082
        %v3181 = vadd.f32 %v2622, %v3087
        %v3182 = vadd.f32 %v2623, %v3090
        %v3183 = vadd.f32 %v2624, %v3095
        %v3184 = vadd.f32 %v2625, %v3098
        %v3185 = vadd.f32 %v2626, %v3103
        %v3186 = vadd.f32 %v2627, %v3106
        %v3187 = vadd.f32 %v2628, %v3111
        %v3188 = vadd.f32 %v2629, %v3114
        %v3189 = vadd.f32 %v2630, %v3119
        %v3190 = vadd.f32 %v2631, %v3122
        %v3191 = vadd.f32 %v2632, %v3127
        %v3192 = vadd.f32 %v2633, %v3130
        %v3193 = vadd.f32 %v2634, %v3135
        %v3194 = vadd.f32 %v2635, %v3138
        %v3195 = vadd.f32 %v2636, %v3143
        %v3196 = vadd.f32 %v2637, %v3146
        %3197 = vst [vmem:[#allocation2] sm:$0xff] %v3149
        %3198 = vst [vmem:[#allocation2 + $0x8] sm:$0xff] %v3150
        %3199 = vst [vmem:[#allocation2 + $0x10] sm:$0xff] %v3151
        %3200 = vst [vmem:[#allocation2 + $0x18] sm:$0xff] %v3152
        %3201 = vst [vmem:[#allocation2 + $0x20] sm:$0xff] %v3153
        %3202 = vst [vmem:[#allocation2 + $0x28] sm:$0xff] %v3154
        %3203 = vst [vmem:[#allocation2 + $0x30] sm:$0xff] %v3155
        %3204 = vst [vmem:[#allocation2 + $0x38] sm:$0xff] %v3156
        %3205 = vst [vmem:[#allocation2 + $0x40] sm:$0xff] %v3157
        %3206 = vst [vmem:[#allocation2 + $0x48] sm:$0xff] %v3158
        %3207 = vst [vmem:[#allocation2 + $0x50] sm:$0xff] %v3159
        %3208 = vst [vmem:[#allocation2 + $0x58] sm:$0xff] %v3160
        %3209 = vst [vmem:[#allocation2 + $0x60] sm:$0xff] %v3161
        %3210 = vst [vmem:[#allocation2 + $0x68] sm:$0xff] %v3162
        %3211 = vst [vmem:[#allocation2 + $0x70] sm:$0xff] %v3163
        %3212 = vst [vmem:[#allocation2 + $0x78] sm:$0xff] %v3164
        %3213 = vst [vmem:[#allocation2 + $0x80] sm:$0xff] %v3165
        %3214 = vst [vmem:[#allocation2 + $0x88] sm:$0xff] %v3166
        %3215 = vst [vmem:[#allocation2 + $0x90] sm:$0xff] %v3167
        %3216 = vst [vmem:[#allocation2 + $0x98] sm:$0xff] %v3168
        %3217 = vst [vmem:[#allocation2 + $0xa0] sm:$0xff] %v3169
        %3218 = vst [vmem:[#allocation2 + $0xa8] sm:$0xff] %v3170
        %3219 = vst [vmem:[#allocation2 + $0xb0] sm:$0xff] %v3171
        %3220 = vst [vmem:[#allocation2 + $0xb8] sm:$0xff] %v3172
        %3221 = vst [vmem:[#allocation2 + $0xc0] sm:$0xff] %v3173
        %3222 = vst [vmem:[#allocation2 + $0xc8] sm:$0xff] %v3174
        %3223 = vst [vmem:[#allocation2 + $0xd0] sm:$0xff] %v3175
        %3224 = vst [vmem:[#allocation2 + $0xd8] sm:$0xff] %v3176
        %3225 = vst [vmem:[#allocation2 + $0xe0] sm:$0xff] %v3177
        %3226 = vst [vmem:[#allocation2 + $0xe8] sm:$0xff] %v3178
        %3227 = vst [vmem:[#allocation2 + $0xf0] sm:$0xff] %v3179
        %3228 = vst [vmem:[#allocation2 + $0xf8] sm:$0xff] %v3180
        %3229 = vst [vmem:[#allocation2 + $0x100] sm:$0xff] %v3181
        %3230 = vst [vmem:[#allocation2 + $0x108] sm:$0xff] %v3182
        %3231 = vst [vmem:[#allocation2 + $0x110] sm:$0xff] %v3183
        %3232 = vst [vmem:[#allocation2 + $0x118] sm:$0xff] %v3184
        %3233 = vst [vmem:[#allocation2 + $0x120] sm:$0xff] %v3185
        %3234 = vst [vmem:[#allocation2 + $0x128] sm:$0xff] %v3186
        %3235 = vst [vmem:[#allocation2 + $0x130] sm:$0xff] %v3187
        %3236 = vst [vmem:[#allocation2 + $0x138] sm:$0xff] %v3188
        %3237 = vst [vmem:[#allocation2 + $0x140] sm:$0xff] %v3189
        %3238 = vst [vmem:[#allocation2 + $0x148] sm:$0xff] %v3190
        %3239 = vst [vmem:[#allocation2 + $0x150] sm:$0xff] %v3191
        %3240 = vst [vmem:[#allocation2 + $0x158] sm:$0xff] %v3192
        %3241 = vst [vmem:[#allocation2 + $0x160] sm:$0xff] %v3193
        %3242 = vst [vmem:[#allocation2 + $0x168] sm:$0xff] %v3194
        %3243 = vst [vmem:[#allocation2 + $0x170] sm:$0xff] %v3195
        %3244 = vst [vmem:[#allocation2 + $0x178] sm:$0xff] %v3196
        %v3245 = vld [vmem:[#allocation3 + $0x10] sm:$0xff]
        %v3246 = vld [vmem:[#allocation3 + $0x18] sm:$0xff]
        %v3247 = vld [vmem:[#allocation3 + $0x20] sm:$0xff]
        %v3248 = vld [vmem:[#allocation3 + $0x28] sm:$0xff]
        %v3249 = vld [vmem:[#allocation3 + $0x30] sm:$0xff]
        %v3250 = vld [vmem:[#allocation3 + $0x38] sm:$0xff]
        %v3251 = vld [vmem:[#allocation3 + $0x40] sm:$0xff]
        %v3252 = vld [vmem:[#allocation3 + $0x48] sm:$0xff]
        %v3253 = vld [vmem:[#allocation3 + $0x50] sm:$0xff]
        %v3254 = vld [vmem:[#allocation3 + $0x58] sm:$0xff]
        %v3255 = vld [vmem:[#allocation3 + $0x60] sm:$0xff]
        %v3256 = vld [vmem:[#allocation3 + $0x68] sm:$0xff]
        %v3257 = vld [vmem:[#allocation3 + $0x70] sm:$0xff]
        %v3258 = vld [vmem:[#allocation3 + $0x78] sm:$0xff]
        %v3259 = vld [vmem:[#allocation3 + $0x80] sm:$0xff]
        %v3260 = vld [vmem:[#allocation3 + $0x88] sm:$0xff]
        %v3261 = vld [vmem:[#allocation3 + $0x90] sm:$0xff]
        %v3262 = vld [vmem:[#allocation3 + $0x98] sm:$0xff]
        %v3263 = vld [vmem:[#allocation3 + $0xa0] sm:$0xff]
        %v3264 = vld [vmem:[#allocation3 + $0xa8] sm:$0xff]
        %v3265 = vld [vmem:[#allocation3 + $0xb0] sm:$0xff]
        %v3266 = vld [vmem:[#allocation3 + $0xb8] sm:$0xff]
        %v3267 = vld [vmem:[#allocation3 + $0xc0] sm:$0xff]
        %v3268 = vld [vmem:[#allocation3 + $0xc8] sm:$0xff]
        %v3269 = vld [vmem:[#allocation2] sm:$0xff]
        %v3270 = vld [vmem:[#allocation2 + $0x8] sm:$0xff]
        %v3271 = vld [vmem:[#allocation2 + $0x10] sm:$0xff]
        %v3272 = vld [vmem:[#allocation2 + $0x18] sm:$0xff]
        %v3273 = vld [vmem:[#allocation2 + $0x20] sm:$0xff]
        %v3274 = vld [vmem:[#allocation2 + $0x28] sm:$0xff]
        %v3275 = vld [vmem:[#allocation2 + $0x30] sm:$0xff]
        %v3276 = vld [vmem:[#allocation2 + $0x38] sm:$0xff]
        %v3277 = vld [vmem:[#allocation2 + $0x40] sm:$0xff]
        %v3278 = vld [vmem:[#allocation2 + $0x48] sm:$0xff]
        %v3279 = vld [vmem:[#allocation2 + $0x50] sm:$0xff]
        %v3280 = vld [vmem:[#allocation2 + $0x58] sm:$0xff]
        %v3281 = vld [vmem:[#allocation2 + $0x60] sm:$0xff]
        %v3282 = vld [vmem:[#allocation2 + $0x68] sm:$0xff]
        %v3283 = vld [vmem:[#allocation2 + $0x70] sm:$0xff]
        %v3284 = vld [vmem:[#allocation2 + $0x78] sm:$0xff]
        %v3285 = vld [vmem:[#allocation2 + $0x80] sm:$0xff]
        %v3286 = vld [vmem:[#allocation2 + $0x88] sm:$0xff]
        %v3287 = vld [vmem:[#allocation2 + $0x90] sm:$0xff]
        %v3288 = vld [vmem:[#allocation2 + $0x98] sm:$0xff]
        %v3289 = vld [vmem:[#allocation2 + $0xa0] sm:$0xff]
        %v3290 = vld [vmem:[#allocation2 + $0xa8] sm:$0xff]
        %v3291 = vld [vmem:[#allocation2 + $0xb0] sm:$0xff]
        %v3292 = vld [vmem:[#allocation2 + $0xb8] sm:$0xff]
        %v3293 = vld [vmem:[#allocation2 + $0xc0] sm:$0xff]
        %v3294 = vld [vmem:[#allocation2 + $0xc8] sm:$0xff]
        %v3295 = vld [vmem:[#allocation2 + $0xd0] sm:$0xff]
        %v3296 = vld [vmem:[#allocation2 + $0xd8] sm:$0xff]
        %v3297 = vld [vmem:[#allocation2 + $0xe0] sm:$0xff]
        %v3298 = vld [vmem:[#allocation2 + $0xe8] sm:$0xff]
        %v3299 = vld [vmem:[#allocation2 + $0xf0] sm:$0xff]
        %v3300 = vld [vmem:[#allocation2 + $0xf8] sm:$0xff]
        %v3301 = vld [vmem:[#allocation2 + $0x100] sm:$0xff]
        %v3302 = vld [vmem:[#allocation2 + $0x108] sm:$0xff]
        %v3303 = vld [vmem:[#allocation2 + $0x110] sm:$0xff]
        %v3304 = vld [vmem:[#allocation2 + $0x118] sm:$0xff]
        %v3305 = vld [vmem:[#allocation2 + $0x120] sm:$0xff]
        %v3306 = vld [vmem:[#allocation2 + $0x128] sm:$0xff]
        %v3307 = vld [vmem:[#allocation2 + $0x130] sm:$0xff]
        %v3308 = vld [vmem:[#allocation2 + $0x138] sm:$0xff]
        %v3309 = vld [vmem:[#allocation2 + $0x140] sm:$0xff]
        %v3310 = vld [vmem:[#allocation2 + $0x148] sm:$0xff]
        %v3311 = vld [vmem:[#allocation2 + $0x150] sm:$0xff]
        %v3312 = vld [vmem:[#allocation2 + $0x158] sm:$0xff]
        %v3313 = vld [vmem:[#allocation2 + $0x160] sm:$0xff]
        %v3314 = vld [vmem:[#allocation2 + $0x168] sm:$0xff]
        %v3315 = vld [vmem:[#allocation2 + $0x170] sm:$0xff]
        %v3316 = vld [vmem:[#allocation2 + $0x178] sm:$0xff]
        %s3317 = scalar_lea.vmem [#allocation7], 256
        %v3318 = vld [vmem:[%s3317] sm:$0xf]
        %v3319 = vld [vmem:[%s3317 + $0x4] sm:$0xf]
        %v3320 = vld [vmem:[%s3317 + $0x8] sm:$0xf]
        %v3321 = vld [vmem:[%s3317 + $0xc] sm:$0xf]
        %v3322 = vld [vmem:[%s3317 + $0x10] sm:$0xf]
        %v3323 = vld [vmem:[%s3317 + $0x14] sm:$0xf]
        %v3324 = vld [vmem:[%s3317 + $0x18] sm:$0xf]
        %v3325 = vld [vmem:[%s3317 + $0x1c] sm:$0xf]
        %v3326 = vld [vmem:[%s3317 + $0x20] sm:$0xf]
        %v3327 = vld [vmem:[%s3317 + $0x24] sm:$0xf]
        %v3328 = vld [vmem:[%s3317 + $0x28] sm:$0xf]
        %v3329 = vld [vmem:[%s3317 + $0x2c] sm:$0xf]
        %v3330 = vld [vmem:[%s3317 + $0x30] sm:$0xf]
        %v3331 = vld [vmem:[%s3317 + $0x34] sm:$0xf]
        %v3332 = vld [vmem:[%s3317 + $0x38] sm:$0xf]
        %v3333 = vld [vmem:[%s3317 + $0x3c] sm:$0xf]
        %v3350 = vunpack.c.l.b16 %v3318
        %v3351 = vunpack.c.l.b16 %v3319
        %v3352 = vunpack.c.l.b16 %v3320
        %v3353 = vunpack.c.l.b16 %v3321
        %v3354 = vunpack.c.l.b16 %v3322
        %v3355 = vunpack.c.l.b16 %v3323
        %v3356 = vunpack.c.l.b16 %v3324
        %v3357 = vunpack.c.l.b16 %v3325
        %v3358 = vunpack.c.l.b16 %v3326
        %v3359 = vunpack.c.l.b16 %v3327
        %v3360 = vunpack.c.l.b16 %v3328
        %v3361 = vunpack.c.l.b16 %v3329
        %v3362 = vunpack.c.l.b16 %v3330
        %v3363 = vunpack.c.l.b16 %v3331
        %v3364 = vunpack.c.l.b16 %v3332
        %v3365 = vunpack.c.l.b16 %v3333
        %v3366 = vpack.c.b16 %v3351, %v3350
        %v3367 = vpack.c.b16 %v3353, %v3352
        %v3368 = vpack.c.b16 %v3355, %v3354
        %v3369 = vpack.c.b16 %v3357, %v3356
        %v3370 = vpack.c.b16 %v3359, %v3358
        %v3371 = vpack.c.b16 %v3361, %v3360
        %v3372 = vpack.c.b16 %v3363, %v3362
        %v3373 = vpack.c.b16 %v3365, %v3364
        %3382 = vmatprep.subr.bf16.mxu0 0
        %3383 = vmatpush1.bf16.msra.mxu0 %v3366
        %3384 = vmatprep.subr.bf16.mxu0 0
        %3385 = vmatpush1.bf16.msra.mxu0 %v3367
        %3386 = vmatprep.subr.bf16.mxu0 0
        %3387 = vmatpush1.bf16.msra.mxu0 %v3368
        %3388 = vmatprep.subr.bf16.mxu0 0
        %3389 = vmatpush1.bf16.msra.mxu0 %v3369
        %3390 = vmatprep.subr.bf16.mxu0 0
        %3391 = vmatpush1.bf16.msra.mxu0 %v3370
        %3392 = vmatprep.subr.bf16.mxu0 0
        %3393 = vmatpush1.bf16.msra.mxu0 %v3371
        %3394 = vmatprep.subr.bf16.mxu0 0
        %3395 = vmatpush1.bf16.msra.mxu0 %v3372
        %3396 = vmatprep.subr.bf16.mxu0 0
        %3397 = vmatpush1.bf16.msra.mxu0 %v3373
        %3398 = vmatprep.subr.bf16.mxu0 0
        %3399 = vmatpush1.bf16.msra.mxu0 0
        %3400 = vmatprep.subr.bf16.mxu0 0
        %3401 = vmatpush1.bf16.msra.mxu0 0
        %3402 = vmatprep.subr.bf16.mxu0 0
        %3403 = vmatpush1.bf16.msra.mxu0 0
        %3404 = vmatprep.subr.bf16.mxu0 0
        %3405 = vmatpush1.bf16.msra.mxu0 0
        %3406 = vmatprep.subr.bf16.mxu0 0
        %3407 = vmatpush1.bf16.msra.mxu0 0
        %3408 = vmatprep.subr.bf16.mxu0 0
        %3409 = vmatpush1.bf16.msra.mxu0 0
        %3410 = vmatprep.subr.bf16.mxu0 0
        %3411 = vmatpush1.bf16.msra.mxu0 0
        %3412 = vmatprep.subr.bf16.mxu0 0
        %3413 = vmatpush1.bf16.msra.mxu0 0
        %3414 = vmatprep.mubr.bf16.mxu0 0
        %3415 = vmatmul.mubr.bf16.gmra.mrb[0].mxu0 %v3245
        %v3416 = vpop.f32.mrb[0].mxu0
        %v3417 = vadd.f32 0.0, %v3416
        %v3418 = vpop.f32.mrb[0].mxu0
        %v3419 = vpop.f32.mrb[0].mxu0
        %v3420 = vadd.f32 0.0, %v3419
        %v3421 = vpop.f32.mrb[0].mxu0
        %3422 = vmatprep.mubr.bf16.mxu0 0
        %3423 = vmatmul.mubr.bf16.gmra.mrb[0].mxu0 %v3246
        %v3424 = vpop.f32.mrb[0].mxu0
        %v3425 = vadd.f32 0.0, %v3424
        %v3426 = vpop.f32.mrb[0].mxu0
        %v3427 = vpop.f32.mrb[0].mxu0
        %v3428 = vadd.f32 0.0, %v3427
        %v3429 = vpop.f32.mrb[0].mxu0
        %3430 = vmatprep.mubr.bf16.mxu0 0
        %3431 = vmatmul.mubr.bf16.gmra.mrb[0].mxu0 %v3247
        %v3432 = vpop.f32.mrb[0].mxu0
        %v3433 = vadd.f32 0.0, %v3432
        %v3434 = vpop.f32.mrb[0].mxu0
        %v3435 = vpop.f32.mrb[0].mxu0
        %v3436 = vadd.f32 0.0, %v3435
        %v3437 = vpop.f32.mrb[0].mxu0
        %3438 = vmatprep.mubr.bf16.mxu0 0
        %3439 = vmatmul.mubr.bf16.gmra.mrb[0].mxu0 %v3248
        %v3440 = vpop.f32.mrb[0].mxu0
        %v3441 = vadd.f32 0.0, %v3440
        %v3442 = vpop.f32.mrb[0].mxu0
        %v3443 = vpop.f32.mrb[0].mxu0
        %v3444 = vadd.f32 0.0, %v3443
        %v3445 = vpop.f32.mrb[0].mxu0
        %3446 = vmatprep.mubr.bf16.mxu0 0
        %3447 = vmatmul.mubr.bf16.gmra.mrb[0].mxu0 %v3249
        %v3448 = vpop.f32.mrb[0].mxu0
        %v3449 = vadd.f32 0.0, %v3448
        %v3450 = vpop.f32.mrb[0].mxu0
        %v3451 = vpop.f32.mrb[0].mxu0
        %v3452 = vadd.f32 0.0, %v3451
        %v3453 = vpop.f32.mrb[0].mxu0
        %3454 = vmatprep.mubr.bf16.mxu0 0
        %3455 = vmatmul.mubr.bf16.gmra.mrb[0].mxu0 %v3250
        %v3456 = vpop.f32.mrb[0].mxu0
        %v3457 = vadd.f32 0.0, %v3456
        %v3458 = vpop.f32.mrb[0].mxu0
        %v3459 = vpop.f32.mrb[0].mxu0
        %v3460 = vadd.f32 0.0, %v3459
        %v3461 = vpop.f32.mrb[0].mxu0
        %3462 = vmatprep.mubr.bf16.mxu0 0
        %3463 = vmatmul.mubr.bf16.gmra.mrb[0].mxu0 %v3251
        %v3464 = vpop.f32.mrb[0].mxu0
        %v3465 = vadd.f32 0.0, %v3464
        %v3466 = vpop.f32.mrb[0].mxu0
        %v3467 = vpop.f32.mrb[0].mxu0
        %v3468 = vadd.f32 0.0, %v3467
        %v3469 = vpop.f32.mrb[0].mxu0
        %3470 = vmatprep.mubr.bf16.mxu0 0
        %3471 = vmatmul.mubr.bf16.gmra.mrb[0].mxu0 %v3252
        %v3472 = vpop.f32.mrb[0].mxu0
        %v3473 = vadd.f32 0.0, %v3472
        %v3474 = vpop.f32.mrb[0].mxu0
        %v3475 = vpop.f32.mrb[0].mxu0
        %v3476 = vadd.f32 0.0, %v3475
        %v3477 = vpop.f32.mrb[0].mxu0
        %3478 = vmatprep.mubr.bf16.mxu0 0
        %3479 = vmatmul.mubr.bf16.gmra.mrb[0].mxu0 %v3253
        %v3480 = vpop.f32.mrb[0].mxu0
        %v3481 = vadd.f32 0.0, %v3480
        %v3482 = vpop.f32.mrb[0].mxu0
        %v3483 = vpop.f32.mrb[0].mxu0
        %v3484 = vadd.f32 0.0, %v3483
        %v3485 = vpop.f32.mrb[0].mxu0
        %3486 = vmatprep.mubr.bf16.mxu0 0
        %3487 = vmatmul.mubr.bf16.gmra.mrb[0].mxu0 %v3254
        %v3488 = vpop.f32.mrb[0].mxu0
        %v3489 = vadd.f32 0.0, %v3488
        %v3490 = vpop.f32.mrb[0].mxu0
        %v3491 = vpop.f32.mrb[0].mxu0
        %v3492 = vadd.f32 0.0, %v3491
        %v3493 = vpop.f32.mrb[0].mxu0
        %3494 = vmatprep.mubr.bf16.mxu0 0
        %3495 = vmatmul.mubr.bf16.gmra.mrb[0].mxu0 %v3255
        %v3496 = vpop.f32.mrb[0].mxu0
        %v3497 = vadd.f32 0.0, %v3496
        %v3498 = vpop.f32.mrb[0].mxu0
        %v3499 = vpop.f32.mrb[0].mxu0
        %v3500 = vadd.f32 0.0, %v3499
        %v3501 = vpop.f32.mrb[0].mxu0
        %3502 = vmatprep.mubr.bf16.mxu0 0
        %3503 = vmatmul.mubr.bf16.gmra.mrb[0].mxu0 %v3256
        %v3504 = vpop.f32.mrb[0].mxu0
        %v3505 = vadd.f32 0.0, %v3504
        %v3506 = vpop.f32.mrb[0].mxu0
        %v3507 = vpop.f32.mrb[0].mxu0
        %v3508 = vadd.f32 0.0, %v3507
        %v3509 = vpop.f32.mrb[0].mxu0
        %3510 = vmatprep.mubr.bf16.mxu0 0
        %3511 = vmatmul.mubr.bf16.gmra.mrb[0].mxu0 %v3257
        %v3512 = vpop.f32.mrb[0].mxu0
        %v3513 = vadd.f32 0.0, %v3512
        %v3514 = vpop.f32.mrb[0].mxu0
        %v3515 = vpop.f32.mrb[0].mxu0
        %v3516 = vadd.f32 0.0, %v3515
        %v3517 = vpop.f32.mrb[0].mxu0
        %3518 = vmatprep.mubr.bf16.mxu0 0
        %3519 = vmatmul.mubr.bf16.gmra.mrb[0].mxu0 %v3258
        %v3520 = vpop.f32.mrb[0].mxu0
        %v3521 = vadd.f32 0.0, %v3520
        %v3522 = vpop.f32.mrb[0].mxu0
        %v3523 = vpop.f32.mrb[0].mxu0
        %v3524 = vadd.f32 0.0, %v3523
        %v3525 = vpop.f32.mrb[0].mxu0
        %3526 = vmatprep.mubr.bf16.mxu0 0
        %3527 = vmatmul.mubr.bf16.gmra.mrb[0].mxu0 %v3259
        %v3528 = vpop.f32.mrb[0].mxu0
        %v3529 = vadd.f32 0.0, %v3528
        %v3530 = vpop.f32.mrb[0].mxu0
        %v3531 = vpop.f32.mrb[0].mxu0
        %v3532 = vadd.f32 0.0, %v3531
        %v3533 = vpop.f32.mrb[0].mxu0
        %3534 = vmatprep.mubr.bf16.mxu0 0
        %3535 = vmatmul.mubr.bf16.gmra.mrb[0].mxu0 %v3260
        %v3536 = vpop.f32.mrb[0].mxu0
        %v3537 = vadd.f32 0.0, %v3536
        %v3538 = vpop.f32.mrb[0].mxu0
        %v3539 = vpop.f32.mrb[0].mxu0
        %v3540 = vadd.f32 0.0, %v3539
        %v3541 = vpop.f32.mrb[0].mxu0
        %3542 = vmatprep.mubr.bf16.mxu0 0
        %3543 = vmatmul.mubr.bf16.gmra.mrb[0].mxu0 %v3261
        %v3544 = vpop.f32.mrb[0].mxu0
        %v3545 = vadd.f32 0.0, %v3544
        %v3546 = vpop.f32.mrb[0].mxu0
        %v3547 = vpop.f32.mrb[0].mxu0
        %v3548 = vadd.f32 0.0, %v3547
        %v3549 = vpop.f32.mrb[0].mxu0
        %3550 = vmatprep.mubr.bf16.mxu0 0
        %3551 = vmatmul.mubr.bf16.gmra.mrb[0].mxu0 %v3262
        %v3552 = vpop.f32.mrb[0].mxu0
        %v3553 = vadd.f32 0.0, %v3552
        %v3554 = vpop.f32.mrb[0].mxu0
        %v3555 = vpop.f32.mrb[0].mxu0
        %v3556 = vadd.f32 0.0, %v3555
        %v3557 = vpop.f32.mrb[0].mxu0
        %3558 = vmatprep.mubr.bf16.mxu0 0
        %3559 = vmatmul.mubr.bf16.gmra.mrb[0].mxu0 %v3263
        %v3560 = vpop.f32.mrb[0].mxu0
        %v3561 = vadd.f32 0.0, %v3560
        %v3562 = vpop.f32.mrb[0].mxu0
        %v3563 = vpop.f32.mrb[0].mxu0
        %v3564 = vadd.f32 0.0, %v3563
        %v3565 = vpop.f32.mrb[0].mxu0
        %3566 = vmatprep.mubr.bf16.mxu0 0
        %3567 = vmatmul.mubr.bf16.gmra.mrb[0].mxu0 %v3264
        %v3568 = vpop.f32.mrb[0].mxu0
        %v3569 = vadd.f32 0.0, %v3568
        %v3570 = vpop.f32.mrb[0].mxu0
        %v3571 = vpop.f32.mrb[0].mxu0
        %v3572 = vadd.f32 0.0, %v3571
        %v3573 = vpop.f32.mrb[0].mxu0
        %3574 = vmatprep.mubr.bf16.mxu0 0
        %3575 = vmatmul.mubr.bf16.gmra.mrb[0].mxu0 %v3265
        %v3576 = vpop.f32.mrb[0].mxu0
        %v3577 = vadd.f32 0.0, %v3576
        %v3578 = vpop.f32.mrb[0].mxu0
        %v3579 = vpop.f32.mrb[0].mxu0
        %v3580 = vadd.f32 0.0, %v3579
        %v3581 = vpop.f32.mrb[0].mxu0
        %3582 = vmatprep.mubr.bf16.mxu0 0
        %3583 = vmatmul.mubr.bf16.gmra.mrb[0].mxu0 %v3266
        %v3584 = vpop.f32.mrb[0].mxu0
        %v3585 = vadd.f32 0.0, %v3584
        %v3586 = vpop.f32.mrb[0].mxu0
        %v3587 = vpop.f32.mrb[0].mxu0
        %v3588 = vadd.f32 0.0, %v3587
        %v3589 = vpop.f32.mrb[0].mxu0
        %3590 = vmatprep.mubr.bf16.mxu0 0
        %3591 = vmatmul.mubr.bf16.gmra.mrb[0].mxu0 %v3267
        %v3592 = vpop.f32.mrb[0].mxu0
        %v3593 = vadd.f32 0.0, %v3592
        %v3594 = vpop.f32.mrb[0].mxu0
        %v3595 = vpop.f32.mrb[0].mxu0
        %v3596 = vadd.f32 0.0, %v3595
        %v3597 = vpop.f32.mrb[0].mxu0
        %3598 = vmatprep.mubr.bf16.mxu0 0
        %3599 = vmatmul.mubr.bf16.gmra.mrb[0].mxu0 %v3268
        %v3600 = vpop.f32.mrb[0].mxu0
        %v3601 = vadd.f32 0.0, %v3600
        %v3602 = vpop.f32.mrb[0].mxu0
        %v3603 = vpop.f32.mrb[0].mxu0
        %v3604 = vadd.f32 0.0, %v3603
        %v3605 = vpop.f32.mrb[0].mxu0
        %3606 = vdwg.mxu0
        %v3607 = vadd.f32 %v3269, %v3417
        %v3608 = vadd.f32 %v3270, %v3420
        %v3609 = vadd.f32 %v3271, %v3425
        %v3610 = vadd.f32 %v3272, %v3428
        %v3611 = vadd.f32 %v3273, %v3433
        %v3612 = vadd.f32 %v3274, %v3436
        %v3613 = vadd.f32 %v3275, %v3441
        %v3614 = vadd.f32 %v3276, %v3444
        %v3615 = vadd.f32 %v3277, %v3449
        %v3616 = vadd.f32 %v3278, %v3452
        %v3617 = vadd.f32 %v3279, %v3457
        %v3618 = vadd.f32 %v3280, %v3460
        %v3619 = vadd.f32 %v3281, %v3465
        %v3620 = vadd.f32 %v3282, %v3468
        %v3621 = vadd.f32 %v3283, %v3473
        %v3622 = vadd.f32 %v3284, %v3476
        %v3623 = vadd.f32 %v3285, %v3481
        %v3624 = vadd.f32 %v3286, %v3484
        %v3625 = vadd.f32 %v3287, %v3489
        %v3626 = vadd.f32 %v3288, %v3492
        %v3627 = vadd.f32 %v3289, %v3497
        %v3628 = vadd.f32 %v3290, %v3500
        %v3629 = vadd.f32 %v3291, %v3505
        %v3630 = vadd.f32 %v3292, %v3508
        %v3631 = vadd.f32 %v3293, %v3513
        %v3632 = vadd.f32 %v3294, %v3516
        %v3633 = vadd.f32 %v3295, %v3521
        %v3634 = vadd.f32 %v3296, %v3524
        %v3635 = vadd.f32 %v3297, %v3529
        %v3636 = vadd.f32 %v3298, %v3532
        %v3637 = vadd.f32 %v3299, %v3537
        %v3638 = vadd.f32 %v3300, %v3540
        %v3639 = vadd.f32 %v3301, %v3545
        %v3640 = vadd.f32 %v3302, %v3548
        %v3641 = vadd.f32 %v3303, %v3553
        %v3642 = vadd.f32 %v3304, %v3556
        %v3643 = vadd.f32 %v3305, %v3561
        %v3644 = vadd.f32 %v3306, %v3564
        %v3645 = vadd.f32 %v3307, %v3569
        %v3646 = vadd.f32 %v3308, %v3572
        %v3647 = vadd.f32 %v3309, %v3577
        %v3648 = vadd.f32 %v3310, %v3580
        %v3649 = vadd.f32 %v3311, %v3585
        %v3650 = vadd.f32 %v3312, %v3588
        %v3651 = vadd.f32 %v3313, %v3593
        %v3652 = vadd.f32 %v3314, %v3596
        %v3653 = vadd.f32 %v3315, %v3601
        %v3654 = vadd.f32 %v3316, %v3604
        %3655 = vst [vmem:[#allocation2] sm:$0xff] %v3607
        %3656 = vst [vmem:[#allocation2 + $0x8] sm:$0xff] %v3608
        %3657 = vst [vmem:[#allocation2 + $0x10] sm:$0xff] %v3609
        %3658 = vst [vmem:[#allocation2 + $0x18] sm:$0xff] %v3610
        %3659 = vst [vmem:[#allocation2 + $0x20] sm:$0xff] %v3611
        %3660 = vst [vmem:[#allocation2 + $0x28] sm:$0xff] %v3612
        %3661 = vst [vmem:[#allocation2 + $0x30] sm:$0xff] %v3613
        %3662 = vst [vmem:[#allocation2 + $0x38] sm:$0xff] %v3614
        %3663 = vst [vmem:[#allocation2 + $0x40] sm:$0xff] %v3615
        %3664 = vst [vmem:[#allocation2 + $0x48] sm:$0xff] %v3616
        %3665 = vst [vmem:[#allocation2 + $0x50] sm:$0xff] %v3617
        %3666 = vst [vmem:[#allocation2 + $0x58] sm:$0xff] %v3618
        %3667 = vst [vmem:[#allocation2 + $0x60] sm:$0xff] %v3619
        %3668 = vst [vmem:[#allocation2 + $0x68] sm:$0xff] %v3620
        %3669 = vst [vmem:[#allocation2 + $0x70] sm:$0xff] %v3621
        %3670 = vst [vmem:[#allocation2 + $0x78] sm:$0xff] %v3622
        %3671 = vst [vmem:[#allocation2 + $0x80] sm:$0xff] %v3623
        %3672 = vst [vmem:[#allocation2 + $0x88] sm:$0xff] %v3624
        %3673 = vst [vmem:[#allocation2 + $0x90] sm:$0xff] %v3625
        %3674 = vst [vmem:[#allocation2 + $0x98] sm:$0xff] %v3626
        %3675 = vst [vmem:[#allocation2 + $0xa0] sm:$0xff] %v3627
        %3676 = vst [vmem:[#allocation2 + $0xa8] sm:$0xff] %v3628
        %3677 = vst [vmem:[#allocation2 + $0xb0] sm:$0xff] %v3629
        %3678 = vst [vmem:[#allocation2 + $0xb8] sm:$0xff] %v3630
        %3679 = vst [vmem:[#allocation2 + $0xc0] sm:$0xff] %v3631
        %3680 = vst [vmem:[#allocation2 + $0xc8] sm:$0xff] %v3632
        %3681 = vst [vmem:[#allocation2 + $0xd0] sm:$0xff] %v3633
        %3682 = vst [vmem:[#allocation2 + $0xd8] sm:$0xff] %v3634
        %3683 = vst [vmem:[#allocation2 + $0xe0] sm:$0xff] %v3635
        %3684 = vst [vmem:[#allocation2 + $0xe8] sm:$0xff] %v3636
        %3685 = vst [vmem:[#allocation2 + $0xf0] sm:$0xff] %v3637
        %3686 = vst [vmem:[#allocation2 + $0xf8] sm:$0xff] %v3638
        %3687 = vst [vmem:[#allocation2 + $0x100] sm:$0xff] %v3639
        %3688 = vst [vmem:[#allocation2 + $0x108] sm:$0xff] %v3640
        %3689 = vst [vmem:[#allocation2 + $0x110] sm:$0xff] %v3641
        %3690 = vst [vmem:[#allocation2 + $0x118] sm:$0xff] %v3642
        %3691 = vst [vmem:[#allocation2 + $0x120] sm:$0xff] %v3643
        %3692 = vst [vmem:[#allocation2 + $0x128] sm:$0xff] %v3644
        %3693 = vst [vmem:[#allocation2 + $0x130] sm:$0xff] %v3645
        %3694 = vst [vmem:[#allocation2 + $0x138] sm:$0xff] %v3646
        %3695 = vst [vmem:[#allocation2 + $0x140] sm:$0xff] %v3647
        %3696 = vst [vmem:[#allocation2 + $0x148] sm:$0xff] %v3648
        %3697 = vst [vmem:[#allocation2 + $0x150] sm:$0xff] %v3649
        %3698 = vst [vmem:[#allocation2 + $0x158] sm:$0xff] %v3650
        %3699 = vst [vmem:[#allocation2 + $0x160] sm:$0xff] %v3651
        %3700 = vst [vmem:[#allocation2 + $0x168] sm:$0xff] %v3652
        %3701 = vst [vmem:[#allocation2 + $0x170] sm:$0xff] %v3653
        %3702 = vst [vmem:[#allocation2 + $0x178] sm:$0xff] %v3654
        %v3703 = vld [vmem:[#allocation3 + $0x10] sm:$0xff]
        %v3704 = vld [vmem:[#allocation3 + $0x18] sm:$0xff]
        %v3705 = vld [vmem:[#allocation3 + $0x20] sm:$0xff]
        %v3706 = vld [vmem:[#allocation3 + $0x28] sm:$0xff]
        %v3707 = vld [vmem:[#allocation3 + $0x30] sm:$0xff]
        %v3708 = vld [vmem:[#allocation3 + $0x38] sm:$0xff]
        %v3709 = vld [vmem:[#allocation3 + $0x40] sm:$0xff]
        %v3710 = vld [vmem:[#allocation3 + $0x48] sm:$0xff]
        %v3711 = vld [vmem:[#allocation3 + $0x50] sm:$0xff]
        %v3712 = vld [vmem:[#allocation3 + $0x58] sm:$0xff]
        %v3713 = vld [vmem:[#allocation3 + $0x60] sm:$0xff]
        %v3714 = vld [vmem:[#allocation3 + $0x68] sm:$0xff]
        %v3715 = vld [vmem:[#allocation3 + $0x70] sm:$0xff]
        %v3716 = vld [vmem:[#allocation3 + $0x78] sm:$0xff]
        %v3717 = vld [vmem:[#allocation3 + $0x80] sm:$0xff]
        %v3718 = vld [vmem:[#allocation3 + $0x88] sm:$0xff]
        %v3719 = vld [vmem:[#allocation3 + $0x90] sm:$0xff]
        %v3720 = vld [vmem:[#allocation3 + $0x98] sm:$0xff]
        %v3721 = vld [vmem:[#allocation3 + $0xa0] sm:$0xff]
        %v3722 = vld [vmem:[#allocation3 + $0xa8] sm:$0xff]
        %v3723 = vld [vmem:[#allocation3 + $0xb0] sm:$0xff]
        %v3724 = vld [vmem:[#allocation3 + $0xb8] sm:$0xff]
        %v3725 = vld [vmem:[#allocation3 + $0xc0] sm:$0xff]
        %v3726 = vld [vmem:[#allocation3 + $0xc8] sm:$0xff]
        %v3727 = vld [vmem:[#allocation3 + $0xd0] sm:$0x1]
        %v3728 = vld [vmem:[#allocation2] sm:$0xff]
        %v3729 = vld [vmem:[#allocation2 + $0x8] sm:$0xff]
        %v3730 = vld [vmem:[#allocation2 + $0x10] sm:$0xff]
        %v3731 = vld [vmem:[#allocation2 + $0x18] sm:$0xff]
        %v3732 = vld [vmem:[#allocation2 + $0x20] sm:$0xff]
        %v3733 = vld [vmem:[#allocation2 + $0x28] sm:$0xff]
        %v3734 = vld [vmem:[#allocation2 + $0x30] sm:$0xff]
        %v3735 = vld [vmem:[#allocation2 + $0x38] sm:$0xff]
        %v3736 = vld [vmem:[#allocation2 + $0x40] sm:$0xff]
        %v3737 = vld [vmem:[#allocation2 + $0x48] sm:$0xff]
        %v3738 = vld [vmem:[#allocation2 + $0x50] sm:$0xff]
        %v3739 = vld [vmem:[#allocation2 + $0x58] sm:$0xff]
        %v3740 = vld [vmem:[#allocation2 + $0x60] sm:$0xff]
        %v3741 = vld [vmem:[#allocation2 + $0x68] sm:$0xff]
        %v3742 = vld [vmem:[#allocation2 + $0x70] sm:$0xff]
        %v3743 = vld [vmem:[#allocation2 + $0x78] sm:$0xff]
        %v3744 = vld [vmem:[#allocation2 + $0x80] sm:$0xff]
        %v3745 = vld [vmem:[#allocation2 + $0x88] sm:$0xff]
        %v3746 = vld [vmem:[#allocation2 + $0x90] sm:$0xff]
        %v3747 = vld [vmem:[#allocation2 + $0x98] sm:$0xff]
        %v3748 = vld [vmem:[#allocation2 + $0xa0] sm:$0xff]
        %v3749 = vld [vmem:[#allocation2 + $0xa8] sm:$0xff]
        %v3750 = vld [vmem:[#allocation2 + $0xb0] sm:$0xff]
        %v3751 = vld [vmem:[#allocation2 + $0xb8] sm:$0xff]
        %v3752 = vld [vmem:[#allocation2 + $0xc0] sm:$0xff]
        %v3753 = vld [vmem:[#allocation2 + $0xc8] sm:$0xff]
        %v3754 = vld [vmem:[#allocation2 + $0xd0] sm:$0xff]
        %v3755 = vld [vmem:[#allocation2 + $0xd8] sm:$0xff]
        %v3756 = vld [vmem:[#allocation2 + $0xe0] sm:$0xff]
        %v3757 = vld [vmem:[#allocation2 + $0xe8] sm:$0xff]
        %v3758 = vld [vmem:[#allocation2 + $0xf0] sm:$0xff]
        %v3759 = vld [vmem:[#allocation2 + $0xf8] sm:$0xff]
        %v3760 = vld [vmem:[#allocation2 + $0x100] sm:$0xff]
        %v3761 = vld [vmem:[#allocation2 + $0x108] sm:$0xff]
        %v3762 = vld [vmem:[#allocation2 + $0x110] sm:$0xff]
        %v3763 = vld [vmem:[#allocation2 + $0x118] sm:$0xff]
        %v3764 = vld [vmem:[#allocation2 + $0x120] sm:$0xff]
        %v3765 = vld [vmem:[#allocation2 + $0x128] sm:$0xff]
        %v3766 = vld [vmem:[#allocation2 + $0x130] sm:$0xff]
        %v3767 = vld [vmem:[#allocation2 + $0x138] sm:$0xff]
        %v3768 = vld [vmem:[#allocation2 + $0x140] sm:$0xff]
        %v3769 = vld [vmem:[#allocation2 + $0x148] sm:$0xff]
        %v3770 = vld [vmem:[#allocation2 + $0x150] sm:$0xff]
        %v3771 = vld [vmem:[#allocation2 + $0x158] sm:$0xff]
        %v3772 = vld [vmem:[#allocation2 + $0x160] sm:$0xff]
        %v3773 = vld [vmem:[#allocation2 + $0x168] sm:$0xff]
        %v3774 = vld [vmem:[#allocation2 + $0x170] sm:$0xff]
        %v3775 = vld [vmem:[#allocation2 + $0x178] sm:$0xff]
        %s3776 = scalar_lea.vmem [#allocation7], 320
        %v3777 = vld [vmem:[%s3776] sm:$0xf]
        %v3778 = vld [vmem:[%s3776 + $0x4] sm:$0xf]
        %v3779 = vld [vmem:[%s3776 + $0x8] sm:$0xf]
        %v3780 = vld [vmem:[%s3776 + $0xc] sm:$0xf]
        %v3781 = vld [vmem:[%s3776 + $0x10] sm:$0xf]
        %v3782 = vld [vmem:[%s3776 + $0x14] sm:$0xf]
        %v3783 = vld [vmem:[%s3776 + $0x18] sm:$0xf]
        %v3784 = vld [vmem:[%s3776 + $0x1c] sm:$0xf]
        %v3785 = vld [vmem:[%s3776 + $0x20] sm:$0xf]
        %v3786 = vld [vmem:[%s3776 + $0x24] sm:$0xf]
        %v3787 = vld [vmem:[%s3776 + $0x28] sm:$0xf]
        %v3788 = vld [vmem:[%s3776 + $0x2c] sm:$0xf]
        %v3789 = vld [vmem:[%s3776 + $0x30] sm:$0xf]
        %v3790 = vld [vmem:[%s3776 + $0x34] sm:$0xf]
        %v3791 = vld [vmem:[%s3776 + $0x38] sm:$0xf]
        %v3792 = vld [vmem:[%s3776 + $0x3c] sm:$0xf]
        %vm3793 = vsmask.f32 7424
        %v3795 = vshrl.u32 %v3703, 16
        %v3797 = vshll.u32 %v3703, 16
        %v3799 = vrot.slane %v3797, 1
        %v3800 = vor.u32 %v3795, %v3799
        %v3802 = vshll.u32 %v3704, 16
        %v3804 = vrot.slane %v3802, 1
        %v3805 = vsel %vm3793, %v3800, %v3804
        %v3806 = vshrl.u32 %v3704, 16
        %v3808 = vor.u32 %v3806, %v3804
        %v3810 = vshll.u32 %v3705, 16
        %v3812 = vrot.slane %v3810, 1
        %v3813 = vsel %vm3793, %v3808, %v3812
        %v3814 = vshrl.u32 %v3705, 16
        %v3816 = vor.u32 %v3814, %v3812
        %v3818 = vshll.u32 %v3706, 16
        %v3820 = vrot.slane %v3818, 1
        %v3821 = vsel %vm3793, %v3816, %v3820
        %v3822 = vshrl.u32 %v3706, 16
        %v3824 = vor.u32 %v3822, %v3820
        %v3826 = vshll.u32 %v3707, 16
        %v3828 = vrot.slane %v3826, 1
        %v3829 = vsel %vm3793, %v3824, %v3828
        %v3830 = vshrl.u32 %v3707, 16
        %v3832 = vor.u32 %v3830, %v3828
        %v3834 = vshll.u32 %v3708, 16
        %v3836 = vrot.slane %v3834, 1
        %v3837 = vsel %vm3793, %v3832, %v3836
        %v3838 = vshrl.u32 %v3708, 16
        %v3840 = vor.u32 %v3838, %v3836
        %v3842 = vshll.u32 %v3709, 16
        %v3844 = vrot.slane %v3842, 1
        %v3845 = vsel %vm3793, %v3840, %v3844
        %v3846 = vshrl.u32 %v3709, 16
        %v3848 = vor.u32 %v3846, %v3844
        %v3850 = vshll.u32 %v3710, 16
        %v3852 = vrot.slane %v3850, 1
        %v3853 = vsel %vm3793, %v3848, %v3852
        %v3854 = vshrl.u32 %v3710, 16
        %v3856 = vor.u32 %v3854, %v3852
        %v3858 = vshll.u32 %v3711, 16
        %v3860 = vrot.slane %v3858, 1
        %v3861 = vsel %vm3793, %v3856, %v3860
        %v3862 = vshrl.u32 %v3711, 16
        %v3864 = vor.u32 %v3862, %v3860
        %v3866 = vshll.u32 %v3712, 16
        %v3868 = vrot.slane %v3866, 1
        %v3869 = vsel %vm3793, %v3864, %v3868
        %v3870 = vshrl.u32 %v3712, 16
        %v3872 = vor.u32 %v3870, %v3868
        %v3874 = vshll.u32 %v3713, 16
        %v3876 = vrot.slane %v3874, 1
        %v3877 = vsel %vm3793, %v3872, %v3876
        %v3878 = vshrl.u32 %v3713, 16
        %v3880 = vor.u32 %v3878, %v3876
        %v3882 = vshll.u32 %v3714, 16
        %v3884 = vrot.slane %v3882, 1
        %v3885 = vsel %vm3793, %v3880, %v3884
        %v3886 = vshrl.u32 %v3714, 16
        %v3888 = vor.u32 %v3886, %v3884
        %v3890 = vshll.u32 %v3715, 16
        %v3892 = vrot.slane %v3890, 1
        %v3893 = vsel %vm3793, %v3888, %v3892
        %v3894 = vshrl.u32 %v3715, 16
        %v3896 = vor.u32 %v3894, %v3892
        %v3898 = vshll.u32 %v3716, 16
        %v3900 = vrot.slane %v3898, 1
        %v3901 = vsel %vm3793, %v3896, %v3900
        %v3902 = vshrl.u32 %v3716, 16
        %v3904 = vor.u32 %v3902, %v3900
        %v3906 = vshll.u32 %v3717, 16
        %v3908 = vrot.slane %v3906, 1
        %v3909 = vsel %vm3793, %v3904, %v3908
        %v3910 = vshrl.u32 %v3717, 16
        %v3912 = vor.u32 %v3910, %v3908
        %v3914 = vshll.u32 %v3718, 16
        %v3916 = vrot.slane %v3914, 1
        %v3917 = vsel %vm3793, %v3912, %v3916
        %v3918 = vshrl.u32 %v3718, 16
        %v3920 = vor.u32 %v3918, %v3916
        %v3922 = vshll.u32 %v3719, 16
        %v3924 = vrot.slane %v3922, 1
        %v3925 = vsel %vm3793, %v3920, %v3924
        %v3926 = vshrl.u32 %v3719, 16
        %v3928 = vor.u32 %v3926, %v3924
        %v3930 = vshll.u32 %v3720, 16
        %v3932 = vrot.slane %v3930, 1
        %v3933 = vsel %vm3793, %v3928, %v3932
        %v3934 = vshrl.u32 %v3720, 16
        %v3936 = vor.u32 %v3934, %v3932
        %v3938 = vshll.u32 %v3721, 16
        %v3940 = vrot.slane %v3938, 1
        %v3941 = vsel %vm3793, %v3936, %v3940
        %v3942 = vshrl.u32 %v3721, 16
        %v3944 = vor.u32 %v3942, %v3940
        %v3946 = vshll.u32 %v3722, 16
        %v3948 = vrot.slane %v3946, 1
        %v3949 = vsel %vm3793, %v3944, %v3948
        %v3950 = vshrl.u32 %v3722, 16
        %v3952 = vor.u32 %v3950, %v3948
        %v3954 = vshll.u32 %v3723, 16
        %v3956 = vrot.slane %v3954, 1
        %v3957 = vsel %vm3793, %v3952, %v3956
        %v3958 = vshrl.u32 %v3723, 16
        %v3960 = vor.u32 %v3958, %v3956
        %v3962 = vshll.u32 %v3724, 16
        %v3964 = vrot.slane %v3962, 1
        %v3965 = vsel %vm3793, %v3960, %v3964
        %v3966 = vshrl.u32 %v3724, 16
        %v3968 = vor.u32 %v3966, %v3964
        %v3970 = vshll.u32 %v3725, 16
        %v3972 = vrot.slane %v3970, 1
        %v3973 = vsel %vm3793, %v3968, %v3972
        %v3974 = vshrl.u32 %v3725, 16
        %v3976 = vor.u32 %v3974, %v3972
        %v3978 = vshll.u32 %v3726, 16
        %v3980 = vrot.slane %v3978, 1
        %v3981 = vsel %vm3793, %v3976, %v3980
        %v3982 = vshrl.u32 %v3726, 16
        %v3984 = vor.u32 %v3982, %v3980
        %v3986 = vshll.u32 %v3727, 16
        %v3988 = vrot.slane %v3986, 1
        %v3989 = vsel %vm3793, %v3984, %v3988
        %v4030 = vunpack.c.l.b16 %v3777
        %v4031 = vunpack.c.l.b16 %v3778
        %v4032 = vunpack.c.l.b16 %v3779
        %v4033 = vunpack.c.l.b16 %v3780
        %v4034 = vunpack.c.l.b16 %v3781
        %v4035 = vunpack.c.l.b16 %v3782
        %v4036 = vunpack.c.l.b16 %v3783
        %v4037 = vunpack.c.l.b16 %v3784
        %v4038 = vunpack.c.l.b16 %v3785
        %v4039 = vunpack.c.l.b16 %v3786
        %v4040 = vunpack.c.l.b16 %v3787
        %v4041 = vunpack.c.l.b16 %v3788
        %v4042 = vunpack.c.l.b16 %v3789
        %v4043 = vunpack.c.l.b16 %v3790
        %v4044 = vunpack.c.l.b16 %v3791
        %v4045 = vunpack.c.l.b16 %v3792
        %v4046 = vpack.c.b16 %v4031, %v4030
        %v4047 = vpack.c.b16 %v4033, %v4032
        %v4048 = vpack.c.b16 %v4035, %v4034
        %v4049 = vpack.c.b16 %v4037, %v4036
        %v4050 = vpack.c.b16 %v4039, %v4038
        %v4051 = vpack.c.b16 %v4041, %v4040
        %v4052 = vpack.c.b16 %v4043, %v4042
        %v4053 = vpack.c.b16 %v4045, %v4044
        %4062 = vmatprep.subr.bf16.mxu0 0
        %4063 = vmatpush1.bf16.msra.mxu0 %v4046
        %4064 = vmatprep.subr.bf16.mxu0 0
        %4065 = vmatpush1.bf16.msra.mxu0 %v4047
        %4066 = vmatprep.subr.bf16.mxu0 0
        %4067 = vmatpush1.bf16.msra.mxu0 %v4048
        %4068 = vmatprep.subr.bf16.mxu0 0
        %4069 = vmatpush1.bf16.msra.mxu0 %v4049
        %4070 = vmatprep.subr.bf16.mxu0 0
        %4071 = vmatpush1.bf16.msra.mxu0 %v4050
        %4072 = vmatprep.subr.bf16.mxu0 0
        %4073 = vmatpush1.bf16.msra.mxu0 %v4051
        %4074 = vmatprep.subr.bf16.mxu0 0
        %4075 = vmatpush1.bf16.msra.mxu0 %v4052
        %4076 = vmatprep.subr.bf16.mxu0 0
        %4077 = vmatpush1.bf16.msra.mxu0 %v4053
        %4078 = vmatprep.subr.bf16.mxu0 0
        %4079 = vmatpush1.bf16.msra.mxu0 0
        %4080 = vmatprep.subr.bf16.mxu0 0
        %4081 = vmatpush1.bf16.msra.mxu0 0
        %4082 = vmatprep.subr.bf16.mxu0 0
        %4083 = vmatpush1.bf16.msra.mxu0 0
        %4084 = vmatprep.subr.bf16.mxu0 0
        %4085 = vmatpush1.bf16.msra.mxu0 0
        %4086 = vmatprep.subr.bf16.mxu0 0
        %4087 = vmatpush1.bf16.msra.mxu0 0
        %4088 = vmatprep.subr.bf16.mxu0 0
        %4089 = vmatpush1.bf16.msra.mxu0 0
        %4090 = vmatprep.subr.bf16.mxu0 0
        %4091 = vmatpush1.bf16.msra.mxu0 0
        %4092 = vmatprep.subr.bf16.mxu0 0
        %4093 = vmatpush1.bf16.msra.mxu0 0
        %4094 = vmatprep.mubr.bf16.mxu0 0
        %4095 = vmatmul.mubr.bf16.gmra.mrb[0].mxu0 %v3805
        %v4096 = vpop.f32.mrb[0].mxu0
        %v4097 = vadd.f32 0.0, %v4096
        %v4098 = vpop.f32.mrb[0].mxu0
        %v4099 = vpop.f32.mrb[0].mxu0
        %v4100 = vadd.f32 0.0, %v4099
        %v4101 = vpop.f32.mrb[0].mxu0
        %4102 = vmatprep.mubr.bf16.mxu0 0
        %4103 = vmatmul.mubr.bf16.gmra.mrb[0].mxu0 %v3813
        %v4104 = vpop.f32.mrb[0].mxu0
        %v4105 = vadd.f32 0.0, %v4104
        %v4106 = vpop.f32.mrb[0].mxu0
        %v4107 = vpop.f32.mrb[0].mxu0
        %v4108 = vadd.f32 0.0, %v4107
        %v4109 = vpop.f32.mrb[0].mxu0
        %4110 = vmatprep.mubr.bf16.mxu0 0
        %4111 = vmatmul.mubr.bf16.gmra.mrb[0].mxu0 %v3821
        %v4112 = vpop.f32.mrb[0].mxu0
        %v4113 = vadd.f32 0.0, %v4112
        %v4114 = vpop.f32.mrb[0].mxu0
        %v4115 = vpop.f32.mrb[0].mxu0
        %v4116 = vadd.f32 0.0, %v4115
        %v4117 = vpop.f32.mrb[0].mxu0
        %4118 = vmatprep.mubr.bf16.mxu0 0
        %4119 = vmatmul.mubr.bf16.gmra.mrb[0].mxu0 %v3829
        %v4120 = vpop.f32.mrb[0].mxu0
        %v4121 = vadd.f32 0.0, %v4120
        %v4122 = vpop.f32.mrb[0].mxu0
        %v4123 = vpop.f32.mrb[0].mxu0
        %v4124 = vadd.f32 0.0, %v4123
        %v4125 = vpop.f32.mrb[0].mxu0
        %4126 = vmatprep.mubr.bf16.mxu0 0
        %4127 = vmatmul.mubr.bf16.gmra.mrb[0].mxu0 %v3837
        %v4128 = vpop.f32.mrb[0].mxu0
        %v4129 = vadd.f32 0.0, %v4128
        %v4130 = vpop.f32.mrb[0].mxu0
        %v4131 = vpop.f32.mrb[0].mxu0
        %v4132 = vadd.f32 0.0, %v4131
        %v4133 = vpop.f32.mrb[0].mxu0
        %4134 = vmatprep.mubr.bf16.mxu0 0
        %4135 = vmatmul.mubr.bf16.gmra.mrb[0].mxu0 %v3845
        %v4136 = vpop.f32.mrb[0].mxu0
        %v4137 = vadd.f32 0.0, %v4136
        %v4138 = vpop.f32.mrb[0].mxu0
        %v4139 = vpop.f32.mrb[0].mxu0
        %v4140 = vadd.f32 0.0, %v4139
        %v4141 = vpop.f32.mrb[0].mxu0
        %4142 = vmatprep.mubr.bf16.mxu0 0
        %4143 = vmatmul.mubr.bf16.gmra.mrb[0].mxu0 %v3853
        %v4144 = vpop.f32.mrb[0].mxu0
        %v4145 = vadd.f32 0.0, %v4144
        %v4146 = vpop.f32.mrb[0].mxu0
        %v4147 = vpop.f32.mrb[0].mxu0
        %v4148 = vadd.f32 0.0, %v4147
        %v4149 = vpop.f32.mrb[0].mxu0
        %4150 = vmatprep.mubr.bf16.mxu0 0
        %4151 = vmatmul.mubr.bf16.gmra.mrb[0].mxu0 %v3861
        %v4152 = vpop.f32.mrb[0].mxu0
        %v4153 = vadd.f32 0.0, %v4152
        %v4154 = vpop.f32.mrb[0].mxu0
        %v4155 = vpop.f32.mrb[0].mxu0
        %v4156 = vadd.f32 0.0, %v4155
        %v4157 = vpop.f32.mrb[0].mxu0
        %4158 = vmatprep.mubr.bf16.mxu0 0
        %4159 = vmatmul.mubr.bf16.gmra.mrb[0].mxu0 %v3869
        %v4160 = vpop.f32.mrb[0].mxu0
        %v4161 = vadd.f32 0.0, %v4160
        %v4162 = vpop.f32.mrb[0].mxu0
        %v4163 = vpop.f32.mrb[0].mxu0
        %v4164 = vadd.f32 0.0, %v4163
        %v4165 = vpop.f32.mrb[0].mxu0
        %4166 = vmatprep.mubr.bf16.mxu0 0
        %4167 = vmatmul.mubr.bf16.gmra.mrb[0].mxu0 %v3877
        %v4168 = vpop.f32.mrb[0].mxu0
        %v4169 = vadd.f32 0.0, %v4168
        %v4170 = vpop.f32.mrb[0].mxu0
        %v4171 = vpop.f32.mrb[0].mxu0
        %v4172 = vadd.f32 0.0, %v4171
        %v4173 = vpop.f32.mrb[0].mxu0
        %4174 = vmatprep.mubr.bf16.mxu0 0
        %4175 = vmatmul.mubr.bf16.gmra.mrb[0].mxu0 %v3885
        %v4176 = vpop.f32.mrb[0].mxu0
        %v4177 = vadd.f32 0.0, %v4176
        %v4178 = vpop.f32.mrb[0].mxu0
        %v4179 = vpop.f32.mrb[0].mxu0
        %v4180 = vadd.f32 0.0, %v4179
        %v4181 = vpop.f32.mrb[0].mxu0
        %4182 = vmatprep.mubr.bf16.mxu0 0
        %4183 = vmatmul.mubr.bf16.gmra.mrb[0].mxu0 %v3893
        %v4184 = vpop.f32.mrb[0].mxu0
        %v4185 = vadd.f32 0.0, %v4184
        %v4186 = vpop.f32.mrb[0].mxu0
        %v4187 = vpop.f32.mrb[0].mxu0
        %v4188 = vadd.f32 0.0, %v4187
        %v4189 = vpop.f32.mrb[0].mxu0
        %4190 = vmatprep.mubr.bf16.mxu0 0
        %4191 = vmatmul.mubr.bf16.gmra.mrb[0].mxu0 %v3901
        %v4192 = vpop.f32.mrb[0].mxu0
        %v4193 = vadd.f32 0.0, %v4192
        %v4194 = vpop.f32.mrb[0].mxu0
        %v4195 = vpop.f32.mrb[0].mxu0
        %v4196 = vadd.f32 0.0, %v4195
        %v4197 = vpop.f32.mrb[0].mxu0
        %4198 = vmatprep.mubr.bf16.mxu0 0
        %4199 = vmatmul.mubr.bf16.gmra.mrb[0].mxu0 %v3909
        %v4200 = vpop.f32.mrb[0].mxu0
        %v4201 = vadd.f32 0.0, %v4200
        %v4202 = vpop.f32.mrb[0].mxu0
        %v4203 = vpop.f32.mrb[0].mxu0
        %v4204 = vadd.f32 0.0, %v4203
        %v4205 = vpop.f32.mrb[0].mxu0
        %4206 = vmatprep.mubr.bf16.mxu0 0
        %4207 = vmatmul.mubr.bf16.gmra.mrb[0].mxu0 %v3917
        %v4208 = vpop.f32.mrb[0].mxu0
        %v4209 = vadd.f32 0.0, %v4208
        %v4210 = vpop.f32.mrb[0].mxu0
        %v4211 = vpop.f32.mrb[0].mxu0
        %v4212 = vadd.f32 0.0, %v4211
        %v4213 = vpop.f32.mrb[0].mxu0
        %4214 = vmatprep.mubr.bf16.mxu0 0
        %4215 = vmatmul.mubr.bf16.gmra.mrb[0].mxu0 %v3925
        %v4216 = vpop.f32.mrb[0].mxu0
        %v4217 = vadd.f32 0.0, %v4216
        %v4218 = vpop.f32.mrb[0].mxu0
        %v4219 = vpop.f32.mrb[0].mxu0
        %v4220 = vadd.f32 0.0, %v4219
        %v4221 = vpop.f32.mrb[0].mxu0
        %4222 = vmatprep.mubr.bf16.mxu0 0
        %4223 = vmatmul.mubr.bf16.gmra.mrb[0].mxu0 %v3933
        %v4224 = vpop.f32.mrb[0].mxu0
        %v4225 = vadd.f32 0.0, %v4224
        %v4226 = vpop.f32.mrb[0].mxu0
        %v4227 = vpop.f32.mrb[0].mxu0
        %v4228 = vadd.f32 0.0, %v4227
        %v4229 = vpop.f32.mrb[0].mxu0
        %4230 = vmatprep.mubr.bf16.mxu0 0
        %4231 = vmatmul.mubr.bf16.gmra.mrb[0].mxu0 %v3941
        %v4232 = vpop.f32.mrb[0].mxu0
        %v4233 = vadd.f32 0.0, %v4232
        %v4234 = vpop.f32.mrb[0].mxu0
        %v4235 = vpop.f32.mrb[0].mxu0
        %v4236 = vadd.f32 0.0, %v4235
        %v4237 = vpop.f32.mrb[0].mxu0
        %4238 = vmatprep.mubr.bf16.mxu0 0
        %4239 = vmatmul.mubr.bf16.gmra.mrb[0].mxu0 %v3949
        %v4240 = vpop.f32.mrb[0].mxu0
        %v4241 = vadd.f32 0.0, %v4240
        %v4242 = vpop.f32.mrb[0].mxu0
        %v4243 = vpop.f32.mrb[0].mxu0
        %v4244 = vadd.f32 0.0, %v4243
        %v4245 = vpop.f32.mrb[0].mxu0
        %4246 = vmatprep.mubr.bf16.mxu0 0
        %4247 = vmatmul.mubr.bf16.gmra.mrb[0].mxu0 %v3957
        %v4248 = vpop.f32.mrb[0].mxu0
        %v4249 = vadd.f32 0.0, %v4248
        %v4250 = vpop.f32.mrb[0].mxu0
        %v4251 = vpop.f32.mrb[0].mxu0
        %v4252 = vadd.f32 0.0, %v4251
        %v4253 = vpop.f32.mrb[0].mxu0
        %4254 = vmatprep.mubr.bf16.mxu0 0
        %4255 = vmatmul.mubr.bf16.gmra.mrb[0].mxu0 %v3965
        %v4256 = vpop.f32.mrb[0].mxu0
        %v4257 = vadd.f32 0.0, %v4256
        %v4258 = vpop.f32.mrb[0].mxu0
        %v4259 = vpop.f32.mrb[0].mxu0
        %v4260 = vadd.f32 0.0, %v4259
        %v4261 = vpop.f32.mrb[0].mxu0
        %4262 = vmatprep.mubr.bf16.mxu0 0
        %4263 = vmatmul.mubr.bf16.gmra.mrb[0].mxu0 %v3973
        %v4264 = vpop.f32.mrb[0].mxu0
        %v4265 = vadd.f32 0.0, %v4264
        %v4266 = vpop.f32.mrb[0].mxu0
        %v4267 = vpop.f32.mrb[0].mxu0
        %v4268 = vadd.f32 0.0, %v4267
        %v4269 = vpop.f32.mrb[0].mxu0
        %4270 = vmatprep.mubr.bf16.mxu0 0
        %4271 = vmatmul.mubr.bf16.gmra.mrb[0].mxu0 %v3981
        %v4272 = vpop.f32.mrb[0].mxu0
        %v4273 = vadd.f32 0.0, %v4272
        %v4274 = vpop.f32.mrb[0].mxu0
        %v4275 = vpop.f32.mrb[0].mxu0
        %v4276 = vadd.f32 0.0, %v4275
        %v4277 = vpop.f32.mrb[0].mxu0
        %4278 = vmatprep.mubr.bf16.mxu0 0
        %4279 = vmatmul.mubr.bf16.gmra.mrb[0].mxu0 %v3989
        %v4280 = vpop.f32.mrb[0].mxu0
        %v4281 = vadd.f32 0.0, %v4280
        %v4282 = vpop.f32.mrb[0].mxu0
        %v4283 = vpop.f32.mrb[0].mxu0
        %v4284 = vadd.f32 0.0, %v4283
        %v4285 = vpop.f32.mrb[0].mxu0
        %4286 = vdwg.mxu0
        %v4287 = vadd.f32 %v3728, %v4097
        %v4288 = vadd.f32 %v3729, %v4100
        %v4289 = vadd.f32 %v3730, %v4105
        %v4290 = vadd.f32 %v3731, %v4108
        %v4291 = vadd.f32 %v3732, %v4113
        %v4292 = vadd.f32 %v3733, %v4116
        %v4293 = vadd.f32 %v3734, %v4121
        %v4294 = vadd.f32 %v3735, %v4124
        %v4295 = vadd.f32 %v3736, %v4129
        %v4296 = vadd.f32 %v3737, %v4132
        %v4297 = vadd.f32 %v3738, %v4137
        %v4298 = vadd.f32 %v3739, %v4140
        %v4299 = vadd.f32 %v3740, %v4145
        %v4300 = vadd.f32 %v3741, %v4148
        %v4301 = vadd.f32 %v3742, %v4153
        %v4302 = vadd.f32 %v3743, %v4156
        %v4303 = vadd.f32 %v3744, %v4161
        %v4304 = vadd.f32 %v3745, %v4164
        %v4305 = vadd.f32 %v3746, %v4169
        %v4306 = vadd.f32 %v3747, %v4172
        %v4307 = vadd.f32 %v3748, %v4177
        %v4308 = vadd.f32 %v3749, %v4180
        %v4309 = vadd.f32 %v3750, %v4185
        %v4310 = vadd.f32 %v3751, %v4188
        %v4311 = vadd.f32 %v3752, %v4193
        %v4312 = vadd.f32 %v3753, %v4196
        %v4313 = vadd.f32 %v3754, %v4201
        %v4314 = vadd.f32 %v3755, %v4204
        %v4315 = vadd.f32 %v3756, %v4209
        %v4316 = vadd.f32 %v3757, %v4212
        %v4317 = vadd.f32 %v3758, %v4217
        %v4318 = vadd.f32 %v3759, %v4220
        %v4319 = vadd.f32 %v3760, %v4225
        %v4320 = vadd.f32 %v3761, %v4228
        %v4321 = vadd.f32 %v3762, %v4233
        %v4322 = vadd.f32 %v3763, %v4236
        %v4323 = vadd.f32 %v3764, %v4241
        %v4324 = vadd.f32 %v3765, %v4244
        %v4325 = vadd.f32 %v3766, %v4249
        %v4326 = vadd.f32 %v3767, %v4252
        %v4327 = vadd.f32 %v3768, %v4257
        %v4328 = vadd.f32 %v3769, %v4260
        %v4329 = vadd.f32 %v3770, %v4265
        %v4330 = vadd.f32 %v3771, %v4268
        %v4331 = vadd.f32 %v3772, %v4273
        %v4332 = vadd.f32 %v3773, %v4276
        %v4333 = vadd.f32 %v3774, %v4281
        %v4334 = vadd.f32 %v3775, %v4284
        %4335 = vst [vmem:[#allocation2] sm:$0xff] %v4287
        %4336 = vst [vmem:[#allocation2 + $0x8] sm:$0xff] %v4288
        %4337 = vst [vmem:[#allocation2 + $0x10] sm:$0xff] %v4289
        %4338 = vst [vmem:[#allocation2 + $0x18] sm:$0xff] %v4290
        %4339 = vst [vmem:[#allocation2 + $0x20] sm:$0xff] %v4291
        %4340 = vst [vmem:[#allocation2 + $0x28] sm:$0xff] %v4292
        %4341 = vst [vmem:[#allocation2 + $0x30] sm:$0xff] %v4293
        %4342 = vst [vmem:[#allocation2 + $0x38] sm:$0xff] %v4294
        %4343 = vst [vmem:[#allocation2 + $0x40] sm:$0xff] %v4295
        %4344 = vst [vmem:[#allocation2 + $0x48] sm:$0xff] %v4296
        %4345 = vst [vmem:[#allocation2 + $0x50] sm:$0xff] %v4297
        %4346 = vst [vmem:[#allocation2 + $0x58] sm:$0xff] %v4298
        %4347 = vst [vmem:[#allocation2 + $0x60] sm:$0xff] %v4299
        %4348 = vst [vmem:[#allocation2 + $0x68] sm:$0xff] %v4300
        %4349 = vst [vmem:[#allocation2 + $0x70] sm:$0xff] %v4301
        %4350 = vst [vmem:[#allocation2 + $0x78] sm:$0xff] %v4302
        %4351 = vst [vmem:[#allocation2 + $0x80] sm:$0xff] %v4303
        %4352 = vst [vmem:[#allocation2 + $0x88] sm:$0xff] %v4304
        %4353 = vst [vmem:[#allocation2 + $0x90] sm:$0xff] %v4305
        %4354 = vst [vmem:[#allocation2 + $0x98] sm:$0xff] %v4306
        %4355 = vst [vmem:[#allocation2 + $0xa0] sm:$0xff] %v4307
        %4356 = vst [vmem:[#allocation2 + $0xa8] sm:$0xff] %v4308
        %4357 = vst [vmem:[#allocation2 + $0xb0] sm:$0xff] %v4309
        %4358 = vst [vmem:[#allocation2 + $0xb8] sm:$0xff] %v4310
        %4359 = vst [vmem:[#allocation2 + $0xc0] sm:$0xff] %v4311
        %4360 = vst [vmem:[#allocation2 + $0xc8] sm:$0xff] %v4312
        %4361 = vst [vmem:[#allocation2 + $0xd0] sm:$0xff] %v4313
        %4362 = vst [vmem:[#allocation2 + $0xd8] sm:$0xff] %v4314
        %4363 = vst [vmem:[#allocation2 + $0xe0] sm:$0xff] %v4315
        %4364 = vst [vmem:[#allocation2 + $0xe8] sm:$0xff] %v4316
        %4365 = vst [vmem:[#allocation2 + $0xf0] sm:$0xff] %v4317
        %4366 = vst [vmem:[#allocation2 + $0xf8] sm:$0xff] %v4318
        %4367 = vst [vmem:[#allocation2 + $0x100] sm:$0xff] %v4319
        %4368 = vst [vmem:[#allocation2 + $0x108] sm:$0xff] %v4320
        %4369 = vst [vmem:[#allocation2 + $0x110] sm:$0xff] %v4321
        %4370 = vst [vmem:[#allocation2 + $0x118] sm:$0xff] %v4322
        %4371 = vst [vmem:[#allocation2 + $0x120] sm:$0xff] %v4323
        %4372 = vst [vmem:[#allocation2 + $0x128] sm:$0xff] %v4324
        %4373 = vst [vmem:[#allocation2 + $0x130] sm:$0xff] %v4325
        %4374 = vst [vmem:[#allocation2 + $0x138] sm:$0xff] %v4326
        %4375 = vst [vmem:[#allocation2 + $0x140] sm:$0xff] %v4327
        %4376 = vst [vmem:[#allocation2 + $0x148] sm:$0xff] %v4328
        %4377 = vst [vmem:[#allocation2 + $0x150] sm:$0xff] %v4329
        %4378 = vst [vmem:[#allocation2 + $0x158] sm:$0xff] %v4330
        %4379 = vst [vmem:[#allocation2 + $0x160] sm:$0xff] %v4331
        %4380 = vst [vmem:[#allocation2 + $0x168] sm:$0xff] %v4332
        %4381 = vst [vmem:[#allocation2 + $0x170] sm:$0xff] %v4333
        %4382 = vst [vmem:[#allocation2 + $0x178] sm:$0xff] %v4334
        %v4383 = vld [vmem:[#allocation3 + $0x18] sm:$0xf8]
        %v4384 = vld [vmem:[#allocation3 + $0x20] sm:$0xff]
        %v4385 = vld [vmem:[#allocation3 + $0x28] sm:$0xff]
        %v4386 = vld [vmem:[#allocation3 + $0x30] sm:$0xff]
        %v4387 = vld [vmem:[#allocation3 + $0x38] sm:$0xff]
        %v4388 = vld [vmem:[#allocation3 + $0x40] sm:$0xff]
        %v4389 = vld [vmem:[#allocation3 + $0x48] sm:$0xff]
        %v4390 = vld [vmem:[#allocation3 + $0x50] sm:$0xff]
        %v4391 = vld [vmem:[#allocation3 + $0x58] sm:$0xff]
        %v4392 = vld [vmem:[#allocation3 + $0x60] sm:$0xff]
        %v4393 = vld [vmem:[#allocation3 + $0x68] sm:$0xff]
        %v4394 = vld [vmem:[#allocation3 + $0x70] sm:$0xff]
        %v4395 = vld [vmem:[#allocation3 + $0x78] sm:$0xff]
        %v4396 = vld [vmem:[#allocation3 + $0x80] sm:$0xff]
        %v4397 = vld [vmem:[#allocation3 + $0x88] sm:$0xff]
        %v4398 = vld [vmem:[#allocation3 + $0x90] sm:$0xff]
        %v4399 = vld [vmem:[#allocation3 + $0x98] sm:$0xff]
        %v4400 = vld [vmem:[#allocation3 + $0xa0] sm:$0xff]
        %v4401 = vld [vmem:[#allocation3 + $0xa8] sm:$0xff]
        %v4402 = vld [vmem:[#allocation3 + $0xb0] sm:$0xff]
        %v4403 = vld [vmem:[#allocation3 + $0xb8] sm:$0xff]
        %v4404 = vld [vmem:[#allocation3 + $0xc0] sm:$0xff]
        %v4405 = vld [vmem:[#allocation3 + $0xc8] sm:$0xff]
        %v4406 = vld [vmem:[#allocation3 + $0xd0] sm:$0xff]
        %v4407 = vld [vmem:[#allocation3 + $0xd8] sm:$0xf]
        %v4408 = vld [vmem:[#allocation2] sm:$0xff]
        %v4409 = vld [vmem:[#allocation2 + $0x8] sm:$0xff]
        %v4410 = vld [vmem:[#allocation2 + $0x10] sm:$0xff]
        %v4411 = vld [vmem:[#allocation2 + $0x18] sm:$0xff]
        %v4412 = vld [vmem:[#allocation2 + $0x20] sm:$0xff]
        %v4413 = vld [vmem:[#allocation2 + $0x28] sm:$0xff]
        %v4414 = vld [vmem:[#allocation2 + $0x30] sm:$0xff]
        %v4415 = vld [vmem:[#allocation2 + $0x38] sm:$0xff]
        %v4416 = vld [vmem:[#allocation2 + $0x40] sm:$0xff]
        %v4417 = vld [vmem:[#allocation2 + $0x48] sm:$0xff]
        %v4418 = vld [vmem:[#allocation2 + $0x50] sm:$0xff]
        %v4419 = vld [vmem:[#allocation2 + $0x58] sm:$0xff]
        %v4420 = vld [vmem:[#allocation2 + $0x60] sm:$0xff]
        %v4421 = vld [vmem:[#allocation2 + $0x68] sm:$0xff]
        %v4422 = vld [vmem:[#allocation2 + $0x70] sm:$0xff]
        %v4423 = vld [vmem:[#allocation2 + $0x78] sm:$0xff]
        %v4424 = vld [vmem:[#allocation2 + $0x80] sm:$0xff]
        %v4425 = vld [vmem:[#allocation2 + $0x88] sm:$0xff]
        %v4426 = vld [vmem:[#allocation2 + $0x90] sm:$0xff]
        %v4427 = vld [vmem:[#allocation2 + $0x98] sm:$0xff]
        %v4428 = vld [vmem:[#allocation2 + $0xa0] sm:$0xff]
        %v4429 = vld [vmem:[#allocation2 + $0xa8] sm:$0xff]
        %v4430 = vld [vmem:[#allocation2 + $0xb0] sm:$0xff]
        %v4431 = vld [vmem:[#allocation2 + $0xb8] sm:$0xff]
        %v4432 = vld [vmem:[#allocation2 + $0xc0] sm:$0xff]
        %v4433 = vld [vmem:[#allocation2 + $0xc8] sm:$0xff]
        %v4434 = vld [vmem:[#allocation2 + $0xd0] sm:$0xff]
        %v4435 = vld [vmem:[#allocation2 + $0xd8] sm:$0xff]
        %v4436 = vld [vmem:[#allocation2 + $0xe0] sm:$0xff]
        %v4437 = vld [vmem:[#allocation2 + $0xe8] sm:$0xff]
        %v4438 = vld [vmem:[#allocation2 + $0xf0] sm:$0xff]
        %v4439 = vld [vmem:[#allocation2 + $0xf8] sm:$0xff]
        %v4440 = vld [vmem:[#allocation2 + $0x100] sm:$0xff]
        %v4441 = vld [vmem:[#allocation2 + $0x108] sm:$0xff]
        %v4442 = vld [vmem:[#allocation2 + $0x110] sm:$0xff]
        %v4443 = vld [vmem:[#allocation2 + $0x118] sm:$0xff]
        %v4444 = vld [vmem:[#allocation2 + $0x120] sm:$0xff]
        %v4445 = vld [vmem:[#allocation2 + $0x128] sm:$0xff]
        %v4446 = vld [vmem:[#allocation2 + $0x130] sm:$0xff]
        %v4447 = vld [vmem:[#allocation2 + $0x138] sm:$0xff]
        %v4448 = vld [vmem:[#allocation2 + $0x140] sm:$0xff]
        %v4449 = vld [vmem:[#allocation2 + $0x148] sm:$0xff]
        %v4450 = vld [vmem:[#allocation2 + $0x150] sm:$0xff]
        %v4451 = vld [vmem:[#allocation2 + $0x158] sm:$0xff]
        %v4452 = vld [vmem:[#allocation2 + $0x160] sm:$0xff]
        %v4453 = vld [vmem:[#allocation2 + $0x168] sm:$0xff]
        %v4454 = vld [vmem:[#allocation2 + $0x170] sm:$0xff]
        %v4455 = vld [vmem:[#allocation2 + $0x178] sm:$0xff]
        %s4456 = scalar_lea.vmem [#allocation7], 384
        %v4457 = vld [vmem:[%s4456] sm:$0xf]
        %v4458 = vld [vmem:[%s4456 + $0x4] sm:$0xf]
        %v4459 = vld [vmem:[%s4456 + $0x8] sm:$0xf]
        %v4460 = vld [vmem:[%s4456 + $0xc] sm:$0xf]
        %v4461 = vld [vmem:[%s4456 + $0x10] sm:$0xf]
        %v4462 = vld [vmem:[%s4456 + $0x14] sm:$0xf]
        %v4463 = vld [vmem:[%s4456 + $0x18] sm:$0xf]
        %v4464 = vld [vmem:[%s4456 + $0x1c] sm:$0xf]
        %v4465 = vld [vmem:[%s4456 + $0x20] sm:$0xf]
        %v4466 = vld [vmem:[%s4456 + $0x24] sm:$0xf]
        %v4467 = vld [vmem:[%s4456 + $0x28] sm:$0xf]
        %v4468 = vld [vmem:[%s4456 + $0x2c] sm:$0xf]
        %v4469 = vld [vmem:[%s4456 + $0x30] sm:$0xf]
        %v4470 = vld [vmem:[%s4456 + $0x34] sm:$0xf]
        %v4471 = vld [vmem:[%s4456 + $0x38] sm:$0xf]
        %v4472 = vld [vmem:[%s4456 + $0x3c] sm:$0xf]
        %v4474 = vshrl.u32 %v4383, 16
        %v4476 = vrot.slane %v4474, 3
        %v4477 = vshll.u32 %v4383, 16
        %v4479 = vrot.slane %v4477, 4
        %v4480 = vor.u32 %v4476, %v4479
        %v4482 = vshrl.u32 %v4384, 16
        %v4484 = vrot.slane %v4482, 3
        %v4485 = vshll.u32 %v4384, 16
        %v4487 = vrot.slane %v4485, 4
        %v4488 = vor.u32 %v4484, %v4487
        %v4489 = vsel %vm681, %v4480, %v4488
        %v4491 = vshrl.u32 %v4385, 16
        %v4493 = vrot.slane %v4491, 3
        %v4494 = vshll.u32 %v4385, 16
        %v4496 = vrot.slane %v4494, 4
        %v4497 = vor.u32 %v4493, %v4496
        %v4498 = vsel %vm681, %v4488, %v4497
        %v4500 = vshrl.u32 %v4386, 16
        %v4502 = vrot.slane %v4500, 3
        %v4503 = vshll.u32 %v4386, 16
        %v4505 = vrot.slane %v4503, 4
        %v4506 = vor.u32 %v4502, %v4505
        %v4507 = vsel %vm681, %v4497, %v4506
        %v4509 = vshrl.u32 %v4387, 16
        %v4511 = vrot.slane %v4509, 3
        %v4512 = vshll.u32 %v4387, 16
        %v4514 = vrot.slane %v4512, 4
        %v4515 = vor.u32 %v4511, %v4514
        %v4516 = vsel %vm681, %v4506, %v4515
        %v4518 = vshrl.u32 %v4388, 16
        %v4520 = vrot.slane %v4518, 3
        %v4521 = vshll.u32 %v4388, 16
        %v4523 = vrot.slane %v4521, 4
        %v4524 = vor.u32 %v4520, %v4523
        %v4525 = vsel %vm681, %v4515, %v4524
        %v4527 = vshrl.u32 %v4389, 16
        %v4529 = vrot.slane %v4527, 3
        %v4530 = vshll.u32 %v4389, 16
        %v4532 = vrot.slane %v4530, 4
        %v4533 = vor.u32 %v4529, %v4532
        %v4534 = vsel %vm681, %v4524, %v4533
        %v4536 = vshrl.u32 %v4390, 16
        %v4538 = vrot.slane %v4536, 3
        %v4539 = vshll.u32 %v4390, 16
        %v4541 = vrot.slane %v4539, 4
        %v4542 = vor.u32 %v4538, %v4541
        %v4543 = vsel %vm681, %v4533, %v4542
        %v4545 = vshrl.u32 %v4391, 16
        %v4547 = vrot.slane %v4545, 3
        %v4548 = vshll.u32 %v4391, 16
        %v4550 = vrot.slane %v4548, 4
        %v4551 = vor.u32 %v4547, %v4550
        %v4552 = vsel %vm681, %v4542, %v4551
        %v4554 = vshrl.u32 %v4392, 16
        %v4556 = vrot.slane %v4554, 3
        %v4557 = vshll.u32 %v4392, 16
        %v4559 = vrot.slane %v4557, 4
        %v4560 = vor.u32 %v4556, %v4559
        %v4561 = vsel %vm681, %v4551, %v4560
        %v4563 = vshrl.u32 %v4393, 16
        %v4565 = vrot.slane %v4563, 3
        %v4566 = vshll.u32 %v4393, 16
        %v4568 = vrot.slane %v4566, 4
        %v4569 = vor.u32 %v4565, %v4568
        %v4570 = vsel %vm681, %v4560, %v4569
        %v4572 = vshrl.u32 %v4394, 16
        %v4574 = vrot.slane %v4572, 3
        %v4575 = vshll.u32 %v4394, 16
        %v4577 = vrot.slane %v4575, 4
        %v4578 = vor.u32 %v4574, %v4577
        %v4579 = vsel %vm681, %v4569, %v4578
        %v4581 = vshrl.u32 %v4395, 16
        %v4583 = vrot.slane %v4581, 3
        %v4584 = vshll.u32 %v4395, 16
        %v4586 = vrot.slane %v4584, 4
        %v4587 = vor.u32 %v4583, %v4586
        %v4588 = vsel %vm681, %v4578, %v4587
        %v4590 = vshrl.u32 %v4396, 16
        %v4592 = vrot.slane %v4590, 3
        %v4593 = vshll.u32 %v4396, 16
        %v4595 = vrot.slane %v4593, 4
        %v4596 = vor.u32 %v4592, %v4595
        %v4597 = vsel %vm681, %v4587, %v4596
        %v4599 = vshrl.u32 %v4397, 16
        %v4601 = vrot.slane %v4599, 3
        %v4602 = vshll.u32 %v4397, 16
        %v4604 = vrot.slane %v4602, 4
        %v4605 = vor.u32 %v4601, %v4604
        %v4606 = vsel %vm681, %v4596, %v4605
        %v4608 = vshrl.u32 %v4398, 16
        %v4610 = vrot.slane %v4608, 3
        %v4611 = vshll.u32 %v4398, 16
        %v4613 = vrot.slane %v4611, 4
        %v4614 = vor.u32 %v4610, %v4613
        %v4615 = vsel %vm681, %v4605, %v4614
        %v4617 = vshrl.u32 %v4399, 16
        %v4619 = vrot.slane %v4617, 3
        %v4620 = vshll.u32 %v4399, 16
        %v4622 = vrot.slane %v4620, 4
        %v4623 = vor.u32 %v4619, %v4622
        %v4624 = vsel %vm681, %v4614, %v4623
        %v4626 = vshrl.u32 %v4400, 16
        %v4628 = vrot.slane %v4626, 3
        %v4629 = vshll.u32 %v4400, 16
        %v4631 = vrot.slane %v4629, 4
        %v4632 = vor.u32 %v4628, %v4631
        %v4633 = vsel %vm681, %v4623, %v4632
        %v4635 = vshrl.u32 %v4401, 16
        %v4637 = vrot.slane %v4635, 3
        %v4638 = vshll.u32 %v4401, 16
        %v4640 = vrot.slane %v4638, 4
        %v4641 = vor.u32 %v4637, %v4640
        %v4642 = vsel %vm681, %v4632, %v4641
        %v4644 = vshrl.u32 %v4402, 16
        %v4646 = vrot.slane %v4644, 3
        %v4647 = vshll.u32 %v4402, 16
        %v4649 = vrot.slane %v4647, 4
        %v4650 = vor.u32 %v4646, %v4649
        %v4651 = vsel %vm681, %v4641, %v4650
        %v4653 = vshrl.u32 %v4403, 16
        %v4655 = vrot.slane %v4653, 3
        %v4656 = vshll.u32 %v4403, 16
        %v4658 = vrot.slane %v4656, 4
        %v4659 = vor.u32 %v4655, %v4658
        %v4660 = vsel %vm681, %v4650, %v4659
        %v4662 = vshrl.u32 %v4404, 16
        %v4664 = vrot.slane %v4662, 3
        %v4665 = vshll.u32 %v4404, 16
        %v4667 = vrot.slane %v4665, 4
        %v4668 = vor.u32 %v4664, %v4667
        %v4669 = vsel %vm681, %v4659, %v4668
        %v4671 = vshrl.u32 %v4405, 16
        %v4673 = vrot.slane %v4671, 3
        %v4674 = vshll.u32 %v4405, 16
        %v4676 = vrot.slane %v4674, 4
        %v4677 = vor.u32 %v4673, %v4676
        %v4678 = vsel %vm681, %v4668, %v4677
        %v4680 = vshrl.u32 %v4406, 16
        %v4682 = vrot.slane %v4680, 3
        %v4683 = vshll.u32 %v4406, 16
        %v4685 = vrot.slane %v4683, 4
        %v4686 = vor.u32 %v4682, %v4685
        %v4687 = vsel %vm681, %v4677, %v4686
        %v4689 = vshrl.u32 %v4407, 16
        %v4691 = vrot.slane %v4689, 3
        %v4692 = vshll.u32 %v4407, 16
        %v4694 = vrot.slane %v4692, 4
        %v4695 = vor.u32 %v4691, %v4694
        %v4696 = vsel %vm681, %v4686, %v4695
        %v4737 = vunpack.c.l.b16 %v4457
        %v4738 = vunpack.c.l.b16 %v4458
        %v4739 = vunpack.c.l.b16 %v4459
        %v4740 = vunpack.c.l.b16 %v4460
        %v4741 = vunpack.c.l.b16 %v4461
        %v4742 = vunpack.c.l.b16 %v4462
        %v4743 = vunpack.c.l.b16 %v4463
        %v4744 = vunpack.c.l.b16 %v4464
        %v4745 = vunpack.c.l.b16 %v4465
        %v4746 = vunpack.c.l.b16 %v4466
        %v4747 = vunpack.c.l.b16 %v4467
        %v4748 = vunpack.c.l.b16 %v4468
        %v4749 = vunpack.c.l.b16 %v4469
        %v4750 = vunpack.c.l.b16 %v4470
        %v4751 = vunpack.c.l.b16 %v4471
        %v4752 = vunpack.c.l.b16 %v4472
        %v4753 = vpack.c.b16 %v4738, %v4737
        %v4754 = vpack.c.b16 %v4740, %v4739
        %v4755 = vpack.c.b16 %v4742, %v4741
        %v4756 = vpack.c.b16 %v4744, %v4743
        %v4757 = vpack.c.b16 %v4746, %v4745
        %v4758 = vpack.c.b16 %v4748, %v4747
        %v4759 = vpack.c.b16 %v4750, %v4749
        %v4760 = vpack.c.b16 %v4752, %v4751
        %4769 = vmatprep.subr.bf16.mxu0 0
        %4770 = vmatpush1.bf16.msra.mxu0 %v4753
        %4771 = vmatprep.subr.bf16.mxu0 0
        %4772 = vmatpush1.bf16.msra.mxu0 %v4754
        %4773 = vmatprep.subr.bf16.mxu0 0
        %4774 = vmatpush1.bf16.msra.mxu0 %v4755
        %4775 = vmatprep.subr.bf16.mxu0 0
        %4776 = vmatpush1.bf16.msra.mxu0 %v4756
        %4777 = vmatprep.subr.bf16.mxu0 0
        %4778 = vmatpush1.bf16.msra.mxu0 %v4757
        %4779 = vmatprep.subr.bf16.mxu0 0
        %4780 = vmatpush1.bf16.msra.mxu0 %v4758
        %4781 = vmatprep.subr.bf16.mxu0 0
        %4782 = vmatpush1.bf16.msra.mxu0 %v4759
        %4783 = vmatprep.subr.bf16.mxu0 0
        %4784 = vmatpush1.bf16.msra.mxu0 %v4760
        %4785 = vmatprep.subr.bf16.mxu0 0
        %4786 = vmatpush1.bf16.msra.mxu0 0
        %4787 = vmatprep.subr.bf16.mxu0 0
        %4788 = vmatpush1.bf16.msra.mxu0 0
        %4789 = vmatprep.subr.bf16.mxu0 0
        %4790 = vmatpush1.bf16.msra.mxu0 0
        %4791 = vmatprep.subr.bf16.mxu0 0
        %4792 = vmatpush1.bf16.msra.mxu0 0
        %4793 = vmatprep.subr.bf16.mxu0 0
        %4794 = vmatpush1.bf16.msra.mxu0 0
        %4795 = vmatprep.subr.bf16.mxu0 0
        %4796 = vmatpush1.bf16.msra.mxu0 0
        %4797 = vmatprep.subr.bf16.mxu0 0
        %4798 = vmatpush1.bf16.msra.mxu0 0
        %4799 = vmatprep.subr.bf16.mxu0 0
        %4800 = vmatpush1.bf16.msra.mxu0 0
        %4801 = vmatprep.mubr.bf16.mxu0 0
        %4802 = vmatmul.mubr.bf16.gmra.mrb[0].mxu0 %v4489
        %v4803 = vpop.f32.mrb[0].mxu0
        %v4804 = vadd.f32 0.0, %v4803
        %v4805 = vpop.f32.mrb[0].mxu0
        %v4806 = vpop.f32.mrb[0].mxu0
        %v4807 = vadd.f32 0.0, %v4806
        %v4808 = vpop.f32.mrb[0].mxu0
        %4809 = vmatprep.mubr.bf16.mxu0 0
        %4810 = vmatmul.mubr.bf16.gmra.mrb[0].mxu0 %v4498
        %v4811 = vpop.f32.mrb[0].mxu0
        %v4812 = vadd.f32 0.0, %v4811
        %v4813 = vpop.f32.mrb[0].mxu0
        %v4814 = vpop.f32.mrb[0].mxu0
        %v4815 = vadd.f32 0.0, %v4814
        %v4816 = vpop.f32.mrb[0].mxu0
        %4817 = vmatprep.mubr.bf16.mxu0 0
        %4818 = vmatmul.mubr.bf16.gmra.mrb[0].mxu0 %v4507
        %v4819 = vpop.f32.mrb[0].mxu0
        %v4820 = vadd.f32 0.0, %v4819
        %v4821 = vpop.f32.mrb[0].mxu0
        %v4822 = vpop.f32.mrb[0].mxu0
        %v4823 = vadd.f32 0.0, %v4822
        %v4824 = vpop.f32.mrb[0].mxu0
        %4825 = vmatprep.mubr.bf16.mxu0 0
        %4826 = vmatmul.mubr.bf16.gmra.mrb[0].mxu0 %v4516
        %v4827 = vpop.f32.mrb[0].mxu0
        %v4828 = vadd.f32 0.0, %v4827
        %v4829 = vpop.f32.mrb[0].mxu0
        %v4830 = vpop.f32.mrb[0].mxu0
        %v4831 = vadd.f32 0.0, %v4830
        %v4832 = vpop.f32.mrb[0].mxu0
        %4833 = vmatprep.mubr.bf16.mxu0 0
        %4834 = vmatmul.mubr.bf16.gmra.mrb[0].mxu0 %v4525
        %v4835 = vpop.f32.mrb[0].mxu0
        %v4836 = vadd.f32 0.0, %v4835
        %v4837 = vpop.f32.mrb[0].mxu0
        %v4838 = vpop.f32.mrb[0].mxu0
        %v4839 = vadd.f32 0.0, %v4838
        %v4840 = vpop.f32.mrb[0].mxu0
        %4841 = vmatprep.mubr.bf16.mxu0 0
        %4842 = vmatmul.mubr.bf16.gmra.mrb[0].mxu0 %v4534
        %v4843 = vpop.f32.mrb[0].mxu0
        %v4844 = vadd.f32 0.0, %v4843
        %v4845 = vpop.f32.mrb[0].mxu0
        %v4846 = vpop.f32.mrb[0].mxu0
        %v4847 = vadd.f32 0.0, %v4846
        %v4848 = vpop.f32.mrb[0].mxu0
        %4849 = vmatprep.mubr.bf16.mxu0 0
        %4850 = vmatmul.mubr.bf16.gmra.mrb[0].mxu0 %v4543
        %v4851 = vpop.f32.mrb[0].mxu0
        %v4852 = vadd.f32 0.0, %v4851
        %v4853 = vpop.f32.mrb[0].mxu0
        %v4854 = vpop.f32.mrb[0].mxu0
        %v4855 = vadd.f32 0.0, %v4854
        %v4856 = vpop.f32.mrb[0].mxu0
        %4857 = vmatprep.mubr.bf16.mxu0 0
        %4858 = vmatmul.mubr.bf16.gmra.mrb[0].mxu0 %v4552
        %v4859 = vpop.f32.mrb[0].mxu0
        %v4860 = vadd.f32 0.0, %v4859
        %v4861 = vpop.f32.mrb[0].mxu0
        %v4862 = vpop.f32.mrb[0].mxu0
        %v4863 = vadd.f32 0.0, %v4862
        %v4864 = vpop.f32.mrb[0].mxu0
        %4865 = vmatprep.mubr.bf16.mxu0 0
        %4866 = vmatmul.mubr.bf16.gmra.mrb[0].mxu0 %v4561
        %v4867 = vpop.f32.mrb[0].mxu0
        %v4868 = vadd.f32 0.0, %v4867
        %v4869 = vpop.f32.mrb[0].mxu0
        %v4870 = vpop.f32.mrb[0].mxu0
        %v4871 = vadd.f32 0.0, %v4870
        %v4872 = vpop.f32.mrb[0].mxu0
        %4873 = vmatprep.mubr.bf16.mxu0 0
        %4874 = vmatmul.mubr.bf16.gmra.mrb[0].mxu0 %v4570
        %v4875 = vpop.f32.mrb[0].mxu0
        %v4876 = vadd.f32 0.0, %v4875
        %v4877 = vpop.f32.mrb[0].mxu0
        %v4878 = vpop.f32.mrb[0].mxu0
        %v4879 = vadd.f32 0.0, %v4878
        %v4880 = vpop.f32.mrb[0].mxu0
        %4881 = vmatprep.mubr.bf16.mxu0 0
        %4882 = vmatmul.mubr.bf16.gmra.mrb[0].mxu0 %v4579
        %v4883 = vpop.f32.mrb[0].mxu0
        %v4884 = vadd.f32 0.0, %v4883
        %v4885 = vpop.f32.mrb[0].mxu0
        %v4886 = vpop.f32.mrb[0].mxu0
        %v4887 = vadd.f32 0.0, %v4886
        %v4888 = vpop.f32.mrb[0].mxu0
        %4889 = vmatprep.mubr.bf16.mxu0 0
        %4890 = vmatmul.mubr.bf16.gmra.mrb[0].mxu0 %v4588
        %v4891 = vpop.f32.mrb[0].mxu0
        %v4892 = vadd.f32 0.0, %v4891
        %v4893 = vpop.f32.mrb[0].mxu0
        %v4894 = vpop.f32.mrb[0].mxu0
        %v4895 = vadd.f32 0.0, %v4894
        %v4896 = vpop.f32.mrb[0].mxu0
        %4897 = vmatprep.mubr.bf16.mxu0 0
        %4898 = vmatmul.mubr.bf16.gmra.mrb[0].mxu0 %v4597
        %v4899 = vpop.f32.mrb[0].mxu0
        %v4900 = vadd.f32 0.0, %v4899
        %v4901 = vpop.f32.mrb[0].mxu0
        %v4902 = vpop.f32.mrb[0].mxu0
        %v4903 = vadd.f32 0.0, %v4902
        %v4904 = vpop.f32.mrb[0].mxu0
        %4905 = vmatprep.mubr.bf16.mxu0 0
        %4906 = vmatmul.mubr.bf16.gmra.mrb[0].mxu0 %v4606
        %v4907 = vpop.f32.mrb[0].mxu0
        %v4908 = vadd.f32 0.0, %v4907
        %v4909 = vpop.f32.mrb[0].mxu0
        %v4910 = vpop.f32.mrb[0].mxu0
        %v4911 = vadd.f32 0.0, %v4910
        %v4912 = vpop.f32.mrb[0].mxu0
        %4913 = vmatprep.mubr.bf16.mxu0 0
        %4914 = vmatmul.mubr.bf16.gmra.mrb[0].mxu0 %v4615
        %v4915 = vpop.f32.mrb[0].mxu0
        %v4916 = vadd.f32 0.0, %v4915
        %v4917 = vpop.f32.mrb[0].mxu0
        %v4918 = vpop.f32.mrb[0].mxu0
        %v4919 = vadd.f32 0.0, %v4918
        %v4920 = vpop.f32.mrb[0].mxu0
        %4921 = vmatprep.mubr.bf16.mxu0 0
        %4922 = vmatmul.mubr.bf16.gmra.mrb[0].mxu0 %v4624
        %v4923 = vpop.f32.mrb[0].mxu0
        %v4924 = vadd.f32 0.0, %v4923
        %v4925 = vpop.f32.mrb[0].mxu0
        %v4926 = vpop.f32.mrb[0].mxu0
        %v4927 = vadd.f32 0.0, %v4926
        %v4928 = vpop.f32.mrb[0].mxu0
        %4929 = vmatprep.mubr.bf16.mxu0 0
        %4930 = vmatmul.mubr.bf16.gmra.mrb[0].mxu0 %v4633
        %v4931 = vpop.f32.mrb[0].mxu0
        %v4932 = vadd.f32 0.0, %v4931
        %v4933 = vpop.f32.mrb[0].mxu0
        %v4934 = vpop.f32.mrb[0].mxu0
        %v4935 = vadd.f32 0.0, %v4934
        %v4936 = vpop.f32.mrb[0].mxu0
        %4937 = vmatprep.mubr.bf16.mxu0 0
        %4938 = vmatmul.mubr.bf16.gmra.mrb[0].mxu0 %v4642
        %v4939 = vpop.f32.mrb[0].mxu0
        %v4940 = vadd.f32 0.0, %v4939
        %v4941 = vpop.f32.mrb[0].mxu0
        %v4942 = vpop.f32.mrb[0].mxu0
        %v4943 = vadd.f32 0.0, %v4942
        %v4944 = vpop.f32.mrb[0].mxu0
        %4945 = vmatprep.mubr.bf16.mxu0 0
        %4946 = vmatmul.mubr.bf16.gmra.mrb[0].mxu0 %v4651
        %v4947 = vpop.f32.mrb[0].mxu0
        %v4948 = vadd.f32 0.0, %v4947
        %v4949 = vpop.f32.mrb[0].mxu0
        %v4950 = vpop.f32.mrb[0].mxu0
        %v4951 = vadd.f32 0.0, %v4950
        %v4952 = vpop.f32.mrb[0].mxu0
        %4953 = vmatprep.mubr.bf16.mxu0 0
        %4954 = vmatmul.mubr.bf16.gmra.mrb[0].mxu0 %v4660
        %v4955 = vpop.f32.mrb[0].mxu0
        %v4956 = vadd.f32 0.0, %v4955
        %v4957 = vpop.f32.mrb[0].mxu0
        %v4958 = vpop.f32.mrb[0].mxu0
        %v4959 = vadd.f32 0.0, %v4958
        %v4960 = vpop.f32.mrb[0].mxu0
        %4961 = vmatprep.mubr.bf16.mxu0 0
        %4962 = vmatmul.mubr.bf16.gmra.mrb[0].mxu0 %v4669
        %v4963 = vpop.f32.mrb[0].mxu0
        %v4964 = vadd.f32 0.0, %v4963
        %v4965 = vpop.f32.mrb[0].mxu0
        %v4966 = vpop.f32.mrb[0].mxu0
        %v4967 = vadd.f32 0.0, %v4966
        %v4968 = vpop.f32.mrb[0].mxu0
        %4969 = vmatprep.mubr.bf16.mxu0 0
        %4970 = vmatmul.mubr.bf16.gmra.mrb[0].mxu0 %v4678
        %v4971 = vpop.f32.mrb[0].mxu0
        %v4972 = vadd.f32 0.0, %v4971
        %v4973 = vpop.f32.mrb[0].mxu0
        %v4974 = vpop.f32.mrb[0].mxu0
        %v4975 = vadd.f32 0.0, %v4974
        %v4976 = vpop.f32.mrb[0].mxu0
        %4977 = vmatprep.mubr.bf16.mxu0 0
        %4978 = vmatmul.mubr.bf16.gmra.mrb[0].mxu0 %v4687
        %v4979 = vpop.f32.mrb[0].mxu0
        %v4980 = vadd.f32 0.0, %v4979
        %v4981 = vpop.f32.mrb[0].mxu0
        %v4982 = vpop.f32.mrb[0].mxu0
        %v4983 = vadd.f32 0.0, %v4982
        %v4984 = vpop.f32.mrb[0].mxu0
        %4985 = vmatprep.mubr.bf16.mxu0 0
        %4986 = vmatmul.mubr.bf16.gmra.mrb[0].mxu0 %v4696
        %v4987 = vpop.f32.mrb[0].mxu0
        %v4988 = vadd.f32 0.0, %v4987
        %v4989 = vpop.f32.mrb[0].mxu0
        %v4990 = vpop.f32.mrb[0].mxu0
        %v4991 = vadd.f32 0.0, %v4990
        %v4992 = vpop.f32.mrb[0].mxu0
        %4993 = vdwg.mxu0
        %v4994 = vadd.f32 %v4408, %v4804
        %v4995 = vadd.f32 %v4409, %v4807
        %v4996 = vadd.f32 %v4410, %v4812
        %v4997 = vadd.f32 %v4411, %v4815
        %v4998 = vadd.f32 %v4412, %v4820
        %v4999 = vadd.f32 %v4413, %v4823
        %v5000 = vadd.f32 %v4414, %v4828
        %v5001 = vadd.f32 %v4415, %v4831
        %v5002 = vadd.f32 %v4416, %v4836
        %v5003 = vadd.f32 %v4417, %v4839
        %v5004 = vadd.f32 %v4418, %v4844
        %v5005 = vadd.f32 %v4419, %v4847
        %v5006 = vadd.f32 %v4420, %v4852
        %v5007 = vadd.f32 %v4421, %v4855
        %v5008 = vadd.f32 %v4422, %v4860
        %v5009 = vadd.f32 %v4423, %v4863
        %v5010 = vadd.f32 %v4424, %v4868
        %v5011 = vadd.f32 %v4425, %v4871
        %v5012 = vadd.f32 %v4426, %v4876
        %v5013 = vadd.f32 %v4427, %v4879
        %v5014 = vadd.f32 %v4428, %v4884
        %v5015 = vadd.f32 %v4429, %v4887
        %v5016 = vadd.f32 %v4430, %v4892
        %v5017 = vadd.f32 %v4431, %v4895
        %v5018 = vadd.f32 %v4432, %v4900
        %v5019 = vadd.f32 %v4433, %v4903
        %v5020 = vadd.f32 %v4434, %v4908
        %v5021 = vadd.f32 %v4435, %v4911
        %v5022 = vadd.f32 %v4436, %v4916
        %v5023 = vadd.f32 %v4437, %v4919
        %v5024 = vadd.f32 %v4438, %v4924
        %v5025 = vadd.f32 %v4439, %v4927
        %v5026 = vadd.f32 %v4440, %v4932
        %v5027 = vadd.f32 %v4441, %v4935
        %v5028 = vadd.f32 %v4442, %v4940
        %v5029 = vadd.f32 %v4443, %v4943
        %v5030 = vadd.f32 %v4444, %v4948
        %v5031 = vadd.f32 %v4445, %v4951
        %v5032 = vadd.f32 %v4446, %v4956
        %v5033 = vadd.f32 %v4447, %v4959
        %v5034 = vadd.f32 %v4448, %v4964
        %v5035 = vadd.f32 %v4449, %v4967
        %v5036 = vadd.f32 %v4450, %v4972
        %v5037 = vadd.f32 %v4451, %v4975
        %v5038 = vadd.f32 %v4452, %v4980
        %v5039 = vadd.f32 %v4453, %v4983
        %v5040 = vadd.f32 %v4454, %v4988
        %v5041 = vadd.f32 %v4455, %v4991
        %5042 = vst [vmem:[#allocation2] sm:$0xff] %v4994
        %5043 = vst [vmem:[#allocation2 + $0x8] sm:$0xff] %v4995
        %5044 = vst [vmem:[#allocation2 + $0x10] sm:$0xff] %v4996
        %5045 = vst [vmem:[#allocation2 + $0x18] sm:$0xff] %v4997
        %5046 = vst [vmem:[#allocation2 + $0x20] sm:$0xff] %v4998
        %5047 = vst [vmem:[#allocation2 + $0x28] sm:$0xff] %v4999
        %5048 = vst [vmem:[#allocation2 + $0x30] sm:$0xff] %v5000
        %5049 = vst [vmem:[#allocation2 + $0x38] sm:$0xff] %v5001
        %5050 = vst [vmem:[#allocation2 + $0x40] sm:$0xff] %v5002
        %5051 = vst [vmem:[#allocation2 + $0x48] sm:$0xff] %v5003
        %5052 = vst [vmem:[#allocation2 + $0x50] sm:$0xff] %v5004
        %5053 = vst [vmem:[#allocation2 + $0x58] sm:$0xff] %v5005
        %5054 = vst [vmem:[#allocation2 + $0x60] sm:$0xff] %v5006
        %5055 = vst [vmem:[#allocation2 + $0x68] sm:$0xff] %v5007
        %5056 = vst [vmem:[#allocation2 + $0x70] sm:$0xff] %v5008
        %5057 = vst [vmem:[#allocation2 + $0x78] sm:$0xff] %v5009
        %5058 = vst [vmem:[#allocation2 + $0x80] sm:$0xff] %v5010
        %5059 = vst [vmem:[#allocation2 + $0x88] sm:$0xff] %v5011
        %5060 = vst [vmem:[#allocation2 + $0x90] sm:$0xff] %v5012
        %5061 = vst [vmem:[#allocation2 + $0x98] sm:$0xff] %v5013
        %5062 = vst [vmem:[#allocation2 + $0xa0] sm:$0xff] %v5014
        %5063 = vst [vmem:[#allocation2 + $0xa8] sm:$0xff] %v5015
        %5064 = vst [vmem:[#allocation2 + $0xb0] sm:$0xff] %v5016
        %5065 = vst [vmem:[#allocation2 + $0xb8] sm:$0xff] %v5017
        %5066 = vst [vmem:[#allocation2 + $0xc0] sm:$0xff] %v5018
        %5067 = vst [vmem:[#allocation2 + $0xc8] sm:$0xff] %v5019
        %5068 = vst [vmem:[#allocation2 + $0xd0] sm:$0xff] %v5020
        %5069 = vst [vmem:[#allocation2 + $0xd8] sm:$0xff] %v5021
        %5070 = vst [vmem:[#allocation2 + $0xe0] sm:$0xff] %v5022
        %5071 = vst [vmem:[#allocation2 + $0xe8] sm:$0xff] %v5023
        %5072 = vst [vmem:[#allocation2 + $0xf0] sm:$0xff] %v5024
        %5073 = vst [vmem:[#allocation2 + $0xf8] sm:$0xff] %v5025
        %5074 = vst [vmem:[#allocation2 + $0x100] sm:$0xff] %v5026
        %5075 = vst [vmem:[#allocation2 + $0x108] sm:$0xff] %v5027
        %5076 = vst [vmem:[#allocation2 + $0x110] sm:$0xff] %v5028
        %5077 = vst [vmem:[#allocation2 + $0x118] sm:$0xff] %v5029
        %5078 = vst [vmem:[#allocation2 + $0x120] sm:$0xff] %v5030
        %5079 = vst [vmem:[#allocation2 + $0x128] sm:$0xff] %v5031
        %5080 = vst [vmem:[#allocation2 + $0x130] sm:$0xff] %v5032
        %5081 = vst [vmem:[#allocation2 + $0x138] sm:$0xff] %v5033
        %5082 = vst [vmem:[#allocation2 + $0x140] sm:$0xff] %v5034
        %5083 = vst [vmem:[#allocation2 + $0x148] sm:$0xff] %v5035
        %5084 = vst [vmem:[#allocation2 + $0x150] sm:$0xff] %v5036
        %5085 = vst [vmem:[#allocation2 + $0x158] sm:$0xff] %v5037
        %5086 = vst [vmem:[#allocation2 + $0x160] sm:$0xff] %v5038
        %5087 = vst [vmem:[#allocation2 + $0x168] sm:$0xff] %v5039
        %5088 = vst [vmem:[#allocation2 + $0x170] sm:$0xff] %v5040
        %5089 = vst [vmem:[#allocation2 + $0x178] sm:$0xff] %v5041
        %v5090 = vld [vmem:[#allocation3 + $0x18] sm:$0xf0]
        %v5091 = vld [vmem:[#allocation3 + $0x20] sm:$0xff]
        %v5092 = vld [vmem:[#allocation3 + $0x28] sm:$0xff]
        %v5093 = vld [vmem:[#allocation3 + $0x30] sm:$0xff]
        %v5094 = vld [vmem:[#allocation3 + $0x38] sm:$0xff]
        %v5095 = vld [vmem:[#allocation3 + $0x40] sm:$0xff]
        %v5096 = vld [vmem:[#allocation3 + $0x48] sm:$0xff]
        %v5097 = vld [vmem:[#allocation3 + $0x50] sm:$0xff]
        %v5098 = vld [vmem:[#allocation3 + $0x58] sm:$0xff]
        %v5099 = vld [vmem:[#allocation3 + $0x60] sm:$0xff]
        %v5100 = vld [vmem:[#allocation3 + $0x68] sm:$0xff]
        %v5101 = vld [vmem:[#allocation3 + $0x70] sm:$0xff]
        %v5102 = vld [vmem:[#allocation3 + $0x78] sm:$0xff]
        %v5103 = vld [vmem:[#allocation3 + $0x80] sm:$0xff]
        %v5104 = vld [vmem:[#allocation3 + $0x88] sm:$0xff]
        %v5105 = vld [vmem:[#allocation3 + $0x90] sm:$0xff]
        %v5106 = vld [vmem:[#allocation3 + $0x98] sm:$0xff]
        %v5107 = vld [vmem:[#allocation3 + $0xa0] sm:$0xff]
        %v5108 = vld [vmem:[#allocation3 + $0xa8] sm:$0xff]
        %v5109 = vld [vmem:[#allocation3 + $0xb0] sm:$0xff]
        %v5110 = vld [vmem:[#allocation3 + $0xb8] sm:$0xff]
        %v5111 = vld [vmem:[#allocation3 + $0xc0] sm:$0xff]
        %v5112 = vld [vmem:[#allocation3 + $0xc8] sm:$0xff]
        %v5113 = vld [vmem:[#allocation3 + $0xd0] sm:$0xff]
        %v5114 = vld [vmem:[#allocation3 + $0xd8] sm:$0xf]
        %v5115 = vld [vmem:[#allocation2] sm:$0xff]
        %v5116 = vld [vmem:[#allocation2 + $0x8] sm:$0xff]
        %v5117 = vld [vmem:[#allocation2 + $0x10] sm:$0xff]
        %v5118 = vld [vmem:[#allocation2 + $0x18] sm:$0xff]
        %v5119 = vld [vmem:[#allocation2 + $0x20] sm:$0xff]
        %v5120 = vld [vmem:[#allocation2 + $0x28] sm:$0xff]
        %v5121 = vld [vmem:[#allocation2 + $0x30] sm:$0xff]
        %v5122 = vld [vmem:[#allocation2 + $0x38] sm:$0xff]
        %v5123 = vld [vmem:[#allocation2 + $0x40] sm:$0xff]
        %v5124 = vld [vmem:[#allocation2 + $0x48] sm:$0xff]
        %v5125 = vld [vmem:[#allocation2 + $0x50] sm:$0xff]
        %v5126 = vld [vmem:[#allocation2 + $0x58] sm:$0xff]
        %v5127 = vld [vmem:[#allocation2 + $0x60] sm:$0xff]
        %v5128 = vld [vmem:[#allocation2 + $0x68] sm:$0xff]
        %v5129 = vld [vmem:[#allocation2 + $0x70] sm:$0xff]
        %v5130 = vld [vmem:[#allocation2 + $0x78] sm:$0xff]
        %v5131 = vld [vmem:[#allocation2 + $0x80] sm:$0xff]
        %v5132 = vld [vmem:[#allocation2 + $0x88] sm:$0xff]
        %v5133 = vld [vmem:[#allocation2 + $0x90] sm:$0xff]
        %v5134 = vld [vmem:[#allocation2 + $0x98] sm:$0xff]
        %v5135 = vld [vmem:[#allocation2 + $0xa0] sm:$0xff]
        %v5136 = vld [vmem:[#allocation2 + $0xa8] sm:$0xff]
        %v5137 = vld [vmem:[#allocation2 + $0xb0] sm:$0xff]
        %v5138 = vld [vmem:[#allocation2 + $0xb8] sm:$0xff]
        %v5139 = vld [vmem:[#allocation2 + $0xc0] sm:$0xff]
        %v5140 = vld [vmem:[#allocation2 + $0xc8] sm:$0xff]
        %v5141 = vld [vmem:[#allocation2 + $0xd0] sm:$0xff]
        %v5142 = vld [vmem:[#allocation2 + $0xd8] sm:$0xff]
        %v5143 = vld [vmem:[#allocation2 + $0xe0] sm:$0xff]
        %v5144 = vld [vmem:[#allocation2 + $0xe8] sm:$0xff]
        %v5145 = vld [vmem:[#allocation2 + $0xf0] sm:$0xff]
        %v5146 = vld [vmem:[#allocation2 + $0xf8] sm:$0xff]
        %v5147 = vld [vmem:[#allocation2 + $0x100] sm:$0xff]
        %v5148 = vld [vmem:[#allocation2 + $0x108] sm:$0xff]
        %v5149 = vld [vmem:[#allocation2 + $0x110] sm:$0xff]
        %v5150 = vld [vmem:[#allocation2 + $0x118] sm:$0xff]
        %v5151 = vld [vmem:[#allocation2 + $0x120] sm:$0xff]
        %v5152 = vld [vmem:[#allocation2 + $0x128] sm:$0xff]
        %v5153 = vld [vmem:[#allocation2 + $0x130] sm:$0xff]
        %v5154 = vld [vmem:[#allocation2 + $0x138] sm:$0xff]
        %v5155 = vld [vmem:[#allocation2 + $0x140] sm:$0xff]
        %v5156 = vld [vmem:[#allocation2 + $0x148] sm:$0xff]
        %v5157 = vld [vmem:[#allocation2 + $0x150] sm:$0xff]
        %v5158 = vld [vmem:[#allocation2 + $0x158] sm:$0xff]
        %v5159 = vld [vmem:[#allocation2 + $0x160] sm:$0xff]
        %v5160 = vld [vmem:[#allocation2 + $0x168] sm:$0xff]
        %v5161 = vld [vmem:[#allocation2 + $0x170] sm:$0xff]
        %v5162 = vld [vmem:[#allocation2 + $0x178] sm:$0xff]
        %s5163 = scalar_lea.vmem [#allocation7], 448
        %v5164 = vld [vmem:[%s5163] sm:$0xf]
        %v5165 = vld [vmem:[%s5163 + $0x4] sm:$0xf]
        %v5166 = vld [vmem:[%s5163 + $0x8] sm:$0xf]
        %v5167 = vld [vmem:[%s5163 + $0xc] sm:$0xf]
        %v5168 = vld [vmem:[%s5163 + $0x10] sm:$0xf]
        %v5169 = vld [vmem:[%s5163 + $0x14] sm:$0xf]
        %v5170 = vld [vmem:[%s5163 + $0x18] sm:$0xf]
        %v5171 = vld [vmem:[%s5163 + $0x1c] sm:$0xf]
        %v5172 = vld [vmem:[%s5163 + $0x20] sm:$0xf]
        %v5173 = vld [vmem:[%s5163 + $0x24] sm:$0xf]
        %v5174 = vld [vmem:[%s5163 + $0x28] sm:$0xf]
        %v5175 = vld [vmem:[%s5163 + $0x2c] sm:$0xf]
        %v5176 = vld [vmem:[%s5163 + $0x30] sm:$0xf]
        %v5177 = vld [vmem:[%s5163 + $0x34] sm:$0xf]
        %v5178 = vld [vmem:[%s5163 + $0x38] sm:$0xf]
        %v5179 = vld [vmem:[%s5163 + $0x3c] sm:$0xf]
        %v5205 = vrot.slane %v5090, 4
        %v5206 = vrot.slane %v5091, 4
        %v5207 = vsel %vm1414, %v5205, %v5206
        %v5208 = vrot.slane %v5092, 4
        %v5209 = vsel %vm1414, %v5206, %v5208
        %v5210 = vrot.slane %v5093, 4
        %v5211 = vsel %vm1414, %v5208, %v5210
        %v5212 = vrot.slane %v5094, 4
        %v5213 = vsel %vm1414, %v5210, %v5212
        %v5214 = vrot.slane %v5095, 4
        %v5215 = vsel %vm1414, %v5212, %v5214
        %v5216 = vrot.slane %v5096, 4
        %v5217 = vsel %vm1414, %v5214, %v5216
        %v5218 = vrot.slane %v5097, 4
        %v5219 = vsel %vm1414, %v5216, %v5218
        %v5220 = vrot.slane %v5098, 4
        %v5221 = vsel %vm1414, %v5218, %v5220
        %v5222 = vrot.slane %v5099, 4
        %v5223 = vsel %vm1414, %v5220, %v5222
        %v5224 = vrot.slane %v5100, 4
        %v5225 = vsel %vm1414, %v5222, %v5224
        %v5226 = vrot.slane %v5101, 4
        %v5227 = vsel %vm1414, %v5224, %v5226
        %v5228 = vrot.slane %v5102, 4
        %v5229 = vsel %vm1414, %v5226, %v5228
        %v5230 = vrot.slane %v5103, 4
        %v5231 = vsel %vm1414, %v5228, %v5230
        %v5232 = vrot.slane %v5104, 4
        %v5233 = vsel %vm1414, %v5230, %v5232
        %v5234 = vrot.slane %v5105, 4
        %v5235 = vsel %vm1414, %v5232, %v5234
        %v5236 = vrot.slane %v5106, 4
        %v5237 = vsel %vm1414, %v5234, %v5236
        %v5238 = vrot.slane %v5107, 4
        %v5239 = vsel %vm1414, %v5236, %v5238
        %v5240 = vrot.slane %v5108, 4
        %v5241 = vsel %vm1414, %v5238, %v5240
        %v5242 = vrot.slane %v5109, 4
        %v5243 = vsel %vm1414, %v5240, %v5242
        %v5244 = vrot.slane %v5110, 4
        %v5245 = vsel %vm1414, %v5242, %v5244
        %v5246 = vrot.slane %v5111, 4
        %v5247 = vsel %vm1414, %v5244, %v5246
        %v5248 = vrot.slane %v5112, 4
        %v5249 = vsel %vm1414, %v5246, %v5248
        %v5250 = vrot.slane %v5113, 4
        %v5251 = vsel %vm1414, %v5248, %v5250
        %v5252 = vrot.slane %v5114, 4
        %v5253 = vsel %vm1414, %v5250, %v5252
        %v5294 = vunpack.c.l.b16 %v5164
        %v5295 = vunpack.c.l.b16 %v5165
        %v5296 = vunpack.c.l.b16 %v5166
        %v5297 = vunpack.c.l.b16 %v5167
        %v5298 = vunpack.c.l.b16 %v5168
        %v5299 = vunpack.c.l.b16 %v5169
        %v5300 = vunpack.c.l.b16 %v5170
        %v5301 = vunpack.c.l.b16 %v5171
        %v5302 = vunpack.c.l.b16 %v5172
        %v5303 = vunpack.c.l.b16 %v5173
        %v5304 = vunpack.c.l.b16 %v5174
        %v5305 = vunpack.c.l.b16 %v5175
        %v5306 = vunpack.c.l.b16 %v5176
        %v5307 = vunpack.c.l.b16 %v5177
        %v5308 = vunpack.c.l.b16 %v5178
        %v5309 = vunpack.c.l.b16 %v5179
        %v5310 = vpack.c.b16 %v5295, %v5294
        %v5311 = vpack.c.b16 %v5297, %v5296
        %v5312 = vpack.c.b16 %v5299, %v5298
        %v5313 = vpack.c.b16 %v5301, %v5300
        %v5314 = vpack.c.b16 %v5303, %v5302
        %v5315 = vpack.c.b16 %v5305, %v5304
        %v5316 = vpack.c.b16 %v5307, %v5306
        %v5317 = vpack.c.b16 %v5309, %v5308
        %5326 = vmatprep.subr.bf16.mxu0 0
        %5327 = vmatpush1.bf16.msra.mxu0 %v5310
        %5328 = vmatprep.subr.bf16.mxu0 0
        %5329 = vmatpush1.bf16.msra.mxu0 %v5311
        %5330 = vmatprep.subr.bf16.mxu0 0
        %5331 = vmatpush1.bf16.msra.mxu0 %v5312
        %5332 = vmatprep.subr.bf16.mxu0 0
        %5333 = vmatpush1.bf16.msra.mxu0 %v5313
        %5334 = vmatprep.subr.bf16.mxu0 0
        %5335 = vmatpush1.bf16.msra.mxu0 %v5314
        %5336 = vmatprep.subr.bf16.mxu0 0
        %5337 = vmatpush1.bf16.msra.mxu0 %v5315
        %5338 = vmatprep.subr.bf16.mxu0 0
        %5339 = vmatpush1.bf16.msra.mxu0 %v5316
        %5340 = vmatprep.subr.bf16.mxu0 0
        %5341 = vmatpush1.bf16.msra.mxu0 %v5317
        %5342 = vmatprep.subr.bf16.mxu0 0
        %5343 = vmatpush1.bf16.msra.mxu0 0
        %5344 = vmatprep.subr.bf16.mxu0 0
        %5345 = vmatpush1.bf16.msra.mxu0 0
        %5346 = vmatprep.subr.bf16.mxu0 0
        %5347 = vmatpush1.bf16.msra.mxu0 0
        %5348 = vmatprep.subr.bf16.mxu0 0
        %5349 = vmatpush1.bf16.msra.mxu0 0
        %5350 = vmatprep.subr.bf16.mxu0 0
        %5351 = vmatpush1.bf16.msra.mxu0 0
        %5352 = vmatprep.subr.bf16.mxu0 0
        %5353 = vmatpush1.bf16.msra.mxu0 0
        %5354 = vmatprep.subr.bf16.mxu0 0
        %5355 = vmatpush1.bf16.msra.mxu0 0
        %5356 = vmatprep.subr.bf16.mxu0 0
        %5357 = vmatpush1.bf16.msra.mxu0 0
        %5358 = vmatprep.mubr.bf16.mxu0 0
        %5359 = vmatmul.mubr.bf16.gmra.mrb[0].mxu0 %v5207
        %v5360 = vpop.f32.mrb[0].mxu0
        %v5361 = vadd.f32 0.0, %v5360
        %v5362 = vpop.f32.mrb[0].mxu0
        %v5363 = vpop.f32.mrb[0].mxu0
        %v5364 = vadd.f32 0.0, %v5363
        %v5365 = vpop.f32.mrb[0].mxu0
        %5366 = vmatprep.mubr.bf16.mxu0 0
        %5367 = vmatmul.mubr.bf16.gmra.mrb[0].mxu0 %v5209
        %v5368 = vpop.f32.mrb[0].mxu0
        %v5369 = vadd.f32 0.0, %v5368
        %v5370 = vpop.f32.mrb[0].mxu0
        %v5371 = vpop.f32.mrb[0].mxu0
        %v5372 = vadd.f32 0.0, %v5371
        %v5373 = vpop.f32.mrb[0].mxu0
        %5374 = vmatprep.mubr.bf16.mxu0 0
        %5375 = vmatmul.mubr.bf16.gmra.mrb[0].mxu0 %v5211
        %v5376 = vpop.f32.mrb[0].mxu0
        %v5377 = vadd.f32 0.0, %v5376
        %v5378 = vpop.f32.mrb[0].mxu0
        %v5379 = vpop.f32.mrb[0].mxu0
        %v5380 = vadd.f32 0.0, %v5379
        %v5381 = vpop.f32.mrb[0].mxu0
        %5382 = vmatprep.mubr.bf16.mxu0 0
        %5383 = vmatmul.mubr.bf16.gmra.mrb[0].mxu0 %v5213
        %v5384 = vpop.f32.mrb[0].mxu0
        %v5385 = vadd.f32 0.0, %v5384
        %v5386 = vpop.f32.mrb[0].mxu0
        %v5387 = vpop.f32.mrb[0].mxu0
        %v5388 = vadd.f32 0.0, %v5387
        %v5389 = vpop.f32.mrb[0].mxu0
        %5390 = vmatprep.mubr.bf16.mxu0 0
        %5391 = vmatmul.mubr.bf16.gmra.mrb[0].mxu0 %v5215
        %v5392 = vpop.f32.mrb[0].mxu0
        %v5393 = vadd.f32 0.0, %v5392
        %v5394 = vpop.f32.mrb[0].mxu0
        %v5395 = vpop.f32.mrb[0].mxu0
        %v5396 = vadd.f32 0.0, %v5395
        %v5397 = vpop.f32.mrb[0].mxu0
        %5398 = vmatprep.mubr.bf16.mxu0 0
        %5399 = vmatmul.mubr.bf16.gmra.mrb[0].mxu0 %v5217
        %v5400 = vpop.f32.mrb[0].mxu0
        %v5401 = vadd.f32 0.0, %v5400
        %v5402 = vpop.f32.mrb[0].mxu0
        %v5403 = vpop.f32.mrb[0].mxu0
        %v5404 = vadd.f32 0.0, %v5403
        %v5405 = vpop.f32.mrb[0].mxu0
        %5406 = vmatprep.mubr.bf16.mxu0 0
        %5407 = vmatmul.mubr.bf16.gmra.mrb[0].mxu0 %v5219
        %v5408 = vpop.f32.mrb[0].mxu0
        %v5409 = vadd.f32 0.0, %v5408
        %v5410 = vpop.f32.mrb[0].mxu0
        %v5411 = vpop.f32.mrb[0].mxu0
        %v5412 = vadd.f32 0.0, %v5411
        %v5413 = vpop.f32.mrb[0].mxu0
        %5414 = vmatprep.mubr.bf16.mxu0 0
        %5415 = vmatmul.mubr.bf16.gmra.mrb[0].mxu0 %v5221
        %v5416 = vpop.f32.mrb[0].mxu0
        %v5417 = vadd.f32 0.0, %v5416
        %v5418 = vpop.f32.mrb[0].mxu0
        %v5419 = vpop.f32.mrb[0].mxu0
        %v5420 = vadd.f32 0.0, %v5419
        %v5421 = vpop.f32.mrb[0].mxu0
        %5422 = vmatprep.mubr.bf16.mxu0 0
        %5423 = vmatmul.mubr.bf16.gmra.mrb[0].mxu0 %v5223
        %v5424 = vpop.f32.mrb[0].mxu0
        %v5425 = vadd.f32 0.0, %v5424
        %v5426 = vpop.f32.mrb[0].mxu0
        %v5427 = vpop.f32.mrb[0].mxu0
        %v5428 = vadd.f32 0.0, %v5427
        %v5429 = vpop.f32.mrb[0].mxu0
        %5430 = vmatprep.mubr.bf16.mxu0 0
        %5431 = vmatmul.mubr.bf16.gmra.mrb[0].mxu0 %v5225
        %v5432 = vpop.f32.mrb[0].mxu0
        %v5433 = vadd.f32 0.0, %v5432
        %v5434 = vpop.f32.mrb[0].mxu0
        %v5435 = vpop.f32.mrb[0].mxu0
        %v5436 = vadd.f32 0.0, %v5435
        %v5437 = vpop.f32.mrb[0].mxu0
        %5438 = vmatprep.mubr.bf16.mxu0 0
        %5439 = vmatmul.mubr.bf16.gmra.mrb[0].mxu0 %v5227
        %v5440 = vpop.f32.mrb[0].mxu0
        %v5441 = vadd.f32 0.0, %v5440
        %v5442 = vpop.f32.mrb[0].mxu0
        %v5443 = vpop.f32.mrb[0].mxu0
        %v5444 = vadd.f32 0.0, %v5443
        %v5445 = vpop.f32.mrb[0].mxu0
        %5446 = vmatprep.mubr.bf16.mxu0 0
        %5447 = vmatmul.mubr.bf16.gmra.mrb[0].mxu0 %v5229
        %v5448 = vpop.f32.mrb[0].mxu0
        %v5449 = vadd.f32 0.0, %v5448
        %v5450 = vpop.f32.mrb[0].mxu0
        %v5451 = vpop.f32.mrb[0].mxu0
        %v5452 = vadd.f32 0.0, %v5451
        %v5453 = vpop.f32.mrb[0].mxu0
        %5454 = vmatprep.mubr.bf16.mxu0 0
        %5455 = vmatmul.mubr.bf16.gmra.mrb[0].mxu0 %v5231
        %v5456 = vpop.f32.mrb[0].mxu0
        %v5457 = vadd.f32 0.0, %v5456
        %v5458 = vpop.f32.mrb[0].mxu0
        %v5459 = vpop.f32.mrb[0].mxu0
        %v5460 = vadd.f32 0.0, %v5459
        %v5461 = vpop.f32.mrb[0].mxu0
        %5462 = vmatprep.mubr.bf16.mxu0 0
        %5463 = vmatmul.mubr.bf16.gmra.mrb[0].mxu0 %v5233
        %v5464 = vpop.f32.mrb[0].mxu0
        %v5465 = vadd.f32 0.0, %v5464
        %v5466 = vpop.f32.mrb[0].mxu0
        %v5467 = vpop.f32.mrb[0].mxu0
        %v5468 = vadd.f32 0.0, %v5467
        %v5469 = vpop.f32.mrb[0].mxu0
        %5470 = vmatprep.mubr.bf16.mxu0 0
        %5471 = vmatmul.mubr.bf16.gmra.mrb[0].mxu0 %v5235
        %v5472 = vpop.f32.mrb[0].mxu0
        %v5473 = vadd.f32 0.0, %v5472
        %v5474 = vpop.f32.mrb[0].mxu0
        %v5475 = vpop.f32.mrb[0].mxu0
        %v5476 = vadd.f32 0.0, %v5475
        %v5477 = vpop.f32.mrb[0].mxu0
        %5478 = vmatprep.mubr.bf16.mxu0 0
        %5479 = vmatmul.mubr.bf16.gmra.mrb[0].mxu0 %v5237
        %v5480 = vpop.f32.mrb[0].mxu0
        %v5481 = vadd.f32 0.0, %v5480
        %v5482 = vpop.f32.mrb[0].mxu0
        %v5483 = vpop.f32.mrb[0].mxu0
        %v5484 = vadd.f32 0.0, %v5483
        %v5485 = vpop.f32.mrb[0].mxu0
        %5486 = vmatprep.mubr.bf16.mxu0 0
        %5487 = vmatmul.mubr.bf16.gmra.mrb[0].mxu0 %v5239
        %v5488 = vpop.f32.mrb[0].mxu0
        %v5489 = vadd.f32 0.0, %v5488
        %v5490 = vpop.f32.mrb[0].mxu0
        %v5491 = vpop.f32.mrb[0].mxu0
        %v5492 = vadd.f32 0.0, %v5491
        %v5493 = vpop.f32.mrb[0].mxu0
        %5494 = vmatprep.mubr.bf16.mxu0 0
        %5495 = vmatmul.mubr.bf16.gmra.mrb[0].mxu0 %v5241
        %v5496 = vpop.f32.mrb[0].mxu0
        %v5497 = vadd.f32 0.0, %v5496
        %v5498 = vpop.f32.mrb[0].mxu0
        %v5499 = vpop.f32.mrb[0].mxu0
        %v5500 = vadd.f32 0.0, %v5499
        %v5501 = vpop.f32.mrb[0].mxu0
        %5502 = vmatprep.mubr.bf16.mxu0 0
        %5503 = vmatmul.mubr.bf16.gmra.mrb[0].mxu0 %v5243
        %v5504 = vpop.f32.mrb[0].mxu0
        %v5505 = vadd.f32 0.0, %v5504
        %v5506 = vpop.f32.mrb[0].mxu0
        %v5507 = vpop.f32.mrb[0].mxu0
        %v5508 = vadd.f32 0.0, %v5507
        %v5509 = vpop.f32.mrb[0].mxu0
        %5510 = vmatprep.mubr.bf16.mxu0 0
        %5511 = vmatmul.mubr.bf16.gmra.mrb[0].mxu0 %v5245
        %v5512 = vpop.f32.mrb[0].mxu0
        %v5513 = vadd.f32 0.0, %v5512
        %v5514 = vpop.f32.mrb[0].mxu0
        %v5515 = vpop.f32.mrb[0].mxu0
        %v5516 = vadd.f32 0.0, %v5515
        %v5517 = vpop.f32.mrb[0].mxu0
        %5518 = vmatprep.mubr.bf16.mxu0 0
        %5519 = vmatmul.mubr.bf16.gmra.mrb[0].mxu0 %v5247
        %v5520 = vpop.f32.mrb[0].mxu0
        %v5521 = vadd.f32 0.0, %v5520
        %v5522 = vpop.f32.mrb[0].mxu0
        %v5523 = vpop.f32.mrb[0].mxu0
        %v5524 = vadd.f32 0.0, %v5523
        %v5525 = vpop.f32.mrb[0].mxu0
        %5526 = vmatprep.mubr.bf16.mxu0 0
        %5527 = vmatmul.mubr.bf16.gmra.mrb[0].mxu0 %v5249
        %v5528 = vpop.f32.mrb[0].mxu0
        %v5529 = vadd.f32 0.0, %v5528
        %v5530 = vpop.f32.mrb[0].mxu0
        %v5531 = vpop.f32.mrb[0].mxu0
        %v5532 = vadd.f32 0.0, %v5531
        %v5533 = vpop.f32.mrb[0].mxu0
        %5534 = vmatprep.mubr.bf16.mxu0 0
        %5535 = vmatmul.mubr.bf16.gmra.mrb[0].mxu0 %v5251
        %v5536 = vpop.f32.mrb[0].mxu0
        %v5537 = vadd.f32 0.0, %v5536
        %v5538 = vpop.f32.mrb[0].mxu0
        %v5539 = vpop.f32.mrb[0].mxu0
        %v5540 = vadd.f32 0.0, %v5539
        %v5541 = vpop.f32.mrb[0].mxu0
        %5542 = vmatprep.mubr.bf16.mxu0 0
        %5543 = vmatmul.mubr.bf16.gmra.mrb[0].mxu0 %v5253
        %v5544 = vpop.f32.mrb[0].mxu0
        %v5545 = vadd.f32 0.0, %v5544
        %v5546 = vpop.f32.mrb[0].mxu0
        %v5547 = vpop.f32.mrb[0].mxu0
        %v5548 = vadd.f32 0.0, %v5547
        %v5549 = vpop.f32.mrb[0].mxu0
        %5550 = vdwg.mxu0
        %v5551 = vadd.f32 %v5115, %v5361
        %v5552 = vadd.f32 %v5116, %v5364
        %v5553 = vadd.f32 %v5117, %v5369
        %v5554 = vadd.f32 %v5118, %v5372
        %v5555 = vadd.f32 %v5119, %v5377
        %v5556 = vadd.f32 %v5120, %v5380
        %v5557 = vadd.f32 %v5121, %v5385
        %v5558 = vadd.f32 %v5122, %v5388
        %v5559 = vadd.f32 %v5123, %v5393
        %v5560 = vadd.f32 %v5124, %v5396
        %v5561 = vadd.f32 %v5125, %v5401
        %v5562 = vadd.f32 %v5126, %v5404
        %v5563 = vadd.f32 %v5127, %v5409
        %v5564 = vadd.f32 %v5128, %v5412
        %v5565 = vadd.f32 %v5129, %v5417
        %v5566 = vadd.f32 %v5130, %v5420
        %v5567 = vadd.f32 %v5131, %v5425
        %v5568 = vadd.f32 %v5132, %v5428
        %v5569 = vadd.f32 %v5133, %v5433
        %v5570 = vadd.f32 %v5134, %v5436
        %v5571 = vadd.f32 %v5135, %v5441
        %v5572 = vadd.f32 %v5136, %v5444
        %v5573 = vadd.f32 %v5137, %v5449
        %v5574 = vadd.f32 %v5138, %v5452
        %v5575 = vadd.f32 %v5139, %v5457
        %v5576 = vadd.f32 %v5140, %v5460
        %v5577 = vadd.f32 %v5141, %v5465
        %v5578 = vadd.f32 %v5142, %v5468
        %v5579 = vadd.f32 %v5143, %v5473
        %v5580 = vadd.f32 %v5144, %v5476
        %v5581 = vadd.f32 %v5145, %v5481
        %v5582 = vadd.f32 %v5146, %v5484
        %v5583 = vadd.f32 %v5147, %v5489
        %v5584 = vadd.f32 %v5148, %v5492
        %v5585 = vadd.f32 %v5149, %v5497
        %v5586 = vadd.f32 %v5150, %v5500
        %v5587 = vadd.f32 %v5151, %v5505
        %v5588 = vadd.f32 %v5152, %v5508
        %v5589 = vadd.f32 %v5153, %v5513
        %v5590 = vadd.f32 %v5154, %v5516
        %v5591 = vadd.f32 %v5155, %v5521
        %v5592 = vadd.f32 %v5156, %v5524
        %v5593 = vadd.f32 %v5157, %v5529
        %v5594 = vadd.f32 %v5158, %v5532
        %v5595 = vadd.f32 %v5159, %v5537
        %v5596 = vadd.f32 %v5160, %v5540
        %v5597 = vadd.f32 %v5161, %v5545
        %v5598 = vadd.f32 %v5162, %v5548
        %5599 = vst [vmem:[#allocation2] sm:$0xff] %v5551
        %5600 = vst [vmem:[#allocation2 + $0x8] sm:$0xff] %v5552
        %5601 = vst [vmem:[#allocation2 + $0x10] sm:$0xff] %v5553
        %5602 = vst [vmem:[#allocation2 + $0x18] sm:$0xff] %v5554
        %5603 = vst [vmem:[#allocation2 + $0x20] sm:$0xff] %v5555
        %5604 = vst [vmem:[#allocation2 + $0x28] sm:$0xff] %v5556
        %5605 = vst [vmem:[#allocation2 + $0x30] sm:$0xff] %v5557
        %5606 = vst [vmem:[#allocation2 + $0x38] sm:$0xff] %v5558
        %5607 = vst [vmem:[#allocation2 + $0x40] sm:$0xff] %v5559
        %5608 = vst [vmem:[#allocation2 + $0x48] sm:$0xff] %v5560
        %5609 = vst [vmem:[#allocation2 + $0x50] sm:$0xff] %v5561
        %5610 = vst [vmem:[#allocation2 + $0x58] sm:$0xff] %v5562
        %5611 = vst [vmem:[#allocation2 + $0x60] sm:$0xff] %v5563
        %5612 = vst [vmem:[#allocation2 + $0x68] sm:$0xff] %v5564
        %5613 = vst [vmem:[#allocation2 + $0x70] sm:$0xff] %v5565
        %5614 = vst [vmem:[#allocation2 + $0x78] sm:$0xff] %v5566
        %5615 = vst [vmem:[#allocation2 + $0x80] sm:$0xff] %v5567
        %5616 = vst [vmem:[#allocation2 + $0x88] sm:$0xff] %v5568
        %5617 = vst [vmem:[#allocation2 + $0x90] sm:$0xff] %v5569
        %5618 = vst [vmem:[#allocation2 + $0x98] sm:$0xff] %v5570
        %5619 = vst [vmem:[#allocation2 + $0xa0] sm:$0xff] %v5571
        %5620 = vst [vmem:[#allocation2 + $0xa8] sm:$0xff] %v5572
        %5621 = vst [vmem:[#allocation2 + $0xb0] sm:$0xff] %v5573
        %5622 = vst [vmem:[#allocation2 + $0xb8] sm:$0xff] %v5574
        %5623 = vst [vmem:[#allocation2 + $0xc0] sm:$0xff] %v5575
        %5624 = vst [vmem:[#allocation2 + $0xc8] sm:$0xff] %v5576
        %5625 = vst [vmem:[#allocation2 + $0xd0] sm:$0xff] %v5577
        %5626 = vst [vmem:[#allocation2 + $0xd8] sm:$0xff] %v5578
        %5627 = vst [vmem:[#allocation2 + $0xe0] sm:$0xff] %v5579
        %5628 = vst [vmem:[#allocation2 + $0xe8] sm:$0xff] %v5580
        %5629 = vst [vmem:[#allocation2 + $0xf0] sm:$0xff] %v5581
        %5630 = vst [vmem:[#allocation2 + $0xf8] sm:$0xff] %v5582
        %5631 = vst [vmem:[#allocation2 + $0x100] sm:$0xff] %v5583
        %5632 = vst [vmem:[#allocation2 + $0x108] sm:$0xff] %v5584
        %5633 = vst [vmem:[#allocation2 + $0x110] sm:$0xff] %v5585
        %5634 = vst [vmem:[#allocation2 + $0x118] sm:$0xff] %v5586
        %5635 = vst [vmem:[#allocation2 + $0x120] sm:$0xff] %v5587
        %5636 = vst [vmem:[#allocation2 + $0x128] sm:$0xff] %v5588
        %5637 = vst [vmem:[#allocation2 + $0x130] sm:$0xff] %v5589
        %5638 = vst [vmem:[#allocation2 + $0x138] sm:$0xff] %v5590
        %5639 = vst [vmem:[#allocation2 + $0x140] sm:$0xff] %v5591
        %5640 = vst [vmem:[#allocation2 + $0x148] sm:$0xff] %v5592
        %5641 = vst [vmem:[#allocation2 + $0x150] sm:$0xff] %v5593
        %5642 = vst [vmem:[#allocation2 + $0x158] sm:$0xff] %v5594
        %5643 = vst [vmem:[#allocation2 + $0x160] sm:$0xff] %v5595
        %5644 = vst [vmem:[#allocation2 + $0x168] sm:$0xff] %v5596
        %5645 = vst [vmem:[#allocation2 + $0x170] sm:$0xff] %v5597
        %5646 = vst [vmem:[#allocation2 + $0x178] sm:$0xff] %v5598
        %v5647 = vld [vmem:[#allocation3 + $0x18] sm:$0xf0]
        %v5648 = vld [vmem:[#allocation3 + $0x20] sm:$0xff]
        %v5649 = vld [vmem:[#allocation3 + $0x28] sm:$0xff]
        %v5650 = vld [vmem:[#allocation3 + $0x30] sm:$0xff]
        %v5651 = vld [vmem:[#allocation3 + $0x38] sm:$0xff]
        %v5652 = vld [vmem:[#allocation3 + $0x40] sm:$0xff]
        %v5653 = vld [vmem:[#allocation3 + $0x48] sm:$0xff]
        %v5654 = vld [vmem:[#allocation3 + $0x50] sm:$0xff]
        %v5655 = vld [vmem:[#allocation3 + $0x58] sm:$0xff]
        %v5656 = vld [vmem:[#allocation3 + $0x60] sm:$0xff]
        %v5657 = vld [vmem:[#allocation3 + $0x68] sm:$0xff]
        %v5658 = vld [vmem:[#allocation3 + $0x70] sm:$0xff]
        %v5659 = vld [vmem:[#allocation3 + $0x78] sm:$0xff]
        %v5660 = vld [vmem:[#allocation3 + $0x80] sm:$0xff]
        %v5661 = vld [vmem:[#allocation3 + $0x88] sm:$0xff]
        %v5662 = vld [vmem:[#allocation3 + $0x90] sm:$0xff]
        %v5663 = vld [vmem:[#allocation3 + $0x98] sm:$0xff]
        %v5664 = vld [vmem:[#allocation3 + $0xa0] sm:$0xff]
        %v5665 = vld [vmem:[#allocation3 + $0xa8] sm:$0xff]
        %v5666 = vld [vmem:[#allocation3 + $0xb0] sm:$0xff]
        %v5667 = vld [vmem:[#allocation3 + $0xb8] sm:$0xff]
        %v5668 = vld [vmem:[#allocation3 + $0xc0] sm:$0xff]
        %v5669 = vld [vmem:[#allocation3 + $0xc8] sm:$0xff]
        %v5670 = vld [vmem:[#allocation3 + $0xd0] sm:$0xff]
        %v5671 = vld [vmem:[#allocation3 + $0xd8] sm:$0x1f]
        %v5672 = vld [vmem:[#allocation2] sm:$0xff]
        %v5673 = vld [vmem:[#allocation2 + $0x8] sm:$0xff]
        %v5674 = vld [vmem:[#allocation2 + $0x10] sm:$0xff]
        %v5675 = vld [vmem:[#allocation2 + $0x18] sm:$0xff]
        %v5676 = vld [vmem:[#allocation2 + $0x20] sm:$0xff]
        %v5677 = vld [vmem:[#allocation2 + $0x28] sm:$0xff]
        %v5678 = vld [vmem:[#allocation2 + $0x30] sm:$0xff]
        %v5679 = vld [vmem:[#allocation2 + $0x38] sm:$0xff]
        %v5680 = vld [vmem:[#allocation2 + $0x40] sm:$0xff]
        %v5681 = vld [vmem:[#allocation2 + $0x48] sm:$0xff]
        %v5682 = vld [vmem:[#allocation2 + $0x50] sm:$0xff]
        %v5683 = vld [vmem:[#allocation2 + $0x58] sm:$0xff]
        %v5684 = vld [vmem:[#allocation2 + $0x60] sm:$0xff]
        %v5685 = vld [vmem:[#allocation2 + $0x68] sm:$0xff]
        %v5686 = vld [vmem:[#allocation2 + $0x70] sm:$0xff]
        %v5687 = vld [vmem:[#allocation2 + $0x78] sm:$0xff]
        %v5688 = vld [vmem:[#allocation2 + $0x80] sm:$0xff]
        %v5689 = vld [vmem:[#allocation2 + $0x88] sm:$0xff]
        %v5690 = vld [vmem:[#allocation2 + $0x90] sm:$0xff]
        %v5691 = vld [vmem:[#allocation2 + $0x98] sm:$0xff]
        %v5692 = vld [vmem:[#allocation2 + $0xa0] sm:$0xff]
        %v5693 = vld [vmem:[#allocation2 + $0xa8] sm:$0xff]
        %v5694 = vld [vmem:[#allocation2 + $0xb0] sm:$0xff]
        %v5695 = vld [vmem:[#allocation2 + $0xb8] sm:$0xff]
        %v5696 = vld [vmem:[#allocation2 + $0xc0] sm:$0xff]
        %v5697 = vld [vmem:[#allocation2 + $0xc8] sm:$0xff]
        %v5698 = vld [vmem:[#allocation2 + $0xd0] sm:$0xff]
        %v5699 = vld [vmem:[#allocation2 + $0xd8] sm:$0xff]
        %v5700 = vld [vmem:[#allocation2 + $0xe0] sm:$0xff]
        %v5701 = vld [vmem:[#allocation2 + $0xe8] sm:$0xff]
        %v5702 = vld [vmem:[#allocation2 + $0xf0] sm:$0xff]
        %v5703 = vld [vmem:[#allocation2 + $0xf8] sm:$0xff]
        %v5704 = vld [vmem:[#allocation2 + $0x100] sm:$0xff]
        %v5705 = vld [vmem:[#allocation2 + $0x108] sm:$0xff]
        %v5706 = vld [vmem:[#allocation2 + $0x110] sm:$0xff]
        %v5707 = vld [vmem:[#allocation2 + $0x118] sm:$0xff]
        %v5708 = vld [vmem:[#allocation2 + $0x120] sm:$0xff]
        %v5709 = vld [vmem:[#allocation2 + $0x128] sm:$0xff]
        %v5710 = vld [vmem:[#allocation2 + $0x130] sm:$0xff]
        %v5711 = vld [vmem:[#allocation2 + $0x138] sm:$0xff]
        %v5712 = vld [vmem:[#allocation2 + $0x140] sm:$0xff]
        %v5713 = vld [vmem:[#allocation2 + $0x148] sm:$0xff]
        %v5714 = vld [vmem:[#allocation2 + $0x150] sm:$0xff]
        %v5715 = vld [vmem:[#allocation2 + $0x158] sm:$0xff]
        %v5716 = vld [vmem:[#allocation2 + $0x160] sm:$0xff]
        %v5717 = vld [vmem:[#allocation2 + $0x168] sm:$0xff]
        %v5718 = vld [vmem:[#allocation2 + $0x170] sm:$0xff]
        %v5719 = vld [vmem:[#allocation2 + $0x178] sm:$0xff]
        %s5720 = scalar_lea.vmem [#allocation7], 512
        %v5721 = vld [vmem:[%s5720] sm:$0xf]
        %v5722 = vld [vmem:[%s5720 + $0x4] sm:$0xf]
        %v5723 = vld [vmem:[%s5720 + $0x8] sm:$0xf]
        %v5724 = vld [vmem:[%s5720 + $0xc] sm:$0xf]
        %v5725 = vld [vmem:[%s5720 + $0x10] sm:$0xf]
        %v5726 = vld [vmem:[%s5720 + $0x14] sm:$0xf]
        %v5727 = vld [vmem:[%s5720 + $0x18] sm:$0xf]
        %v5728 = vld [vmem:[%s5720 + $0x1c] sm:$0xf]
        %v5729 = vld [vmem:[%s5720 + $0x20] sm:$0xf]
        %v5730 = vld [vmem:[%s5720 + $0x24] sm:$0xf]
        %v5731 = vld [vmem:[%s5720 + $0x28] sm:$0xf]
        %v5732 = vld [vmem:[%s5720 + $0x2c] sm:$0xf]
        %v5733 = vld [vmem:[%s5720 + $0x30] sm:$0xf]
        %v5734 = vld [vmem:[%s5720 + $0x34] sm:$0xf]
        %v5735 = vld [vmem:[%s5720 + $0x38] sm:$0xf]
        %v5736 = vld [vmem:[%s5720 + $0x3c] sm:$0xf]
        %v5738 = vshrl.u32 %v5647, 16
        %v5740 = vrot.slane %v5738, 4
        %v5741 = vshll.u32 %v5647, 16
        %v5743 = vrot.slane %v5741, 5
        %v5744 = vor.u32 %v5740, %v5743
        %v5746 = vshrl.u32 %v5648, 16
        %v5748 = vrot.slane %v5746, 4
        %v5749 = vshll.u32 %v5648, 16
        %v5751 = vrot.slane %v5749, 5
        %v5752 = vor.u32 %v5748, %v5751
        %v5753 = vsel %vm1947, %v5744, %v5752
        %v5755 = vshrl.u32 %v5649, 16
        %v5757 = vrot.slane %v5755, 4
        %v5758 = vshll.u32 %v5649, 16
        %v5760 = vrot.slane %v5758, 5
        %v5761 = vor.u32 %v5757, %v5760
        %v5762 = vsel %vm1947, %v5752, %v5761
        %v5764 = vshrl.u32 %v5650, 16
        %v5766 = vrot.slane %v5764, 4
        %v5767 = vshll.u32 %v5650, 16
        %v5769 = vrot.slane %v5767, 5
        %v5770 = vor.u32 %v5766, %v5769
        %v5771 = vsel %vm1947, %v5761, %v5770
        %v5773 = vshrl.u32 %v5651, 16
        %v5775 = vrot.slane %v5773, 4
        %v5776 = vshll.u32 %v5651, 16
        %v5778 = vrot.slane %v5776, 5
        %v5779 = vor.u32 %v5775, %v5778
        %v5780 = vsel %vm1947, %v5770, %v5779
        %v5782 = vshrl.u32 %v5652, 16
        %v5784 = vrot.slane %v5782, 4
        %v5785 = vshll.u32 %v5652, 16
        %v5787 = vrot.slane %v5785, 5
        %v5788 = vor.u32 %v5784, %v5787
        %v5789 = vsel %vm1947, %v5779, %v5788
        %v5791 = vshrl.u32 %v5653, 16
        %v5793 = vrot.slane %v5791, 4
        %v5794 = vshll.u32 %v5653, 16
        %v5796 = vrot.slane %v5794, 5
        %v5797 = vor.u32 %v5793, %v5796
        %v5798 = vsel %vm1947, %v5788, %v5797
        %v5800 = vshrl.u32 %v5654, 16
        %v5802 = vrot.slane %v5800, 4
        %v5803 = vshll.u32 %v5654, 16
        %v5805 = vrot.slane %v5803, 5
        %v5806 = vor.u32 %v5802, %v5805
        %v5807 = vsel %vm1947, %v5797, %v5806
        %v5809 = vshrl.u32 %v5655, 16
        %v5811 = vrot.slane %v5809, 4
        %v5812 = vshll.u32 %v5655, 16
        %v5814 = vrot.slane %v5812, 5
        %v5815 = vor.u32 %v5811, %v5814
        %v5816 = vsel %vm1947, %v5806, %v5815
        %v5818 = vshrl.u32 %v5656, 16
        %v5820 = vrot.slane %v5818, 4
        %v5821 = vshll.u32 %v5656, 16
        %v5823 = vrot.slane %v5821, 5
        %v5824 = vor.u32 %v5820, %v5823
        %v5825 = vsel %vm1947, %v5815, %v5824
        %v5827 = vshrl.u32 %v5657, 16
        %v5829 = vrot.slane %v5827, 4
        %v5830 = vshll.u32 %v5657, 16
        %v5832 = vrot.slane %v5830, 5
        %v5833 = vor.u32 %v5829, %v5832
        %v5834 = vsel %vm1947, %v5824, %v5833
        %v5836 = vshrl.u32 %v5658, 16
        %v5838 = vrot.slane %v5836, 4
        %v5839 = vshll.u32 %v5658, 16
        %v5841 = vrot.slane %v5839, 5
        %v5842 = vor.u32 %v5838, %v5841
        %v5843 = vsel %vm1947, %v5833, %v5842
        %v5845 = vshrl.u32 %v5659, 16
        %v5847 = vrot.slane %v5845, 4
        %v5848 = vshll.u32 %v5659, 16
        %v5850 = vrot.slane %v5848, 5
        %v5851 = vor.u32 %v5847, %v5850
        %v5852 = vsel %vm1947, %v5842, %v5851
        %v5854 = vshrl.u32 %v5660, 16
        %v5856 = vrot.slane %v5854, 4
        %v5857 = vshll.u32 %v5660, 16
        %v5859 = vrot.slane %v5857, 5
        %v5860 = vor.u32 %v5856, %v5859
        %v5861 = vsel %vm1947, %v5851, %v5860
        %v5863 = vshrl.u32 %v5661, 16
        %v5865 = vrot.slane %v5863, 4
        %v5866 = vshll.u32 %v5661, 16
        %v5868 = vrot.slane %v5866, 5
        %v5869 = vor.u32 %v5865, %v5868
        %v5870 = vsel %vm1947, %v5860, %v5869
        %v5872 = vshrl.u32 %v5662, 16
        %v5874 = vrot.slane %v5872, 4
        %v5875 = vshll.u32 %v5662, 16
        %v5877 = vrot.slane %v5875, 5
        %v5878 = vor.u32 %v5874, %v5877
        %v5879 = vsel %vm1947, %v5869, %v5878
        %v5881 = vshrl.u32 %v5663, 16
        %v5883 = vrot.slane %v5881, 4
        %v5884 = vshll.u32 %v5663, 16
        %v5886 = vrot.slane %v5884, 5
        %v5887 = vor.u32 %v5883, %v5886
        %v5888 = vsel %vm1947, %v5878, %v5887
        %v5890 = vshrl.u32 %v5664, 16
        %v5892 = vrot.slane %v5890, 4
        %v5893 = vshll.u32 %v5664, 16
        %v5895 = vrot.slane %v5893, 5
        %v5896 = vor.u32 %v5892, %v5895
        %v5897 = vsel %vm1947, %v5887, %v5896
        %v5899 = vshrl.u32 %v5665, 16
        %v5901 = vrot.slane %v5899, 4
        %v5902 = vshll.u32 %v5665, 16
        %v5904 = vrot.slane %v5902, 5
        %v5905 = vor.u32 %v5901, %v5904
        %v5906 = vsel %vm1947, %v5896, %v5905
        %v5908 = vshrl.u32 %v5666, 16
        %v5910 = vrot.slane %v5908, 4
        %v5911 = vshll.u32 %v5666, 16
        %v5913 = vrot.slane %v5911, 5
        %v5914 = vor.u32 %v5910, %v5913
        %v5915 = vsel %vm1947, %v5905, %v5914
        %v5917 = vshrl.u32 %v5667, 16
        %v5919 = vrot.slane %v5917, 4
        %v5920 = vshll.u32 %v5667, 16
        %v5922 = vrot.slane %v5920, 5
        %v5923 = vor.u32 %v5919, %v5922
        %v5924 = vsel %vm1947, %v5914, %v5923
        %v5926 = vshrl.u32 %v5668, 16
        %v5928 = vrot.slane %v5926, 4
        %v5929 = vshll.u32 %v5668, 16
        %v5931 = vrot.slane %v5929, 5
        %v5932 = vor.u32 %v5928, %v5931
        %v5933 = vsel %vm1947, %v5923, %v5932
        %v5935 = vshrl.u32 %v5669, 16
        %v5937 = vrot.slane %v5935, 4
        %v5938 = vshll.u32 %v5669, 16
        %v5940 = vrot.slane %v5938, 5
        %v5941 = vor.u32 %v5937, %v5940
        %v5942 = vsel %vm1947, %v5932, %v5941
        %v5944 = vshrl.u32 %v5670, 16
        %v5946 = vrot.slane %v5944, 4
        %v5947 = vshll.u32 %v5670, 16
        %v5949 = vrot.slane %v5947, 5
        %v5950 = vor.u32 %v5946, %v5949
        %v5951 = vsel %vm1947, %v5941, %v5950
        %v5953 = vshrl.u32 %v5671, 16
        %v5955 = vrot.slane %v5953, 4
        %v5956 = vshll.u32 %v5671, 16
        %v5958 = vrot.slane %v5956, 5
        %v5959 = vor.u32 %v5955, %v5958
        %v5960 = vsel %vm1947, %v5950, %v5959
        %v6001 = vunpack.c.l.b16 %v5721
        %v6002 = vunpack.c.l.b16 %v5722
        %v6003 = vunpack.c.l.b16 %v5723
        %v6004 = vunpack.c.l.b16 %v5724
        %v6005 = vunpack.c.l.b16 %v5725
        %v6006 = vunpack.c.l.b16 %v5726
        %v6007 = vunpack.c.l.b16 %v5727
        %v6008 = vunpack.c.l.b16 %v5728
        %v6009 = vunpack.c.l.b16 %v5729
        %v6010 = vunpack.c.l.b16 %v5730
        %v6011 = vunpack.c.l.b16 %v5731
        %v6012 = vunpack.c.l.b16 %v5732
        %v6013 = vunpack.c.l.b16 %v5733
        %v6014 = vunpack.c.l.b16 %v5734
        %v6015 = vunpack.c.l.b16 %v5735
        %v6016 = vunpack.c.l.b16 %v5736
        %v6017 = vpack.c.b16 %v6002, %v6001
        %v6018 = vpack.c.b16 %v6004, %v6003
        %v6019 = vpack.c.b16 %v6006, %v6005
        %v6020 = vpack.c.b16 %v6008, %v6007
        %v6021 = vpack.c.b16 %v6010, %v6009
        %v6022 = vpack.c.b16 %v6012, %v6011
        %v6023 = vpack.c.b16 %v6014, %v6013
        %v6024 = vpack.c.b16 %v6016, %v6015
        %6033 = vmatprep.subr.bf16.mxu0 0
        %6034 = vmatpush1.bf16.msra.mxu0 %v6017
        %6035 = vmatprep.subr.bf16.mxu0 0
        %6036 = vmatpush1.bf16.msra.mxu0 %v6018
        %6037 = vmatprep.subr.bf16.mxu0 0
        %6038 = vmatpush1.bf16.msra.mxu0 %v6019
        %6039 = vmatprep.subr.bf16.mxu0 0
        %6040 = vmatpush1.bf16.msra.mxu0 %v6020
        %6041 = vmatprep.subr.bf16.mxu0 0
        %6042 = vmatpush1.bf16.msra.mxu0 %v6021
        %6043 = vmatprep.subr.bf16.mxu0 0
        %6044 = vmatpush1.bf16.msra.mxu0 %v6022
        %6045 = vmatprep.subr.bf16.mxu0 0
        %6046 = vmatpush1.bf16.msra.mxu0 %v6023
        %6047 = vmatprep.subr.bf16.mxu0 0
        %6048 = vmatpush1.bf16.msra.mxu0 %v6024
        %6049 = vmatprep.subr.bf16.mxu0 0
        %6050 = vmatpush1.bf16.msra.mxu0 0
        %6051 = vmatprep.subr.bf16.mxu0 0
        %6052 = vmatpush1.bf16.msra.mxu0 0
        %6053 = vmatprep.subr.bf16.mxu0 0
        %6054 = vmatpush1.bf16.msra.mxu0 0
        %6055 = vmatprep.subr.bf16.mxu0 0
        %6056 = vmatpush1.bf16.msra.mxu0 0
        %6057 = vmatprep.subr.bf16.mxu0 0
        %6058 = vmatpush1.bf16.msra.mxu0 0
        %6059 = vmatprep.subr.bf16.mxu0 0
        %6060 = vmatpush1.bf16.msra.mxu0 0
        %6061 = vmatprep.subr.bf16.mxu0 0
        %6062 = vmatpush1.bf16.msra.mxu0 0
        %6063 = vmatprep.subr.bf16.mxu0 0
        %6064 = vmatpush1.bf16.msra.mxu0 0
        %6065 = vmatprep.mubr.bf16.mxu0 0
        %6066 = vmatmul.mubr.bf16.gmra.mrb[0].mxu0 %v5753
        %v6067 = vpop.f32.mrb[0].mxu0
        %v6068 = vadd.f32 0.0, %v6067
        %v6069 = vpop.f32.mrb[0].mxu0
        %v6070 = vpop.f32.mrb[0].mxu0
        %v6071 = vadd.f32 0.0, %v6070
        %v6072 = vpop.f32.mrb[0].mxu0
        %6073 = vmatprep.mubr.bf16.mxu0 0
        %6074 = vmatmul.mubr.bf16.gmra.mrb[0].mxu0 %v5762
        %v6075 = vpop.f32.mrb[0].mxu0
        %v6076 = vadd.f32 0.0, %v6075
        %v6077 = vpop.f32.mrb[0].mxu0
        %v6078 = vpop.f32.mrb[0].mxu0
        %v6079 = vadd.f32 0.0, %v6078
        %v6080 = vpop.f32.mrb[0].mxu0
        %6081 = vmatprep.mubr.bf16.mxu0 0
        %6082 = vmatmul.mubr.bf16.gmra.mrb[0].mxu0 %v5771
        %v6083 = vpop.f32.mrb[0].mxu0
        %v6084 = vadd.f32 0.0, %v6083
        %v6085 = vpop.f32.mrb[0].mxu0
        %v6086 = vpop.f32.mrb[0].mxu0
        %v6087 = vadd.f32 0.0, %v6086
        %v6088 = vpop.f32.mrb[0].mxu0
        %6089 = vmatprep.mubr.bf16.mxu0 0
        %6090 = vmatmul.mubr.bf16.gmra.mrb[0].mxu0 %v5780
        %v6091 = vpop.f32.mrb[0].mxu0
        %v6092 = vadd.f32 0.0, %v6091
        %v6093 = vpop.f32.mrb[0].mxu0
        %v6094 = vpop.f32.mrb[0].mxu0
        %v6095 = vadd.f32 0.0, %v6094
        %v6096 = vpop.f32.mrb[0].mxu0
        %6097 = vmatprep.mubr.bf16.mxu0 0
        %6098 = vmatmul.mubr.bf16.gmra.mrb[0].mxu0 %v5789
        %v6099 = vpop.f32.mrb[0].mxu0
        %v6100 = vadd.f32 0.0, %v6099
        %v6101 = vpop.f32.mrb[0].mxu0
        %v6102 = vpop.f32.mrb[0].mxu0
        %v6103 = vadd.f32 0.0, %v6102
        %v6104 = vpop.f32.mrb[0].mxu0
        %6105 = vmatprep.mubr.bf16.mxu0 0
        %6106 = vmatmul.mubr.bf16.gmra.mrb[0].mxu0 %v5798
        %v6107 = vpop.f32.mrb[0].mxu0
        %v6108 = vadd.f32 0.0, %v6107
        %v6109 = vpop.f32.mrb[0].mxu0
        %v6110 = vpop.f32.mrb[0].mxu0
        %v6111 = vadd.f32 0.0, %v6110
        %v6112 = vpop.f32.mrb[0].mxu0
        %6113 = vmatprep.mubr.bf16.mxu0 0
        %6114 = vmatmul.mubr.bf16.gmra.mrb[0].mxu0 %v5807
        %v6115 = vpop.f32.mrb[0].mxu0
        %v6116 = vadd.f32 0.0, %v6115
        %v6117 = vpop.f32.mrb[0].mxu0
        %v6118 = vpop.f32.mrb[0].mxu0
        %v6119 = vadd.f32 0.0, %v6118
        %v6120 = vpop.f32.mrb[0].mxu0
        %6121 = vmatprep.mubr.bf16.mxu0 0
        %6122 = vmatmul.mubr.bf16.gmra.mrb[0].mxu0 %v5816
        %v6123 = vpop.f32.mrb[0].mxu0
        %v6124 = vadd.f32 0.0, %v6123
        %v6125 = vpop.f32.mrb[0].mxu0
        %v6126 = vpop.f32.mrb[0].mxu0
        %v6127 = vadd.f32 0.0, %v6126
        %v6128 = vpop.f32.mrb[0].mxu0
        %6129 = vmatprep.mubr.bf16.mxu0 0
        %6130 = vmatmul.mubr.bf16.gmra.mrb[0].mxu0 %v5825
        %v6131 = vpop.f32.mrb[0].mxu0
        %v6132 = vadd.f32 0.0, %v6131
        %v6133 = vpop.f32.mrb[0].mxu0
        %v6134 = vpop.f32.mrb[0].mxu0
        %v6135 = vadd.f32 0.0, %v6134
        %v6136 = vpop.f32.mrb[0].mxu0
        %6137 = vmatprep.mubr.bf16.mxu0 0
        %6138 = vmatmul.mubr.bf16.gmra.mrb[0].mxu0 %v5834
        %v6139 = vpop.f32.mrb[0].mxu0
        %v6140 = vadd.f32 0.0, %v6139
        %v6141 = vpop.f32.mrb[0].mxu0
        %v6142 = vpop.f32.mrb[0].mxu0
        %v6143 = vadd.f32 0.0, %v6142
        %v6144 = vpop.f32.mrb[0].mxu0
        %6145 = vmatprep.mubr.bf16.mxu0 0
        %6146 = vmatmul.mubr.bf16.gmra.mrb[0].mxu0 %v5843
        %v6147 = vpop.f32.mrb[0].mxu0
        %v6148 = vadd.f32 0.0, %v6147
        %v6149 = vpop.f32.mrb[0].mxu0
        %v6150 = vpop.f32.mrb[0].mxu0
        %v6151 = vadd.f32 0.0, %v6150
        %v6152 = vpop.f32.mrb[0].mxu0
        %6153 = vmatprep.mubr.bf16.mxu0 0
        %6154 = vmatmul.mubr.bf16.gmra.mrb[0].mxu0 %v5852
        %v6155 = vpop.f32.mrb[0].mxu0
        %v6156 = vadd.f32 0.0, %v6155
        %v6157 = vpop.f32.mrb[0].mxu0
        %v6158 = vpop.f32.mrb[0].mxu0
        %v6159 = vadd.f32 0.0, %v6158
        %v6160 = vpop.f32.mrb[0].mxu0
        %6161 = vmatprep.mubr.bf16.mxu0 0
        %6162 = vmatmul.mubr.bf16.gmra.mrb[0].mxu0 %v5861
        %v6163 = vpop.f32.mrb[0].mxu0
        %v6164 = vadd.f32 0.0, %v6163
        %v6165 = vpop.f32.mrb[0].mxu0
        %v6166 = vpop.f32.mrb[0].mxu0
        %v6167 = vadd.f32 0.0, %v6166
        %v6168 = vpop.f32.mrb[0].mxu0
        %6169 = vmatprep.mubr.bf16.mxu0 0
        %6170 = vmatmul.mubr.bf16.gmra.mrb[0].mxu0 %v5870
        %v6171 = vpop.f32.mrb[0].mxu0
        %v6172 = vadd.f32 0.0, %v6171
        %v6173 = vpop.f32.mrb[0].mxu0
        %v6174 = vpop.f32.mrb[0].mxu0
        %v6175 = vadd.f32 0.0, %v6174
        %v6176 = vpop.f32.mrb[0].mxu0
        %6177 = vmatprep.mubr.bf16.mxu0 0
        %6178 = vmatmul.mubr.bf16.gmra.mrb[0].mxu0 %v5879
        %v6179 = vpop.f32.mrb[0].mxu0
        %v6180 = vadd.f32 0.0, %v6179
        %v6181 = vpop.f32.mrb[0].mxu0
        %v6182 = vpop.f32.mrb[0].mxu0
        %v6183 = vadd.f32 0.0, %v6182
        %v6184 = vpop.f32.mrb[0].mxu0
        %6185 = vmatprep.mubr.bf16.mxu0 0
        %6186 = vmatmul.mubr.bf16.gmra.mrb[0].mxu0 %v5888
        %v6187 = vpop.f32.mrb[0].mxu0
        %v6188 = vadd.f32 0.0, %v6187
        %v6189 = vpop.f32.mrb[0].mxu0
        %v6190 = vpop.f32.mrb[0].mxu0
        %v6191 = vadd.f32 0.0, %v6190
        %v6192 = vpop.f32.mrb[0].mxu0
        %6193 = vmatprep.mubr.bf16.mxu0 0
        %6194 = vmatmul.mubr.bf16.gmra.mrb[0].mxu0 %v5897
        %v6195 = vpop.f32.mrb[0].mxu0
        %v6196 = vadd.f32 0.0, %v6195
        %v6197 = vpop.f32.mrb[0].mxu0
        %v6198 = vpop.f32.mrb[0].mxu0
        %v6199 = vadd.f32 0.0, %v6198
        %v6200 = vpop.f32.mrb[0].mxu0
        %6201 = vmatprep.mubr.bf16.mxu0 0
        %6202 = vmatmul.mubr.bf16.gmra.mrb[0].mxu0 %v5906
        %v6203 = vpop.f32.mrb[0].mxu0
        %v6204 = vadd.f32 0.0, %v6203
        %v6205 = vpop.f32.mrb[0].mxu0
        %v6206 = vpop.f32.mrb[0].mxu0
        %v6207 = vadd.f32 0.0, %v6206
        %v6208 = vpop.f32.mrb[0].mxu0
        %6209 = vmatprep.mubr.bf16.mxu0 0
        %6210 = vmatmul.mubr.bf16.gmra.mrb[0].mxu0 %v5915
        %v6211 = vpop.f32.mrb[0].mxu0
        %v6212 = vadd.f32 0.0, %v6211
        %v6213 = vpop.f32.mrb[0].mxu0
        %v6214 = vpop.f32.mrb[0].mxu0
        %v6215 = vadd.f32 0.0, %v6214
        %v6216 = vpop.f32.mrb[0].mxu0
        %6217 = vmatprep.mubr.bf16.mxu0 0
        %6218 = vmatmul.mubr.bf16.gmra.mrb[0].mxu0 %v5924
        %v6219 = vpop.f32.mrb[0].mxu0
        %v6220 = vadd.f32 0.0, %v6219
        %v6221 = vpop.f32.mrb[0].mxu0
        %v6222 = vpop.f32.mrb[0].mxu0
        %v6223 = vadd.f32 0.0, %v6222
        %v6224 = vpop.f32.mrb[0].mxu0
        %6225 = vmatprep.mubr.bf16.mxu0 0
        %6226 = vmatmul.mubr.bf16.gmra.mrb[0].mxu0 %v5933
        %v6227 = vpop.f32.mrb[0].mxu0
        %v6228 = vadd.f32 0.0, %v6227
        %v6229 = vpop.f32.mrb[0].mxu0
        %v6230 = vpop.f32.mrb[0].mxu0
        %v6231 = vadd.f32 0.0, %v6230
        %v6232 = vpop.f32.mrb[0].mxu0
        %6233 = vmatprep.mubr.bf16.mxu0 0
        %6234 = vmatmul.mubr.bf16.gmra.mrb[0].mxu0 %v5942
        %v6235 = vpop.f32.mrb[0].mxu0
        %v6236 = vadd.f32 0.0, %v6235
        %v6237 = vpop.f32.mrb[0].mxu0
        %v6238 = vpop.f32.mrb[0].mxu0
        %v6239 = vadd.f32 0.0, %v6238
        %v6240 = vpop.f32.mrb[0].mxu0
        %6241 = vmatprep.mubr.bf16.mxu0 0
        %6242 = vmatmul.mubr.bf16.gmra.mrb[0].mxu0 %v5951
        %v6243 = vpop.f32.mrb[0].mxu0
        %v6244 = vadd.f32 0.0, %v6243
        %v6245 = vpop.f32.mrb[0].mxu0
        %v6246 = vpop.f32.mrb[0].mxu0
        %v6247 = vadd.f32 0.0, %v6246
        %v6248 = vpop.f32.mrb[0].mxu0
        %6249 = vmatprep.mubr.bf16.mxu0 0
        %6250 = vmatmul.mubr.bf16.gmra.mrb[0].mxu0 %v5960
        %v6251 = vpop.f32.mrb[0].mxu0
        %v6252 = vadd.f32 0.0, %v6251
        %v6253 = vpop.f32.mrb[0].mxu0
        %v6254 = vpop.f32.mrb[0].mxu0
        %v6255 = vadd.f32 0.0, %v6254
        %v6256 = vpop.f32.mrb[0].mxu0
        %6257 = vdwg.mxu0
        %v6258 = vadd.f32 %v5672, %v6068
        %v6259 = vadd.f32 %v5673, %v6071
        %v6260 = vadd.f32 %v5674, %v6076
        %v6261 = vadd.f32 %v5675, %v6079
        %v6262 = vadd.f32 %v5676, %v6084
        %v6263 = vadd.f32 %v5677, %v6087
        %v6264 = vadd.f32 %v5678, %v6092
        %v6265 = vadd.f32 %v5679, %v6095
        %v6266 = vadd.f32 %v5680, %v6100
        %v6267 = vadd.f32 %v5681, %v6103
        %v6268 = vadd.f32 %v5682, %v6108
        %v6269 = vadd.f32 %v5683, %v6111
        %v6270 = vadd.f32 %v5684, %v6116
        %v6271 = vadd.f32 %v5685, %v6119
        %v6272 = vadd.f32 %v5686, %v6124
        %v6273 = vadd.f32 %v5687, %v6127
        %v6274 = vadd.f32 %v5688, %v6132
        %v6275 = vadd.f32 %v5689, %v6135
        %v6276 = vadd.f32 %v5690, %v6140
        %v6277 = vadd.f32 %v5691, %v6143
        %v6278 = vadd.f32 %v5692, %v6148
        %v6279 = vadd.f32 %v5693, %v6151
        %v6280 = vadd.f32 %v5694, %v6156
        %v6281 = vadd.f32 %v5695, %v6159
        %v6282 = vadd.f32 %v5696, %v6164
        %v6283 = vadd.f32 %v5697, %v6167
        %v6284 = vadd.f32 %v5698, %v6172
        %v6285 = vadd.f32 %v5699, %v6175
        %v6286 = vadd.f32 %v5700, %v6180
        %v6287 = vadd.f32 %v5701, %v6183
        %v6288 = vadd.f32 %v5702, %v6188
        %v6289 = vadd.f32 %v5703, %v6191
        %v6290 = vadd.f32 %v5704, %v6196
        %v6291 = vadd.f32 %v5705, %v6199
        %v6292 = vadd.f32 %v5706, %v6204
        %v6293 = vadd.f32 %v5707, %v6207
        %v6294 = vadd.f32 %v5708, %v6212
        %v6295 = vadd.f32 %v5709, %v6215
        %v6296 = vadd.f32 %v5710, %v6220
        %v6297 = vadd.f32 %v5711, %v6223
        %v6298 = vadd.f32 %v5712, %v6228
        %v6299 = vadd.f32 %v5713, %v6231
        %v6300 = vadd.f32 %v5714, %v6236
        %v6301 = vadd.f32 %v5715, %v6239
        %v6302 = vadd.f32 %v5716, %v6244
        %v6303 = vadd.f32 %v5717, %v6247
        %v6304 = vadd.f32 %v5718, %v6252
        %v6305 = vadd.f32 %v5719, %v6255
        %6306 = vst [vmem:[#allocation2] sm:$0xff] %v6258
        %6307 = vst [vmem:[#allocation2 + $0x8] sm:$0xff] %v6259
        %6308 = vst [vmem:[#allocation2 + $0x10] sm:$0xff] %v6260
        %6309 = vst [vmem:[#allocation2 + $0x18] sm:$0xff] %v6261
        %6310 = vst [vmem:[#allocation2 + $0x20] sm:$0xff] %v6262
        %6311 = vst [vmem:[#allocation2 + $0x28] sm:$0xff] %v6263
        %6312 = vst [vmem:[#allocation2 + $0x30] sm:$0xff] %v6264
        %6313 = vst [vmem:[#allocation2 + $0x38] sm:$0xff] %v6265
        %6314 = vst [vmem:[#allocation2 + $0x40] sm:$0xff] %v6266
        %6315 = vst [vmem:[#allocation2 + $0x48] sm:$0xff] %v6267
        %6316 = vst [vmem:[#allocation2 + $0x50] sm:$0xff] %v6268
        %6317 = vst [vmem:[#allocation2 + $0x58] sm:$0xff] %v6269
        %6318 = vst [vmem:[#allocation2 + $0x60] sm:$0xff] %v6270
        %6319 = vst [vmem:[#allocation2 + $0x68] sm:$0xff] %v6271
        %6320 = vst [vmem:[#allocation2 + $0x70] sm:$0xff] %v6272
        %6321 = vst [vmem:[#allocation2 + $0x78] sm:$0xff] %v6273
        %6322 = vst [vmem:[#allocation2 + $0x80] sm:$0xff] %v6274
        %6323 = vst [vmem:[#allocation2 + $0x88] sm:$0xff] %v6275
        %6324 = vst [vmem:[#allocation2 + $0x90] sm:$0xff] %v6276
        %6325 = vst [vmem:[#allocation2 + $0x98] sm:$0xff] %v6277
        %6326 = vst [vmem:[#allocation2 + $0xa0] sm:$0xff] %v6278
        %6327 = vst [vmem:[#allocation2 + $0xa8] sm:$0xff] %v6279
        %6328 = vst [vmem:[#allocation2 + $0xb0] sm:$0xff] %v6280
        %6329 = vst [vmem:[#allocation2 + $0xb8] sm:$0xff] %v6281
        %6330 = vst [vmem:[#allocation2 + $0xc0] sm:$0xff] %v6282
        %6331 = vst [vmem:[#allocation2 + $0xc8] sm:$0xff] %v6283
        %6332 = vst [vmem:[#allocation2 + $0xd0] sm:$0xff] %v6284
        %6333 = vst [vmem:[#allocation2 + $0xd8] sm:$0xff] %v6285
        %6334 = vst [vmem:[#allocation2 + $0xe0] sm:$0xff] %v6286
        %6335 = vst [vmem:[#allocation2 + $0xe8] sm:$0xff] %v6287
        %6336 = vst [vmem:[#allocation2 + $0xf0] sm:$0xff] %v6288
        %6337 = vst [vmem:[#allocation2 + $0xf8] sm:$0xff] %v6289
        %6338 = vst [vmem:[#allocation2 + $0x100] sm:$0xff] %v6290
        %6339 = vst [vmem:[#allocation2 + $0x108] sm:$0xff] %v6291
        %6340 = vst [vmem:[#allocation2 + $0x110] sm:$0xff] %v6292
        %6341 = vst [vmem:[#allocation2 + $0x118] sm:$0xff] %v6293
        %6342 = vst [vmem:[#allocation2 + $0x120] sm:$0xff] %v6294
        %6343 = vst [vmem:[#allocation2 + $0x128] sm:$0xff] %v6295
        %6344 = vst [vmem:[#allocation2 + $0x130] sm:$0xff] %v6296
        %6345 = vst [vmem:[#allocation2 + $0x138] sm:$0xff] %v6297
        %6346 = vst [vmem:[#allocation2 + $0x140] sm:$0xff] %v6298
        %6347 = vst [vmem:[#allocation2 + $0x148] sm:$0xff] %v6299
        %6348 = vst [vmem:[#allocation2 + $0x150] sm:$0xff] %v6300
        %6349 = vst [vmem:[#allocation2 + $0x158] sm:$0xff] %v6301
        %6350 = vst [vmem:[#allocation2 + $0x160] sm:$0xff] %v6302
        %6351 = vst [vmem:[#allocation2 + $0x168] sm:$0xff] %v6303
        %6352 = vst [vmem:[#allocation2 + $0x170] sm:$0xff] %v6304
        %6353 = vst [vmem:[#allocation2 + $0x178] sm:$0xff] %v6305
        // Predicated region
        $region45: #{tpu_custom_call.1} parent=31 // pred_check
          %p6354 = pneg %p329
        $region46: #{tpu_custom_call.1} parent=31 // pred_check_branch
          %6356 = sbr.rel (%p6354) target = $region48
        $region47: #{tpu_custom_call.1} parent=31 // pred_region
          %v6357 = vld [vmem:[%s327] sm:$0x1]
          %v6358 = vld [vmem:[#allocation2] sm:$0xff]
          %v6359 = vld [vmem:[#allocation2 + $0x8] sm:$0xff]
          %v6361 = vlaneseq
          %v6362 = vshrl.u32 %v6361, 7
          %v6363 = vsub.s32 0, %v6362
          %v6364 = vrot.slane %v6357, %v6363
          %v6366 = vadd.f32 %v6358, %v6364
          %v6367 = vadd.f32 %v6359, %v6364
          %v6368 = vadd.f32 %v6366, %v6367
          %v6369 = vrot.slane %v6368, 4
          %v6370 = vadd.f32 %v6368, %v6369
          %v6371 = vrot.slane %v6370, 2
          %v6372 = vadd.f32 %v6370, %v6371
          %v6373 = vrot.slane %v6372, 1
          %v6374 = vadd.f32 %v6372, %v6373
          %v6375 = vadd.f32 %v6374, 0.0
          %v6376 = vmul.f32 %v6366, %v6366
          %v6377 = vmul.f32 %v6367, %v6367
          %v6378 = vadd.f32 %v6376, %v6377
          %v6379 = vrot.slane %v6378, 4
          %v6380 = vadd.f32 %v6378, %v6379
          %v6381 = vrot.slane %v6380, 2
          %v6382 = vadd.f32 %v6380, %v6381
          %v6383 = vrot.slane %v6382, 1
          %v6384 = vadd.f32 %v6382, %v6383
          %v6385 = vadd.f32 %v6384, 0.0
          %v6386 = vpack.c.bf16 %v6367, %v6366
          %v6388 = vunpack.c.l.b16 %v6386
          %v6389 = vunpack.c.h.b16 %v6386
          %v6390 = vpack.c.b16 %v6388, %v6388
          %v6391 = vpack.c.b16 %v6389, %v6389
          %6394 = vst [vmem:[%s311] sm:$0xf] %v6390
          %6395 = vst [vmem:[%s311 + $0x4] sm:$0xf] %v6391
          %v6396 = vld [vmem:[#allocation2 + $0x18] sm:$0xff]
          %v6397 = vld [vmem:[#allocation2 + $0x20] sm:$0xff]
          %v6398 = vadd.f32 %v6396, %v6364
          %v6399 = vadd.f32 %v6397, %v6364
          %v6400 = vadd.f32 %v6398, %v6399
          %v6401 = vrot.slane %v6400, 4
          %v6402 = vadd.f32 %v6400, %v6401
          %v6403 = vrot.slane %v6402, 2
          %v6404 = vadd.f32 %v6402, %v6403
          %v6405 = vrot.slane %v6404, 1
          %v6406 = vadd.f32 %v6404, %v6405
          %v6407 = vadd.f32 %v6375, %v6406
          %v6408 = vmul.f32 %v6398, %v6398
          %v6409 = vmul.f32 %v6399, %v6399
          %v6410 = vadd.f32 %v6408, %v6409
          %v6411 = vrot.slane %v6410, 4
          %v6412 = vadd.f32 %v6410, %v6411
          %v6413 = vrot.slane %v6412, 2
          %v6414 = vadd.f32 %v6412, %v6413
          %v6415 = vrot.slane %v6414, 1
          %v6416 = vadd.f32 %v6414, %v6415
          %v6417 = vadd.f32 %v6385, %v6416
          %v6418 = vpack.c.bf16 %v6399, %v6398
          %v6420 = vunpack.c.l.b16 %v6418
          %v6421 = vunpack.c.h.b16 %v6418
          %v6422 = vpack.c.b16 %v6420, %v6420
          %v6423 = vpack.c.b16 %v6421, %v6421
          %s6426 = scalar_lea.vmem %s311, 8 [#allocation9]
          %6427 = vst [vmem:[%s6426] sm:$0xf] %v6422
          %6428 = vst [vmem:[%s6426 + $0x4] sm:$0xf] %v6423
          %v6429 = vld [vmem:[#allocation2 + $0x30] sm:$0xff]
          %v6430 = vld [vmem:[#allocation2 + $0x38] sm:$0xff]
          %v6431 = vadd.f32 %v6429, %v6364
          %v6432 = vadd.f32 %v6430, %v6364
          %v6433 = vadd.f32 %v6431, %v6432
          %v6434 = vrot.slane %v6433, 4
          %v6435 = vadd.f32 %v6433, %v6434
          %v6436 = vrot.slane %v6435, 2
          %v6437 = vadd.f32 %v6435, %v6436
          %v6438 = vrot.slane %v6437, 1
          %v6439 = vadd.f32 %v6437, %v6438
          %v6440 = vadd.f32 %v6407, %v6439
          %v6441 = vmul.f32 %v6431, %v6431
          %v6442 = vmul.f32 %v6432, %v6432
          %v6443 = vadd.f32 %v6441, %v6442
          %v6444 = vrot.slane %v6443, 4
          %v6445 = vadd.f32 %v6443, %v6444
          %v6446 = vrot.slane %v6445, 2
          %v6447 = vadd.f32 %v6445, %v6446
          %v6448 = vrot.slane %v6447, 1
          %v6449 = vadd.f32 %v6447, %v6448
          %v6450 = vadd.f32 %v6417, %v6449
          %v6451 = vpack.c.bf16 %v6432, %v6431
          %v6453 = vunpack.c.l.b16 %v6451
          %v6454 = vunpack.c.h.b16 %v6451
          %v6455 = vpack.c.b16 %v6453, %v6453
          %v6456 = vpack.c.b16 %v6454, %v6454
          %s6459 = scalar_lea.vmem %s311, 16 [#allocation9]
          %6460 = vst [vmem:[%s6459] sm:$0xf] %v6455
          %6461 = vst [vmem:[%s6459 + $0x4] sm:$0xf] %v6456
          %v6462 = vld [vmem:[#allocation2 + $0x48] sm:$0xff]
          %v6463 = vld [vmem:[#allocation2 + $0x50] sm:$0xff]
          %v6464 = vadd.f32 %v6462, %v6364
          %v6465 = vadd.f32 %v6463, %v6364
          %v6466 = vadd.f32 %v6464, %v6465
          %v6467 = vrot.slane %v6466, 4
          %v6468 = vadd.f32 %v6466, %v6467
          %v6469 = vrot.slane %v6468, 2
          %v6470 = vadd.f32 %v6468, %v6469
          %v6471 = vrot.slane %v6470, 1
          %v6472 = vadd.f32 %v6470, %v6471
          %v6473 = vadd.f32 %v6440, %v6472
          %v6474 = vmul.f32 %v6464, %v6464
          %v6475 = vmul.f32 %v6465, %v6465
          %v6476 = vadd.f32 %v6474, %v6475
          %v6477 = vrot.slane %v6476, 4
          %v6478 = vadd.f32 %v6476, %v6477
          %v6479 = vrot.slane %v6478, 2
          %v6480 = vadd.f32 %v6478, %v6479
          %v6481 = vrot.slane %v6480, 1
          %v6482 = vadd.f32 %v6480, %v6481
          %v6483 = vadd.f32 %v6450, %v6482
          %v6484 = vpack.c.bf16 %v6465, %v6464
          %v6486 = vunpack.c.l.b16 %v6484
          %v6487 = vunpack.c.h.b16 %v6484
          %v6488 = vpack.c.b16 %v6486, %v6486
          %v6489 = vpack.c.b16 %v6487, %v6487
          %s6492 = scalar_lea.vmem %s311, 24 [#allocation9]
          %6493 = vst [vmem:[%s6492] sm:$0xf] %v6488
          %6494 = vst [vmem:[%s6492 + $0x4] sm:$0xf] %v6489
          %v6495 = vld [vmem:[#allocation2 + $0x60] sm:$0xff]
          %v6496 = vld [vmem:[#allocation2 + $0x68] sm:$0xff]
          %v6497 = vadd.f32 %v6495, %v6364
          %v6498 = vadd.f32 %v6496, %v6364
          %v6499 = vadd.f32 %v6497, %v6498
          %v6500 = vrot.slane %v6499, 4
          %v6501 = vadd.f32 %v6499, %v6500
          %v6502 = vrot.slane %v6501, 2
          %v6503 = vadd.f32 %v6501, %v6502
          %v6504 = vrot.slane %v6503, 1
          %v6505 = vadd.f32 %v6503, %v6504
          %v6506 = vadd.f32 %v6473, %v6505
          %v6507 = vmul.f32 %v6497, %v6497
          %v6508 = vmul.f32 %v6498, %v6498
          %v6509 = vadd.f32 %v6507, %v6508
          %v6510 = vrot.slane %v6509, 4
          %v6511 = vadd.f32 %v6509, %v6510
          %v6512 = vrot.slane %v6511, 2
          %v6513 = vadd.f32 %v6511, %v6512
          %v6514 = vrot.slane %v6513, 1
          %v6515 = vadd.f32 %v6513, %v6514
          %v6516 = vadd.f32 %v6483, %v6515
          %v6517 = vpack.c.bf16 %v6498, %v6497
          %v6519 = vunpack.c.l.b16 %v6517
          %v6520 = vunpack.c.h.b16 %v6517
          %v6521 = vpack.c.b16 %v6519, %v6519
          %v6522 = vpack.c.b16 %v6520, %v6520
          %s6525 = scalar_lea.vmem %s311, 32 [#allocation9]
          %6526 = vst [vmem:[%s6525] sm:$0xf] %v6521
          %6527 = vst [vmem:[%s6525 + $0x4] sm:$0xf] %v6522
          %v6528 = vld [vmem:[#allocation2 + $0x78] sm:$0xff]
          %v6529 = vld [vmem:[#allocation2 + $0x80] sm:$0xff]
          %v6530 = vadd.f32 %v6528, %v6364
          %v6531 = vadd.f32 %v6529, %v6364
          %v6532 = vadd.f32 %v6530, %v6531
          %v6533 = vrot.slane %v6532, 4
          %v6534 = vadd.f32 %v6532, %v6533
          %v6535 = vrot.slane %v6534, 2
          %v6536 = vadd.f32 %v6534, %v6535
          %v6537 = vrot.slane %v6536, 1
          %v6538 = vadd.f32 %v6536, %v6537
          %v6539 = vadd.f32 %v6506, %v6538
          %v6540 = vmul.f32 %v6530, %v6530
          %v6541 = vmul.f32 %v6531, %v6531
          %v6542 = vadd.f32 %v6540, %v6541
          %v6543 = vrot.slane %v6542, 4
          %v6544 = vadd.f32 %v6542, %v6543
          %v6545 = vrot.slane %v6544, 2
          %v6546 = vadd.f32 %v6544, %v6545
          %v6547 = vrot.slane %v6546, 1
          %v6548 = vadd.f32 %v6546, %v6547
          %v6549 = vadd.f32 %v6516, %v6548
          %v6550 = vpack.c.bf16 %v6531, %v6530
          %v6552 = vunpack.c.l.b16 %v6550
          %v6553 = vunpack.c.h.b16 %v6550
          %v6554 = vpack.c.b16 %v6552, %v6552
          %v6555 = vpack.c.b16 %v6553, %v6553
          %s6558 = scalar_lea.vmem %s311, 40 [#allocation9]
          %6559 = vst [vmem:[%s6558] sm:$0xf] %v6554
          %6560 = vst [vmem:[%s6558 + $0x4] sm:$0xf] %v6555
          %v6561 = vld [vmem:[#allocation2 + $0x90] sm:$0xff]
          %v6562 = vld [vmem:[#allocation2 + $0x98] sm:$0xff]
          %v6563 = vadd.f32 %v6561, %v6364
          %v6564 = vadd.f32 %v6562, %v6364
          %v6565 = vadd.f32 %v6563, %v6564
          %v6566 = vrot.slane %v6565, 4
          %v6567 = vadd.f32 %v6565, %v6566
          %v6568 = vrot.slane %v6567, 2
          %v6569 = vadd.f32 %v6567, %v6568
          %v6570 = vrot.slane %v6569, 1
          %v6571 = vadd.f32 %v6569, %v6570
          %v6572 = vadd.f32 %v6539, %v6571
          %v6573 = vmul.f32 %v6563, %v6563
          %v6574 = vmul.f32 %v6564, %v6564
          %v6575 = vadd.f32 %v6573, %v6574
          %v6576 = vrot.slane %v6575, 4
          %v6577 = vadd.f32 %v6575, %v6576
          %v6578 = vrot.slane %v6577, 2
          %v6579 = vadd.f32 %v6577, %v6578
          %v6580 = vrot.slane %v6579, 1
          %v6581 = vadd.f32 %v6579, %v6580
          %v6582 = vadd.f32 %v6549, %v6581
          %v6583 = vpack.c.bf16 %v6564, %v6563
          %v6585 = vunpack.c.l.b16 %v6583
          %v6586 = vunpack.c.h.b16 %v6583
          %v6587 = vpack.c.b16 %v6585, %v6585
          %v6588 = vpack.c.b16 %v6586, %v6586
          %s6591 = scalar_lea.vmem %s311, 48 [#allocation9]
          %6592 = vst [vmem:[%s6591] sm:$0xf] %v6587
          %6593 = vst [vmem:[%s6591 + $0x4] sm:$0xf] %v6588
          %v6594 = vld [vmem:[#allocation2 + $0xa8] sm:$0xff]
          %v6595 = vld [vmem:[#allocation2 + $0xb0] sm:$0xff]
          %v6596 = vadd.f32 %v6594, %v6364
          %v6597 = vadd.f32 %v6595, %v6364
          %v6598 = vadd.f32 %v6596, %v6597
          %v6599 = vrot.slane %v6598, 4
          %v6600 = vadd.f32 %v6598, %v6599
          %v6601 = vrot.slane %v6600, 2
          %v6602 = vadd.f32 %v6600, %v6601
          %v6603 = vrot.slane %v6602, 1
          %v6604 = vadd.f32 %v6602, %v6603
          %v6605 = vadd.f32 %v6572, %v6604
          %v6606 = vmul.f32 %v6596, %v6596
          %v6607 = vmul.f32 %v6597, %v6597
          %v6608 = vadd.f32 %v6606, %v6607
          %v6609 = vrot.slane %v6608, 4
          %v6610 = vadd.f32 %v6608, %v6609
          %v6611 = vrot.slane %v6610, 2
          %v6612 = vadd.f32 %v6610, %v6611
          %v6613 = vrot.slane %v6612, 1
          %v6614 = vadd.f32 %v6612, %v6613
          %v6615 = vadd.f32 %v6582, %v6614
          %v6616 = vpack.c.bf16 %v6597, %v6596
          %v6618 = vunpack.c.l.b16 %v6616
          %v6619 = vunpack.c.h.b16 %v6616
          %v6620 = vpack.c.b16 %v6618, %v6618
          %v6621 = vpack.c.b16 %v6619, %v6619
          %s6624 = scalar_lea.vmem %s311, 56 [#allocation9]
          %6625 = vst [vmem:[%s6624] sm:$0xf] %v6620
          %6626 = vst [vmem:[%s6624 + $0x4] sm:$0xf] %v6621
          %v6627 = vld [vmem:[#allocation2 + $0xc0] sm:$0xff]
          %v6628 = vld [vmem:[#allocation2 + $0xc8] sm:$0xff]
          %v6629 = vadd.f32 %v6627, %v6364
          %v6630 = vadd.f32 %v6628, %v6364
          %v6631 = vadd.f32 %v6629, %v6630
          %v6632 = vrot.slane %v6631, 4
          %v6633 = vadd.f32 %v6631, %v6632
          %v6634 = vrot.slane %v6633, 2
          %v6635 = vadd.f32 %v6633, %v6634
          %v6636 = vrot.slane %v6635, 1
          %v6637 = vadd.f32 %v6635, %v6636
          %v6638 = vadd.f32 %v6605, %v6637
          %v6639 = vmul.f32 %v6629, %v6629
          %v6640 = vmul.f32 %v6630, %v6630
          %v6641 = vadd.f32 %v6639, %v6640
          %v6642 = vrot.slane %v6641, 4
          %v6643 = vadd.f32 %v6641, %v6642
          %v6644 = vrot.slane %v6643, 2
          %v6645 = vadd.f32 %v6643, %v6644
          %v6646 = vrot.slane %v6645, 1
          %v6647 = vadd.f32 %v6645, %v6646
          %v6648 = vadd.f32 %v6615, %v6647
          %v6649 = vpack.c.bf16 %v6630, %v6629
          %v6651 = vunpack.c.l.b16 %v6649
          %v6652 = vunpack.c.h.b16 %v6649
          %v6653 = vpack.c.b16 %v6651, %v6651
          %v6654 = vpack.c.b16 %v6652, %v6652
          %s6657 = scalar_lea.vmem %s311, 64 [#allocation9]
          %6658 = vst [vmem:[%s6657] sm:$0xf] %v6653
          %6659 = vst [vmem:[%s6657 + $0x4] sm:$0xf] %v6654
          %v6660 = vld [vmem:[#allocation2 + $0xd8] sm:$0xff]
          %v6661 = vld [vmem:[#allocation2 + $0xe0] sm:$0xff]
          %v6662 = vadd.f32 %v6660, %v6364
          %v6663 = vadd.f32 %v6661, %v6364
          %v6664 = vadd.f32 %v6662, %v6663
          %v6665 = vrot.slane %v6664, 4
          %v6666 = vadd.f32 %v6664, %v6665
          %v6667 = vrot.slane %v6666, 2
          %v6668 = vadd.f32 %v6666, %v6667
          %v6669 = vrot.slane %v6668, 1
          %v6670 = vadd.f32 %v6668, %v6669
          %v6671 = vadd.f32 %v6638, %v6670
          %v6672 = vmul.f32 %v6662, %v6662
          %v6673 = vmul.f32 %v6663, %v6663
          %v6674 = vadd.f32 %v6672, %v6673
          %v6675 = vrot.slane %v6674, 4
          %v6676 = vadd.f32 %v6674, %v6675
          %v6677 = vrot.slane %v6676, 2
          %v6678 = vadd.f32 %v6676, %v6677
          %v6679 = vrot.slane %v6678, 1
          %v6680 = vadd.f32 %v6678, %v6679
          %v6681 = vadd.f32 %v6648, %v6680
          %v6682 = vpack.c.bf16 %v6663, %v6662
          %v6684 = vunpack.c.l.b16 %v6682
          %v6685 = vunpack.c.h.b16 %v6682
          %v6686 = vpack.c.b16 %v6684, %v6684
          %v6687 = vpack.c.b16 %v6685, %v6685
          %s6690 = scalar_lea.vmem %s311, 72 [#allocation9]
          %6691 = vst [vmem:[%s6690] sm:$0xf] %v6686
          %6692 = vst [vmem:[%s6690 + $0x4] sm:$0xf] %v6687
          %v6693 = vld [vmem:[#allocation2 + $0xf0] sm:$0xff]
          %v6694 = vld [vmem:[#allocation2 + $0xf8] sm:$0xff]
          %v6695 = vadd.f32 %v6693, %v6364
          %v6696 = vadd.f32 %v6694, %v6364
          %v6697 = vadd.f32 %v6695, %v6696
          %v6698 = vrot.slane %v6697, 4
          %v6699 = vadd.f32 %v6697, %v6698
          %v6700 = vrot.slane %v6699, 2
          %v6701 = vadd.f32 %v6699, %v6700
          %v6702 = vrot.slane %v6701, 1
          %v6703 = vadd.f32 %v6701, %v6702
          %v6704 = vadd.f32 %v6671, %v6703
          %v6705 = vmul.f32 %v6695, %v6695
          %v6706 = vmul.f32 %v6696, %v6696
          %v6707 = vadd.f32 %v6705, %v6706
          %v6708 = vrot.slane %v6707, 4
          %v6709 = vadd.f32 %v6707, %v6708
          %v6710 = vrot.slane %v6709, 2
          %v6711 = vadd.f32 %v6709, %v6710
          %v6712 = vrot.slane %v6711, 1
          %v6713 = vadd.f32 %v6711, %v6712
          %v6714 = vadd.f32 %v6681, %v6713
          %v6715 = vpack.c.bf16 %v6696, %v6695
          %v6717 = vunpack.c.l.b16 %v6715
          %v6718 = vunpack.c.h.b16 %v6715
          %v6719 = vpack.c.b16 %v6717, %v6717
          %v6720 = vpack.c.b16 %v6718, %v6718
          %s6723 = scalar_lea.vmem %s311, 80 [#allocation9]
          %6724 = vst [vmem:[%s6723] sm:$0xf] %v6719
          %6725 = vst [vmem:[%s6723 + $0x4] sm:$0xf] %v6720
          %v6726 = vld [vmem:[#allocation2 + $0x108] sm:$0xff]
          %v6727 = vld [vmem:[#allocation2 + $0x110] sm:$0xff]
          %v6728 = vadd.f32 %v6726, %v6364
          %v6729 = vadd.f32 %v6727, %v6364
          %v6730 = vadd.f32 %v6728, %v6729
          %v6731 = vrot.slane %v6730, 4
          %v6732 = vadd.f32 %v6730, %v6731
          %v6733 = vrot.slane %v6732, 2
          %v6734 = vadd.f32 %v6732, %v6733
          %v6735 = vrot.slane %v6734, 1
          %v6736 = vadd.f32 %v6734, %v6735
          %v6737 = vadd.f32 %v6704, %v6736
          %v6738 = vmul.f32 %v6728, %v6728
          %v6739 = vmul.f32 %v6729, %v6729
          %v6740 = vadd.f32 %v6738, %v6739
          %v6741 = vrot.slane %v6740, 4
          %v6742 = vadd.f32 %v6740, %v6741
          %v6743 = vrot.slane %v6742, 2
          %v6744 = vadd.f32 %v6742, %v6743
          %v6745 = vrot.slane %v6744, 1
          %v6746 = vadd.f32 %v6744, %v6745
          %v6747 = vadd.f32 %v6714, %v6746
          %v6748 = vpack.c.bf16 %v6729, %v6728
          %v6750 = vunpack.c.l.b16 %v6748
          %v6751 = vunpack.c.h.b16 %v6748
          %v6752 = vpack.c.b16 %v6750, %v6750
          %v6753 = vpack.c.b16 %v6751, %v6751
          %s6756 = scalar_lea.vmem %s311, 88 [#allocation9]
          %6757 = vst [vmem:[%s6756] sm:$0xf] %v6752
          %6758 = vst [vmem:[%s6756 + $0x4] sm:$0xf] %v6753
          %v6759 = vld [vmem:[#allocation2 + $0x120] sm:$0xff]
          %v6760 = vld [vmem:[#allocation2 + $0x128] sm:$0xff]
          %v6761 = vadd.f32 %v6759, %v6364
          %v6762 = vadd.f32 %v6760, %v6364
          %v6763 = vadd.f32 %v6761, %v6762
          %v6764 = vrot.slane %v6763, 4
          %v6765 = vadd.f32 %v6763, %v6764
          %v6766 = vrot.slane %v6765, 2
          %v6767 = vadd.f32 %v6765, %v6766
          %v6768 = vrot.slane %v6767, 1
          %v6769 = vadd.f32 %v6767, %v6768
          %v6770 = vadd.f32 %v6737, %v6769
          %v6771 = vmul.f32 %v6761, %v6761
          %v6772 = vmul.f32 %v6762, %v6762
          %v6773 = vadd.f32 %v6771, %v6772
          %v6774 = vrot.slane %v6773, 4
          %v6775 = vadd.f32 %v6773, %v6774
          %v6776 = vrot.slane %v6775, 2
          %v6777 = vadd.f32 %v6775, %v6776
          %v6778 = vrot.slane %v6777, 1
          %v6779 = vadd.f32 %v6777, %v6778
          %v6780 = vadd.f32 %v6747, %v6779
          %v6781 = vpack.c.bf16 %v6762, %v6761
          %v6783 = vunpack.c.l.b16 %v6781
          %v6784 = vunpack.c.h.b16 %v6781
          %v6785 = vpack.c.b16 %v6783, %v6783
          %v6786 = vpack.c.b16 %v6784, %v6784
          %s6789 = scalar_lea.vmem %s311, 96 [#allocation9]
          %6790 = vst [vmem:[%s6789] sm:$0xf] %v6785
          %6791 = vst [vmem:[%s6789 + $0x4] sm:$0xf] %v6786
          %v6792 = vld [vmem:[#allocation2 + $0x138] sm:$0xff]
          %v6793 = vld [vmem:[#allocation2 + $0x140] sm:$0xff]
          %v6794 = vadd.f32 %v6792, %v6364
          %v6795 = vadd.f32 %v6793, %v6364
          %v6796 = vadd.f32 %v6794, %v6795
          %v6797 = vrot.slane %v6796, 4
          %v6798 = vadd.f32 %v6796, %v6797
          %v6799 = vrot.slane %v6798, 2
          %v6800 = vadd.f32 %v6798, %v6799
          %v6801 = vrot.slane %v6800, 1
          %v6802 = vadd.f32 %v6800, %v6801
          %v6803 = vadd.f32 %v6770, %v6802
          %v6804 = vmul.f32 %v6794, %v6794
          %v6805 = vmul.f32 %v6795, %v6795
          %v6806 = vadd.f32 %v6804, %v6805
          %v6807 = vrot.slane %v6806, 4
          %v6808 = vadd.f32 %v6806, %v6807
          %v6809 = vrot.slane %v6808, 2
          %v6810 = vadd.f32 %v6808, %v6809
          %v6811 = vrot.slane %v6810, 1
          %v6812 = vadd.f32 %v6810, %v6811
          %v6813 = vadd.f32 %v6780, %v6812
          %v6814 = vpack.c.bf16 %v6795, %v6794
          %v6816 = vunpack.c.l.b16 %v6814
          %v6817 = vunpack.c.h.b16 %v6814
          %v6818 = vpack.c.b16 %v6816, %v6816
          %v6819 = vpack.c.b16 %v6817, %v6817
          %s6822 = scalar_lea.vmem %s311, 104 [#allocation9]
          %6823 = vst [vmem:[%s6822] sm:$0xf] %v6818
          %6824 = vst [vmem:[%s6822 + $0x4] sm:$0xf] %v6819
          %v6825 = vld [vmem:[#allocation2 + $0x150] sm:$0xff]
          %v6826 = vld [vmem:[#allocation2 + $0x158] sm:$0xff]
          %v6827 = vadd.f32 %v6825, %v6364
          %v6828 = vadd.f32 %v6826, %v6364
          %v6829 = vadd.f32 %v6827, %v6828
          %v6830 = vrot.slane %v6829, 4
          %v6831 = vadd.f32 %v6829, %v6830
          %v6832 = vrot.slane %v6831, 2
          %v6833 = vadd.f32 %v6831, %v6832
          %v6834 = vrot.slane %v6833, 1
          %v6835 = vadd.f32 %v6833, %v6834
          %v6836 = vadd.f32 %v6803, %v6835
          %v6837 = vmul.f32 %v6827, %v6827
          %v6838 = vmul.f32 %v6828, %v6828
          %v6839 = vadd.f32 %v6837, %v6838
          %v6840 = vrot.slane %v6839, 4
          %v6841 = vadd.f32 %v6839, %v6840
          %v6842 = vrot.slane %v6841, 2
          %v6843 = vadd.f32 %v6841, %v6842
          %v6844 = vrot.slane %v6843, 1
          %v6845 = vadd.f32 %v6843, %v6844
          %v6846 = vadd.f32 %v6813, %v6845
          %v6847 = vpack.c.bf16 %v6828, %v6827
          %v6849 = vunpack.c.l.b16 %v6847
          %v6850 = vunpack.c.h.b16 %v6847
          %v6851 = vpack.c.b16 %v6849, %v6849
          %v6852 = vpack.c.b16 %v6850, %v6850
          %s6855 = scalar_lea.vmem %s311, 112 [#allocation9]
          %6856 = vst [vmem:[%s6855] sm:$0xf] %v6851
          %6857 = vst [vmem:[%s6855 + $0x4] sm:$0xf] %v6852
          %v6858 = vld [vmem:[#allocation2 + $0x168] sm:$0xff]
          %v6859 = vld [vmem:[#allocation2 + $0x170] sm:$0xff]
          %v6860 = vadd.f32 %v6858, %v6364
          %v6861 = vadd.f32 %v6859, %v6364
          %v6862 = vadd.f32 %v6860, %v6861
          %v6863 = vrot.slane %v6862, 4
          %v6864 = vadd.f32 %v6862, %v6863
          %v6865 = vrot.slane %v6864, 2
          %v6866 = vadd.f32 %v6864, %v6865
          %v6867 = vrot.slane %v6866, 1
          %v6868 = vadd.f32 %v6866, %v6867
          %v6869 = vadd.f32 %v6836, %v6868
          %v6870 = vmul.f32 %v6860, %v6860
          %v6871 = vmul.f32 %v6861, %v6861
          %v6872 = vadd.f32 %v6870, %v6871
          %v6873 = vrot.slane %v6872, 4
          %v6874 = vadd.f32 %v6872, %v6873
          %v6875 = vrot.slane %v6874, 2
          %v6876 = vadd.f32 %v6874, %v6875
          %v6877 = vrot.slane %v6876, 1
          %v6878 = vadd.f32 %v6876, %v6877
          %v6879 = vadd.f32 %v6846, %v6878
          %v6880 = vpack.c.bf16 %v6861, %v6860
          %v6882 = vunpack.c.l.b16 %v6880
          %v6883 = vunpack.c.h.b16 %v6880
          %v6884 = vpack.c.b16 %v6882, %v6882
          %v6885 = vpack.c.b16 %v6883, %v6883
          %s6888 = scalar_lea.vmem %s311, 120 [#allocation9]
          %6889 = vst [vmem:[%s6888] sm:$0xf] %v6884
          %6890 = vst [vmem:[%s6888 + $0x4] sm:$0xf] %v6885
          %6891 = vst [vmem:[%s317] sm:$0x1] %v6869
          %6892 = vst [vmem:[%s323] sm:$0x1] %v6879
        $region48: #{tpu_custom_call.1} parent=31 // pred_fallthru
          _
        %s6893 = sand.u32 %s138, 1
        %s6894 = scalar_lea.sflag [#allocation6], %s6893
        %s6895 = sand.u32 %s138, 1
        %s6896 = smul.addr %s6895, 128
        %s6897 = scalar_lea.vmem [#allocation9], %s6896
        %s6898 = sand.u32 %s27, 1
        %s6899 = scalar_lea.sflag [#allocation11], %s6898
        %s6900 = sand.u32 %s166, 1
        %s6901 = scalar_lea.vmem [#allocation10], %s6900
        %s6902 = sand.u32 %s27, 1
        %s6903 = scalar_lea.sflag [#allocation11], %s6902
        %s6904 = sand.u32 %s194, 1
        %s6905 = scalar_lea.vmem [#allocation12], %s6904
        // Predicated region
        $region49: #{tpu_custom_call.1} parent=31 // pred_check
          %p6906 = pneg %p148
        $region50: #{tpu_custom_call.1} parent=31 // pred_check_branch
          %6908 = sbr.rel (%p6906) target = $region52
        $region51: #{tpu_custom_call.1} parent=31 // pred_region
          %s6910 = ssub.s32 2048, 2048
          %6911 = vsyncadd %s6894, %s6910
          %s6912 = smul.addr %s32, 32
          %s6913 = sadd.s32 %s33, %s6912
          %s6914 = smul.addr %s6913, 64
          %s6915 = scalar_lea.hbm %s3, %s6914
          %s6916 = sshll.u32 %s6897, 4
          %s6917 = int_to_ptr.vmem [resolvable:$true] %s6916
          %6922 = dma.vmem_to_hbm [thread:$0]  %s6917, 2048, %s6915, %s6894, 64, 64, 4
        $region52: #{tpu_custom_call.1} parent=31 // pred_fallthru
          _
        // Predicated region
        $region53: #{tpu_custom_call.1} parent=31 // pred_check
          %p6923 = pneg %p176
        $region54: #{tpu_custom_call.1} parent=31 // pred_check_branch
          %6925 = sbr.rel (%p6923) target = $region56
        $region55: #{tpu_custom_call.1} parent=31 // pred_region
          %s6927 = ssub.s32 16, 16
          %6928 = vsyncadd %s6899, %s6927
          %s6929 = sadd.s32 %s33, %s32
          %s6930 = smul.addr %s6929, 16
          %s6931 = scalar_lea.hbm %s4, %s6930
          %s6933 = sshll.u32 %s6901, 4
          %s6934 = int_to_ptr.vmem [resolvable:$true] %s6933
          %6936 = dma.vmem_to_hbm [thread:$0]  %s6934, 16, %s6931, %s6899
        $region56: #{tpu_custom_call.1} parent=31 // pred_fallthru
          _
        // Predicated region
        $region57: #{tpu_custom_call.1} parent=31 // pred_check
          %p6937 = pneg %p204
        $region58: #{tpu_custom_call.1} parent=31 // pred_check_branch
          %6939 = sbr.rel (%p6937) target = $region60
        $region59: #{tpu_custom_call.1} parent=31 // pred_region
          %s6941 = ssub.s32 16, 16
          %6942 = vsyncadd %s6903, %s6941
          %s6943 = sadd.s32 %s33, %s32
          %s6944 = smul.addr %s6943, 16
          %s6945 = scalar_lea.hbm %s5, %s6944
          %s6947 = sshll.u32 %s6905, 4
          %s6948 = int_to_ptr.vmem [resolvable:$true] %s6947
          %6950 = dma.vmem_to_hbm [thread:$0]  %s6948, 16, %s6945, %s6903
        $region60: #{tpu_custom_call.1} parent=31 // pred_fallthru
          _
      $region32: #{tpu_custom_call.1} parent=5 // pred_fallthru
        _
      %p6951 = scmp.le.s32.totalorder 2, %s22
      // Predicated region
      $region61: #{tpu_custom_call.1} parent=5 // pred_check
        %p6952 = pneg %p6951
      $region62: #{tpu_custom_call.1} parent=5 // pred_check_branch
        %6954 = sbr.rel (%p6952) target = $region64
      $region63: #{tpu_custom_call.1} parent=5 // pred_region
        %s6955 = ssub.s32 %s22, 2
        // Predicated region
        $region65: #{tpu_custom_call.1} parent=63 // pred_check
          %p6956 = pneg %p154
        $region66: #{tpu_custom_call.1} parent=63 // pred_check_branch
          %6958 = sbr.rel (%p6956) target = $region68
        $region67: #{tpu_custom_call.1} parent=63 // pred_region
          %s6959 = sand.u32 %s139, 1
          %s6960 = scalar_lea.sflag [#allocation6], %s6959
          %s6961 = sand.u32 %s139, 1
          %s6962 = smul.addr %s6961, 128
          %s6963 = scalar_lea.vmem [#allocation9], %s6962
          %6964 = dma.done %s6960, 2048
        $region68: #{tpu_custom_call.1} parent=63 // pred_fallthru
          _
        // Predicated region
        $region69: #{tpu_custom_call.1} parent=63 // pred_check
          %p6965 = pneg %p182
        $region70: #{tpu_custom_call.1} parent=63 // pred_check_branch
          %6967 = sbr.rel (%p6965) target = $region72
        $region71: #{tpu_custom_call.1} parent=63 // pred_region
          %s6968 = sand.u32 %s28, 1
          %s6969 = scalar_lea.sflag [#allocation11], %s6968
          %s6970 = sand.u32 %s167, 1
          %s6971 = scalar_lea.vmem [#allocation10], %s6970
          %6972 = dma.done %s6969, 16
        $region72: #{tpu_custom_call.1} parent=63 // pred_fallthru
          _
        // Predicated region
        $region73: #{tpu_custom_call.1} parent=63 // pred_check
          %p6973 = pneg %p210
        $region74: #{tpu_custom_call.1} parent=63 // pred_check_branch
          %6975 = sbr.rel (%p6973) target = $region76
        $region75: #{tpu_custom_call.1} parent=63 // pred_region
          %s6976 = sand.u32 %s28, 1
          %s6977 = scalar_lea.sflag [#allocation11], %s6976
          %s6978 = sand.u32 %s195, 1
          %s6979 = scalar_lea.vmem [#allocation12], %s6978
          %6980 = dma.done %s6977, 16
        $region76: #{tpu_custom_call.1} parent=63 // pred_fallthru
          _
      $region64: #{tpu_custom_call.1} parent=5 // pred_fallthru
        _
    $region6: #{tpu_custom_call.1} parent=1 // loop_footer
      %s26 = sadd.s32 1, %s22
    $region7: #{tpu_custom_call.1} parent=1 // loop_footer_branch
      %21 = sbr.rel target = $region3
    $region8: #{tpu_custom_call.1} parent=1 // loop_exit
      _
    %6981 = vsyncpa [#allocation5], 1
    %s6982 = scalar_lea.sflag [#allocation5], 1
    %6983 = vsyncpa %s6982, 1
    %6984 = vsyncpa [#allocation8], 1
    %6985 = vsyncpa [#allocation6], 1
    %s6986 = scalar_lea.sflag [#allocation6], 1
    %6987 = vsyncpa %s6986, 1
    %6988 = vsyncpa [#allocation11], 1
    %s6989 = scalar_lea.sflag [#allocation11], 1
    %6990 = vsyncpa %s6989, 1

</llo_original>
